<compile_context>
chip_gen: v7x
topology: tpu7x:2x2x1
jax: 0.10.0
libtpu: 0.0.40
codegen_flags: <defaults>
</compile_context>

<pallas_src>
import functools

import jax
import jax.numpy as jnp
from jax.experimental import pallas as pl
from jax.experimental.pallas import tpu as pltpu


def _sigmoid(x):
    # sigmoid(x) == 0.5 * tanh(x / 2) + 0.5 : one EUP tanh + one VPU FMA,
    # no VPU divide (the EUP is otherwise idle during the gate phase).
    return 0.5 * jnp.tanh(0.5 * x) + 0.5


def _cgru_kernel(x_ref, w1_ref, b1_ref, g1_ref, bt1_ref,
                 w2_ref, b2_ref, g2_ref, bt2_ref,
                 y_ref,
                 h_scr, pad_scr,
                 *, B, H, W, Cin, F, K, P, G1, G2, eps):
    t = pl.program_id(0)
    HW = H * W
    Ct = Cin + F

    @pl.when(t == 0)
    def _():
        h_scr[...] = jnp.zeros_like(h_scr)
        pad_scr[...] = jnp.zeros_like(pad_scr)  # zero halo stays zero forever

    # Stage this step's conv input.  The x channels are written once per step;
    # only the h / r*h channel slab is rewritten before the second conv.
    pad_scr[:, P:P + H, P:P + W, :Cin] = x_ref[0]
    h4 = h_scr[...]                               # (B, H, W, F) f32 carried h
    hf = h4.reshape(B, HW, F)
    pad_scr[:, P:P + H, P:P + W, Cin:] = h4

    def conv_gn(w_ref, b_ref, g_ref, beta_ref, cout, groups):
        # --- conv2d (stride 1, SAME) as ONE im2col GEMM on the MXU ----------
        # K*K shifted taps concatenated along channels -> contraction K*K*Ct;
        # bf16 operands, f32 accumulation (single MXU pass per tile).
        taps = [pad_scr[:, ky:ky + H, kx:kx + W, :].astype(jnp.bfloat16)
                for ky in range(K) for kx in range(K)]
        cols = jnp.concatenate(taps, axis=-1).reshape(B * HW, K * K * Ct)
        acc = jnp.dot(cols, w_ref[...],
                      preferred_element_type=jnp.float32)      # (B*HW, cout)
        acc = acc.reshape(B, HW, cout)

        # --- conv bias + GroupNorm folded into ONE per-channel FMA ----------
        b = b_ref[...]                                         # (1, cout)
        gamma = g_ref[...]
        beta = beta_ref[...]

        s1 = jnp.sum(acc, axis=1)                              # (B, cout)
        s2 = jnp.sum(acc * acc, axis=1)                        # (B, cout)
        hw = float(HW)
        sb1 = s1 + hw * b                                      # sums of (acc + b)
        sb2 = s2 + 2.0 * b * s1 + hw * (b * b)                 # sums of (acc + b)^2

        cg = cout // groups
        n = float(HW * cg)
        scale_parts, shift_parts = [], []
        for g in range(groups):                                # tiny, unrolled
            sl = slice(g * cg, (g + 1) * cg)
            gs1 = jnp.sum(sb1[:, sl], axis=-1, keepdims=True)  # (B, 1)
            gs2 = jnp.sum(sb2[:, sl], axis=-1, keepdims=True)
            mean = gs1 / n
            var = gs2 / n - mean * mean                        # biased var
            inv = jax.lax.rsqrt(var + eps)
            sc = inv * gamma[:, sl]                            # (B, cg)
            sh = (b[:, sl] - mean) * sc + beta[:, sl]
            scale_parts.append(sc)
            shift_parts.append(sh)
        scale = jnp.concatenate(scale_parts, axis=-1)          # (B, cout)
        shift = jnp.concatenate(shift_parts, axis=-1)
        # single full-tensor FMA replaces bias-add + 4 GroupNorm passes
        return acc * scale[:, None, :] + shift[:, None, :]     # (B, HW, cout)

    # gates = sigmoid(GroupNorm(conv1(cat(x, h))))
    gates = _sigmoid(conv_gn(w1_ref, b1_ref, g1_ref, bt1_ref, 2 * F, G1))
    z = gates[..., :F]
    r = gates[..., F:]

    # candidate = tanh(GroupNorm(conv2(cat(x, r*h))))
    pad_scr[:, P:P + H, P:P + W, Cin:] = (r * hf).reshape(B, H, W, F)
    ht = jnp.tanh(conv_gn(w2_ref, b2_ref, g2_ref, bt2_ref, F, G2))

    hnext = hf + z * (ht - hf)                  # == (1 - z) * h + z * ht
    h4n = hnext.reshape(B, H, W, F)
    h_scr[...] = h4n
    y_ref[0] = h4n.astype(y_ref.dtype)


def cgru_cell_forward(inputs_btchw, params, *, shape, input_channels,
                      filter_size, num_features, seq_len):
    """ConvGRU forward (hidden_state=None). inputs_btchw: (B, T, Cin, H, W) f32."""
    # TODO(synk): the `inputs is None` branch of the PyTorch forward (all-zero
    # inputs with a provided hidden_state) is not implemented here.
    B, T, Cin, H, W = inputs_btchw.shape
    assert T == seq_len and Cin == input_channels and (H, W) == tuple(shape)
    F = num_features
    K = filter_size
    P = (K - 1) // 2
    Ct = Cin + F
    assert F % 16 == 0, "GroupNorm group count assumes num_features % 16 == 0"
    G1 = (2 * F) // 16
    G2 = F // 16

    # time-major NHWC for the kernel
    x_seq = jnp.transpose(inputs_btchw, (1, 0, 3, 4, 2)).astype(jnp.float32)

    # conv weights OIHW -> (K*K*Ct, Cout) in (ky, kx, cin) row order, bf16
    # (single-pass MXU operands; the kernel accumulates in f32).
    w1 = jnp.transpose(params["conv1_w"], (2, 3, 1, 0)).reshape(K * K * Ct, 2 * F)
    w2 = jnp.transpose(params["conv2_w"], (2, 3, 1, 0)).reshape(K * K * Ct, F)
    w1 = w1.astype(jnp.bfloat16)
    w2 = w2.astype(jnp.bfloat16)
    b1 = params["conv1_b"].reshape(1, 2 * F).astype(jnp.float32)
    b2 = params["conv2_b"].reshape(1, F).astype(jnp.float32)
    g1 = params["gn1_w"].reshape(1, 2 * F).astype(jnp.float32)
    bt1 = params["gn1_b"].reshape(1, 2 * F).astype(jnp.float32)
    g2 = params["gn2_w"].reshape(1, F).astype(jnp.float32)
    bt2 = params["gn2_b"].reshape(1, F).astype(jnp.float32)

    kernel = functools.partial(_cgru_kernel, B=B, H=H, W=W, Cin=Cin, F=F,
                               K=K, P=P, G1=G1, G2=G2, eps=1e-5)

    def const(*s):
        return pl.BlockSpec(s, lambda t, _n=len(s): (0,) * _n)

    grid_spec = pltpu.PrefetchScalarGridSpec(
        num_scalar_prefetch=0,
        grid=(T,),
        in_specs=[
            pl.BlockSpec((1, B, H, W, Cin), lambda t: (t, 0, 0, 0, 0)),
            const(K * K * Ct, 2 * F),
            const(1, 2 * F),
            const(1, 2 * F),
            const(1, 2 * F),
            const(K * K * Ct, F),
            const(1, F),
            const(1, F),
            const(1, F),
        ],
        out_specs=pl.BlockSpec((1, B, H, W, F), lambda t: (t, 0, 0, 0, 0)),
        scratch_shapes=[
            pltpu.VMEM((B, H, W, F), jnp.float32),                   # carried h
            pltpu.VMEM((B, H + 2 * P, W + 2 * P, Ct), jnp.float32),  # padded cat(x, h)
        ],
    )

    # TODO(synk): on v7x a leading "parallel" grid axis over B (with per-block
    # scratch) could use both TensorCores; kept single-core here for safety.
    y_seq = pl.pallas_call(
        kernel,
        out_shape=jax.ShapeDtypeStruct((T, B, H, W, F), jnp.float32),
        grid_spec=grid_spec,
        compiler_params=pltpu.CompilerParams(
            dimension_semantics=("arbitrary",)),   # h carried across steps
    )(x_seq, w1, b1, g1, bt1, w2, b2, g2, bt2)

    outputs = jnp.transpose(y_seq, (1, 0, 4, 2, 3))   # (B, T, F, H, W)
    h_last = outputs[:, -1]                           # final hidden state
    return outputs, h_last


def cgru_cell_reference(inputs_btchw, params, *, shape, input_channels,
                        filter_size, num_features, seq_len,
                        conv_dtype=jnp.bfloat16):
    """Pure-JAX reference mirroring the PyTorch forward (NCHW).

    conv_dtype=jnp.bfloat16 matches the kernel's MXU operand precision (bf16
    inputs, f32 accumulation).  Pass jnp.float32 for a full-precision check.
    """
    B, T, Cin, H, W = inputs_btchw.shape
    F = num_features
    P = (filter_size - 1) // 2
    G1 = (2 * F) // 16
    G2 = F // 16

    def conv(x, w, b):
        y = jax.lax.conv_general_dilated(
            x.astype(conv_dtype), w.astype(conv_dtype), (1, 1), [(P, P), (P, P)],
            dimension_numbers=("NCHW", "OIHW", "NCHW"),
            preferred_element_type=jnp.float32)
        return y + b[None, :, None, None]

    def gn(x, gamma, beta, groups):
        Bx, C, Hx, Wx = x.shape
        xg = x.reshape(Bx, groups, C // groups, Hx, Wx)
        mean = xg.mean(axis=(2, 3, 4), keepdims=True)
        var = xg.var(axis=(2, 3, 4), keepdims=True)
        xn = ((xg - mean) * jax.lax.rsqrt(var + 1e-5)).reshape(Bx, C, Hx, Wx)
        return xn * gamma[None, :, None, None] + beta[None, :, None, None]

    h = jnp.zeros((B, F, H, W), jnp.float32)
    outs = []
    for t in range(T):
        x = inputs_btchw[:, t]
        gates = gn(conv(jnp.concatenate([x, h], axis=1),
                        params["conv1_w"], params["conv1_b"]),
                   params["gn1_w"], params["gn1_b"], G1)
        z = jax.nn.sigmoid(gates[:, :F])
        r = jax.nn.sigmoid(gates[:, F:])
        ht = jnp.tanh(gn(conv(jnp.concatenate([x, r * h], axis=1),
                              params["conv2_w"], params["conv2_b"]),
                         params["gn2_w"], params["gn2_b"], G2))
        h = (1.0 - z) * h + z * ht
        outs.append(h)
    return jnp.stack(outs, axis=1), h


if __name__ == "__main__":
    # Shapes consistent with CGRU_cell(shape=(16,16), input_channels=4,
    # filter_size=3, num_features=32), forward(inputs, seq_len=8).
    B, T = 2, 8
    Cin, F = 4, 32
    H = W = 16
    K = 3
    Ct = Cin + F

    keys = jax.random.split(jax.random.PRNGKey(0), 9)
    params = {
        "conv1_w": 0.1 * jax.random.normal(keys[0], (2 * F, Ct, K, K), jnp.float32),
        "conv1_b": 0.1 * jax.random.normal(keys[1], (2 * F,), jnp.float32),
        "gn1_w": 1.0 + 0.1 * jax.random.normal(keys[2], (2 * F,), jnp.float32),
        "gn1_b": 0.1 * jax.random.normal(keys[3], (2 * F,), jnp.float32),
        "conv2_w": 0.1 * jax.random.normal(keys[4], (F, Ct, K, K), jnp.float32),
        "conv2_b": 0.1 * jax.random.normal(keys[5], (F,), jnp.float32),
        "gn2_w": 1.0 + 0.1 * jax.random.normal(keys[6], (F,), jnp.float32),
        "gn2_b": 0.1 * jax.random.normal(keys[7], (F,), jnp.float32),
    }
    x = jax.random.normal(keys[8], (B, T, Cin, H, W), jnp.float32)

    outputs, h_last = cgru_cell_forward(
        x, params, shape=(H, W), input_channels=Cin,
        filter_size=K, num_features=F, seq_len=T)
    jax.block_until_ready((outputs, h_last))

    # Reference matched to the kernel's bf16-operand / f32-accumulation convs.
    ref_out, ref_h = cgru_cell_reference(
        x, params, shape=(H, W), input_channels=Cin,
        filter_size=K, num_features=F, seq_len=T)

    assert outputs.shape == (B, T, F, H, W), outputs.shape
    assert h_last.shape == (B, F, H, W), h_last.shape
    assert jnp.allclose(outputs, ref_out, atol=5e-3, rtol=5e-3), (
        float(jnp.max(jnp.abs(outputs - ref_out))))
    assert jnp.allclose(h_last, ref_h, atol=5e-3, rtol=5e-3), (
        float(jnp.max(jnp.abs(h_last - ref_h))))
    print("KERNEL_OK")
</pallas_src>

<mosaic_0001>
module attributes {stable_mosaic.version = 11 : i64} {
  func.func @_cgru_kernel(%arg0: i32, %arg1: memref<1x2x16x16x4xf32, #tpu.memory_space<vmem>>, %arg2: memref<324x64xbf16, #tpu.memory_space<vmem>>, %arg3: memref<1x64xf32, #tpu.memory_space<vmem>>, %arg4: memref<1x64xf32, #tpu.memory_space<vmem>>, %arg5: memref<1x64xf32, #tpu.memory_space<vmem>>, %arg6: memref<324x32xbf16, #tpu.memory_space<vmem>>, %arg7: memref<1x32xf32, #tpu.memory_space<vmem>>, %arg8: memref<1x32xf32, #tpu.memory_space<vmem>>, %arg9: memref<1x32xf32, #tpu.memory_space<vmem>>, %arg10: memref<1x2x16x16x32xf32, #tpu.memory_space<vmem>>, %arg11: memref<2x16x16x32xf32, #tpu.memory_space<vmem>>, %arg12: memref<2x18x18x36xf32, #tpu.memory_space<vmem>>) attributes {dimension_semantics = [#tpu.dimension_semantics<arbitrary>], iteration_bounds = array<i64: 8>, scalar_prefetch = 0 : i64, scratch_operands = 2 : i64, tpu.core_type = #tpu.core_type<tc>, window_params = [{transform_indices = @transform_0, window_bounds = array<i64: 1, 2, 16, 16, 4>}, {pipeline_mode = #tpu.pipeline_mode<synchronous>, transform_indices = @transform_1, window_bounds = array<i64: 324, 64>}, {pipeline_mode = #tpu.pipeline_mode<synchronous>, transform_indices = @transform_2, window_bounds = array<i64: 1, 64>}, {pipeline_mode = #tpu.pipeline_mode<synchronous>, transform_indices = @transform_3, window_bounds = array<i64: 1, 64>}, {pipeline_mode = #tpu.pipeline_mode<synchronous>, transform_indices = @transform_4, window_bounds = array<i64: 1, 64>}, {pipeline_mode = #tpu.pipeline_mode<synchronous>, transform_indices = @transform_5, window_bounds = array<i64: 324, 32>}, {pipeline_mode = #tpu.pipeline_mode<synchronous>, transform_indices = @transform_6, window_bounds = array<i64: 1, 32>}, {pipeline_mode = #tpu.pipeline_mode<synchronous>, transform_indices = @transform_7, window_bounds = array<i64: 1, 32>}, {pipeline_mode = #tpu.pipeline_mode<synchronous>, transform_indices = @transform_8, window_bounds = array<i64: 1, 32>}, {transform_indices = @transform_9, window_bounds = array<i64: 1, 2, 16, 16, 32>}]} {
    %c0_i32 = arith.constant 0 : i32
    %0 = arith.cmpi eq, %arg0, %c0_i32 : i32
    %1 = arith.extui %0 : i1 to i32
    %c0_i32_0 = arith.constant 0 : i32
    %2 = arith.cmpi ne, %1, %c0_i32_0 : i32
    scf.if %2 {
      %cst_159 = arith.constant 0.000000e+00 : f32
      %294 = vector.broadcast %cst_159 : f32 to vector<2x16x16x32xf32>
      %c0_160 = arith.constant 0 : index
      %c0_161 = arith.constant 0 : index
      %c0_162 = arith.constant 0 : index
      %c0_163 = arith.constant 0 : index
      %295 = vector.load %arg11[%c0_160, %c0_161, %c0_162, %c0_163] : memref<2x16x16x32xf32, #tpu.memory_space<vmem>>, vector<2x16x16x32xf32>
      tpu.vector_store %arg11[%c0_160, %c0_161, %c0_162, %c0_163], %294 {strides = array<i32>} : memref<2x16x16x32xf32, #tpu.memory_space<vmem>>, vector<2x16x16x32xf32>,
      %cst_164 = arith.constant 0.000000e+00 : f32
      %296 = vector.broadcast %cst_164 : f32 to vector<2x18x18x36xf32>
      %c0_165 = arith.constant 0 : index
      %c0_166 = arith.constant 0 : index
      %c0_167 = arith.constant 0 : index
      %c0_168 = arith.constant 0 : index
      %297 = vector.load %arg12[%c0_165, %c0_166, %c0_167, %c0_168] : memref<2x18x18x36xf32, #tpu.memory_space<vmem>>, vector<2x18x18x36xf32>
      tpu.vector_store %arg12[%c0_165, %c0_166, %c0_167, %c0_168], %296 {strides = array<i32>} : memref<2x18x18x36xf32, #tpu.memory_space<vmem>>, vector<2x18x18x36xf32>,
    } else {
    }
    %c0 = arith.constant 0 : index
    %c0_1 = arith.constant 0 : index
    %c0_2 = arith.constant 0 : index
    %c0_3 = arith.constant 0 : index
    %c0_4 = arith.constant 0 : index
    %3 = vector.load %arg1[%c0, %c0_1, %c0_2, %c0_3, %c0_4] : memref<1x2x16x16x4xf32, #tpu.memory_space<vmem>>, vector<1x2x16x16x4xf32>
    %4 = vector.shape_cast %3 : vector<1x2x16x16x4xf32> to vector<2x16x16x4xf32>
    %c0_5 = arith.constant 0 : index
    %c1 = arith.constant 1 : index
    %c1_6 = arith.constant 1 : index
    %c0_7 = arith.constant 0 : index
    %5 = vector.load %arg12[%c0_5, %c1, %c1_6, %c0_7] : memref<2x18x18x36xf32, #tpu.memory_space<vmem>>, vector<2x16x16x4xf32>
    tpu.vector_store %arg12[%c0_5, %c1, %c1_6, %c0_7], %4 {strides = array<i32>} : memref<2x18x18x36xf32, #tpu.memory_space<vmem>>, vector<2x16x16x4xf32>,
    %c0_8 = arith.constant 0 : index
    %c0_9 = arith.constant 0 : index
    %c0_10 = arith.constant 0 : index
    %c0_11 = arith.constant 0 : index
    %6 = vector.load %arg11[%c0_8, %c0_9, %c0_10, %c0_11] : memref<2x16x16x32xf32, #tpu.memory_space<vmem>>, vector<2x16x16x32xf32>
    %7 = vector.shape_cast %6 : vector<2x16x16x32xf32> to vector<2x256x32xf32>
    %c0_12 = arith.constant 0 : index
    %c1_13 = arith.constant 1 : index
    %c1_14 = arith.constant 1 : index
    %c4 = arith.constant 4 : index
    %8 = vector.load %arg12[%c0_12, %c1_13, %c1_14, %c4] : memref<2x18x18x36xf32, #tpu.memory_space<vmem>>, vector<2x16x16x32xf32>
    tpu.vector_store %arg12[%c0_12, %c1_13, %c1_14, %c4], %6 {strides = array<i32>} : memref<2x18x18x36xf32, #tpu.memory_space<vmem>>, vector<2x16x16x32xf32>,
    %c0_15 = arith.constant 0 : index
    %c0_16 = arith.constant 0 : index
    %c0_17 = arith.constant 0 : index
    %c0_18 = arith.constant 0 : index
    %9 = vector.load %arg12[%c0_15, %c0_16, %c0_17, %c0_18] : memref<2x18x18x36xf32, #tpu.memory_space<vmem>>, vector<2x16x16x36xf32>
    %10 = arith.truncf %9 : vector<2x16x16x36xf32> to vector<2x16x16x36xbf16>
    %c0_19 = arith.constant 0 : index
    %c0_20 = arith.constant 0 : index
    %c1_21 = arith.constant 1 : index
    %c0_22 = arith.constant 0 : index
    %11 = vector.load %arg12[%c0_19, %c0_20, %c1_21, %c0_22] : memref<2x18x18x36xf32, #tpu.memory_space<vmem>>, vector<2x16x16x36xf32>
    %12 = arith.truncf %11 : vector<2x16x16x36xf32> to vector<2x16x16x36xbf16>
    %c0_23 = arith.constant 0 : index
    %c0_24 = arith.constant 0 : index
    %c2 = arith.constant 2 : index
    %c0_25 = arith.constant 0 : index
    %13 = vector.load %arg12[%c0_23, %c0_24, %c2, %c0_25] : memref<2x18x18x36xf32, #tpu.memory_space<vmem>>, vector<2x16x16x36xf32>
    %14 = arith.truncf %13 : vector<2x16x16x36xf32> to vector<2x16x16x36xbf16>
    %c0_26 = arith.constant 0 : index
    %c1_27 = arith.constant 1 : index
    %c0_28 = arith.constant 0 : index
    %c0_29 = arith.constant 0 : index
    %15 = vector.load %arg12[%c0_26, %c1_27, %c0_28, %c0_29] : memref<2x18x18x36xf32, #tpu.memory_space<vmem>>, vector<2x16x16x36xf32>
    %16 = arith.truncf %15 : vector<2x16x16x36xf32> to vector<2x16x16x36xbf16>
    %c0_30 = arith.constant 0 : index
    %c1_31 = arith.constant 1 : index
    %c1_32 = arith.constant 1 : index
    %c0_33 = arith.constant 0 : index
    %17 = vector.load %arg12[%c0_30, %c1_31, %c1_32, %c0_33] : memref<2x18x18x36xf32, #tpu.memory_space<vmem>>, vector<2x16x16x36xf32>
    %18 = arith.truncf %17 : vector<2x16x16x36xf32> to vector<2x16x16x36xbf16>
    %c0_34 = arith.constant 0 : index
    %c1_35 = arith.constant 1 : index
    %c2_36 = arith.constant 2 : index
    %c0_37 = arith.constant 0 : index
    %19 = vector.load %arg12[%c0_34, %c1_35, %c2_36, %c0_37] : memref<2x18x18x36xf32, #tpu.memory_space<vmem>>, vector<2x16x16x36xf32>
    %20 = arith.truncf %19 : vector<2x16x16x36xf32> to vector<2x16x16x36xbf16>
    %c0_38 = arith.constant 0 : index
    %c2_39 = arith.constant 2 : index
    %c0_40 = arith.constant 0 : index
    %c0_41 = arith.constant 0 : index
    %21 = vector.load %arg12[%c0_38, %c2_39, %c0_40, %c0_41] : memref<2x18x18x36xf32, #tpu.memory_space<vmem>>, vector<2x16x16x36xf32>
    %22 = arith.truncf %21 : vector<2x16x16x36xf32> to vector<2x16x16x36xbf16>
    %c0_42 = arith.constant 0 : index
    %c2_43 = arith.constant 2 : index
    %c1_44 = arith.constant 1 : index
    %c0_45 = arith.constant 0 : index
    %23 = vector.load %arg12[%c0_42, %c2_43, %c1_44, %c0_45] : memref<2x18x18x36xf32, #tpu.memory_space<vmem>>, vector<2x16x16x36xf32>
    %24 = arith.truncf %23 : vector<2x16x16x36xf32> to vector<2x16x16x36xbf16>
    %c0_46 = arith.constant 0 : index
    %c2_47 = arith.constant 2 : index
    %c2_48 = arith.constant 2 : index
    %c0_49 = arith.constant 0 : index
    %25 = vector.load %arg12[%c0_46, %c2_47, %c2_48, %c0_49] : memref<2x18x18x36xf32, #tpu.memory_space<vmem>>, vector<2x16x16x36xf32>
    %26 = arith.truncf %25 : vector<2x16x16x36xf32> to vector<2x16x16x36xbf16>
    %27 = tpu.concatenate %10, %12, %14, %16, %18, %20, %22, %24, %26 in 3 : vector<2x16x16x36xbf16>, vector<2x16x16x36xbf16>, vector<2x16x16x36xbf16>, vector<2x16x16x36xbf16>, vector<2x16x16x36xbf16>, vector<2x16x16x36xbf16>, vector<2x16x16x36xbf16>, vector<2x16x16x36xbf16>, vector<2x16x16x36xbf16> -> vector<2x16x16x324xbf16>
    %28 = vector.shape_cast %27 : vector<2x16x16x324xbf16> to vector<512x324xbf16>
    %c0_50 = arith.constant 0 : index
    %c0_51 = arith.constant 0 : index
    %29 = vector.load %arg2[%c0_50, %c0_51] : memref<324x64xbf16, #tpu.memory_space<vmem>>, vector<324x64xbf16>
    %cst = arith.constant dense<0.000000e+00> : vector<512x64xf32>
    %30 = tpu.matmul %28, %29, %cst {dimension_numbers = #tpu.dot_dimension_numbers<[1], [0], [0], [1], [0, 0, 1, 1], [], []>} : vector<512x324xbf16>, vector<324x64xbf16>, vector<512x64xf32> -> vector<512x64xf32>
    %31 = vector.shape_cast %30 : vector<512x64xf32> to vector<2x256x64xf32>
    %c0_52 = arith.constant 0 : index
    %c0_53 = arith.constant 0 : index
    %32 = vector.load %arg3[%c0_52, %c0_53] : memref<1x64xf32, #tpu.memory_space<vmem>>, vector<1x64xf32>
    %c0_54 = arith.constant 0 : index
    %c0_55 = arith.constant 0 : index
    %33 = vector.load %arg4[%c0_54, %c0_55] : memref<1x64xf32, #tpu.memory_space<vmem>>, vector<1x64xf32>
    %c0_56 = arith.constant 0 : index
    %c0_57 = arith.constant 0 : index
    %34 = vector.load %arg5[%c0_56, %c0_57] : memref<1x64xf32, #tpu.memory_space<vmem>>, vector<1x64xf32>
    %cst_58 = arith.constant dense<0.000000e+00> : vector<2x64xf32>
    %35 = vector.multi_reduction <add>, %31, %cst_58 [1] : vector<2x256x64xf32> to vector<2x64xf32>
    %36 = arith.mulf %31, %31 : vector<2x256x64xf32>
    %cst_59 = arith.constant dense<0.000000e+00> : vector<2x64xf32>
    %37 = vector.multi_reduction <add>, %36, %cst_59 [1] : vector<2x256x64xf32> to vector<2x64xf32>
    %cst_60 = arith.constant 2.560000e+02 : f32
    %38 = vector.broadcast %cst_60 : f32 to vector<1x64xf32>
    %39 = arith.mulf %38, %32 : vector<1x64xf32>
    %40 = vector.broadcast %39 : vector<1x64xf32> to vector<2x64xf32>
    %41 = arith.addf %35, %40 : vector<2x64xf32>
    %cst_61 = arith.constant 2.000000e+00 : f32
    %42 = vector.broadcast %cst_61 : f32 to vector<1x64xf32>
    %43 = arith.mulf %42, %32 : vector<1x64xf32>
    %44 = vector.broadcast %43 : vector<1x64xf32> to vector<2x64xf32>
    %45 = arith.mulf %44, %35 : vector<2x64xf32>
    %46 = arith.addf %37, %45 : vector<2x64xf32>
    %47 = arith.mulf %32, %32 : vector<1x64xf32>
    %cst_62 = arith.constant 2.560000e+02 : f32
    %48 = vector.broadcast %cst_62 : f32 to vector<1x64xf32>
    %49 = arith.mulf %48, %47 : vector<1x64xf32>
    %50 = vector.broadcast %49 : vector<1x64xf32> to vector<2x64xf32>
    %51 = arith.addf %46, %50 : vector<2x64xf32>
    %52 = vector.extract_strided_slice %41 {offsets = [0, 0], sizes = [2, 16], strides = [1, 1]} : vector<2x64xf32> to vector<2x16xf32>
    %cst_63 = arith.constant dense<0.000000e+00> : vector<2xf32>
    %53 = vector.multi_reduction <add>, %52, %cst_63 [1] : vector<2x16xf32> to vector<2xf32>
    %54 = vector.shape_cast %53 : vector<2xf32> to vector<2x1xf32>
    %55 = vector.extract_strided_slice %51 {offsets = [0, 0], sizes = [2, 16], strides = [1, 1]} : vector<2x64xf32> to vector<2x16xf32>
    %cst_64 = arith.constant dense<0.000000e+00> : vector<2xf32>
    %56 = vector.multi_reduction <add>, %55, %cst_64 [1] : vector<2x16xf32> to vector<2xf32>
    %57 = vector.shape_cast %56 : vector<2xf32> to vector<2x1xf32>
    %cst_65 = arith.constant 4.096000e+03 : f32
    %58 = vector.broadcast %cst_65 : f32 to vector<2x1xf32>
    %59 = arith.divf %54, %58 : vector<2x1xf32>
    %cst_66 = arith.constant 4.096000e+03 : f32
    %60 = vector.broadcast %cst_66 : f32 to vector<2x1xf32>
    %61 = arith.divf %57, %60 : vector<2x1xf32>
    %62 = arith.mulf %59, %59 : vector<2x1xf32>
    %63 = arith.subf %61, %62 : vector<2x1xf32>
    %cst_67 = arith.constant 9.99999974E-6 : f32
    %64 = vector.broadcast %cst_67 : f32 to vector<2x1xf32>
    %65 = arith.addf %63, %64 : vector<2x1xf32>
    %66 = math.rsqrt %65 : vector<2x1xf32>
    %67 = vector.extract_strided_slice %33 {offsets = [0, 0], sizes = [1, 16], strides = [1, 1]} : vector<1x64xf32> to vector<1x16xf32>
    %68 = vector.broadcast %66 : vector<2x1xf32> to vector<2x16xf32>
    %69 = vector.broadcast %67 : vector<1x16xf32> to vector<2x16xf32>
    %70 = arith.mulf %68, %69 : vector<2x16xf32>
    %71 = vector.extract_strided_slice %32 {offsets = [0, 0], sizes = [1, 16], strides = [1, 1]} : vector<1x64xf32> to vector<1x16xf32>
    %72 = vector.broadcast %71 : vector<1x16xf32> to vector<2x16xf32>
    %73 = vector.broadcast %59 : vector<2x1xf32> to vector<2x16xf32>
    %74 = arith.subf %72, %73 : vector<2x16xf32>
    %75 = arith.mulf %74, %70 : vector<2x16xf32>
    %76 = vector.extract_strided_slice %34 {offsets = [0, 0], sizes = [1, 16], strides = [1, 1]} : vector<1x64xf32> to vector<1x16xf32>
    %77 = vector.broadcast %76 : vector<1x16xf32> to vector<2x16xf32>
    %78 = arith.addf %75, %77 : vector<2x16xf32>
    %79 = vector.extract_strided_slice %41 {offsets = [0, 16], sizes = [2, 16], strides = [1, 1]} : vector<2x64xf32> to vector<2x16xf32>
    %cst_68 = arith.constant dense<0.000000e+00> : vector<2xf32>
    %80 = vector.multi_reduction <add>, %79, %cst_68 [1] : vector<2x16xf32> to vector<2xf32>
    %81 = vector.shape_cast %80 : vector<2xf32> to vector<2x1xf32>
    %82 = vector.extract_strided_slice %51 {offsets = [0, 16], sizes = [2, 16], strides = [1, 1]} : vector<2x64xf32> to vector<2x16xf32>
    %cst_69 = arith.constant dense<0.000000e+00> : vector<2xf32>
    %83 = vector.multi_reduction <add>, %82, %cst_69 [1] : vector<2x16xf32> to vector<2xf32>
    %84 = vector.shape_cast %83 : vector<2xf32> to vector<2x1xf32>
    %cst_70 = arith.constant 4.096000e+03 : f32
    %85 = vector.broadcast %cst_70 : f32 to vector<2x1xf32>
    %86 = arith.divf %81, %85 : vector<2x1xf32>
    %cst_71 = arith.constant 4.096000e+03 : f32
    %87 = vector.broadcast %cst_71 : f32 to vector<2x1xf32>
    %88 = arith.divf %84, %87 : vector<2x1xf32>
    %89 = arith.mulf %86, %86 : vector<2x1xf32>
    %90 = arith.subf %88, %89 : vector<2x1xf32>
    %cst_72 = arith.constant 9.99999974E-6 : f32
    %91 = vector.broadcast %cst_72 : f32 to vector<2x1xf32>
    %92 = arith.addf %90, %91 : vector<2x1xf32>
    %93 = math.rsqrt %92 : vector<2x1xf32>
    %94 = vector.extract_strided_slice %33 {offsets = [0, 16], sizes = [1, 16], strides = [1, 1]} : vector<1x64xf32> to vector<1x16xf32>
    %95 = vector.broadcast %93 : vector<2x1xf32> to vector<2x16xf32>
    %96 = vector.broadcast %94 : vector<1x16xf32> to vector<2x16xf32>
    %97 = arith.mulf %95, %96 : vector<2x16xf32>
    %98 = vector.extract_strided_slice %32 {offsets = [0, 16], sizes = [1, 16], strides = [1, 1]} : vector<1x64xf32> to vector<1x16xf32>
    %99 = vector.broadcast %98 : vector<1x16xf32> to vector<2x16xf32>
    %100 = vector.broadcast %86 : vector<2x1xf32> to vector<2x16xf32>
    %101 = arith.subf %99, %100 : vector<2x16xf32>
    %102 = arith.mulf %101, %97 : vector<2x16xf32>
    %103 = vector.extract_strided_slice %34 {offsets = [0, 16], sizes = [1, 16], strides = [1, 1]} : vector<1x64xf32> to vector<1x16xf32>
    %104 = vector.broadcast %103 : vector<1x16xf32> to vector<2x16xf32>
    %105 = arith.addf %102, %104 : vector<2x16xf32>
    %106 = vector.extract_strided_slice %41 {offsets = [0, 32], sizes = [2, 16], strides = [1, 1]} : vector<2x64xf32> to vector<2x16xf32>
    %cst_73 = arith.constant dense<0.000000e+00> : vector<2xf32>
    %107 = vector.multi_reduction <add>, %106, %cst_73 [1] : vector<2x16xf32> to vector<2xf32>
    %108 = vector.shape_cast %107 : vector<2xf32> to vector<2x1xf32>
    %109 = vector.extract_strided_slice %51 {offsets = [0, 32], sizes = [2, 16], strides = [1, 1]} : vector<2x64xf32> to vector<2x16xf32>
    %cst_74 = arith.constant dense<0.000000e+00> : vector<2xf32>
    %110 = vector.multi_reduction <add>, %109, %cst_74 [1] : vector<2x16xf32> to vector<2xf32>
    %111 = vector.shape_cast %110 : vector<2xf32> to vector<2x1xf32>
    %cst_75 = arith.constant 4.096000e+03 : f32
    %112 = vector.broadcast %cst_75 : f32 to vector<2x1xf32>
    %113 = arith.divf %108, %112 : vector<2x1xf32>
    %cst_76 = arith.constant 4.096000e+03 : f32
    %114 = vector.broadcast %cst_76 : f32 to vector<2x1xf32>
    %115 = arith.divf %111, %114 : vector<2x1xf32>
    %116 = arith.mulf %113, %113 : vector<2x1xf32>
    %117 = arith.subf %115, %116 : vector<2x1xf32>
    %cst_77 = arith.constant 9.99999974E-6 : f32
    %118 = vector.broadcast %cst_77 : f32 to vector<2x1xf32>
    %119 = arith.addf %117, %118 : vector<2x1xf32>
    %120 = math.rsqrt %119 : vector<2x1xf32>
    %121 = vector.extract_strided_slice %33 {offsets = [0, 32], sizes = [1, 16], strides = [1, 1]} : vector<1x64xf32> to vector<1x16xf32>
    %122 = vector.broadcast %120 : vector<2x1xf32> to vector<2x16xf32>
    %123 = vector.broadcast %121 : vector<1x16xf32> to vector<2x16xf32>
    %124 = arith.mulf %122, %123 : vector<2x16xf32>
    %125 = vector.extract_strided_slice %32 {offsets = [0, 32], sizes = [1, 16], strides = [1, 1]} : vector<1x64xf32> to vector<1x16xf32>
    %126 = vector.broadcast %125 : vector<1x16xf32> to vector<2x16xf32>
    %127 = vector.broadcast %113 : vector<2x1xf32> to vector<2x16xf32>
    %128 = arith.subf %126, %127 : vector<2x16xf32>
    %129 = arith.mulf %128, %124 : vector<2x16xf32>
    %130 = vector.extract_strided_slice %34 {offsets = [0, 32], sizes = [1, 16], strides = [1, 1]} : vector<1x64xf32> to vector<1x16xf32>
    %131 = vector.broadcast %130 : vector<1x16xf32> to vector<2x16xf32>
    %132 = arith.addf %129, %131 : vector<2x16xf32>
    %133 = vector.extract_strided_slice %41 {offsets = [0, 48], sizes = [2, 16], strides = [1, 1]} : vector<2x64xf32> to vector<2x16xf32>
    %cst_78 = arith.constant dense<0.000000e+00> : vector<2xf32>
    %134 = vector.multi_reduction <add>, %133, %cst_78 [1] : vector<2x16xf32> to vector<2xf32>
    %135 = vector.shape_cast %134 : vector<2xf32> to vector<2x1xf32>
    %136 = vector.extract_strided_slice %51 {offsets = [0, 48], sizes = [2, 16], strides = [1, 1]} : vector<2x64xf32> to vector<2x16xf32>
    %cst_79 = arith.constant dense<0.000000e+00> : vector<2xf32>
    %137 = vector.multi_reduction <add>, %136, %cst_79 [1] : vector<2x16xf32> to vector<2xf32>
    %138 = vector.shape_cast %137 : vector<2xf32> to vector<2x1xf32>
    %cst_80 = arith.constant 4.096000e+03 : f32
    %139 = vector.broadcast %cst_80 : f32 to vector<2x1xf32>
    %140 = arith.divf %135, %139 : vector<2x1xf32>
    %cst_81 = arith.constant 4.096000e+03 : f32
    %141 = vector.broadcast %cst_81 : f32 to vector<2x1xf32>
    %142 = arith.divf %138, %141 : vector<2x1xf32>
    %143 = arith.mulf %140, %140 : vector<2x1xf32>
    %144 = arith.subf %142, %143 : vector<2x1xf32>
    %cst_82 = arith.constant 9.99999974E-6 : f32
    %145 = vector.broadcast %cst_82 : f32 to vector<2x1xf32>
    %146 = arith.addf %144, %145 : vector<2x1xf32>
    %147 = math.rsqrt %146 : vector<2x1xf32>
    %148 = vector.extract_strided_slice %33 {offsets = [0, 48], sizes = [1, 16], strides = [1, 1]} : vector<1x64xf32> to vector<1x16xf32>
    %149 = vector.broadcast %147 : vector<2x1xf32> to vector<2x16xf32>
    %150 = vector.broadcast %148 : vector<1x16xf32> to vector<2x16xf32>
    %151 = arith.mulf %149, %150 : vector<2x16xf32>
    %152 = vector.extract_strided_slice %32 {offsets = [0, 48], sizes = [1, 16], strides = [1, 1]} : vector<1x64xf32> to vector<1x16xf32>
    %153 = vector.broadcast %152 : vector<1x16xf32> to vector<2x16xf32>
    %154 = vector.broadcast %140 : vector<2x1xf32> to vector<2x16xf32>
    %155 = arith.subf %153, %154 : vector<2x16xf32>
    %156 = arith.mulf %155, %151 : vector<2x16xf32>
    %157 = vector.extract_strided_slice %34 {offsets = [0, 48], sizes = [1, 16], strides = [1, 1]} : vector<1x64xf32> to vector<1x16xf32>
    %158 = vector.broadcast %157 : vector<1x16xf32> to vector<2x16xf32>
    %159 = arith.addf %156, %158 : vector<2x16xf32>
    %160 = tpu.concatenate %70, %97, %124, %151 in 1 : vector<2x16xf32>, vector<2x16xf32>, vector<2x16xf32>, vector<2x16xf32> -> vector<2x64xf32>
    %161 = tpu.concatenate %78, %105, %132, %159 in 1 : vector<2x16xf32>, vector<2x16xf32>, vector<2x16xf32>, vector<2x16xf32> -> vector<2x64xf32>
    %162 = vector.shape_cast %160 : vector<2x64xf32> to vector<2x1x64xf32>
    %163 = vector.broadcast %162 : vector<2x1x64xf32> to vector<2x256x64xf32>
    %164 = arith.mulf %31, %163 : vector<2x256x64xf32>
    %165 = vector.shape_cast %161 : vector<2x64xf32> to vector<2x1x64xf32>
    %166 = vector.broadcast %165 : vector<2x1x64xf32> to vector<2x256x64xf32>
    %167 = arith.addf %164, %166 : vector<2x256x64xf32>
    %cst_83 = arith.constant 5.000000e-01 : f32
    %168 = vector.broadcast %cst_83 : f32 to vector<2x256x64xf32>
    %169 = arith.mulf %168, %167 : vector<2x256x64xf32>
    %170 = math.tanh %169 : vector<2x256x64xf32>
    %cst_84 = arith.constant 5.000000e-01 : f32
    %171 = vector.broadcast %cst_84 : f32 to vector<2x256x64xf32>
    %172 = arith.mulf %171, %170 : vector<2x256x64xf32>
    %cst_85 = arith.constant 5.000000e-01 : f32
    %173 = vector.broadcast %cst_85 : f32 to vector<2x256x64xf32>
    %174 = arith.addf %172, %173 : vector<2x256x64xf32>
    %175 = vector.extract_strided_slice %174 {offsets = [0, 0, 0], sizes = [2, 256, 32], strides = [1, 1, 1]} : vector<2x256x64xf32> to vector<2x256x32xf32>
    %176 = vector.extract_strided_slice %174 {offsets = [0, 0, 32], sizes = [2, 256, 32], strides = [1, 1, 1]} : vector<2x256x64xf32> to vector<2x256x32xf32>
    %177 = arith.mulf %176, %7 : vector<2x256x32xf32>
    %178 = vector.shape_cast %177 : vector<2x256x32xf32> to vector<2x16x16x32xf32>
    %c0_86 = arith.constant 0 : index
    %c1_87 = arith.constant 1 : index
    %c1_88 = arith.constant 1 : index
    %c4_89 = arith.constant 4 : index
    %179 = vector.load %arg12[%c0_86, %c1_87, %c1_88, %c4_89] : memref<2x18x18x36xf32, #tpu.memory_space<vmem>>, vector<2x16x16x32xf32>
    tpu.vector_store %arg12[%c0_86, %c1_87, %c1_88, %c4_89], %178 {strides = array<i32>} : memref<2x18x18x36xf32, #tpu.memory_space<vmem>>, vector<2x16x16x32xf32>,
    %c0_90 = arith.constant 0 : index
    %c0_91 = arith.constant 0 : index
    %c0_92 = arith.constant 0 : index
    %c0_93 = arith.constant 0 : index
    %180 = vector.load %arg12[%c0_90, %c0_91, %c0_92, %c0_93] : memref<2x18x18x36xf32, #tpu.memory_space<vmem>>, vector<2x16x16x36xf32>
    %181 = arith.truncf %180 : vector<2x16x16x36xf32> to vector<2x16x16x36xbf16>
    %c0_94 = arith.constant 0 : index
    %c0_95 = arith.constant 0 : index
    %c1_96 = arith.constant 1 : index
    %c0_97 = arith.constant 0 : index
    %182 = vector.load %arg12[%c0_94, %c0_95, %c1_96, %c0_97] : memref<2x18x18x36xf32, #tpu.memory_space<vmem>>, vector<2x16x16x36xf32>
    %183 = arith.truncf %182 : vector<2x16x16x36xf32> to vector<2x16x16x36xbf16>
    %c0_98 = arith.constant 0 : index
    %c0_99 = arith.constant 0 : index
    %c2_100 = arith.constant 2 : index
    %c0_101 = arith.constant 0 : index
    %184 = vector.load %arg12[%c0_98, %c0_99, %c2_100, %c0_101] : memref<2x18x18x36xf32, #tpu.memory_space<vmem>>, vector<2x16x16x36xf32>
    %185 = arith.truncf %184 : vector<2x16x16x36xf32> to vector<2x16x16x36xbf16>
    %c0_102 = arith.constant 0 : index
    %c1_103 = arith.constant 1 : index
    %c0_104 = arith.constant 0 : index
    %c0_105 = arith.constant 0 : index
    %186 = vector.load %arg12[%c0_102, %c1_103, %c0_104, %c0_105] : memref<2x18x18x36xf32, #tpu.memory_space<vmem>>, vector<2x16x16x36xf32>
    %187 = arith.truncf %186 : vector<2x16x16x36xf32> to vector<2x16x16x36xbf16>
    %c0_106 = arith.constant 0 : index
    %c1_107 = arith.constant 1 : index
    %c1_108 = arith.constant 1 : index
    %c0_109 = arith.constant 0 : index
    %188 = vector.load %arg12[%c0_106, %c1_107, %c1_108, %c0_109] : memref<2x18x18x36xf32, #tpu.memory_space<vmem>>, vector<2x16x16x36xf32>
    %189 = arith.truncf %188 : vector<2x16x16x36xf32> to vector<2x16x16x36xbf16>
    %c0_110 = arith.constant 0 : index
    %c1_111 = arith.constant 1 : index
    %c2_112 = arith.constant 2 : index
    %c0_113 = arith.constant 0 : index
    %190 = vector.load %arg12[%c0_110, %c1_111, %c2_112, %c0_113] : memref<2x18x18x36xf32, #tpu.memory_space<vmem>>, vector<2x16x16x36xf32>
    %191 = arith.truncf %190 : vector<2x16x16x36xf32> to vector<2x16x16x36xbf16>
    %c0_114 = arith.constant 0 : index
    %c2_115 = arith.constant 2 : index
    %c0_116 = arith.constant 0 : index
    %c0_117 = arith.constant 0 : index
    %192 = vector.load %arg12[%c0_114, %c2_115, %c0_116, %c0_117] : memref<2x18x18x36xf32, #tpu.memory_space<vmem>>, vector<2x16x16x36xf32>
    %193 = arith.truncf %192 : vector<2x16x16x36xf32> to vector<2x16x16x36xbf16>
    %c0_118 = arith.constant 0 : index
    %c2_119 = arith.constant 2 : index
    %c1_120 = arith.constant 1 : index
    %c0_121 = arith.constant 0 : index
    %194 = vector.load %arg12[%c0_118, %c2_119, %c1_120, %c0_121] : memref<2x18x18x36xf32, #tpu.memory_space<vmem>>, vector<2x16x16x36xf32>
    %195 = arith.truncf %194 : vector<2x16x16x36xf32> to vector<2x16x16x36xbf16>
    %c0_122 = arith.constant 0 : index
    %c2_123 = arith.constant 2 : index
    %c2_124 = arith.constant 2 : index
    %c0_125 = arith.constant 0 : index
    %196 = vector.load %arg12[%c0_122, %c2_123, %c2_124, %c0_125] : memref<2x18x18x36xf32, #tpu.memory_space<vmem>>, vector<2x16x16x36xf32>
    %197 = arith.truncf %196 : vector<2x16x16x36xf32> to vector<2x16x16x36xbf16>
    %198 = tpu.concatenate %181, %183, %185, %187, %189, %191, %193, %195, %197 in 3 : vector<2x16x16x36xbf16>, vector<2x16x16x36xbf16>, vector<2x16x16x36xbf16>, vector<2x16x16x36xbf16>, vector<2x16x16x36xbf16>, vector<2x16x16x36xbf16>, vector<2x16x16x36xbf16>, vector<2x16x16x36xbf16>, vector<2x16x16x36xbf16> -> vector<2x16x16x324xbf16>
    %199 = vector.shape_cast %198 : vector<2x16x16x324xbf16> to vector<512x324xbf16>
    %c0_126 = arith.constant 0 : index
    %c0_127 = arith.constant 0 : index
    %200 = vector.load %arg6[%c0_126, %c0_127] : memref<324x32xbf16, #tpu.memory_space<vmem>>, vector<324x32xbf16>
    %cst_128 = arith.constant dense<0.000000e+00> : vector<512x32xf32>
    %201 = tpu.matmul %199, %200, %cst_128 {dimension_numbers = #tpu.dot_dimension_numbers<[1], [0], [0], [1], [0, 0, 1, 1], [], []>} : vector<512x324xbf16>, vector<324x32xbf16>, vector<512x32xf32> -> vector<512x32xf32>
    %202 = vector.shape_cast %201 : vector<512x32xf32> to vector<2x256x32xf32>
    %c0_129 = arith.constant 0 : index
    %c0_130 = arith.constant 0 : index
    %203 = vector.load %arg7[%c0_129, %c0_130] : memref<1x32xf32, #tpu.memory_space<vmem>>, vector<1x32xf32>
    %c0_131 = arith.constant 0 : index
    %c0_132 = arith.constant 0 : index
    %204 = vector.load %arg8[%c0_131, %c0_132] : memref<1x32xf32, #tpu.memory_space<vmem>>, vector<1x32xf32>
    %c0_133 = arith.constant 0 : index
    %c0_134 = arith.constant 0 : index
    %205 = vector.load %arg9[%c0_133, %c0_134] : memref<1x32xf32, #tpu.memory_space<vmem>>, vector<1x32xf32>
    %cst_135 = arith.constant dense<0.000000e+00> : vector<2x32xf32>
    %206 = vector.multi_reduction <add>, %202, %cst_135 [1] : vector<2x256x32xf32> to vector<2x32xf32>
    %207 = arith.mulf %202, %202 : vector<2x256x32xf32>
    %cst_136 = arith.constant dense<0.000000e+00> : vector<2x32xf32>
    %208 = vector.multi_reduction <add>, %207, %cst_136 [1] : vector<2x256x32xf32> to vector<2x32xf32>
    %cst_137 = arith.constant 2.560000e+02 : f32
    %209 = vector.broadcast %cst_137 : f32 to vector<1x32xf32>
    %210 = arith.mulf %209, %203 : vector<1x32xf32>
    %211 = vector.broadcast %210 : vector<1x32xf32> to vector<2x32xf32>
    %212 = arith.addf %206, %211 : vector<2x32xf32>
    %cst_138 = arith.constant 2.000000e+00 : f32
    %213 = vector.broadcast %cst_138 : f32 to vector<1x32xf32>
    %214 = arith.mulf %213, %203 : vector<1x32xf32>
    %215 = vector.broadcast %214 : vector<1x32xf32> to vector<2x32xf32>
    %216 = arith.mulf %215, %206 : vector<2x32xf32>
    %217 = arith.addf %208, %216 : vector<2x32xf32>
    %218 = arith.mulf %203, %203 : vector<1x32xf32>
    %cst_139 = arith.constant 2.560000e+02 : f32
    %219 = vector.broadcast %cst_139 : f32 to vector<1x32xf32>
    %220 = arith.mulf %219, %218 : vector<1x32xf32>
    %221 = vector.broadcast %220 : vector<1x32xf32> to vector<2x32xf32>
    %222 = arith.addf %217, %221 : vector<2x32xf32>
    %223 = vector.extract_strided_slice %212 {offsets = [0, 0], sizes = [2, 16], strides = [1, 1]} : vector<2x32xf32> to vector<2x16xf32>
    %cst_140 = arith.constant dense<0.000000e+00> : vector<2xf32>
    %224 = vector.multi_reduction <add>, %223, %cst_140 [1] : vector<2x16xf32> to vector<2xf32>
    %225 = vector.shape_cast %224 : vector<2xf32> to vector<2x1xf32>
    %226 = vector.extract_strided_slice %222 {offsets = [0, 0], sizes = [2, 16], strides = [1, 1]} : vector<2x32xf32> to vector<2x16xf32>
    %cst_141 = arith.constant dense<0.000000e+00> : vector<2xf32>
    %227 = vector.multi_reduction <add>, %226, %cst_141 [1] : vector<2x16xf32> to vector<2xf32>
    %228 = vector.shape_cast %227 : vector<2xf32> to vector<2x1xf32>
    %cst_142 = arith.constant 4.096000e+03 : f32
    %229 = vector.broadcast %cst_142 : f32 to vector<2x1xf32>
    %230 = arith.divf %225, %229 : vector<2x1xf32>
    %cst_143 = arith.constant 4.096000e+03 : f32
    %231 = vector.broadcast %cst_143 : f32 to vector<2x1xf32>
    %232 = arith.divf %228, %231 : vector<2x1xf32>
    %233 = arith.mulf %230, %230 : vector<2x1xf32>
    %234 = arith.subf %232, %233 : vector<2x1xf32>
    %cst_144 = arith.constant 9.99999974E-6 : f32
    %235 = vector.broadcast %cst_144 : f32 to vector<2x1xf32>
    %236 = arith.addf %234, %235 : vector<2x1xf32>
    %237 = math.rsqrt %236 : vector<2x1xf32>
    %238 = vector.extract_strided_slice %204 {offsets = [0, 0], sizes = [1, 16], strides = [1, 1]} : vector<1x32xf32> to vector<1x16xf32>
    %239 = vector.broadcast %237 : vector<2x1xf32> to vector<2x16xf32>
    %240 = vector.broadcast %238 : vector<1x16xf32> to vector<2x16xf32>
    %241 = arith.mulf %239, %240 : vector<2x16xf32>
    %242 = vector.extract_strided_slice %203 {offsets = [0, 0], sizes = [1, 16], strides = [1, 1]} : vector<1x32xf32> to vector<1x16xf32>
    %243 = vector.broadcast %242 : vector<1x16xf32> to vector<2x16xf32>
    %244 = vector.broadcast %230 : vector<2x1xf32> to vector<2x16xf32>
    %245 = arith.subf %243, %244 : vector<2x16xf32>
    %246 = arith.mulf %245, %241 : vector<2x16xf32>
    %247 = vector.extract_strided_slice %205 {offsets = [0, 0], sizes = [1, 16], strides = [1, 1]} : vector<1x32xf32> to vector<1x16xf32>
    %248 = vector.broadcast %247 : vector<1x16xf32> to vector<2x16xf32>
    %249 = arith.addf %246, %248 : vector<2x16xf32>
    %250 = vector.extract_strided_slice %212 {offsets = [0, 16], sizes = [2, 16], strides = [1, 1]} : vector<2x32xf32> to vector<2x16xf32>
    %cst_145 = arith.constant dense<0.000000e+00> : vector<2xf32>
    %251 = vector.multi_reduction <add>, %250, %cst_145 [1] : vector<2x16xf32> to vector<2xf32>
    %252 = vector.shape_cast %251 : vector<2xf32> to vector<2x1xf32>
    %253 = vector.extract_strided_slice %222 {offsets = [0, 16], sizes = [2, 16], strides = [1, 1]} : vector<2x32xf32> to vector<2x16xf32>
    %cst_146 = arith.constant dense<0.000000e+00> : vector<2xf32>
    %254 = vector.multi_reduction <add>, %253, %cst_146 [1] : vector<2x16xf32> to vector<2xf32>
    %255 = vector.shape_cast %254 : vector<2xf32> to vector<2x1xf32>
    %cst_147 = arith.constant 4.096000e+03 : f32
    %256 = vector.broadcast %cst_147 : f32 to vector<2x1xf32>
    %257 = arith.divf %252, %256 : vector<2x1xf32>
    %cst_148 = arith.constant 4.096000e+03 : f32
    %258 = vector.broadcast %cst_148 : f32 to vector<2x1xf32>
    %259 = arith.divf %255, %258 : vector<2x1xf32>
    %260 = arith.mulf %257, %257 : vector<2x1xf32>
    %261 = arith.subf %259, %260 : vector<2x1xf32>
    %cst_149 = arith.constant 9.99999974E-6 : f32
    %262 = vector.broadcast %cst_149 : f32 to vector<2x1xf32>
    %263 = arith.addf %261, %262 : vector<2x1xf32>
    %264 = math.rsqrt %263 : vector<2x1xf32>
    %265 = vector.extract_strided_slice %204 {offsets = [0, 16], sizes = [1, 16], strides = [1, 1]} : vector<1x32xf32> to vector<1x16xf32>
    %266 = vector.broadcast %264 : vector<2x1xf32> to vector<2x16xf32>
    %267 = vector.broadcast %265 : vector<1x16xf32> to vector<2x16xf32>
    %268 = arith.mulf %266, %267 : vector<2x16xf32>
    %269 = vector.extract_strided_slice %203 {offsets = [0, 16], sizes = [1, 16], strides = [1, 1]} : vector<1x32xf32> to vector<1x16xf32>
    %270 = vector.broadcast %269 : vector<1x16xf32> to vector<2x16xf32>
    %271 = vector.broadcast %257 : vector<2x1xf32> to vector<2x16xf32>
    %272 = arith.subf %270, %271 : vector<2x16xf32>
    %273 = arith.mulf %272, %268 : vector<2x16xf32>
    %274 = vector.extract_strided_slice %205 {offsets = [0, 16], sizes = [1, 16], strides = [1, 1]} : vector<1x32xf32> to vector<1x16xf32>
    %275 = vector.broadcast %274 : vector<1x16xf32> to vector<2x16xf32>
    %276 = arith.addf %273, %275 : vector<2x16xf32>
    %277 = tpu.concatenate %241, %268 in 1 : vector<2x16xf32>, vector<2x16xf32> -> vector<2x32xf32>
    %278 = tpu.concatenate %249, %276 in 1 : vector<2x16xf32>, vector<2x16xf32> -> vector<2x32xf32>
    %279 = vector.shape_cast %277 : vector<2x32xf32> to vector<2x1x32xf32>
    %280 = vector.broadcast %279 : vector<2x1x32xf32> to vector<2x256x32xf32>
    %281 = arith.mulf %202, %280 : vector<2x256x32xf32>
    %282 = vector.shape_cast %278 : vector<2x32xf32> to vector<2x1x32xf32>
    %283 = vector.broadcast %282 : vector<2x1x32xf32> to vector<2x256x32xf32>
    %284 = arith.addf %281, %283 : vector<2x256x32xf32>
    %285 = math.tanh %284 : vector<2x256x32xf32>
    %286 = arith.subf %285, %7 : vector<2x256x32xf32>
    %287 = arith.mulf %175, %286 : vector<2x256x32xf32>
    %288 = arith.addf %7, %287 : vector<2x256x32xf32>
    %289 = vector.shape_cast %288 : vector<2x256x32xf32> to vector<2x16x16x32xf32>
    %c0_150 = arith.constant 0 : index
    %c0_151 = arith.constant 0 : index
    %c0_152 = arith.constant 0 : index
    %c0_153 = arith.constant 0 : index
    %290 = vector.load %arg11[%c0_150, %c0_151, %c0_152, %c0_153] : memref<2x16x16x32xf32, #tpu.memory_space<vmem>>, vector<2x16x16x32xf32>
    tpu.vector_store %arg11[%c0_150, %c0_151, %c0_152, %c0_153], %289 {strides = array<i32>} : memref<2x16x16x32xf32, #tpu.memory_space<vmem>>, vector<2x16x16x32xf32>,
    %c0_154 = arith.constant 0 : index
    %c0_155 = arith.constant 0 : index
    %c0_156 = arith.constant 0 : index
    %c0_157 = arith.constant 0 : index
    %c0_158 = arith.constant 0 : index
    %291 = vector.load %arg10[%c0_154, %c0_155, %c0_156, %c0_157, %c0_158] : memref<1x2x16x16x32xf32, #tpu.memory_space<vmem>>, vector<1x2x16x16x32xf32>
    %292 = vector.shape_cast %291 : vector<1x2x16x16x32xf32> to vector<2x16x16x32xf32>
    %293 = vector.shape_cast %289 : vector<2x16x16x32xf32> to vector<1x2x16x16x32xf32>
    tpu.vector_store %arg10[%c0_154, %c0_155, %c0_156, %c0_157, %c0_158], %293 {strides = array<i32>} : memref<1x2x16x16x32xf32, #tpu.memory_space<vmem>>, vector<1x2x16x16x32xf32>,
    return
  }
  func.func @transform_0(%arg0: i32) -> (i32, i32, i32, i32, i32) {
    %c0_i32 = arith.constant 0 : i32
    %c0_i32_0 = arith.constant 0 : i32
    %c0_i32_1 = arith.constant 0 : i32
    %c0_i32_2 = arith.constant 0 : i32
    %c0_i32_3 = arith.constant 0 : i32
    return %arg0, %c0_i32, %c0_i32_0, %c0_i32_1, %c0_i32_2 : i32, i32, i32, i32, i32
  }
  func.func @transform_1(%arg0: i32) -> (i32, i32) {
    %c0_i32 = arith.constant 0 : i32
    %c0_i32_0 = arith.constant 0 : i32
    %c0_i32_1 = arith.constant 0 : i32
    return %c0_i32, %c0_i32_0 : i32, i32
  }
  func.func @transform_2(%arg0: i32) -> (i32, i32) {
    %c0_i32 = arith.constant 0 : i32
    %c0_i32_0 = arith.constant 0 : i32
    %c0_i32_1 = arith.constant 0 : i32
    return %c0_i32, %c0_i32_0 : i32, i32
  }
  func.func @transform_3(%arg0: i32) -> (i32, i32) {
    %c0_i32 = arith.constant 0 : i32
    %c0_i32_0 = arith.constant 0 : i32
    %c0_i32_1 = arith.constant 0 : i32
    return %c0_i32, %c0_i32_0 : i32, i32
  }
  func.func @transform_4(%arg0: i32) -> (i32, i32) {
    %c0_i32 = arith.constant 0 : i32
    %c0_i32_0 = arith.constant 0 : i32
    %c0_i32_1 = arith.constant 0 : i32
    return %c0_i32, %c0_i32_0 : i32, i32
  }
  func.func @transform_5(%arg0: i32) -> (i32, i32) {
    %c0_i32 = arith.constant 0 : i32
    %c0_i32_0 = arith.constant 0 : i32
    %c0_i32_1 = arith.constant 0 : i32
    return %c0_i32, %c0_i32_0 : i32, i32
  }
  func.func @transform_6(%arg0: i32) -> (i32, i32) {
    %c0_i32 = arith.constant 0 : i32
    %c0_i32_0 = arith.constant 0 : i32
    %c0_i32_1 = arith.constant 0 : i32
    return %c0_i32, %c0_i32_0 : i32, i32
  }
  func.func @transform_7(%arg0: i32) -> (i32, i32) {
    %c0_i32 = arith.constant 0 : i32
    %c0_i32_0 = arith.constant 0 : i32
    %c0_i32_1 = arith.constant 0 : i32
    return %c0_i32, %c0_i32_0 : i32, i32
  }
  func.func @transform_8(%arg0: i32) -> (i32, i32) {
    %c0_i32 = arith.constant 0 : i32
    %c0_i32_0 = arith.constant 0 : i32
    %c0_i32_1 = arith.constant 0 : i32
    return %c0_i32, %c0_i32_0 : i32, i32
  }
  func.func @transform_9(%arg0: i32) -> (i32, i32, i32, i32, i32) {
    %c0_i32 = arith.constant 0 : i32
    %c0_i32_0 = arith.constant 0 : i32
    %c0_i32_1 = arith.constant 0 : i32
    %c0_i32_2 = arith.constant 0 : i32
    %c0_i32_3 = arith.constant 0 : i32
    return %arg0, %c0_i32, %c0_i32_0, %c0_i32_1, %c0_i32_2 : i32, i32, i32, i32, i32
  }
}

</mosaic_0001>

<llo_original>
// kernel: tpu_custom_call.1
$region0: #{tpu_custom_call.1}
  #allocation0 [shape = 'u32[]', space=smem, size = 0x4, offset = 0x4, fixed_abs, tag = 'smem constant byte address 0x4 - core index']
  #allocation1 [shape = 'u32[144,128]{1,0:T(1,128)}', space=vmem, size = 0x12000, scoped, tag = 'internal scratch']
  #allocation2 [shape = 'f32[2,16,16,32]{3,2,1,0:T(8,128)}', space=vmem, size = 0x40000, scoped, tag = 'scratch operand']
  #allocation3 [shape = 'f32[2,18,18,36]{3,2,1,0:T(8,128)}', space=vmem, size = 0x6c000, scoped, tag = 'scratch operand']
  %s0 = inlined_call_operand.vmem [shape: f32[8,2,16,16,4], index: 0, kind: input, shape index: {}]
  %s1 = inlined_call_operand.vmem [shape: bf16[324,64], index: 1, kind: input, shape index: {}]
  %s2 = inlined_call_operand.vmem [shape: f32[1,64], index: 2, kind: input, shape index: {}]
  %s3 = inlined_call_operand.vmem [shape: f32[1,64], index: 3, kind: input, shape index: {}]
  %s4 = inlined_call_operand.vmem [shape: f32[1,64], index: 4, kind: input, shape index: {}]
  %s5 = inlined_call_operand.vmem [shape: bf16[324,32], index: 5, kind: input, shape index: {}]
  %s6 = inlined_call_operand.vmem [shape: f32[1,32], index: 6, kind: input, shape index: {}]
  %s7 = inlined_call_operand.vmem [shape: f32[1,32], index: 7, kind: input, shape index: {}]
  %s8 = inlined_call_operand.vmem [shape: f32[1,32], index: 8, kind: input, shape index: {}]
  %s9 = inlined_call_operand.hbm [shape: f32[8,2,16,16,32], index: 9, kind: output, shape index: {}]
  %s10 = sld [smem:[#allocation0]]
  $region73: #{tpu_custom_call.1} parent=0
    _
  %s12 = ssub.s32 1, %s10
  %s13 = scalar_select 0, %s12, %s10
  $region1: #{tpu_custom_call.1} parent=0
    #allocation4 [shape = 'u8[524288]{0}', space=vmem, size = 0x80000, scoped, tag = 'output window, operand 0']
    #allocation5 [shape = 's32[2]{0}', space=sflag, size = 0x8, scoped, tag = 'scoped memory for tpu_custom_call.1']
    %14 = vsyncpa [#allocation5], 0
    %s15 = scalar_lea.sflag [#allocation5], 1
    %16 = vsyncpa %s15, 0
    loop: start=0, step=1, limit=10
    $region2: #{tpu_custom_call.1} parent=1 // loop_pre_header
      _
    $region3: #{tpu_custom_call.1} parent=1 // loop_header
      %s18 = sphi 0, %s22
      %p19 = scmp.ge.s32.totalorder %s18, 10
      %s28 = sphi 0, %s30
      %s31 = sphi 0, %s28
      %s32 = sphi 0, %s31
      %s48 = sphi 0, %s32
      %s52 = sphi 0, %s52
      %s54 = sphi 0, %s52
      %s55 = sphi 0, %s54
      %s69 = sphi 0, %s55
      %s73 = sphi 0, %s73
      %s75 = sphi 0, %s73
      %s76 = sphi 0, %s75
      %s90 = sphi 0, %s76
      %s94 = sphi 0, %s94
      %s96 = sphi 0, %s94
      %s97 = sphi 0, %s96
      %s111 = sphi 0, %s97
      %s115 = sphi 0, %s115
      %s117 = sphi 0, %s115
      %s118 = sphi 0, %s117
      %s132 = sphi 0, %s118
      %s136 = sphi 0, %s136
      %s138 = sphi 0, %s136
      %s139 = sphi 0, %s138
      %s153 = sphi 0, %s139
      %s157 = sphi 0, %s157
      %s159 = sphi 0, %s157
      %s160 = sphi 0, %s159
      %s174 = sphi 0, %s160
      %s178 = sphi 0, %s178
      %s180 = sphi 0, %s178
      %s181 = sphi 0, %s180
      %s195 = sphi 0, %s181
      %s199 = sphi 0, %s199
      %s201 = sphi 0, %s199
      %s202 = sphi 0, %s201
      %s216 = sphi 0, %s202
      %s222 = sphi 0, %s224
      %s225 = sphi 0, %s222
      %s226 = sphi 0, %s225
      %s242 = sphi 0, %s226
    $region4: #{tpu_custom_call.1} parent=1 // loop_header_branch
      %21 = sbr.rel (%p19) target = $region8
    $region5: #{tpu_custom_call.1} parent=1 // loop_body
      %s23 = ssub.s32 %s18, 1
      %s24 = ssub.s32 %s18, 2
      %s25 = sadd.s32 %s18, 1
      %s26 = ssub.s32 %s18, %s25
      %p27 = scmp.eq.s32.totalorder %s26, 0
      %s29 = sadd.s32 %s28, 1
      %s30 = scalar_select %p27, %s28, %s29
      %p33 = pneg %p27
      %p34 = scmp.eq.s32.totalorder %s18, 7
      %p35 = por %p33, %p34
      %p36 = scmp.ne.s32.totalorder %s28, %s31
      %p37 = scmp.eq.s32.totalorder %s18, 0
      %p38 = por %p36, %p37
      %p39 = scmp.ne.s32.totalorder %s28, %s31
      %p40 = scmp.eq.s32.totalorder %s23, 7
      %p41 = por %p39, %p40
      %p42 = scmp.ne.s32.totalorder %s31, %s32
      %p43 = scmp.eq.s32.totalorder %s23, 0
      %p44 = por %p42, %p43
      %p45 = scmp.ne.s32.totalorder %s31, %s32
      %p46 = scmp.eq.s32.totalorder %s24, 7
      %p47 = por %p45, %p46
      %p49 = scmp.ne.s32.totalorder %s32, %s48
      %p50 = scmp.eq.s32.totalorder %s24, 0
      %p51 = por %p49, %p50
      %s53 = sadd.s32 %s52, 1
      %p56 = scmp.eq.s32.totalorder %s18, 7
      %p57 = scmp.ne.s32.totalorder %s52, %s54
      %p58 = scmp.eq.s32.totalorder %s18, 0
      %p59 = por %p57, %p58
      %p60 = scmp.ne.s32.totalorder %s52, %s54
      %p61 = scmp.eq.s32.totalorder %s23, 7
      %p62 = por %p60, %p61
      %p63 = scmp.ne.s32.totalorder %s54, %s55
      %p64 = scmp.eq.s32.totalorder %s23, 0
      %p65 = por %p63, %p64
      %p66 = scmp.ne.s32.totalorder %s54, %s55
      %p67 = scmp.eq.s32.totalorder %s24, 7
      %p68 = por %p66, %p67
      %p70 = scmp.ne.s32.totalorder %s55, %s69
      %p71 = scmp.eq.s32.totalorder %s24, 0
      %p72 = por %p70, %p71
      %s74 = sadd.s32 %s73, 1
      %p77 = scmp.eq.s32.totalorder %s18, 7
      %p78 = scmp.ne.s32.totalorder %s73, %s75
      %p79 = scmp.eq.s32.totalorder %s18, 0
      %p80 = por %p78, %p79
      %p81 = scmp.ne.s32.totalorder %s73, %s75
      %p82 = scmp.eq.s32.totalorder %s23, 7
      %p83 = por %p81, %p82
      %p84 = scmp.ne.s32.totalorder %s75, %s76
      %p85 = scmp.eq.s32.totalorder %s23, 0
      %p86 = por %p84, %p85
      %p87 = scmp.ne.s32.totalorder %s75, %s76
      %p88 = scmp.eq.s32.totalorder %s24, 7
      %p89 = por %p87, %p88
      %p91 = scmp.ne.s32.totalorder %s76, %s90
      %p92 = scmp.eq.s32.totalorder %s24, 0
      %p93 = por %p91, %p92
      %s95 = sadd.s32 %s94, 1
      %p98 = scmp.eq.s32.totalorder %s18, 7
      %p99 = scmp.ne.s32.totalorder %s94, %s96
      %p100 = scmp.eq.s32.totalorder %s18, 0
      %p101 = por %p99, %p100
      %p102 = scmp.ne.s32.totalorder %s94, %s96
      %p103 = scmp.eq.s32.totalorder %s23, 7
      %p104 = por %p102, %p103
      %p105 = scmp.ne.s32.totalorder %s96, %s97
      %p106 = scmp.eq.s32.totalorder %s23, 0
      %p107 = por %p105, %p106
      %p108 = scmp.ne.s32.totalorder %s96, %s97
      %p109 = scmp.eq.s32.totalorder %s24, 7
      %p110 = por %p108, %p109
      %p112 = scmp.ne.s32.totalorder %s97, %s111
      %p113 = scmp.eq.s32.totalorder %s24, 0
      %p114 = por %p112, %p113
      %s116 = sadd.s32 %s115, 1
      %p119 = scmp.eq.s32.totalorder %s18, 7
      %p120 = scmp.ne.s32.totalorder %s115, %s117
      %p121 = scmp.eq.s32.totalorder %s18, 0
      %p122 = por %p120, %p121
      %p123 = scmp.ne.s32.totalorder %s115, %s117
      %p124 = scmp.eq.s32.totalorder %s23, 7
      %p125 = por %p123, %p124
      %p126 = scmp.ne.s32.totalorder %s117, %s118
      %p127 = scmp.eq.s32.totalorder %s23, 0
      %p128 = por %p126, %p127
      %p129 = scmp.ne.s32.totalorder %s117, %s118
      %p130 = scmp.eq.s32.totalorder %s24, 7
      %p131 = por %p129, %p130
      %p133 = scmp.ne.s32.totalorder %s118, %s132
      %p134 = scmp.eq.s32.totalorder %s24, 0
      %p135 = por %p133, %p134
      %s137 = sadd.s32 %s136, 1
      %p140 = scmp.eq.s32.totalorder %s18, 7
      %p141 = scmp.ne.s32.totalorder %s136, %s138
      %p142 = scmp.eq.s32.totalorder %s18, 0
      %p143 = por %p141, %p142
      %p144 = scmp.ne.s32.totalorder %s136, %s138
      %p145 = scmp.eq.s32.totalorder %s23, 7
      %p146 = por %p144, %p145
      %p147 = scmp.ne.s32.totalorder %s138, %s139
      %p148 = scmp.eq.s32.totalorder %s23, 0
      %p149 = por %p147, %p148
      %p150 = scmp.ne.s32.totalorder %s138, %s139
      %p151 = scmp.eq.s32.totalorder %s24, 7
      %p152 = por %p150, %p151
      %p154 = scmp.ne.s32.totalorder %s139, %s153
      %p155 = scmp.eq.s32.totalorder %s24, 0
      %p156 = por %p154, %p155
      %s158 = sadd.s32 %s157, 1
      %p161 = scmp.eq.s32.totalorder %s18, 7
      %p162 = scmp.ne.s32.totalorder %s157, %s159
      %p163 = scmp.eq.s32.totalorder %s18, 0
      %p164 = por %p162, %p163
      %p165 = scmp.ne.s32.totalorder %s157, %s159
      %p166 = scmp.eq.s32.totalorder %s23, 7
      %p167 = por %p165, %p166
      %p168 = scmp.ne.s32.totalorder %s159, %s160
      %p169 = scmp.eq.s32.totalorder %s23, 0
      %p170 = por %p168, %p169
      %p171 = scmp.ne.s32.totalorder %s159, %s160
      %p172 = scmp.eq.s32.totalorder %s24, 7
      %p173 = por %p171, %p172
      %p175 = scmp.ne.s32.totalorder %s160, %s174
      %p176 = scmp.eq.s32.totalorder %s24, 0
      %p177 = por %p175, %p176
      %s179 = sadd.s32 %s178, 1
      %p182 = scmp.eq.s32.totalorder %s18, 7
      %p183 = scmp.ne.s32.totalorder %s178, %s180
      %p184 = scmp.eq.s32.totalorder %s18, 0
      %p185 = por %p183, %p184
      %p186 = scmp.ne.s32.totalorder %s178, %s180
      %p187 = scmp.eq.s32.totalorder %s23, 7
      %p188 = por %p186, %p187
      %p189 = scmp.ne.s32.totalorder %s180, %s181
      %p190 = scmp.eq.s32.totalorder %s23, 0
      %p191 = por %p189, %p190
      %p192 = scmp.ne.s32.totalorder %s180, %s181
      %p193 = scmp.eq.s32.totalorder %s24, 7
      %p194 = por %p192, %p193
      %p196 = scmp.ne.s32.totalorder %s181, %s195
      %p197 = scmp.eq.s32.totalorder %s24, 0
      %p198 = por %p196, %p197
      %s200 = sadd.s32 %s199, 1
      %p203 = scmp.eq.s32.totalorder %s18, 7
      %p204 = scmp.ne.s32.totalorder %s199, %s201
      %p205 = scmp.eq.s32.totalorder %s18, 0
      %p206 = por %p204, %p205
      %p207 = scmp.ne.s32.totalorder %s199, %s201
      %p208 = scmp.eq.s32.totalorder %s23, 7
      %p209 = por %p207, %p208
      %p210 = scmp.ne.s32.totalorder %s201, %s202
      %p211 = scmp.eq.s32.totalorder %s23, 0
      %p212 = por %p210, %p211
      %p213 = scmp.ne.s32.totalorder %s201, %s202
      %p214 = scmp.eq.s32.totalorder %s24, 7
      %p215 = por %p213, %p214
      %p217 = scmp.ne.s32.totalorder %s202, %s216
      %p218 = scmp.eq.s32.totalorder %s24, 0
      %p219 = por %p217, %p218
      %s220 = ssub.s32 %s18, %s25
      %p221 = scmp.eq.s32.totalorder %s220, 0
      %s223 = sadd.s32 %s222, 1
      %s224 = scalar_select %p221, %s222, %s223
      %p227 = pneg %p221
      %p228 = scmp.eq.s32.totalorder %s18, 7
      %p229 = por %p227, %p228
      %p230 = scmp.ne.s32.totalorder %s222, %s225
      %p231 = scmp.eq.s32.totalorder %s18, 0
      %p232 = por %p230, %p231
      %p233 = scmp.ne.s32.totalorder %s222, %s225
      %p234 = scmp.eq.s32.totalorder %s23, 7
      %p235 = por %p233, %p234
      %p236 = scmp.ne.s32.totalorder %s225, %s226
      %p237 = scmp.eq.s32.totalorder %s23, 0
      %p238 = por %p236, %p237
      %p239 = scmp.ne.s32.totalorder %s225, %s226
      %p240 = scmp.eq.s32.totalorder %s24, 7
      %p241 = por %p239, %p240
      %p243 = scmp.ne.s32.totalorder %s226, %s242
      %p244 = scmp.eq.s32.totalorder %s24, 0
      %p245 = por %p243, %p244
      %p246 = scmp.le.s32.totalorder 1, %s18
      %p247 = scmp.lt.s32.totalorder %s18, 9
      %p248 = pnand %p246, %p247
      %p249 = pneg %p248
      // Predicated region
      $region9: #{tpu_custom_call.1} parent=5 // pred_check
        _
      $region10: #{tpu_custom_call.1} parent=5 // pred_check_branch
        %251 = sbr.rel (%p248) target = $region12
      $region11: #{tpu_custom_call.1} parent=5 // pred_region
        %s252 = ssub.s32 %s18, 1
        // Predicated region
        $region13: #{tpu_custom_call.1} parent=11 // pred_check
          %p253 = pneg %p65
        $region14: #{tpu_custom_call.1} parent=11 // pred_check_branch
          %255 = sbr.rel (%p253) target = $region16
        $region15: #{tpu_custom_call.1} parent=11 // pred_region
          _
        $region16: #{tpu_custom_call.1} parent=11 // pred_fallthru
          _
        // Predicated region
        $region17: #{tpu_custom_call.1} parent=11 // pred_check
          %p256 = pneg %p86
        $region18: #{tpu_custom_call.1} parent=11 // pred_check_branch
          %258 = sbr.rel (%p256) target = $region20
        $region19: #{tpu_custom_call.1} parent=11 // pred_region
          _
        $region20: #{tpu_custom_call.1} parent=11 // pred_fallthru
          _
        // Predicated region
        $region21: #{tpu_custom_call.1} parent=11 // pred_check
          %p259 = pneg %p107
        $region22: #{tpu_custom_call.1} parent=11 // pred_check_branch
          %261 = sbr.rel (%p259) target = $region24
        $region23: #{tpu_custom_call.1} parent=11 // pred_region
          _
        $region24: #{tpu_custom_call.1} parent=11 // pred_fallthru
          _
        // Predicated region
        $region25: #{tpu_custom_call.1} parent=11 // pred_check
          %p262 = pneg %p128
        $region26: #{tpu_custom_call.1} parent=11 // pred_check_branch
          %264 = sbr.rel (%p262) target = $region28
        $region27: #{tpu_custom_call.1} parent=11 // pred_region
          _
        $region28: #{tpu_custom_call.1} parent=11 // pred_fallthru
          _
        // Predicated region
        $region29: #{tpu_custom_call.1} parent=11 // pred_check
          %p265 = pneg %p149
        $region30: #{tpu_custom_call.1} parent=11 // pred_check_branch
          %267 = sbr.rel (%p265) target = $region32
        $region31: #{tpu_custom_call.1} parent=11 // pred_region
          _
        $region32: #{tpu_custom_call.1} parent=11 // pred_fallthru
          _
        // Predicated region
        $region33: #{tpu_custom_call.1} parent=11 // pred_check
          %p268 = pneg %p170
        $region34: #{tpu_custom_call.1} parent=11 // pred_check_branch
          %270 = sbr.rel (%p268) target = $region36
        $region35: #{tpu_custom_call.1} parent=11 // pred_region
          _
        $region36: #{tpu_custom_call.1} parent=11 // pred_fallthru
          _
        // Predicated region
        $region37: #{tpu_custom_call.1} parent=11 // pred_check
          %p271 = pneg %p191
        $region38: #{tpu_custom_call.1} parent=11 // pred_check_branch
          %273 = sbr.rel (%p271) target = $region40
        $region39: #{tpu_custom_call.1} parent=11 // pred_region
          _
        $region40: #{tpu_custom_call.1} parent=11 // pred_fallthru
          _
        // Predicated region
        $region41: #{tpu_custom_call.1} parent=11 // pred_check
          %p274 = pneg %p212
        $region42: #{tpu_custom_call.1} parent=11 // pred_check_branch
          %276 = sbr.rel (%p274) target = $region44
        $region43: #{tpu_custom_call.1} parent=11 // pred_region
          _
        $region44: #{tpu_custom_call.1} parent=11 // pred_fallthru
          _
      $region12: #{tpu_custom_call.1} parent=5 // pred_fallthru
        _
      %p277 = scmp.lt.s32.totalorder %s18, 8
      // Predicated region
      $region45: #{tpu_custom_call.1} parent=5 // pred_check
        %p278 = pneg %p277
      $region46: #{tpu_custom_call.1} parent=5 // pred_check_branch
        %280 = sbr.rel (%p278) target = $region48
      $region47: #{tpu_custom_call.1} parent=5 // pred_region
        // Predicated region
        $region49: #{tpu_custom_call.1} parent=47 // pred_check
          %p281 = pneg %p38
        $region50: #{tpu_custom_call.1} parent=47 // pred_check_branch
          %283 = sbr.rel (%p281) target = $region52
        $region51: #{tpu_custom_call.1} parent=47 // pred_region
          %p284 = scmp.lt.s32.totalorder %s18, 7
          %s285 = scalar_select %p284, %s18, 7
          %s286 = smul.addr %s285, 64
          %s287 = smul.addr %s286, 8
          %s288 = scalar_lea.vmem %s0, %s287
        $region52: #{tpu_custom_call.1} parent=47 // pred_fallthru
          _
      $region48: #{tpu_custom_call.1} parent=5 // pred_fallthru
        _
      %p289 = scmp.le.s32.totalorder 1, %s18
      %p290 = scmp.lt.s32.totalorder %s18, 9
      %p291 = pnand %p289, %p290
      %p292 = pneg %p291
      // Predicated region
      $region53: #{tpu_custom_call.1} parent=5 // pred_check
        _
      $region54: #{tpu_custom_call.1} parent=5 // pred_check_branch
        %294 = sbr.rel (%p291) target = $region56
      $region55: #{tpu_custom_call.1} parent=5 // pred_region
        %s295 = ssub.s32 %s18, 1
        %p296 = scmp.lt.s32.totalorder %s23, 7
        %s297 = scalar_select %p296, %s23, 7
        %s298 = smul.addr %s297, 64
        %s299 = smul.addr %s298, 8
        %s300 = scalar_lea.vmem %s0, %s299
        %p301 = pneg %p44
        %p302 = pneg %p41
        %p303 = pneg %p65
        %p304 = pneg %p62
        %p305 = pneg %p86
        %p306 = pneg %p83
        %p307 = pneg %p107
        %p308 = pneg %p104
        %p309 = pneg %p128
        %p310 = pneg %p125
        %p311 = pneg %p149
        %p312 = pneg %p146
        %p313 = pneg %p170
        %p314 = pneg %p167
        %p315 = pneg %p191
        %p316 = pneg %p188
        %p317 = pneg %p212
        %p318 = pneg %p209
        %p319 = pneg %p238
        %p320 = pneg %p235
        %s321 = sand.u32 %s225, 1
        %s322 = scalar_lea.sflag [#allocation5], %s321
        %s323 = sand.u32 %s225, 1
        %s324 = smul.addr %s323, 512
        %s325 = scalar_lea.vmem [#allocation4], %s324
        %p326 = scmp.lt.s32.totalorder %s23, 7
        %s327 = scalar_select %p326, %s23, 7
        %s328 = smul.addr %s327, 64
        %s329 = smul.addr %s328, 8
        %s330 = scalar_lea.vmem %s0, %s329
        %p332 = scmp.eq.s32.totalorder %s23, 0
        // Predicated region
        $region57: #{tpu_custom_call.1} parent=55 // pred_check
          %p333 = pneg %p332
        $region58: #{tpu_custom_call.1} parent=55 // pred_check_branch
          %335 = sbr.rel (%p333) target = $region60
        $region59: #{tpu_custom_call.1} parent=55 // pred_region
          %vm336 = vcmask 261120
          %337 = vst.msk [vmem:[#allocation2] sm:$0xff] %vm336, 0.0
          %338 = vst.msk [vmem:[#allocation2 + $0x8] sm:$0xff] %vm336, 0.0
          %339 = vst.msk [vmem:[#allocation2 + $0x10] sm:$0xff] %vm336, 0.0
          %340 = vst.msk [vmem:[#allocation2 + $0x18] sm:$0xff] %vm336, 0.0
          %341 = vst.msk [vmem:[#allocation2 + $0x20] sm:$0xff] %vm336, 0.0
          %342 = vst.msk [vmem:[#allocation2 + $0x28] sm:$0xff] %vm336, 0.0
          %343 = vst.msk [vmem:[#allocation2 + $0x30] sm:$0xff] %vm336, 0.0
          %344 = vst.msk [vmem:[#allocation2 + $0x38] sm:$0xff] %vm336, 0.0
          %345 = vst.msk [vmem:[#allocation2 + $0x40] sm:$0xff] %vm336, 0.0
          %346 = vst.msk [vmem:[#allocation2 + $0x48] sm:$0xff] %vm336, 0.0
          %347 = vst.msk [vmem:[#allocation2 + $0x50] sm:$0xff] %vm336, 0.0
          %348 = vst.msk [vmem:[#allocation2 + $0x58] sm:$0xff] %vm336, 0.0
          %349 = vst.msk [vmem:[#allocation2 + $0x60] sm:$0xff] %vm336, 0.0
          %350 = vst.msk [vmem:[#allocation2 + $0x68] sm:$0xff] %vm336, 0.0
          %351 = vst.msk [vmem:[#allocation2 + $0x70] sm:$0xff] %vm336, 0.0
          %352 = vst.msk [vmem:[#allocation2 + $0x78] sm:$0xff] %vm336, 0.0
          %353 = vst.msk [vmem:[#allocation2 + $0x80] sm:$0xff] %vm336, 0.0
          %354 = vst.msk [vmem:[#allocation2 + $0x88] sm:$0xff] %vm336, 0.0
          %355 = vst.msk [vmem:[#allocation2 + $0x90] sm:$0xff] %vm336, 0.0
          %356 = vst.msk [vmem:[#allocation2 + $0x98] sm:$0xff] %vm336, 0.0
          %357 = vst.msk [vmem:[#allocation2 + $0xa0] sm:$0xff] %vm336, 0.0
          %358 = vst.msk [vmem:[#allocation2 + $0xa8] sm:$0xff] %vm336, 0.0
          %359 = vst.msk [vmem:[#allocation2 + $0xb0] sm:$0xff] %vm336, 0.0
          %360 = vst.msk [vmem:[#allocation2 + $0xb8] sm:$0xff] %vm336, 0.0
          %361 = vst.msk [vmem:[#allocation2 + $0xc0] sm:$0xff] %vm336, 0.0
          %362 = vst.msk [vmem:[#allocation2 + $0xc8] sm:$0xff] %vm336, 0.0
          %363 = vst.msk [vmem:[#allocation2 + $0xd0] sm:$0xff] %vm336, 0.0
          %364 = vst.msk [vmem:[#allocation2 + $0xd8] sm:$0xff] %vm336, 0.0
          %365 = vst.msk [vmem:[#allocation2 + $0xe0] sm:$0xff] %vm336, 0.0
          %366 = vst.msk [vmem:[#allocation2 + $0xe8] sm:$0xff] %vm336, 0.0
          %367 = vst.msk [vmem:[#allocation2 + $0xf0] sm:$0xff] %vm336, 0.0
          %368 = vst.msk [vmem:[#allocation2 + $0xf8] sm:$0xff] %vm336, 0.0
          %369 = vst.msk [vmem:[#allocation2 + $0x100] sm:$0xff] %vm336, 0.0
          %370 = vst.msk [vmem:[#allocation2 + $0x108] sm:$0xff] %vm336, 0.0
          %371 = vst.msk [vmem:[#allocation2 + $0x110] sm:$0xff] %vm336, 0.0
          %372 = vst.msk [vmem:[#allocation2 + $0x118] sm:$0xff] %vm336, 0.0
          %373 = vst.msk [vmem:[#allocation2 + $0x120] sm:$0xff] %vm336, 0.0
          %374 = vst.msk [vmem:[#allocation2 + $0x128] sm:$0xff] %vm336, 0.0
          %375 = vst.msk [vmem:[#allocation2 + $0x130] sm:$0xff] %vm336, 0.0
          %376 = vst.msk [vmem:[#allocation2 + $0x138] sm:$0xff] %vm336, 0.0
          %377 = vst.msk [vmem:[#allocation2 + $0x140] sm:$0xff] %vm336, 0.0
          %378 = vst.msk [vmem:[#allocation2 + $0x148] sm:$0xff] %vm336, 0.0
          %379 = vst.msk [vmem:[#allocation2 + $0x150] sm:$0xff] %vm336, 0.0
          %380 = vst.msk [vmem:[#allocation2 + $0x158] sm:$0xff] %vm336, 0.0
          %381 = vst.msk [vmem:[#allocation2 + $0x160] sm:$0xff] %vm336, 0.0
          %382 = vst.msk [vmem:[#allocation2 + $0x168] sm:$0xff] %vm336, 0.0
          %383 = vst.msk [vmem:[#allocation2 + $0x170] sm:$0xff] %vm336, 0.0
          %384 = vst.msk [vmem:[#allocation2 + $0x178] sm:$0xff] %vm336, 0.0
          %385 = vst.msk [vmem:[#allocation2 + $0x180] sm:$0xff] %vm336, 0.0
          %386 = vst.msk [vmem:[#allocation2 + $0x188] sm:$0xff] %vm336, 0.0
          %387 = vst.msk [vmem:[#allocation2 + $0x190] sm:$0xff] %vm336, 0.0
          %388 = vst.msk [vmem:[#allocation2 + $0x198] sm:$0xff] %vm336, 0.0
          %389 = vst.msk [vmem:[#allocation2 + $0x1a0] sm:$0xff] %vm336, 0.0
          %390 = vst.msk [vmem:[#allocation2 + $0x1a8] sm:$0xff] %vm336, 0.0
          %391 = vst.msk [vmem:[#allocation2 + $0x1b0] sm:$0xff] %vm336, 0.0
          %392 = vst.msk [vmem:[#allocation2 + $0x1b8] sm:$0xff] %vm336, 0.0
          %393 = vst.msk [vmem:[#allocation2 + $0x1c0] sm:$0xff] %vm336, 0.0
          %394 = vst.msk [vmem:[#allocation2 + $0x1c8] sm:$0xff] %vm336, 0.0
          %395 = vst.msk [vmem:[#allocation2 + $0x1d0] sm:$0xff] %vm336, 0.0
          %396 = vst.msk [vmem:[#allocation2 + $0x1d8] sm:$0xff] %vm336, 0.0
          %397 = vst.msk [vmem:[#allocation2 + $0x1e0] sm:$0xff] %vm336, 0.0
          %398 = vst.msk [vmem:[#allocation2 + $0x1e8] sm:$0xff] %vm336, 0.0
          %399 = vst.msk [vmem:[#allocation2 + $0x1f0] sm:$0xff] %vm336, 0.0
          %400 = vst.msk [vmem:[#allocation2 + $0x1f8] sm:$0xff] %vm336, 0.0
          %vm401 = vcmask 293888
          %402 = vst.msk [vmem:[#allocation3] sm:$0xff] %vm401, 0.0
          %403 = vst.msk [vmem:[#allocation3 + $0x8] sm:$0xff] %vm401, 0.0
          %vm404 = vcmask 287744
          %405 = vst.msk [vmem:[#allocation3 + $0x10] sm:$0x3] %vm404, 0.0
          %406 = vst.msk [vmem:[#allocation3 + $0x18] sm:$0xff] %vm401, 0.0
          %407 = vst.msk [vmem:[#allocation3 + $0x20] sm:$0xff] %vm401, 0.0
          %408 = vst.msk [vmem:[#allocation3 + $0x28] sm:$0x3] %vm404, 0.0
          %409 = vst.msk [vmem:[#allocation3 + $0x30] sm:$0xff] %vm401, 0.0
          %410 = vst.msk [vmem:[#allocation3 + $0x38] sm:$0xff] %vm401, 0.0
          %411 = vst.msk [vmem:[#allocation3 + $0x40] sm:$0x3] %vm404, 0.0
          %412 = vst.msk [vmem:[#allocation3 + $0x48] sm:$0xff] %vm401, 0.0
          %413 = vst.msk [vmem:[#allocation3 + $0x50] sm:$0xff] %vm401, 0.0
          %414 = vst.msk [vmem:[#allocation3 + $0x58] sm:$0x3] %vm404, 0.0
          %415 = vst.msk [vmem:[#allocation3 + $0x60] sm:$0xff] %vm401, 0.0
          %416 = vst.msk [vmem:[#allocation3 + $0x68] sm:$0xff] %vm401, 0.0
          %417 = vst.msk [vmem:[#allocation3 + $0x70] sm:$0x3] %vm404, 0.0
          %418 = vst.msk [vmem:[#allocation3 + $0x78] sm:$0xff] %vm401, 0.0
          %419 = vst.msk [vmem:[#allocation3 + $0x80] sm:$0xff] %vm401, 0.0
          %420 = vst.msk [vmem:[#allocation3 + $0x88] sm:$0x3] %vm404, 0.0
          %421 = vst.msk [vmem:[#allocation3 + $0x90] sm:$0xff] %vm401, 0.0
          %422 = vst.msk [vmem:[#allocation3 + $0x98] sm:$0xff] %vm401, 0.0
          %423 = vst.msk [vmem:[#allocation3 + $0xa0] sm:$0x3] %vm404, 0.0
          %424 = vst.msk [vmem:[#allocation3 + $0xa8] sm:$0xff] %vm401, 0.0
          %425 = vst.msk [vmem:[#allocation3 + $0xb0] sm:$0xff] %vm401, 0.0
          %426 = vst.msk [vmem:[#allocation3 + $0xb8] sm:$0x3] %vm404, 0.0
          %427 = vst.msk [vmem:[#allocation3 + $0xc0] sm:$0xff] %vm401, 0.0
          %428 = vst.msk [vmem:[#allocation3 + $0xc8] sm:$0xff] %vm401, 0.0
          %429 = vst.msk [vmem:[#allocation3 + $0xd0] sm:$0x3] %vm404, 0.0
          %430 = vst.msk [vmem:[#allocation3 + $0xd8] sm:$0xff] %vm401, 0.0
          %431 = vst.msk [vmem:[#allocation3 + $0xe0] sm:$0xff] %vm401, 0.0
          %432 = vst.msk [vmem:[#allocation3 + $0xe8] sm:$0x3] %vm404, 0.0
          %433 = vst.msk [vmem:[#allocation3 + $0xf0] sm:$0xff] %vm401, 0.0
          %434 = vst.msk [vmem:[#allocation3 + $0xf8] sm:$0xff] %vm401, 0.0
          %435 = vst.msk [vmem:[#allocation3 + $0x100] sm:$0x3] %vm404, 0.0
          %436 = vst.msk [vmem:[#allocation3 + $0x108] sm:$0xff] %vm401, 0.0
          %437 = vst.msk [vmem:[#allocation3 + $0x110] sm:$0xff] %vm401, 0.0
          %438 = vst.msk [vmem:[#allocation3 + $0x118] sm:$0x3] %vm404, 0.0
          %439 = vst.msk [vmem:[#allocation3 + $0x120] sm:$0xff] %vm401, 0.0
          %440 = vst.msk [vmem:[#allocation3 + $0x128] sm:$0xff] %vm401, 0.0
          %441 = vst.msk [vmem:[#allocation3 + $0x130] sm:$0x3] %vm404, 0.0
          %442 = vst.msk [vmem:[#allocation3 + $0x138] sm:$0xff] %vm401, 0.0
          %443 = vst.msk [vmem:[#allocation3 + $0x140] sm:$0xff] %vm401, 0.0
          %444 = vst.msk [vmem:[#allocation3 + $0x148] sm:$0x3] %vm404, 0.0
          %445 = vst.msk [vmem:[#allocation3 + $0x150] sm:$0xff] %vm401, 0.0
          %446 = vst.msk [vmem:[#allocation3 + $0x158] sm:$0xff] %vm401, 0.0
          %447 = vst.msk [vmem:[#allocation3 + $0x160] sm:$0x3] %vm404, 0.0
          %448 = vst.msk [vmem:[#allocation3 + $0x168] sm:$0xff] %vm401, 0.0
          %449 = vst.msk [vmem:[#allocation3 + $0x170] sm:$0xff] %vm401, 0.0
          %450 = vst.msk [vmem:[#allocation3 + $0x178] sm:$0x3] %vm404, 0.0
          %451 = vst.msk [vmem:[#allocation3 + $0x180] sm:$0xff] %vm401, 0.0
          %452 = vst.msk [vmem:[#allocation3 + $0x188] sm:$0xff] %vm401, 0.0
          %453 = vst.msk [vmem:[#allocation3 + $0x190] sm:$0x3] %vm404, 0.0
          %454 = vst.msk [vmem:[#allocation3 + $0x198] sm:$0xff] %vm401, 0.0
          %455 = vst.msk [vmem:[#allocation3 + $0x1a0] sm:$0xff] %vm401, 0.0
          %456 = vst.msk [vmem:[#allocation3 + $0x1a8] sm:$0x3] %vm404, 0.0
          %457 = vst.msk [vmem:[#allocation3 + $0x1b0] sm:$0xff] %vm401, 0.0
          %458 = vst.msk [vmem:[#allocation3 + $0x1b8] sm:$0xff] %vm401, 0.0
          %459 = vst.msk [vmem:[#allocation3 + $0x1c0] sm:$0x3] %vm404, 0.0
          %460 = vst.msk [vmem:[#allocation3 + $0x1c8] sm:$0xff] %vm401, 0.0
          %461 = vst.msk [vmem:[#allocation3 + $0x1d0] sm:$0xff] %vm401, 0.0
          %462 = vst.msk [vmem:[#allocation3 + $0x1d8] sm:$0x3] %vm404, 0.0
          %463 = vst.msk [vmem:[#allocation3 + $0x1e0] sm:$0xff] %vm401, 0.0
          %464 = vst.msk [vmem:[#allocation3 + $0x1e8] sm:$0xff] %vm401, 0.0
          %465 = vst.msk [vmem:[#allocation3 + $0x1f0] sm:$0x3] %vm404, 0.0
          %466 = vst.msk [vmem:[#allocation3 + $0x1f8] sm:$0xff] %vm401, 0.0
          %467 = vst.msk [vmem:[#allocation3 + $0x200] sm:$0xff] %vm401, 0.0
          %468 = vst.msk [vmem:[#allocation3 + $0x208] sm:$0x3] %vm404, 0.0
          %469 = vst.msk [vmem:[#allocation3 + $0x210] sm:$0xff] %vm401, 0.0
          %470 = vst.msk [vmem:[#allocation3 + $0x218] sm:$0xff] %vm401, 0.0
          %471 = vst.msk [vmem:[#allocation3 + $0x220] sm:$0x3] %vm404, 0.0
          %472 = vst.msk [vmem:[#allocation3 + $0x228] sm:$0xff] %vm401, 0.0
          %473 = vst.msk [vmem:[#allocation3 + $0x230] sm:$0xff] %vm401, 0.0
          %474 = vst.msk [vmem:[#allocation3 + $0x238] sm:$0x3] %vm404, 0.0
          %475 = vst.msk [vmem:[#allocation3 + $0x240] sm:$0xff] %vm401, 0.0
          %476 = vst.msk [vmem:[#allocation3 + $0x248] sm:$0xff] %vm401, 0.0
          %477 = vst.msk [vmem:[#allocation3 + $0x250] sm:$0x3] %vm404, 0.0
          %478 = vst.msk [vmem:[#allocation3 + $0x258] sm:$0xff] %vm401, 0.0
          %479 = vst.msk [vmem:[#allocation3 + $0x260] sm:$0xff] %vm401, 0.0
          %480 = vst.msk [vmem:[#allocation3 + $0x268] sm:$0x3] %vm404, 0.0
          %481 = vst.msk [vmem:[#allocation3 + $0x270] sm:$0xff] %vm401, 0.0
          %482 = vst.msk [vmem:[#allocation3 + $0x278] sm:$0xff] %vm401, 0.0
          %483 = vst.msk [vmem:[#allocation3 + $0x280] sm:$0x3] %vm404, 0.0
          %484 = vst.msk [vmem:[#allocation3 + $0x288] sm:$0xff] %vm401, 0.0
          %485 = vst.msk [vmem:[#allocation3 + $0x290] sm:$0xff] %vm401, 0.0
          %486 = vst.msk [vmem:[#allocation3 + $0x298] sm:$0x3] %vm404, 0.0
          %487 = vst.msk [vmem:[#allocation3 + $0x2a0] sm:$0xff] %vm401, 0.0
          %488 = vst.msk [vmem:[#allocation3 + $0x2a8] sm:$0xff] %vm401, 0.0
          %489 = vst.msk [vmem:[#allocation3 + $0x2b0] sm:$0x3] %vm404, 0.0
          %490 = vst.msk [vmem:[#allocation3 + $0x2b8] sm:$0xff] %vm401, 0.0
          %491 = vst.msk [vmem:[#allocation3 + $0x2c0] sm:$0xff] %vm401, 0.0
          %492 = vst.msk [vmem:[#allocation3 + $0x2c8] sm:$0x3] %vm404, 0.0
          %493 = vst.msk [vmem:[#allocation3 + $0x2d0] sm:$0xff] %vm401, 0.0
          %494 = vst.msk [vmem:[#allocation3 + $0x2d8] sm:$0xff] %vm401, 0.0
          %495 = vst.msk [vmem:[#allocation3 + $0x2e0] sm:$0x3] %vm404, 0.0
          %496 = vst.msk [vmem:[#allocation3 + $0x2e8] sm:$0xff] %vm401, 0.0
          %497 = vst.msk [vmem:[#allocation3 + $0x2f0] sm:$0xff] %vm401, 0.0
          %498 = vst.msk [vmem:[#allocation3 + $0x2f8] sm:$0x3] %vm404, 0.0
          %499 = vst.msk [vmem:[#allocation3 + $0x300] sm:$0xff] %vm401, 0.0
          %500 = vst.msk [vmem:[#allocation3 + $0x308] sm:$0xff] %vm401, 0.0
          %501 = vst.msk [vmem:[#allocation3 + $0x310] sm:$0x3] %vm404, 0.0
          %502 = vst.msk [vmem:[#allocation3 + $0x318] sm:$0xff] %vm401, 0.0
          %503 = vst.msk [vmem:[#allocation3 + $0x320] sm:$0xff] %vm401, 0.0
          %504 = vst.msk [vmem:[#allocation3 + $0x328] sm:$0x3] %vm404, 0.0
          %505 = vst.msk [vmem:[#allocation3 + $0x330] sm:$0xff] %vm401, 0.0
          %506 = vst.msk [vmem:[#allocation3 + $0x338] sm:$0xff] %vm401, 0.0
          %507 = vst.msk [vmem:[#allocation3 + $0x340] sm:$0x3] %vm404, 0.0
          %508 = vst.msk [vmem:[#allocation3 + $0x348] sm:$0xff] %vm401, 0.0
          %509 = vst.msk [vmem:[#allocation3 + $0x350] sm:$0xff] %vm401, 0.0
          %510 = vst.msk [vmem:[#allocation3 + $0x358] sm:$0x3] %vm404, 0.0
        $region60: #{tpu_custom_call.1} parent=55 // pred_fallthru
          _
        %v511 = vld [vmem:[%s330] sm:$0xff]
        %v512 = vld [vmem:[%s330 + $0x8] sm:$0xff]
        %v513 = vld [vmem:[%s330 + $0x10] sm:$0xff]
        %v514 = vld [vmem:[%s330 + $0x18] sm:$0xff]
        %v515 = vld [vmem:[%s330 + $0x20] sm:$0xff]
        %v516 = vld [vmem:[%s330 + $0x28] sm:$0xff]
        %v517 = vld [vmem:[%s330 + $0x30] sm:$0xff]
        %v518 = vld [vmem:[%s330 + $0x38] sm:$0xff]
        %v519 = vld [vmem:[%s330 + $0x40] sm:$0xff]
        %v520 = vld [vmem:[%s330 + $0x48] sm:$0xff]
        %v521 = vld [vmem:[%s330 + $0x50] sm:$0xff]
        %v522 = vld [vmem:[%s330 + $0x58] sm:$0xff]
        %v523 = vld [vmem:[%s330 + $0x60] sm:$0xff]
        %v524 = vld [vmem:[%s330 + $0x68] sm:$0xff]
        %v525 = vld [vmem:[%s330 + $0x70] sm:$0xff]
        %v526 = vld [vmem:[%s330 + $0x78] sm:$0xff]
        %v527 = vld [vmem:[%s330 + $0x80] sm:$0xff]
        %v528 = vld [vmem:[%s330 + $0x88] sm:$0xff]
        %v529 = vld [vmem:[%s330 + $0x90] sm:$0xff]
        %v530 = vld [vmem:[%s330 + $0x98] sm:$0xff]
        %v531 = vld [vmem:[%s330 + $0xa0] sm:$0xff]
        %v532 = vld [vmem:[%s330 + $0xa8] sm:$0xff]
        %v533 = vld [vmem:[%s330 + $0xb0] sm:$0xff]
        %v534 = vld [vmem:[%s330 + $0xb8] sm:$0xff]
        %v535 = vld [vmem:[%s330 + $0xc0] sm:$0xff]
        %v536 = vld [vmem:[%s330 + $0xc8] sm:$0xff]
        %v537 = vld [vmem:[%s330 + $0xd0] sm:$0xff]
        %v538 = vld [vmem:[%s330 + $0xd8] sm:$0xff]
        %v539 = vld [vmem:[%s330 + $0xe0] sm:$0xff]
        %v540 = vld [vmem:[%s330 + $0xe8] sm:$0xff]
        %v541 = vld [vmem:[%s330 + $0xf0] sm:$0xff]
        %v542 = vld [vmem:[%s330 + $0xf8] sm:$0xff]
        %v543 = vld [vmem:[%s330 + $0x100] sm:$0xff]
        %v544 = vld [vmem:[%s330 + $0x108] sm:$0xff]
        %v545 = vld [vmem:[%s330 + $0x110] sm:$0xff]
        %v546 = vld [vmem:[%s330 + $0x118] sm:$0xff]
        %v547 = vld [vmem:[%s330 + $0x120] sm:$0xff]
        %v548 = vld [vmem:[%s330 + $0x128] sm:$0xff]
        %v549 = vld [vmem:[%s330 + $0x130] sm:$0xff]
        %v550 = vld [vmem:[%s330 + $0x138] sm:$0xff]
        %v551 = vld [vmem:[%s330 + $0x140] sm:$0xff]
        %v552 = vld [vmem:[%s330 + $0x148] sm:$0xff]
        %v553 = vld [vmem:[%s330 + $0x150] sm:$0xff]
        %v554 = vld [vmem:[%s330 + $0x158] sm:$0xff]
        %v555 = vld [vmem:[%s330 + $0x160] sm:$0xff]
        %v556 = vld [vmem:[%s330 + $0x168] sm:$0xff]
        %v557 = vld [vmem:[%s330 + $0x170] sm:$0xff]
        %v558 = vld [vmem:[%s330 + $0x178] sm:$0xff]
        %v559 = vld [vmem:[%s330 + $0x180] sm:$0xff]
        %v560 = vld [vmem:[%s330 + $0x188] sm:$0xff]
        %v561 = vld [vmem:[%s330 + $0x190] sm:$0xff]
        %v562 = vld [vmem:[%s330 + $0x198] sm:$0xff]
        %v563 = vld [vmem:[%s330 + $0x1a0] sm:$0xff]
        %v564 = vld [vmem:[%s330 + $0x1a8] sm:$0xff]
        %v565 = vld [vmem:[%s330 + $0x1b0] sm:$0xff]
        %v566 = vld [vmem:[%s330 + $0x1b8] sm:$0xff]
        %v567 = vld [vmem:[%s330 + $0x1c0] sm:$0xff]
        %v568 = vld [vmem:[%s330 + $0x1c8] sm:$0xff]
        %v569 = vld [vmem:[%s330 + $0x1d0] sm:$0xff]
        %v570 = vld [vmem:[%s330 + $0x1d8] sm:$0xff]
        %v571 = vld [vmem:[%s330 + $0x1e0] sm:$0xff]
        %v572 = vld [vmem:[%s330 + $0x1e8] sm:$0xff]
        %v573 = vld [vmem:[%s330 + $0x1f0] sm:$0xff]
        %v574 = vld [vmem:[%s330 + $0x1f8] sm:$0xff]
        %s575 = scalar_lea.vmem [#allocation3], 24
        %vm576 = vcmask 31744
        %577 = vst.msk [vmem:[%s575 + $0x1] sm:$0xff] %vm576, %v511
        %578 = vst.msk [vmem:[%s575 + $0x9] sm:$0xff] %vm576, %v512
        %579 = vst.msk [vmem:[%s575 + $0x19] sm:$0xff] %vm576, %v513
        %580 = vst.msk [vmem:[%s575 + $0x21] sm:$0xff] %vm576, %v514
        %581 = vst.msk [vmem:[%s575 + $0x31] sm:$0xff] %vm576, %v515
        %582 = vst.msk [vmem:[%s575 + $0x39] sm:$0xff] %vm576, %v516
        %583 = vst.msk [vmem:[%s575 + $0x49] sm:$0xff] %vm576, %v517
        %584 = vst.msk [vmem:[%s575 + $0x51] sm:$0xff] %vm576, %v518
        %585 = vst.msk [vmem:[%s575 + $0x61] sm:$0xff] %vm576, %v519
        %586 = vst.msk [vmem:[%s575 + $0x69] sm:$0xff] %vm576, %v520
        %587 = vst.msk [vmem:[%s575 + $0x79] sm:$0xff] %vm576, %v521
        %588 = vst.msk [vmem:[%s575 + $0x81] sm:$0xff] %vm576, %v522
        %589 = vst.msk [vmem:[%s575 + $0x91] sm:$0xff] %vm576, %v523
        %590 = vst.msk [vmem:[%s575 + $0x99] sm:$0xff] %vm576, %v524
        %591 = vst.msk [vmem:[%s575 + $0xa9] sm:$0xff] %vm576, %v525
        %592 = vst.msk [vmem:[%s575 + $0xb1] sm:$0xff] %vm576, %v526
        %593 = vst.msk [vmem:[%s575 + $0xc1] sm:$0xff] %vm576, %v527
        %594 = vst.msk [vmem:[%s575 + $0xc9] sm:$0xff] %vm576, %v528
        %595 = vst.msk [vmem:[%s575 + $0xd9] sm:$0xff] %vm576, %v529
        %596 = vst.msk [vmem:[%s575 + $0xe1] sm:$0xff] %vm576, %v530
        %597 = vst.msk [vmem:[%s575 + $0xf1] sm:$0xff] %vm576, %v531
        %598 = vst.msk [vmem:[%s575 + $0xf9] sm:$0xff] %vm576, %v532
        %599 = vst.msk [vmem:[%s575 + $0x109] sm:$0xff] %vm576, %v533
        %600 = vst.msk [vmem:[%s575 + $0x111] sm:$0xff] %vm576, %v534
        %601 = vst.msk [vmem:[%s575 + $0x121] sm:$0xff] %vm576, %v535
        %602 = vst.msk [vmem:[%s575 + $0x129] sm:$0xff] %vm576, %v536
        %603 = vst.msk [vmem:[%s575 + $0x139] sm:$0xff] %vm576, %v537
        %604 = vst.msk [vmem:[%s575 + $0x141] sm:$0xff] %vm576, %v538
        %605 = vst.msk [vmem:[%s575 + $0x151] sm:$0xff] %vm576, %v539
        %606 = vst.msk [vmem:[%s575 + $0x159] sm:$0xff] %vm576, %v540
        %607 = vst.msk [vmem:[%s575 + $0x169] sm:$0xff] %vm576, %v541
        %608 = vst.msk [vmem:[%s575 + $0x171] sm:$0xff] %vm576, %v542
        %609 = vst.msk [vmem:[%s575 + $0x1b1] sm:$0xff] %vm576, %v543
        %610 = vst.msk [vmem:[%s575 + $0x1b9] sm:$0xff] %vm576, %v544
        %611 = vst.msk [vmem:[%s575 + $0x1c9] sm:$0xff] %vm576, %v545
        %612 = vst.msk [vmem:[%s575 + $0x1d1] sm:$0xff] %vm576, %v546
        %613 = vst.msk [vmem:[%s575 + $0x1e1] sm:$0xff] %vm576, %v547
        %614 = vst.msk [vmem:[%s575 + $0x1e9] sm:$0xff] %vm576, %v548
        %615 = vst.msk [vmem:[%s575 + $0x1f9] sm:$0xff] %vm576, %v549
        %616 = vst.msk [vmem:[%s575 + $0x201] sm:$0xff] %vm576, %v550
        %617 = vst.msk [vmem:[%s575 + $0x211] sm:$0xff] %vm576, %v551
        %618 = vst.msk [vmem:[%s575 + $0x219] sm:$0xff] %vm576, %v552
        %619 = vst.msk [vmem:[%s575 + $0x229] sm:$0xff] %vm576, %v553
        %620 = vst.msk [vmem:[%s575 + $0x231] sm:$0xff] %vm576, %v554
        %621 = vst.msk [vmem:[%s575 + $0x241] sm:$0xff] %vm576, %v555
        %622 = vst.msk [vmem:[%s575 + $0x249] sm:$0xff] %vm576, %v556
        %623 = vst.msk [vmem:[%s575 + $0x259] sm:$0xff] %vm576, %v557
        %624 = vst.msk [vmem:[%s575 + $0x261] sm:$0xff] %vm576, %v558
        %625 = vst.msk [vmem:[%s575 + $0x271] sm:$0xff] %vm576, %v559
        %626 = vst.msk [vmem:[%s575 + $0x279] sm:$0xff] %vm576, %v560
        %627 = vst.msk [vmem:[%s575 + $0x289] sm:$0xff] %vm576, %v561
        %628 = vst.msk [vmem:[%s575 + $0x291] sm:$0xff] %vm576, %v562
        %629 = vst.msk [vmem:[%s575 + $0x2a1] sm:$0xff] %vm576, %v563
        %630 = vst.msk [vmem:[%s575 + $0x2a9] sm:$0xff] %vm576, %v564
        %631 = vst.msk [vmem:[%s575 + $0x2b9] sm:$0xff] %vm576, %v565
        %632 = vst.msk [vmem:[%s575 + $0x2c1] sm:$0xff] %vm576, %v566
        %633 = vst.msk [vmem:[%s575 + $0x2d1] sm:$0xff] %vm576, %v567
        %634 = vst.msk [vmem:[%s575 + $0x2d9] sm:$0xff] %vm576, %v568
        %635 = vst.msk [vmem:[%s575 + $0x2e9] sm:$0xff] %vm576, %v569
        %636 = vst.msk [vmem:[%s575 + $0x2f1] sm:$0xff] %vm576, %v570
        %637 = vst.msk [vmem:[%s575 + $0x301] sm:$0xff] %vm576, %v571
        %638 = vst.msk [vmem:[%s575 + $0x309] sm:$0xff] %vm576, %v572
        %639 = vst.msk [vmem:[%s575 + $0x319] sm:$0xff] %vm576, %v573
        %640 = vst.msk [vmem:[%s575 + $0x321] sm:$0xff] %vm576, %v574
        %v641 = vld [vmem:[#allocation2] sm:$0xff]
        %v642 = vld [vmem:[#allocation2 + $0x8] sm:$0xff]
        %v643 = vld [vmem:[#allocation2 + $0x10] sm:$0xff]
        %v644 = vld [vmem:[#allocation2 + $0x18] sm:$0xff]
        %v645 = vld [vmem:[#allocation2 + $0x20] sm:$0xff]
        %v646 = vld [vmem:[#allocation2 + $0x28] sm:$0xff]
        %v647 = vld [vmem:[#allocation2 + $0x30] sm:$0xff]
        %v648 = vld [vmem:[#allocation2 + $0x38] sm:$0xff]
        %v649 = vld [vmem:[#allocation2 + $0x40] sm:$0xff]
        %v650 = vld [vmem:[#allocation2 + $0x48] sm:$0xff]
        %v651 = vld [vmem:[#allocation2 + $0x50] sm:$0xff]
        %v652 = vld [vmem:[#allocation2 + $0x58] sm:$0xff]
        %v653 = vld [vmem:[#allocation2 + $0x60] sm:$0xff]
        %v654 = vld [vmem:[#allocation2 + $0x68] sm:$0xff]
        %v655 = vld [vmem:[#allocation2 + $0x70] sm:$0xff]
        %v656 = vld [vmem:[#allocation2 + $0x78] sm:$0xff]
        %v657 = vld [vmem:[#allocation2 + $0x80] sm:$0xff]
        %v658 = vld [vmem:[#allocation2 + $0x88] sm:$0xff]
        %v659 = vld [vmem:[#allocation2 + $0x90] sm:$0xff]
        %v660 = vld [vmem:[#allocation2 + $0x98] sm:$0xff]
        %v661 = vld [vmem:[#allocation2 + $0xa0] sm:$0xff]
        %v662 = vld [vmem:[#allocation2 + $0xa8] sm:$0xff]
        %v663 = vld [vmem:[#allocation2 + $0xb0] sm:$0xff]
        %v664 = vld [vmem:[#allocation2 + $0xb8] sm:$0xff]
        %v665 = vld [vmem:[#allocation2 + $0xc0] sm:$0xff]
        %v666 = vld [vmem:[#allocation2 + $0xc8] sm:$0xff]
        %v667 = vld [vmem:[#allocation2 + $0xd0] sm:$0xff]
        %v668 = vld [vmem:[#allocation2 + $0xd8] sm:$0xff]
        %v669 = vld [vmem:[#allocation2 + $0xe0] sm:$0xff]
        %v670 = vld [vmem:[#allocation2 + $0xe8] sm:$0xff]
        %v671 = vld [vmem:[#allocation2 + $0xf0] sm:$0xff]
        %v672 = vld [vmem:[#allocation2 + $0xf8] sm:$0xff]
        %v673 = vld [vmem:[#allocation2 + $0x100] sm:$0xff]
        %v674 = vld [vmem:[#allocation2 + $0x108] sm:$0xff]
        %v675 = vld [vmem:[#allocation2 + $0x110] sm:$0xff]
        %v676 = vld [vmem:[#allocation2 + $0x118] sm:$0xff]
        %v677 = vld [vmem:[#allocation2 + $0x120] sm:$0xff]
        %v678 = vld [vmem:[#allocation2 + $0x128] sm:$0xff]
        %v679 = vld [vmem:[#allocation2 + $0x130] sm:$0xff]
        %v680 = vld [vmem:[#allocation2 + $0x138] sm:$0xff]
        %v681 = vld [vmem:[#allocation2 + $0x140] sm:$0xff]
        %v682 = vld [vmem:[#allocation2 + $0x148] sm:$0xff]
        %v683 = vld [vmem:[#allocation2 + $0x150] sm:$0xff]
        %v684 = vld [vmem:[#allocation2 + $0x158] sm:$0xff]
        %v685 = vld [vmem:[#allocation2 + $0x160] sm:$0xff]
        %v686 = vld [vmem:[#allocation2 + $0x168] sm:$0xff]
        %v687 = vld [vmem:[#allocation2 + $0x170] sm:$0xff]
        %v688 = vld [vmem:[#allocation2 + $0x178] sm:$0xff]
        %v689 = vld [vmem:[#allocation2 + $0x180] sm:$0xff]
        %v690 = vld [vmem:[#allocation2 + $0x188] sm:$0xff]
        %v691 = vld [vmem:[#allocation2 + $0x190] sm:$0xff]
        %v692 = vld [vmem:[#allocation2 + $0x198] sm:$0xff]
        %v693 = vld [vmem:[#allocation2 + $0x1a0] sm:$0xff]
        %v694 = vld [vmem:[#allocation2 + $0x1a8] sm:$0xff]
        %v695 = vld [vmem:[#allocation2 + $0x1b0] sm:$0xff]
        %v696 = vld [vmem:[#allocation2 + $0x1b8] sm:$0xff]
        %v697 = vld [vmem:[#allocation2 + $0x1c0] sm:$0xff]
        %v698 = vld [vmem:[#allocation2 + $0x1c8] sm:$0xff]
        %v699 = vld [vmem:[#allocation2 + $0x1d0] sm:$0xff]
        %v700 = vld [vmem:[#allocation2 + $0x1d8] sm:$0xff]
        %v701 = vld [vmem:[#allocation2 + $0x1e0] sm:$0xff]
        %v702 = vld [vmem:[#allocation2 + $0x1e8] sm:$0xff]
        %v703 = vld [vmem:[#allocation2 + $0x1f0] sm:$0xff]
        %v704 = vld [vmem:[#allocation2 + $0x1f8] sm:$0xff]
        %769 = vrot.lane.b32.xlu0 %v641, 4
        %v770 = vpop.permute.xlu0 %769
        %771 = vrot.lane.b32.xlu0 %v642, 4
        %v772 = vpop.permute.xlu0 %771
        %773 = vrot.lane.b32.xlu0 %v643, 4
        %v774 = vpop.permute.xlu0 %773
        %775 = vrot.lane.b32.xlu0 %v644, 4
        %v776 = vpop.permute.xlu0 %775
        %777 = vrot.lane.b32.xlu0 %v645, 4
        %v778 = vpop.permute.xlu0 %777
        %779 = vrot.lane.b32.xlu0 %v646, 4
        %v780 = vpop.permute.xlu0 %779
        %781 = vrot.lane.b32.xlu0 %v647, 4
        %v782 = vpop.permute.xlu0 %781
        %783 = vrot.lane.b32.xlu0 %v648, 4
        %v784 = vpop.permute.xlu0 %783
        %785 = vrot.lane.b32.xlu0 %v649, 4
        %v786 = vpop.permute.xlu0 %785
        %787 = vrot.lane.b32.xlu0 %v650, 4
        %v788 = vpop.permute.xlu0 %787
        %789 = vrot.lane.b32.xlu0 %v651, 4
        %v790 = vpop.permute.xlu0 %789
        %791 = vrot.lane.b32.xlu0 %v652, 4
        %v792 = vpop.permute.xlu0 %791
        %793 = vrot.lane.b32.xlu0 %v653, 4
        %v794 = vpop.permute.xlu0 %793
        %795 = vrot.lane.b32.xlu0 %v654, 4
        %v796 = vpop.permute.xlu0 %795
        %797 = vrot.lane.b32.xlu0 %v655, 4
        %v798 = vpop.permute.xlu0 %797
        %799 = vrot.lane.b32.xlu0 %v656, 4
        %v800 = vpop.permute.xlu0 %799
        %801 = vrot.lane.b32.xlu0 %v657, 4
        %v802 = vpop.permute.xlu0 %801
        %803 = vrot.lane.b32.xlu0 %v658, 4
        %v804 = vpop.permute.xlu0 %803
        %805 = vrot.lane.b32.xlu0 %v659, 4
        %v806 = vpop.permute.xlu0 %805
        %807 = vrot.lane.b32.xlu0 %v660, 4
        %v808 = vpop.permute.xlu0 %807
        %809 = vrot.lane.b32.xlu0 %v661, 4
        %v810 = vpop.permute.xlu0 %809
        %811 = vrot.lane.b32.xlu0 %v662, 4
        %v812 = vpop.permute.xlu0 %811
        %813 = vrot.lane.b32.xlu0 %v663, 4
        %v814 = vpop.permute.xlu0 %813
        %815 = vrot.lane.b32.xlu0 %v664, 4
        %v816 = vpop.permute.xlu0 %815
        %817 = vrot.lane.b32.xlu0 %v665, 4
        %v818 = vpop.permute.xlu0 %817
        %819 = vrot.lane.b32.xlu0 %v666, 4
        %v820 = vpop.permute.xlu0 %819
        %821 = vrot.lane.b32.xlu0 %v667, 4
        %v822 = vpop.permute.xlu0 %821
        %823 = vrot.lane.b32.xlu0 %v668, 4
        %v824 = vpop.permute.xlu0 %823
        %825 = vrot.lane.b32.xlu0 %v669, 4
        %v826 = vpop.permute.xlu0 %825
        %827 = vrot.lane.b32.xlu0 %v670, 4
        %v828 = vpop.permute.xlu0 %827
        %829 = vrot.lane.b32.xlu0 %v671, 4
        %v830 = vpop.permute.xlu0 %829
        %831 = vrot.lane.b32.xlu0 %v672, 4
        %v832 = vpop.permute.xlu0 %831
        %833 = vrot.lane.b32.xlu0 %v673, 4
        %v834 = vpop.permute.xlu0 %833
        %835 = vrot.lane.b32.xlu0 %v674, 4
        %v836 = vpop.permute.xlu0 %835
        %837 = vrot.lane.b32.xlu0 %v675, 4
        %v838 = vpop.permute.xlu0 %837
        %839 = vrot.lane.b32.xlu0 %v676, 4
        %v840 = vpop.permute.xlu0 %839
        %841 = vrot.lane.b32.xlu0 %v677, 4
        %v842 = vpop.permute.xlu0 %841
        %843 = vrot.lane.b32.xlu0 %v678, 4
        %v844 = vpop.permute.xlu0 %843
        %845 = vrot.lane.b32.xlu0 %v679, 4
        %v846 = vpop.permute.xlu0 %845
        %847 = vrot.lane.b32.xlu0 %v680, 4
        %v848 = vpop.permute.xlu0 %847
        %849 = vrot.lane.b32.xlu0 %v681, 4
        %v850 = vpop.permute.xlu0 %849
        %851 = vrot.lane.b32.xlu0 %v682, 4
        %v852 = vpop.permute.xlu0 %851
        %853 = vrot.lane.b32.xlu0 %v683, 4
        %v854 = vpop.permute.xlu0 %853
        %855 = vrot.lane.b32.xlu0 %v684, 4
        %v856 = vpop.permute.xlu0 %855
        %857 = vrot.lane.b32.xlu0 %v685, 4
        %v858 = vpop.permute.xlu0 %857
        %859 = vrot.lane.b32.xlu0 %v686, 4
        %v860 = vpop.permute.xlu0 %859
        %861 = vrot.lane.b32.xlu0 %v687, 4
        %v862 = vpop.permute.xlu0 %861
        %863 = vrot.lane.b32.xlu0 %v688, 4
        %v864 = vpop.permute.xlu0 %863
        %865 = vrot.lane.b32.xlu0 %v689, 4
        %v866 = vpop.permute.xlu0 %865
        %867 = vrot.lane.b32.xlu0 %v690, 4
        %v868 = vpop.permute.xlu0 %867
        %869 = vrot.lane.b32.xlu0 %v691, 4
        %v870 = vpop.permute.xlu0 %869
        %871 = vrot.lane.b32.xlu0 %v692, 4
        %v872 = vpop.permute.xlu0 %871
        %873 = vrot.lane.b32.xlu0 %v693, 4
        %v874 = vpop.permute.xlu0 %873
        %875 = vrot.lane.b32.xlu0 %v694, 4
        %v876 = vpop.permute.xlu0 %875
        %877 = vrot.lane.b32.xlu0 %v695, 4
        %v878 = vpop.permute.xlu0 %877
        %879 = vrot.lane.b32.xlu0 %v696, 4
        %v880 = vpop.permute.xlu0 %879
        %881 = vrot.lane.b32.xlu0 %v697, 4
        %v882 = vpop.permute.xlu0 %881
        %883 = vrot.lane.b32.xlu0 %v698, 4
        %v884 = vpop.permute.xlu0 %883
        %885 = vrot.lane.b32.xlu0 %v699, 4
        %v886 = vpop.permute.xlu0 %885
        %887 = vrot.lane.b32.xlu0 %v700, 4
        %v888 = vpop.permute.xlu0 %887
        %889 = vrot.lane.b32.xlu0 %v701, 4
        %v890 = vpop.permute.xlu0 %889
        %891 = vrot.lane.b32.xlu0 %v702, 4
        %v892 = vpop.permute.xlu0 %891
        %893 = vrot.lane.b32.xlu0 %v703, 4
        %v894 = vpop.permute.xlu0 %893
        %895 = vrot.lane.b32.xlu0 %v704, 4
        %v896 = vpop.permute.xlu0 %895
        %vm961 = vcmask 293920
        %962 = vst.msk [vmem:[%s575 + $0x1] sm:$0xff] %vm961, %v770
        %963 = vst.msk [vmem:[%s575 + $0x9] sm:$0xff] %vm961, %v772
        %964 = vst.msk [vmem:[%s575 + $0x19] sm:$0xff] %vm961, %v774
        %965 = vst.msk [vmem:[%s575 + $0x21] sm:$0xff] %vm961, %v776
        %966 = vst.msk [vmem:[%s575 + $0x31] sm:$0xff] %vm961, %v778
        %967 = vst.msk [vmem:[%s575 + $0x39] sm:$0xff] %vm961, %v780
        %968 = vst.msk [vmem:[%s575 + $0x49] sm:$0xff] %vm961, %v782
        %969 = vst.msk [vmem:[%s575 + $0x51] sm:$0xff] %vm961, %v784
        %970 = vst.msk [vmem:[%s575 + $0x61] sm:$0xff] %vm961, %v786
        %971 = vst.msk [vmem:[%s575 + $0x69] sm:$0xff] %vm961, %v788
        %972 = vst.msk [vmem:[%s575 + $0x79] sm:$0xff] %vm961, %v790
        %973 = vst.msk [vmem:[%s575 + $0x81] sm:$0xff] %vm961, %v792
        %974 = vst.msk [vmem:[%s575 + $0x91] sm:$0xff] %vm961, %v794
        %975 = vst.msk [vmem:[%s575 + $0x99] sm:$0xff] %vm961, %v796
        %976 = vst.msk [vmem:[%s575 + $0xa9] sm:$0xff] %vm961, %v798
        %977 = vst.msk [vmem:[%s575 + $0xb1] sm:$0xff] %vm961, %v800
        %978 = vst.msk [vmem:[%s575 + $0xc1] sm:$0xff] %vm961, %v802
        %979 = vst.msk [vmem:[%s575 + $0xc9] sm:$0xff] %vm961, %v804
        %980 = vst.msk [vmem:[%s575 + $0xd9] sm:$0xff] %vm961, %v806
        %981 = vst.msk [vmem:[%s575 + $0xe1] sm:$0xff] %vm961, %v808
        %982 = vst.msk [vmem:[%s575 + $0xf1] sm:$0xff] %vm961, %v810
        %983 = vst.msk [vmem:[%s575 + $0xf9] sm:$0xff] %vm961, %v812
        %984 = vst.msk [vmem:[%s575 + $0x109] sm:$0xff] %vm961, %v814
        %985 = vst.msk [vmem:[%s575 + $0x111] sm:$0xff] %vm961, %v816
        %986 = vst.msk [vmem:[%s575 + $0x121] sm:$0xff] %vm961, %v818
        %987 = vst.msk [vmem:[%s575 + $0x129] sm:$0xff] %vm961, %v820
        %988 = vst.msk [vmem:[%s575 + $0x139] sm:$0xff] %vm961, %v822
        %989 = vst.msk [vmem:[%s575 + $0x141] sm:$0xff] %vm961, %v824
        %990 = vst.msk [vmem:[%s575 + $0x151] sm:$0xff] %vm961, %v826
        %991 = vst.msk [vmem:[%s575 + $0x159] sm:$0xff] %vm961, %v828
        %992 = vst.msk [vmem:[%s575 + $0x169] sm:$0xff] %vm961, %v830
        %993 = vst.msk [vmem:[%s575 + $0x171] sm:$0xff] %vm961, %v832
        %994 = vst.msk [vmem:[%s575 + $0x1b1] sm:$0xff] %vm961, %v834
        %995 = vst.msk [vmem:[%s575 + $0x1b9] sm:$0xff] %vm961, %v836
        %996 = vst.msk [vmem:[%s575 + $0x1c9] sm:$0xff] %vm961, %v838
        %997 = vst.msk [vmem:[%s575 + $0x1d1] sm:$0xff] %vm961, %v840
        %998 = vst.msk [vmem:[%s575 + $0x1e1] sm:$0xff] %vm961, %v842
        %999 = vst.msk [vmem:[%s575 + $0x1e9] sm:$0xff] %vm961, %v844
        %1000 = vst.msk [vmem:[%s575 + $0x1f9] sm:$0xff] %vm961, %v846
        %1001 = vst.msk [vmem:[%s575 + $0x201] sm:$0xff] %vm961, %v848
        %1002 = vst.msk [vmem:[%s575 + $0x211] sm:$0xff] %vm961, %v850
        %1003 = vst.msk [vmem:[%s575 + $0x219] sm:$0xff] %vm961, %v852
        %1004 = vst.msk [vmem:[%s575 + $0x229] sm:$0xff] %vm961, %v854
        %1005 = vst.msk [vmem:[%s575 + $0x231] sm:$0xff] %vm961, %v856
        %1006 = vst.msk [vmem:[%s575 + $0x241] sm:$0xff] %vm961, %v858
        %1007 = vst.msk [vmem:[%s575 + $0x249] sm:$0xff] %vm961, %v860
        %1008 = vst.msk [vmem:[%s575 + $0x259] sm:$0xff] %vm961, %v862
        %1009 = vst.msk [vmem:[%s575 + $0x261] sm:$0xff] %vm961, %v864
        %1010 = vst.msk [vmem:[%s575 + $0x271] sm:$0xff] %vm961, %v866
        %1011 = vst.msk [vmem:[%s575 + $0x279] sm:$0xff] %vm961, %v868
        %1012 = vst.msk [vmem:[%s575 + $0x289] sm:$0xff] %vm961, %v870
        %1013 = vst.msk [vmem:[%s575 + $0x291] sm:$0xff] %vm961, %v872
        %1014 = vst.msk [vmem:[%s575 + $0x2a1] sm:$0xff] %vm961, %v874
        %1015 = vst.msk [vmem:[%s575 + $0x2a9] sm:$0xff] %vm961, %v876
        %1016 = vst.msk [vmem:[%s575 + $0x2b9] sm:$0xff] %vm961, %v878
        %1017 = vst.msk [vmem:[%s575 + $0x2c1] sm:$0xff] %vm961, %v880
        %1018 = vst.msk [vmem:[%s575 + $0x2d1] sm:$0xff] %vm961, %v882
        %1019 = vst.msk [vmem:[%s575 + $0x2d9] sm:$0xff] %vm961, %v884
        %1020 = vst.msk [vmem:[%s575 + $0x2e9] sm:$0xff] %vm961, %v886
        %1021 = vst.msk [vmem:[%s575 + $0x2f1] sm:$0xff] %vm961, %v888
        %1022 = vst.msk [vmem:[%s575 + $0x301] sm:$0xff] %vm961, %v890
        %1023 = vst.msk [vmem:[%s575 + $0x309] sm:$0xff] %vm961, %v892
        %1024 = vst.msk [vmem:[%s575 + $0x319] sm:$0xff] %vm961, %v894
        %1025 = vst.msk [vmem:[%s575 + $0x321] sm:$0xff] %vm961, %v896
        %v1026 = vld [vmem:[#allocation3] sm:$0xff]
        %v1027 = vld [vmem:[#allocation3 + $0x8] sm:$0xff]
        %v1028 = vld [vmem:[#allocation3 + $0x18] sm:$0xff]
        %v1029 = vld [vmem:[#allocation3 + $0x20] sm:$0xff]
        %v1030 = vld [vmem:[#allocation3 + $0x30] sm:$0xff]
        %v1031 = vld [vmem:[#allocation3 + $0x38] sm:$0xff]
        %v1032 = vld [vmem:[#allocation3 + $0x48] sm:$0xff]
        %v1033 = vld [vmem:[#allocation3 + $0x50] sm:$0xff]
        %v1034 = vld [vmem:[#allocation3 + $0x60] sm:$0xff]
        %v1035 = vld [vmem:[#allocation3 + $0x68] sm:$0xff]
        %v1036 = vld [vmem:[#allocation3 + $0x78] sm:$0xff]
        %v1037 = vld [vmem:[#allocation3 + $0x80] sm:$0xff]
        %v1038 = vld [vmem:[#allocation3 + $0x90] sm:$0xff]
        %v1039 = vld [vmem:[#allocation3 + $0x98] sm:$0xff]
        %v1040 = vld [vmem:[#allocation3 + $0xa8] sm:$0xff]
        %v1041 = vld [vmem:[#allocation3 + $0xb0] sm:$0xff]
        %v1042 = vld [vmem:[#allocation3 + $0xc0] sm:$0xff]
        %v1043 = vld [vmem:[#allocation3 + $0xc8] sm:$0xff]
        %v1044 = vld [vmem:[#allocation3 + $0xd8] sm:$0xff]
        %v1045 = vld [vmem:[#allocation3 + $0xe0] sm:$0xff]
        %v1046 = vld [vmem:[#allocation3 + $0xf0] sm:$0xff]
        %v1047 = vld [vmem:[#allocation3 + $0xf8] sm:$0xff]
        %v1048 = vld [vmem:[#allocation3 + $0x108] sm:$0xff]
        %v1049 = vld [vmem:[#allocation3 + $0x110] sm:$0xff]
        %v1050 = vld [vmem:[#allocation3 + $0x120] sm:$0xff]
        %v1051 = vld [vmem:[#allocation3 + $0x128] sm:$0xff]
        %v1052 = vld [vmem:[#allocation3 + $0x138] sm:$0xff]
        %v1053 = vld [vmem:[#allocation3 + $0x140] sm:$0xff]
        %v1054 = vld [vmem:[#allocation3 + $0x150] sm:$0xff]
        %v1055 = vld [vmem:[#allocation3 + $0x158] sm:$0xff]
        %v1056 = vld [vmem:[#allocation3 + $0x168] sm:$0xff]
        %v1057 = vld [vmem:[#allocation3 + $0x170] sm:$0xff]
        %v1058 = vld [vmem:[#allocation3 + $0x1b0] sm:$0xff]
        %v1059 = vld [vmem:[#allocation3 + $0x1b8] sm:$0xff]
        %v1060 = vld [vmem:[#allocation3 + $0x1c8] sm:$0xff]
        %v1061 = vld [vmem:[#allocation3 + $0x1d0] sm:$0xff]
        %v1062 = vld [vmem:[#allocation3 + $0x1e0] sm:$0xff]
        %v1063 = vld [vmem:[#allocation3 + $0x1e8] sm:$0xff]
        %v1064 = vld [vmem:[#allocation3 + $0x1f8] sm:$0xff]
        %v1065 = vld [vmem:[#allocation3 + $0x200] sm:$0xff]
        %v1066 = vld [vmem:[#allocation3 + $0x210] sm:$0xff]
        %v1067 = vld [vmem:[#allocation3 + $0x218] sm:$0xff]
        %v1068 = vld [vmem:[#allocation3 + $0x228] sm:$0xff]
        %v1069 = vld [vmem:[#allocation3 + $0x230] sm:$0xff]
        %v1070 = vld [vmem:[#allocation3 + $0x240] sm:$0xff]
        %v1071 = vld [vmem:[#allocation3 + $0x248] sm:$0xff]
        %v1072 = vld [vmem:[#allocation3 + $0x258] sm:$0xff]
        %v1073 = vld [vmem:[#allocation3 + $0x260] sm:$0xff]
        %v1074 = vld [vmem:[#allocation3 + $0x270] sm:$0xff]
        %v1075 = vld [vmem:[#allocation3 + $0x278] sm:$0xff]
        %v1076 = vld [vmem:[#allocation3 + $0x288] sm:$0xff]
        %v1077 = vld [vmem:[#allocation3 + $0x290] sm:$0xff]
        %v1078 = vld [vmem:[#allocation3 + $0x2a0] sm:$0xff]
        %v1079 = vld [vmem:[#allocation3 + $0x2a8] sm:$0xff]
        %v1080 = vld [vmem:[#allocation3 + $0x2b8] sm:$0xff]
        %v1081 = vld [vmem:[#allocation3 + $0x2c0] sm:$0xff]
        %v1082 = vld [vmem:[#allocation3 + $0x2d0] sm:$0xff]
        %v1083 = vld [vmem:[#allocation3 + $0x2d8] sm:$0xff]
        %v1084 = vld [vmem:[#allocation3 + $0x2e8] sm:$0xff]
        %v1085 = vld [vmem:[#allocation3 + $0x2f0] sm:$0xff]
        %v1086 = vld [vmem:[#allocation3 + $0x300] sm:$0xff]
        %v1087 = vld [vmem:[#allocation3 + $0x308] sm:$0xff]
        %v1088 = vld [vmem:[#allocation3 + $0x318] sm:$0xff]
        %v1089 = vld [vmem:[#allocation3 + $0x320] sm:$0xff]
        %v1090 = vpack.c.bf16 %v1027, %v1026
        %v1091 = vpack.c.bf16 %v1029, %v1028
        %v1092 = vpack.c.bf16 %v1031, %v1030
        %v1093 = vpack.c.bf16 %v1033, %v1032
        %v1094 = vpack.c.bf16 %v1035, %v1034
        %v1095 = vpack.c.bf16 %v1037, %v1036
        %v1096 = vpack.c.bf16 %v1039, %v1038
        %v1097 = vpack.c.bf16 %v1041, %v1040
        %v1098 = vpack.c.bf16 %v1043, %v1042
        %v1099 = vpack.c.bf16 %v1045, %v1044
        %v1100 = vpack.c.bf16 %v1047, %v1046
        %v1101 = vpack.c.bf16 %v1049, %v1048
        %v1102 = vpack.c.bf16 %v1051, %v1050
        %v1103 = vpack.c.bf16 %v1053, %v1052
        %v1104 = vpack.c.bf16 %v1055, %v1054
        %v1105 = vpack.c.bf16 %v1057, %v1056
        %v1106 = vpack.c.bf16 %v1059, %v1058
        %v1107 = vpack.c.bf16 %v1061, %v1060
        %v1108 = vpack.c.bf16 %v1063, %v1062
        %v1109 = vpack.c.bf16 %v1065, %v1064
        %v1110 = vpack.c.bf16 %v1067, %v1066
        %v1111 = vpack.c.bf16 %v1069, %v1068
        %v1112 = vpack.c.bf16 %v1071, %v1070
        %v1113 = vpack.c.bf16 %v1073, %v1072
        %v1114 = vpack.c.bf16 %v1075, %v1074
        %v1115 = vpack.c.bf16 %v1077, %v1076
        %v1116 = vpack.c.bf16 %v1079, %v1078
        %v1117 = vpack.c.bf16 %v1081, %v1080
        %v1118 = vpack.c.bf16 %v1083, %v1082
        %v1119 = vpack.c.bf16 %v1085, %v1084
        %v1120 = vpack.c.bf16 %v1087, %v1086
        %v1121 = vpack.c.bf16 %v1089, %v1088
        %v1122 = vld [vmem:[#allocation3 + $0x1] sm:$0xff]
        %v1123 = vld [vmem:[#allocation3 + $0x9] sm:$0xff]
        %v1124 = vld [vmem:[#allocation3 + $0x19] sm:$0xff]
        %v1125 = vld [vmem:[#allocation3 + $0x21] sm:$0xff]
        %v1126 = vld [vmem:[#allocation3 + $0x31] sm:$0xff]
        %v1127 = vld [vmem:[#allocation3 + $0x39] sm:$0xff]
        %v1128 = vld [vmem:[#allocation3 + $0x49] sm:$0xff]
        %v1129 = vld [vmem:[#allocation3 + $0x51] sm:$0xff]
        %v1130 = vld [vmem:[#allocation3 + $0x61] sm:$0xff]
        %v1131 = vld [vmem:[#allocation3 + $0x69] sm:$0xff]
        %v1132 = vld [vmem:[#allocation3 + $0x79] sm:$0xff]
        %v1133 = vld [vmem:[#allocation3 + $0x81] sm:$0xff]
        %v1134 = vld [vmem:[#allocation3 + $0x91] sm:$0xff]
        %v1135 = vld [vmem:[#allocation3 + $0x99] sm:$0xff]
        %v1136 = vld [vmem:[#allocation3 + $0xa9] sm:$0xff]
        %v1137 = vld [vmem:[#allocation3 + $0xb1] sm:$0xff]
        %v1138 = vld [vmem:[#allocation3 + $0xc1] sm:$0xff]
        %v1139 = vld [vmem:[#allocation3 + $0xc9] sm:$0xff]
        %v1140 = vld [vmem:[#allocation3 + $0xd9] sm:$0xff]
        %v1141 = vld [vmem:[#allocation3 + $0xe1] sm:$0xff]
        %v1142 = vld [vmem:[#allocation3 + $0xf1] sm:$0xff]
        %v1143 = vld [vmem:[#allocation3 + $0xf9] sm:$0xff]
        %v1144 = vld [vmem:[#allocation3 + $0x109] sm:$0xff]
        %v1145 = vld [vmem:[#allocation3 + $0x111] sm:$0xff]
        %v1146 = vld [vmem:[#allocation3 + $0x121] sm:$0xff]
        %v1147 = vld [vmem:[#allocation3 + $0x129] sm:$0xff]
        %v1148 = vld [vmem:[#allocation3 + $0x139] sm:$0xff]
        %v1149 = vld [vmem:[#allocation3 + $0x141] sm:$0xff]
        %v1150 = vld [vmem:[#allocation3 + $0x151] sm:$0xff]
        %v1151 = vld [vmem:[#allocation3 + $0x159] sm:$0xff]
        %v1152 = vld [vmem:[#allocation3 + $0x169] sm:$0xff]
        %v1153 = vld [vmem:[#allocation3 + $0x171] sm:$0xff]
        %v1154 = vld [vmem:[#allocation3 + $0x1b1] sm:$0xff]
        %v1155 = vld [vmem:[#allocation3 + $0x1b9] sm:$0xff]
        %v1156 = vld [vmem:[#allocation3 + $0x1c9] sm:$0xff]
        %v1157 = vld [vmem:[#allocation3 + $0x1d1] sm:$0xff]
        %v1158 = vld [vmem:[#allocation3 + $0x1e1] sm:$0xff]
        %v1159 = vld [vmem:[#allocation3 + $0x1e9] sm:$0xff]
        %v1160 = vld [vmem:[#allocation3 + $0x1f9] sm:$0xff]
        %v1161 = vld [vmem:[#allocation3 + $0x201] sm:$0xff]
        %v1162 = vld [vmem:[#allocation3 + $0x211] sm:$0xff]
        %v1163 = vld [vmem:[#allocation3 + $0x219] sm:$0xff]
        %v1164 = vld [vmem:[#allocation3 + $0x229] sm:$0xff]
        %v1165 = vld [vmem:[#allocation3 + $0x231] sm:$0xff]
        %v1166 = vld [vmem:[#allocation3 + $0x241] sm:$0xff]
        %v1167 = vld [vmem:[#allocation3 + $0x249] sm:$0xff]
        %v1168 = vld [vmem:[#allocation3 + $0x259] sm:$0xff]
        %v1169 = vld [vmem:[#allocation3 + $0x261] sm:$0xff]
        %v1170 = vld [vmem:[#allocation3 + $0x271] sm:$0xff]
        %v1171 = vld [vmem:[#allocation3 + $0x279] sm:$0xff]
        %v1172 = vld [vmem:[#allocation3 + $0x289] sm:$0xff]
        %v1173 = vld [vmem:[#allocation3 + $0x291] sm:$0xff]
        %v1174 = vld [vmem:[#allocation3 + $0x2a1] sm:$0xff]
        %v1175 = vld [vmem:[#allocation3 + $0x2a9] sm:$0xff]
        %v1176 = vld [vmem:[#allocation3 + $0x2b9] sm:$0xff]
        %v1177 = vld [vmem:[#allocation3 + $0x2c1] sm:$0xff]
        %v1178 = vld [vmem:[#allocation3 + $0x2d1] sm:$0xff]
        %v1179 = vld [vmem:[#allocation3 + $0x2d9] sm:$0xff]
        %v1180 = vld [vmem:[#allocation3 + $0x2e9] sm:$0xff]
        %v1181 = vld [vmem:[#allocation3 + $0x2f1] sm:$0xff]
        %v1182 = vld [vmem:[#allocation3 + $0x301] sm:$0xff]
        %v1183 = vld [vmem:[#allocation3 + $0x309] sm:$0xff]
        %v1184 = vld [vmem:[#allocation3 + $0x319] sm:$0xff]
        %v1185 = vld [vmem:[#allocation3 + $0x321] sm:$0xff]
        %v1186 = vpack.c.bf16 %v1123, %v1122
        %v1187 = vpack.c.bf16 %v1125, %v1124
        %v1188 = vpack.c.bf16 %v1127, %v1126
        %v1189 = vpack.c.bf16 %v1129, %v1128
        %v1190 = vpack.c.bf16 %v1131, %v1130
        %v1191 = vpack.c.bf16 %v1133, %v1132
        %v1192 = vpack.c.bf16 %v1135, %v1134
        %v1193 = vpack.c.bf16 %v1137, %v1136
        %v1194 = vpack.c.bf16 %v1139, %v1138
        %v1195 = vpack.c.bf16 %v1141, %v1140
        %v1196 = vpack.c.bf16 %v1143, %v1142
        %v1197 = vpack.c.bf16 %v1145, %v1144
        %v1198 = vpack.c.bf16 %v1147, %v1146
        %v1199 = vpack.c.bf16 %v1149, %v1148
        %v1200 = vpack.c.bf16 %v1151, %v1150
        %v1201 = vpack.c.bf16 %v1153, %v1152
        %v1202 = vpack.c.bf16 %v1155, %v1154
        %v1203 = vpack.c.bf16 %v1157, %v1156
        %v1204 = vpack.c.bf16 %v1159, %v1158
        %v1205 = vpack.c.bf16 %v1161, %v1160
        %v1206 = vpack.c.bf16 %v1163, %v1162
        %v1207 = vpack.c.bf16 %v1165, %v1164
        %v1208 = vpack.c.bf16 %v1167, %v1166
        %v1209 = vpack.c.bf16 %v1169, %v1168
        %v1210 = vpack.c.bf16 %v1171, %v1170
        %v1211 = vpack.c.bf16 %v1173, %v1172
        %v1212 = vpack.c.bf16 %v1175, %v1174
        %v1213 = vpack.c.bf16 %v1177, %v1176
        %v1214 = vpack.c.bf16 %v1179, %v1178
        %v1215 = vpack.c.bf16 %v1181, %v1180
        %v1216 = vpack.c.bf16 %v1183, %v1182
        %v1217 = vpack.c.bf16 %v1185, %v1184
        %v1218 = vld [vmem:[#allocation3 + $0x2] sm:$0xff]
        %v1219 = vld [vmem:[#allocation3 + $0xa] sm:$0xff]
        %v1220 = vld [vmem:[#allocation3 + $0x1a] sm:$0xff]
        %v1221 = vld [vmem:[#allocation3 + $0x22] sm:$0xff]
        %v1222 = vld [vmem:[#allocation3 + $0x32] sm:$0xff]
        %v1223 = vld [vmem:[#allocation3 + $0x3a] sm:$0xff]
        %v1224 = vld [vmem:[#allocation3 + $0x4a] sm:$0xff]
        %v1225 = vld [vmem:[#allocation3 + $0x52] sm:$0xff]
        %v1226 = vld [vmem:[#allocation3 + $0x62] sm:$0xff]
        %v1227 = vld [vmem:[#allocation3 + $0x6a] sm:$0xff]
        %v1228 = vld [vmem:[#allocation3 + $0x7a] sm:$0xff]
        %v1229 = vld [vmem:[#allocation3 + $0x82] sm:$0xff]
        %v1230 = vld [vmem:[#allocation3 + $0x92] sm:$0xff]
        %v1231 = vld [vmem:[#allocation3 + $0x9a] sm:$0xff]
        %v1232 = vld [vmem:[#allocation3 + $0xaa] sm:$0xff]
        %v1233 = vld [vmem:[#allocation3 + $0xb2] sm:$0xff]
        %v1234 = vld [vmem:[#allocation3 + $0xc2] sm:$0xff]
        %v1235 = vld [vmem:[#allocation3 + $0xca] sm:$0xff]
        %v1236 = vld [vmem:[#allocation3 + $0xda] sm:$0xff]
        %v1237 = vld [vmem:[#allocation3 + $0xe2] sm:$0xff]
        %v1238 = vld [vmem:[#allocation3 + $0xf2] sm:$0xff]
        %v1239 = vld [vmem:[#allocation3 + $0xfa] sm:$0xff]
        %v1240 = vld [vmem:[#allocation3 + $0x10a] sm:$0xff]
        %v1241 = vld [vmem:[#allocation3 + $0x112] sm:$0xff]
        %v1242 = vld [vmem:[#allocation3 + $0x122] sm:$0xff]
        %v1243 = vld [vmem:[#allocation3 + $0x12a] sm:$0xff]
        %v1244 = vld [vmem:[#allocation3 + $0x13a] sm:$0xff]
        %v1245 = vld [vmem:[#allocation3 + $0x142] sm:$0xff]
        %v1246 = vld [vmem:[#allocation3 + $0x152] sm:$0xff]
        %v1247 = vld [vmem:[#allocation3 + $0x15a] sm:$0xff]
        %v1248 = vld [vmem:[#allocation3 + $0x16a] sm:$0xff]
        %v1249 = vld [vmem:[#allocation3 + $0x172] sm:$0xff]
        %v1250 = vld [vmem:[#allocation3 + $0x1b2] sm:$0xff]
        %v1251 = vld [vmem:[#allocation3 + $0x1ba] sm:$0xff]
        %v1252 = vld [vmem:[#allocation3 + $0x1ca] sm:$0xff]
        %v1253 = vld [vmem:[#allocation3 + $0x1d2] sm:$0xff]
        %v1254 = vld [vmem:[#allocation3 + $0x1e2] sm:$0xff]
        %v1255 = vld [vmem:[#allocation3 + $0x1ea] sm:$0xff]
        %v1256 = vld [vmem:[#allocation3 + $0x1fa] sm:$0xff]
        %v1257 = vld [vmem:[#allocation3 + $0x202] sm:$0xff]
        %v1258 = vld [vmem:[#allocation3 + $0x212] sm:$0xff]
        %v1259 = vld [vmem:[#allocation3 + $0x21a] sm:$0xff]
        %v1260 = vld [vmem:[#allocation3 + $0x22a] sm:$0xff]
        %v1261 = vld [vmem:[#allocation3 + $0x232] sm:$0xff]
        %v1262 = vld [vmem:[#allocation3 + $0x242] sm:$0xff]
        %v1263 = vld [vmem:[#allocation3 + $0x24a] sm:$0xff]
        %v1264 = vld [vmem:[#allocation3 + $0x25a] sm:$0xff]
        %v1265 = vld [vmem:[#allocation3 + $0x262] sm:$0xff]
        %v1266 = vld [vmem:[#allocation3 + $0x272] sm:$0xff]
        %v1267 = vld [vmem:[#allocation3 + $0x27a] sm:$0xff]
        %v1268 = vld [vmem:[#allocation3 + $0x28a] sm:$0xff]
        %v1269 = vld [vmem:[#allocation3 + $0x292] sm:$0xff]
        %v1270 = vld [vmem:[#allocation3 + $0x2a2] sm:$0xff]
        %v1271 = vld [vmem:[#allocation3 + $0x2aa] sm:$0xff]
        %v1272 = vld [vmem:[#allocation3 + $0x2ba] sm:$0xff]
        %v1273 = vld [vmem:[#allocation3 + $0x2c2] sm:$0xff]
        %v1274 = vld [vmem:[#allocation3 + $0x2d2] sm:$0xff]
        %v1275 = vld [vmem:[#allocation3 + $0x2da] sm:$0xff]
        %v1276 = vld [vmem:[#allocation3 + $0x2ea] sm:$0xff]
        %v1277 = vld [vmem:[#allocation3 + $0x2f2] sm:$0xff]
        %v1278 = vld [vmem:[#allocation3 + $0x302] sm:$0xff]
        %v1279 = vld [vmem:[#allocation3 + $0x30a] sm:$0xff]
        %v1280 = vld [vmem:[#allocation3 + $0x31a] sm:$0xff]
        %v1281 = vld [vmem:[#allocation3 + $0x322] sm:$0xff]
        %v1282 = vpack.c.bf16 %v1219, %v1218
        %v1283 = vpack.c.bf16 %v1221, %v1220
        %v1284 = vpack.c.bf16 %v1223, %v1222
        %v1285 = vpack.c.bf16 %v1225, %v1224
        %v1286 = vpack.c.bf16 %v1227, %v1226
        %v1287 = vpack.c.bf16 %v1229, %v1228
        %v1288 = vpack.c.bf16 %v1231, %v1230
        %v1289 = vpack.c.bf16 %v1233, %v1232
        %v1290 = vpack.c.bf16 %v1235, %v1234
        %v1291 = vpack.c.bf16 %v1237, %v1236
        %v1292 = vpack.c.bf16 %v1239, %v1238
        %v1293 = vpack.c.bf16 %v1241, %v1240
        %v1294 = vpack.c.bf16 %v1243, %v1242
        %v1295 = vpack.c.bf16 %v1245, %v1244
        %v1296 = vpack.c.bf16 %v1247, %v1246
        %v1297 = vpack.c.bf16 %v1249, %v1248
        %v1298 = vpack.c.bf16 %v1251, %v1250
        %v1299 = vpack.c.bf16 %v1253, %v1252
        %v1300 = vpack.c.bf16 %v1255, %v1254
        %v1301 = vpack.c.bf16 %v1257, %v1256
        %v1302 = vpack.c.bf16 %v1259, %v1258
        %v1303 = vpack.c.bf16 %v1261, %v1260
        %v1304 = vpack.c.bf16 %v1263, %v1262
        %v1305 = vpack.c.bf16 %v1265, %v1264
        %v1306 = vpack.c.bf16 %v1267, %v1266
        %v1307 = vpack.c.bf16 %v1269, %v1268
        %v1308 = vpack.c.bf16 %v1271, %v1270
        %v1309 = vpack.c.bf16 %v1273, %v1272
        %v1310 = vpack.c.bf16 %v1275, %v1274
        %v1311 = vpack.c.bf16 %v1277, %v1276
        %v1312 = vpack.c.bf16 %v1279, %v1278
        %v1313 = vpack.c.bf16 %v1281, %v1280
        %v1314 = vld [vmem:[%s575] sm:$0xff]
        %v1315 = vld [vmem:[%s575 + $0x8] sm:$0xff]
        %v1316 = vld [vmem:[%s575 + $0x18] sm:$0xff]
        %v1317 = vld [vmem:[%s575 + $0x20] sm:$0xff]
        %v1318 = vld [vmem:[%s575 + $0x30] sm:$0xff]
        %v1319 = vld [vmem:[%s575 + $0x38] sm:$0xff]
        %v1320 = vld [vmem:[%s575 + $0x48] sm:$0xff]
        %v1321 = vld [vmem:[%s575 + $0x50] sm:$0xff]
        %v1322 = vld [vmem:[%s575 + $0x60] sm:$0xff]
        %v1323 = vld [vmem:[%s575 + $0x68] sm:$0xff]
        %v1324 = vld [vmem:[%s575 + $0x78] sm:$0xff]
        %v1325 = vld [vmem:[%s575 + $0x80] sm:$0xff]
        %v1326 = vld [vmem:[%s575 + $0x90] sm:$0xff]
        %v1327 = vld [vmem:[%s575 + $0x98] sm:$0xff]
        %v1328 = vld [vmem:[%s575 + $0xa8] sm:$0xff]
        %v1329 = vld [vmem:[%s575 + $0xb0] sm:$0xff]
        %v1330 = vld [vmem:[%s575 + $0xc0] sm:$0xff]
        %v1331 = vld [vmem:[%s575 + $0xc8] sm:$0xff]
        %v1332 = vld [vmem:[%s575 + $0xd8] sm:$0xff]
        %v1333 = vld [vmem:[%s575 + $0xe0] sm:$0xff]
        %v1334 = vld [vmem:[%s575 + $0xf0] sm:$0xff]
        %v1335 = vld [vmem:[%s575 + $0xf8] sm:$0xff]
        %v1336 = vld [vmem:[%s575 + $0x108] sm:$0xff]
        %v1337 = vld [vmem:[%s575 + $0x110] sm:$0xff]
        %v1338 = vld [vmem:[%s575 + $0x120] sm:$0xff]
        %v1339 = vld [vmem:[%s575 + $0x128] sm:$0xff]
        %v1340 = vld [vmem:[%s575 + $0x138] sm:$0xff]
        %v1341 = vld [vmem:[%s575 + $0x140] sm:$0xff]
        %v1342 = vld [vmem:[%s575 + $0x150] sm:$0xff]
        %v1343 = vld [vmem:[%s575 + $0x158] sm:$0xff]
        %v1344 = vld [vmem:[%s575 + $0x168] sm:$0xff]
        %v1345 = vld [vmem:[%s575 + $0x170] sm:$0xff]
        %v1346 = vld [vmem:[%s575 + $0x1b0] sm:$0xff]
        %v1347 = vld [vmem:[%s575 + $0x1b8] sm:$0xff]
        %v1348 = vld [vmem:[%s575 + $0x1c8] sm:$0xff]
        %v1349 = vld [vmem:[%s575 + $0x1d0] sm:$0xff]
        %v1350 = vld [vmem:[%s575 + $0x1e0] sm:$0xff]
        %v1351 = vld [vmem:[%s575 + $0x1e8] sm:$0xff]
        %v1352 = vld [vmem:[%s575 + $0x1f8] sm:$0xff]
        %v1353 = vld [vmem:[%s575 + $0x200] sm:$0xff]
        %v1354 = vld [vmem:[%s575 + $0x210] sm:$0xff]
        %v1355 = vld [vmem:[%s575 + $0x218] sm:$0xff]
        %v1356 = vld [vmem:[%s575 + $0x228] sm:$0xff]
        %v1357 = vld [vmem:[%s575 + $0x230] sm:$0xff]
        %v1358 = vld [vmem:[%s575 + $0x240] sm:$0xff]
        %v1359 = vld [vmem:[%s575 + $0x248] sm:$0xff]
        %v1360 = vld [vmem:[%s575 + $0x258] sm:$0xff]
        %v1361 = vld [vmem:[%s575 + $0x260] sm:$0xff]
        %v1362 = vld [vmem:[%s575 + $0x270] sm:$0xff]
        %v1363 = vld [vmem:[%s575 + $0x278] sm:$0xff]
        %v1364 = vld [vmem:[%s575 + $0x288] sm:$0xff]
        %v1365 = vld [vmem:[%s575 + $0x290] sm:$0xff]
        %v1366 = vld [vmem:[%s575 + $0x2a0] sm:$0xff]
        %v1367 = vld [vmem:[%s575 + $0x2a8] sm:$0xff]
        %v1368 = vld [vmem:[%s575 + $0x2b8] sm:$0xff]
        %v1369 = vld [vmem:[%s575 + $0x2c0] sm:$0xff]
        %v1370 = vld [vmem:[%s575 + $0x2d0] sm:$0xff]
        %v1371 = vld [vmem:[%s575 + $0x2d8] sm:$0xff]
        %v1372 = vld [vmem:[%s575 + $0x2e8] sm:$0xff]
        %v1373 = vld [vmem:[%s575 + $0x2f0] sm:$0xff]
        %v1374 = vld [vmem:[%s575 + $0x300] sm:$0xff]
        %v1375 = vld [vmem:[%s575 + $0x308] sm:$0xff]
        %v1376 = vld [vmem:[%s575 + $0x318] sm:$0xff]
        %v1377 = vld [vmem:[%s575 + $0x320] sm:$0xff]
        %v1378 = vpack.c.bf16 %v1315, %v1314
        %v1379 = vpack.c.bf16 %v1317, %v1316
        %v1380 = vpack.c.bf16 %v1319, %v1318
        %v1381 = vpack.c.bf16 %v1321, %v1320
        %v1382 = vpack.c.bf16 %v1323, %v1322
        %v1383 = vpack.c.bf16 %v1325, %v1324
        %v1384 = vpack.c.bf16 %v1327, %v1326
        %v1385 = vpack.c.bf16 %v1329, %v1328
        %v1386 = vpack.c.bf16 %v1331, %v1330
        %v1387 = vpack.c.bf16 %v1333, %v1332
        %v1388 = vpack.c.bf16 %v1335, %v1334
        %v1389 = vpack.c.bf16 %v1337, %v1336
        %v1390 = vpack.c.bf16 %v1339, %v1338
        %v1391 = vpack.c.bf16 %v1341, %v1340
        %v1392 = vpack.c.bf16 %v1343, %v1342
        %v1393 = vpack.c.bf16 %v1345, %v1344
        %v1394 = vpack.c.bf16 %v1347, %v1346
        %v1395 = vpack.c.bf16 %v1349, %v1348
        %v1396 = vpack.c.bf16 %v1351, %v1350
        %v1397 = vpack.c.bf16 %v1353, %v1352
        %v1398 = vpack.c.bf16 %v1355, %v1354
        %v1399 = vpack.c.bf16 %v1357, %v1356
        %v1400 = vpack.c.bf16 %v1359, %v1358
        %v1401 = vpack.c.bf16 %v1361, %v1360
        %v1402 = vpack.c.bf16 %v1363, %v1362
        %v1403 = vpack.c.bf16 %v1365, %v1364
        %v1404 = vpack.c.bf16 %v1367, %v1366
        %v1405 = vpack.c.bf16 %v1369, %v1368
        %v1406 = vpack.c.bf16 %v1371, %v1370
        %v1407 = vpack.c.bf16 %v1373, %v1372
        %v1408 = vpack.c.bf16 %v1375, %v1374
        %v1409 = vpack.c.bf16 %v1377, %v1376
        %v1410 = vld [vmem:[%s575 + $0x1] sm:$0xff]
        %v1411 = vld [vmem:[%s575 + $0x9] sm:$0xff]
        %v1412 = vld [vmem:[%s575 + $0x19] sm:$0xff]
        %v1413 = vld [vmem:[%s575 + $0x21] sm:$0xff]
        %v1414 = vld [vmem:[%s575 + $0x31] sm:$0xff]
        %v1415 = vld [vmem:[%s575 + $0x39] sm:$0xff]
        %v1416 = vld [vmem:[%s575 + $0x49] sm:$0xff]
        %v1417 = vld [vmem:[%s575 + $0x51] sm:$0xff]
        %v1418 = vld [vmem:[%s575 + $0x61] sm:$0xff]
        %v1419 = vld [vmem:[%s575 + $0x69] sm:$0xff]
        %v1420 = vld [vmem:[%s575 + $0x79] sm:$0xff]
        %v1421 = vld [vmem:[%s575 + $0x81] sm:$0xff]
        %v1422 = vld [vmem:[%s575 + $0x91] sm:$0xff]
        %v1423 = vld [vmem:[%s575 + $0x99] sm:$0xff]
        %v1424 = vld [vmem:[%s575 + $0xa9] sm:$0xff]
        %v1425 = vld [vmem:[%s575 + $0xb1] sm:$0xff]
        %v1426 = vld [vmem:[%s575 + $0xc1] sm:$0xff]
        %v1427 = vld [vmem:[%s575 + $0xc9] sm:$0xff]
        %v1428 = vld [vmem:[%s575 + $0xd9] sm:$0xff]
        %v1429 = vld [vmem:[%s575 + $0xe1] sm:$0xff]
        %v1430 = vld [vmem:[%s575 + $0xf1] sm:$0xff]
        %v1431 = vld [vmem:[%s575 + $0xf9] sm:$0xff]
        %v1432 = vld [vmem:[%s575 + $0x109] sm:$0xff]
        %v1433 = vld [vmem:[%s575 + $0x111] sm:$0xff]
        %v1434 = vld [vmem:[%s575 + $0x121] sm:$0xff]
        %v1435 = vld [vmem:[%s575 + $0x129] sm:$0xff]
        %v1436 = vld [vmem:[%s575 + $0x139] sm:$0xff]
        %v1437 = vld [vmem:[%s575 + $0x141] sm:$0xff]
        %v1438 = vld [vmem:[%s575 + $0x151] sm:$0xff]
        %v1439 = vld [vmem:[%s575 + $0x159] sm:$0xff]
        %v1440 = vld [vmem:[%s575 + $0x169] sm:$0xff]
        %v1441 = vld [vmem:[%s575 + $0x171] sm:$0xff]
        %v1442 = vld [vmem:[%s575 + $0x1b1] sm:$0xff]
        %v1443 = vld [vmem:[%s575 + $0x1b9] sm:$0xff]
        %v1444 = vld [vmem:[%s575 + $0x1c9] sm:$0xff]
        %v1445 = vld [vmem:[%s575 + $0x1d1] sm:$0xff]
        %v1446 = vld [vmem:[%s575 + $0x1e1] sm:$0xff]
        %v1447 = vld [vmem:[%s575 + $0x1e9] sm:$0xff]
        %v1448 = vld [vmem:[%s575 + $0x1f9] sm:$0xff]
        %v1449 = vld [vmem:[%s575 + $0x201] sm:$0xff]
        %v1450 = vld [vmem:[%s575 + $0x211] sm:$0xff]
        %v1451 = vld [vmem:[%s575 + $0x219] sm:$0xff]
        %v1452 = vld [vmem:[%s575 + $0x229] sm:$0xff]
        %v1453 = vld [vmem:[%s575 + $0x231] sm:$0xff]
        %v1454 = vld [vmem:[%s575 + $0x241] sm:$0xff]
        %v1455 = vld [vmem:[%s575 + $0x249] sm:$0xff]
        %v1456 = vld [vmem:[%s575 + $0x259] sm:$0xff]
        %v1457 = vld [vmem:[%s575 + $0x261] sm:$0xff]
        %v1458 = vld [vmem:[%s575 + $0x271] sm:$0xff]
        %v1459 = vld [vmem:[%s575 + $0x279] sm:$0xff]
        %v1460 = vld [vmem:[%s575 + $0x289] sm:$0xff]
        %v1461 = vld [vmem:[%s575 + $0x291] sm:$0xff]
        %v1462 = vld [vmem:[%s575 + $0x2a1] sm:$0xff]
        %v1463 = vld [vmem:[%s575 + $0x2a9] sm:$0xff]
        %v1464 = vld [vmem:[%s575 + $0x2b9] sm:$0xff]
        %v1465 = vld [vmem:[%s575 + $0x2c1] sm:$0xff]
        %v1466 = vld [vmem:[%s575 + $0x2d1] sm:$0xff]
        %v1467 = vld [vmem:[%s575 + $0x2d9] sm:$0xff]
        %v1468 = vld [vmem:[%s575 + $0x2e9] sm:$0xff]
        %v1469 = vld [vmem:[%s575 + $0x2f1] sm:$0xff]
        %v1470 = vld [vmem:[%s575 + $0x301] sm:$0xff]
        %v1471 = vld [vmem:[%s575 + $0x309] sm:$0xff]
        %v1472 = vld [vmem:[%s575 + $0x319] sm:$0xff]
        %v1473 = vld [vmem:[%s575 + $0x321] sm:$0xff]
        %v1474 = vpack.c.bf16 %v1411, %v1410
        %v1475 = vpack.c.bf16 %v1413, %v1412
        %v1476 = vpack.c.bf16 %v1415, %v1414
        %v1477 = vpack.c.bf16 %v1417, %v1416
        %v1478 = vpack.c.bf16 %v1419, %v1418
        %v1479 = vpack.c.bf16 %v1421, %v1420
        %v1480 = vpack.c.bf16 %v1423, %v1422
        %v1481 = vpack.c.bf16 %v1425, %v1424
        %v1482 = vpack.c.bf16 %v1427, %v1426
        %v1483 = vpack.c.bf16 %v1429, %v1428
        %v1484 = vpack.c.bf16 %v1431, %v1430
        %v1485 = vpack.c.bf16 %v1433, %v1432
        %v1486 = vpack.c.bf16 %v1435, %v1434
        %v1487 = vpack.c.bf16 %v1437, %v1436
        %v1488 = vpack.c.bf16 %v1439, %v1438
        %v1489 = vpack.c.bf16 %v1441, %v1440
        %v1490 = vpack.c.bf16 %v1443, %v1442
        %v1491 = vpack.c.bf16 %v1445, %v1444
        %v1492 = vpack.c.bf16 %v1447, %v1446
        %v1493 = vpack.c.bf16 %v1449, %v1448
        %v1494 = vpack.c.bf16 %v1451, %v1450
        %v1495 = vpack.c.bf16 %v1453, %v1452
        %v1496 = vpack.c.bf16 %v1455, %v1454
        %v1497 = vpack.c.bf16 %v1457, %v1456
        %v1498 = vpack.c.bf16 %v1459, %v1458
        %v1499 = vpack.c.bf16 %v1461, %v1460
        %v1500 = vpack.c.bf16 %v1463, %v1462
        %v1501 = vpack.c.bf16 %v1465, %v1464
        %v1502 = vpack.c.bf16 %v1467, %v1466
        %v1503 = vpack.c.bf16 %v1469, %v1468
        %v1504 = vpack.c.bf16 %v1471, %v1470
        %v1505 = vpack.c.bf16 %v1473, %v1472
        %v1506 = vld [vmem:[%s575 + $0x2] sm:$0xff]
        %v1507 = vld [vmem:[%s575 + $0xa] sm:$0xff]
        %v1508 = vld [vmem:[%s575 + $0x1a] sm:$0xff]
        %v1509 = vld [vmem:[%s575 + $0x22] sm:$0xff]
        %v1510 = vld [vmem:[%s575 + $0x32] sm:$0xff]
        %v1511 = vld [vmem:[%s575 + $0x3a] sm:$0xff]
        %v1512 = vld [vmem:[%s575 + $0x4a] sm:$0xff]
        %v1513 = vld [vmem:[%s575 + $0x52] sm:$0xff]
        %v1514 = vld [vmem:[%s575 + $0x62] sm:$0xff]
        %v1515 = vld [vmem:[%s575 + $0x6a] sm:$0xff]
        %v1516 = vld [vmem:[%s575 + $0x7a] sm:$0xff]
        %v1517 = vld [vmem:[%s575 + $0x82] sm:$0xff]
        %v1518 = vld [vmem:[%s575 + $0x92] sm:$0xff]
        %v1519 = vld [vmem:[%s575 + $0x9a] sm:$0xff]
        %v1520 = vld [vmem:[%s575 + $0xaa] sm:$0xff]
        %v1521 = vld [vmem:[%s575 + $0xb2] sm:$0xff]
        %v1522 = vld [vmem:[%s575 + $0xc2] sm:$0xff]
        %v1523 = vld [vmem:[%s575 + $0xca] sm:$0xff]
        %v1524 = vld [vmem:[%s575 + $0xda] sm:$0xff]
        %v1525 = vld [vmem:[%s575 + $0xe2] sm:$0xff]
        %v1526 = vld [vmem:[%s575 + $0xf2] sm:$0xff]
        %v1527 = vld [vmem:[%s575 + $0xfa] sm:$0xff]
        %v1528 = vld [vmem:[%s575 + $0x10a] sm:$0xff]
        %v1529 = vld [vmem:[%s575 + $0x112] sm:$0xff]
        %v1530 = vld [vmem:[%s575 + $0x122] sm:$0xff]
        %v1531 = vld [vmem:[%s575 + $0x12a] sm:$0xff]
        %v1532 = vld [vmem:[%s575 + $0x13a] sm:$0xff]
        %v1533 = vld [vmem:[%s575 + $0x142] sm:$0xff]
        %v1534 = vld [vmem:[%s575 + $0x152] sm:$0xff]
        %v1535 = vld [vmem:[%s575 + $0x15a] sm:$0xff]
        %v1536 = vld [vmem:[%s575 + $0x16a] sm:$0xff]
        %v1537 = vld [vmem:[%s575 + $0x172] sm:$0xff]
        %v1538 = vld [vmem:[%s575 + $0x1b2] sm:$0xff]
        %v1539 = vld [vmem:[%s575 + $0x1ba] sm:$0xff]
        %v1540 = vld [vmem:[%s575 + $0x1ca] sm:$0xff]
        %v1541 = vld [vmem:[%s575 + $0x1d2] sm:$0xff]
        %v1542 = vld [vmem:[%s575 + $0x1e2] sm:$0xff]
        %v1543 = vld [vmem:[%s575 + $0x1ea] sm:$0xff]
        %v1544 = vld [vmem:[%s575 + $0x1fa] sm:$0xff]
        %v1545 = vld [vmem:[%s575 + $0x202] sm:$0xff]
        %v1546 = vld [vmem:[%s575 + $0x212] sm:$0xff]
        %v1547 = vld [vmem:[%s575 + $0x21a] sm:$0xff]
        %v1548 = vld [vmem:[%s575 + $0x22a] sm:$0xff]
        %v1549 = vld [vmem:[%s575 + $0x232] sm:$0xff]
        %v1550 = vld [vmem:[%s575 + $0x242] sm:$0xff]
        %v1551 = vld [vmem:[%s575 + $0x24a] sm:$0xff]
        %v1552 = vld [vmem:[%s575 + $0x25a] sm:$0xff]
        %v1553 = vld [vmem:[%s575 + $0x262] sm:$0xff]
        %v1554 = vld [vmem:[%s575 + $0x272] sm:$0xff]
        %v1555 = vld [vmem:[%s575 + $0x27a] sm:$0xff]
        %v1556 = vld [vmem:[%s575 + $0x28a] sm:$0xff]
        %v1557 = vld [vmem:[%s575 + $0x292] sm:$0xff]
        %v1558 = vld [vmem:[%s575 + $0x2a2] sm:$0xff]
        %v1559 = vld [vmem:[%s575 + $0x2aa] sm:$0xff]
        %v1560 = vld [vmem:[%s575 + $0x2ba] sm:$0xff]
        %v1561 = vld [vmem:[%s575 + $0x2c2] sm:$0xff]
        %v1562 = vld [vmem:[%s575 + $0x2d2] sm:$0xff]
        %v1563 = vld [vmem:[%s575 + $0x2da] sm:$0xff]
        %v1564 = vld [vmem:[%s575 + $0x2ea] sm:$0xff]
        %v1565 = vld [vmem:[%s575 + $0x2f2] sm:$0xff]
        %v1566 = vld [vmem:[%s575 + $0x302] sm:$0xff]
        %v1567 = vld [vmem:[%s575 + $0x30a] sm:$0xff]
        %v1568 = vld [vmem:[%s575 + $0x31a] sm:$0xff]
        %v1569 = vld [vmem:[%s575 + $0x322] sm:$0xff]
        %v1570 = vpack.c.bf16 %v1507, %v1506
        %v1571 = vpack.c.bf16 %v1509, %v1508
        %v1572 = vpack.c.bf16 %v1511, %v1510
        %v1573 = vpack.c.bf16 %v1513, %v1512
        %v1574 = vpack.c.bf16 %v1515, %v1514
        %v1575 = vpack.c.bf16 %v1517, %v1516
        %v1576 = vpack.c.bf16 %v1519, %v1518
        %v1577 = vpack.c.bf16 %v1521, %v1520
        %v1578 = vpack.c.bf16 %v1523, %v1522
        %v1579 = vpack.c.bf16 %v1525, %v1524
        %v1580 = vpack.c.bf16 %v1527, %v1526
        %v1581 = vpack.c.bf16 %v1529, %v1528
        %v1582 = vpack.c.bf16 %v1531, %v1530
        %v1583 = vpack.c.bf16 %v1533, %v1532
        %v1584 = vpack.c.bf16 %v1535, %v1534
        %v1585 = vpack.c.bf16 %v1537, %v1536
        %v1586 = vpack.c.bf16 %v1539, %v1538
        %v1587 = vpack.c.bf16 %v1541, %v1540
        %v1588 = vpack.c.bf16 %v1543, %v1542
        %v1589 = vpack.c.bf16 %v1545, %v1544
        %v1590 = vpack.c.bf16 %v1547, %v1546
        %v1591 = vpack.c.bf16 %v1549, %v1548
        %v1592 = vpack.c.bf16 %v1551, %v1550
        %v1593 = vpack.c.bf16 %v1553, %v1552
        %v1594 = vpack.c.bf16 %v1555, %v1554
        %v1595 = vpack.c.bf16 %v1557, %v1556
        %v1596 = vpack.c.bf16 %v1559, %v1558
        %v1597 = vpack.c.bf16 %v1561, %v1560
        %v1598 = vpack.c.bf16 %v1563, %v1562
        %v1599 = vpack.c.bf16 %v1565, %v1564
        %v1600 = vpack.c.bf16 %v1567, %v1566
        %v1601 = vpack.c.bf16 %v1569, %v1568
        %s1602 = scalar_lea.vmem [#allocation3], 48
        %v1603 = vld [vmem:[%s1602] sm:$0xff]
        %v1604 = vld [vmem:[%s1602 + $0x8] sm:$0xff]
        %v1605 = vld [vmem:[%s1602 + $0x18] sm:$0xff]
        %v1606 = vld [vmem:[%s1602 + $0x20] sm:$0xff]
        %v1607 = vld [vmem:[%s1602 + $0x30] sm:$0xff]
        %v1608 = vld [vmem:[%s1602 + $0x38] sm:$0xff]
        %v1609 = vld [vmem:[%s1602 + $0x48] sm:$0xff]
        %v1610 = vld [vmem:[%s1602 + $0x50] sm:$0xff]
        %v1611 = vld [vmem:[%s1602 + $0x60] sm:$0xff]
        %v1612 = vld [vmem:[%s1602 + $0x68] sm:$0xff]
        %v1613 = vld [vmem:[%s1602 + $0x78] sm:$0xff]
        %v1614 = vld [vmem:[%s1602 + $0x80] sm:$0xff]
        %v1615 = vld [vmem:[%s1602 + $0x90] sm:$0xff]
        %v1616 = vld [vmem:[%s1602 + $0x98] sm:$0xff]
        %v1617 = vld [vmem:[%s1602 + $0xa8] sm:$0xff]
        %v1618 = vld [vmem:[%s1602 + $0xb0] sm:$0xff]
        %v1619 = vld [vmem:[%s1602 + $0xc0] sm:$0xff]
        %v1620 = vld [vmem:[%s1602 + $0xc8] sm:$0xff]
        %v1621 = vld [vmem:[%s1602 + $0xd8] sm:$0xff]
        %v1622 = vld [vmem:[%s1602 + $0xe0] sm:$0xff]
        %v1623 = vld [vmem:[%s1602 + $0xf0] sm:$0xff]
        %v1624 = vld [vmem:[%s1602 + $0xf8] sm:$0xff]
        %v1625 = vld [vmem:[%s1602 + $0x108] sm:$0xff]
        %v1626 = vld [vmem:[%s1602 + $0x110] sm:$0xff]
        %v1627 = vld [vmem:[%s1602 + $0x120] sm:$0xff]
        %v1628 = vld [vmem:[%s1602 + $0x128] sm:$0xff]
        %v1629 = vld [vmem:[%s1602 + $0x138] sm:$0xff]
        %v1630 = vld [vmem:[%s1602 + $0x140] sm:$0xff]
        %v1631 = vld [vmem:[%s1602 + $0x150] sm:$0xff]
        %v1632 = vld [vmem:[%s1602 + $0x158] sm:$0xff]
        %v1633 = vld [vmem:[%s1602 + $0x168] sm:$0xff]
        %v1634 = vld [vmem:[%s1602 + $0x170] sm:$0xff]
        %v1635 = vld [vmem:[%s1602 + $0x1b0] sm:$0xff]
        %v1636 = vld [vmem:[%s1602 + $0x1b8] sm:$0xff]
        %v1637 = vld [vmem:[%s1602 + $0x1c8] sm:$0xff]
        %v1638 = vld [vmem:[%s1602 + $0x1d0] sm:$0xff]
        %v1639 = vld [vmem:[%s1602 + $0x1e0] sm:$0xff]
        %v1640 = vld [vmem:[%s1602 + $0x1e8] sm:$0xff]
        %v1641 = vld [vmem:[%s1602 + $0x1f8] sm:$0xff]
        %v1642 = vld [vmem:[%s1602 + $0x200] sm:$0xff]
        %v1643 = vld [vmem:[%s1602 + $0x210] sm:$0xff]
        %v1644 = vld [vmem:[%s1602 + $0x218] sm:$0xff]
        %v1645 = vld [vmem:[%s1602 + $0x228] sm:$0xff]
        %v1646 = vld [vmem:[%s1602 + $0x230] sm:$0xff]
        %v1647 = vld [vmem:[%s1602 + $0x240] sm:$0xff]
        %v1648 = vld [vmem:[%s1602 + $0x248] sm:$0xff]
        %v1649 = vld [vmem:[%s1602 + $0x258] sm:$0xff]
        %v1650 = vld [vmem:[%s1602 + $0x260] sm:$0xff]
        %v1651 = vld [vmem:[%s1602 + $0x270] sm:$0xff]
        %v1652 = vld [vmem:[%s1602 + $0x278] sm:$0xff]
        %v1653 = vld [vmem:[%s1602 + $0x288] sm:$0xff]
        %v1654 = vld [vmem:[%s1602 + $0x290] sm:$0xff]
        %v1655 = vld [vmem:[%s1602 + $0x2a0] sm:$0xff]
        %v1656 = vld [vmem:[%s1602 + $0x2a8] sm:$0xff]
        %v1657 = vld [vmem:[%s1602 + $0x2b8] sm:$0xff]
        %v1658 = vld [vmem:[%s1602 + $0x2c0] sm:$0xff]
        %v1659 = vld [vmem:[%s1602 + $0x2d0] sm:$0xff]
        %v1660 = vld [vmem:[%s1602 + $0x2d8] sm:$0xff]
        %v1661 = vld [vmem:[%s1602 + $0x2e8] sm:$0xff]
        %v1662 = vld [vmem:[%s1602 + $0x2f0] sm:$0xff]
        %v1663 = vld [vmem:[%s1602 + $0x300] sm:$0xff]
        %v1664 = vld [vmem:[%s1602 + $0x308] sm:$0xff]
        %v1665 = vld [vmem:[%s1602 + $0x318] sm:$0xff]
        %v1666 = vld [vmem:[%s1602 + $0x320] sm:$0xff]
        %v1667 = vpack.c.bf16 %v1604, %v1603
        %v1668 = vpack.c.bf16 %v1606, %v1605
        %v1669 = vpack.c.bf16 %v1608, %v1607
        %v1670 = vpack.c.bf16 %v1610, %v1609
        %v1671 = vpack.c.bf16 %v1612, %v1611
        %v1672 = vpack.c.bf16 %v1614, %v1613
        %v1673 = vpack.c.bf16 %v1616, %v1615
        %v1674 = vpack.c.bf16 %v1618, %v1617
        %v1675 = vpack.c.bf16 %v1620, %v1619
        %v1676 = vpack.c.bf16 %v1622, %v1621
        %v1677 = vpack.c.bf16 %v1624, %v1623
        %v1678 = vpack.c.bf16 %v1626, %v1625
        %v1679 = vpack.c.bf16 %v1628, %v1627
        %v1680 = vpack.c.bf16 %v1630, %v1629
        %v1681 = vpack.c.bf16 %v1632, %v1631
        %v1682 = vpack.c.bf16 %v1634, %v1633
        %v1683 = vpack.c.bf16 %v1636, %v1635
        %v1684 = vpack.c.bf16 %v1638, %v1637
        %v1685 = vpack.c.bf16 %v1640, %v1639
        %v1686 = vpack.c.bf16 %v1642, %v1641
        %v1687 = vpack.c.bf16 %v1644, %v1643
        %v1688 = vpack.c.bf16 %v1646, %v1645
        %v1689 = vpack.c.bf16 %v1648, %v1647
        %v1690 = vpack.c.bf16 %v1650, %v1649
        %v1691 = vpack.c.bf16 %v1652, %v1651
        %v1692 = vpack.c.bf16 %v1654, %v1653
        %v1693 = vpack.c.bf16 %v1656, %v1655
        %v1694 = vpack.c.bf16 %v1658, %v1657
        %v1695 = vpack.c.bf16 %v1660, %v1659
        %v1696 = vpack.c.bf16 %v1662, %v1661
        %v1697 = vpack.c.bf16 %v1664, %v1663
        %v1698 = vpack.c.bf16 %v1666, %v1665
        %v1699 = vld [vmem:[%s1602 + $0x1] sm:$0xff]
        %v1700 = vld [vmem:[%s1602 + $0x9] sm:$0xff]
        %v1701 = vld [vmem:[%s1602 + $0x19] sm:$0xff]
        %v1702 = vld [vmem:[%s1602 + $0x21] sm:$0xff]
        %v1703 = vld [vmem:[%s1602 + $0x31] sm:$0xff]
        %v1704 = vld [vmem:[%s1602 + $0x39] sm:$0xff]
        %v1705 = vld [vmem:[%s1602 + $0x49] sm:$0xff]
        %v1706 = vld [vmem:[%s1602 + $0x51] sm:$0xff]
        %v1707 = vld [vmem:[%s1602 + $0x61] sm:$0xff]
        %v1708 = vld [vmem:[%s1602 + $0x69] sm:$0xff]
        %v1709 = vld [vmem:[%s1602 + $0x79] sm:$0xff]
        %v1710 = vld [vmem:[%s1602 + $0x81] sm:$0xff]
        %v1711 = vld [vmem:[%s1602 + $0x91] sm:$0xff]
        %v1712 = vld [vmem:[%s1602 + $0x99] sm:$0xff]
        %v1713 = vld [vmem:[%s1602 + $0xa9] sm:$0xff]
        %v1714 = vld [vmem:[%s1602 + $0xb1] sm:$0xff]
        %v1715 = vld [vmem:[%s1602 + $0xc1] sm:$0xff]
        %v1716 = vld [vmem:[%s1602 + $0xc9] sm:$0xff]
        %v1717 = vld [vmem:[%s1602 + $0xd9] sm:$0xff]
        %v1718 = vld [vmem:[%s1602 + $0xe1] sm:$0xff]
        %v1719 = vld [vmem:[%s1602 + $0xf1] sm:$0xff]
        %v1720 = vld [vmem:[%s1602 + $0xf9] sm:$0xff]
        %v1721 = vld [vmem:[%s1602 + $0x109] sm:$0xff]
        %v1722 = vld [vmem:[%s1602 + $0x111] sm:$0xff]
        %v1723 = vld [vmem:[%s1602 + $0x121] sm:$0xff]
        %v1724 = vld [vmem:[%s1602 + $0x129] sm:$0xff]
        %v1725 = vld [vmem:[%s1602 + $0x139] sm:$0xff]
        %v1726 = vld [vmem:[%s1602 + $0x141] sm:$0xff]
        %v1727 = vld [vmem:[%s1602 + $0x151] sm:$0xff]
        %v1728 = vld [vmem:[%s1602 + $0x159] sm:$0xff]
        %v1729 = vld [vmem:[%s1602 + $0x169] sm:$0xff]
        %v1730 = vld [vmem:[%s1602 + $0x171] sm:$0xff]
        %v1731 = vld [vmem:[%s1602 + $0x1b1] sm:$0xff]
        %v1732 = vld [vmem:[%s1602 + $0x1b9] sm:$0xff]
        %v1733 = vld [vmem:[%s1602 + $0x1c9] sm:$0xff]
        %v1734 = vld [vmem:[%s1602 + $0x1d1] sm:$0xff]
        %v1735 = vld [vmem:[%s1602 + $0x1e1] sm:$0xff]
        %v1736 = vld [vmem:[%s1602 + $0x1e9] sm:$0xff]
        %v1737 = vld [vmem:[%s1602 + $0x1f9] sm:$0xff]
        %v1738 = vld [vmem:[%s1602 + $0x201] sm:$0xff]
        %v1739 = vld [vmem:[%s1602 + $0x211] sm:$0xff]
        %v1740 = vld [vmem:[%s1602 + $0x219] sm:$0xff]
        %v1741 = vld [vmem:[%s1602 + $0x229] sm:$0xff]
        %v1742 = vld [vmem:[%s1602 + $0x231] sm:$0xff]
        %v1743 = vld [vmem:[%s1602 + $0x241] sm:$0xff]
        %v1744 = vld [vmem:[%s1602 + $0x249] sm:$0xff]
        %v1745 = vld [vmem:[%s1602 + $0x259] sm:$0xff]
        %v1746 = vld [vmem:[%s1602 + $0x261] sm:$0xff]
        %v1747 = vld [vmem:[%s1602 + $0x271] sm:$0xff]
        %v1748 = vld [vmem:[%s1602 + $0x279] sm:$0xff]
        %v1749 = vld [vmem:[%s1602 + $0x289] sm:$0xff]
        %v1750 = vld [vmem:[%s1602 + $0x291] sm:$0xff]
        %v1751 = vld [vmem:[%s1602 + $0x2a1] sm:$0xff]
        %v1752 = vld [vmem:[%s1602 + $0x2a9] sm:$0xff]
        %v1753 = vld [vmem:[%s1602 + $0x2b9] sm:$0xff]
        %v1754 = vld [vmem:[%s1602 + $0x2c1] sm:$0xff]
        %v1755 = vld [vmem:[%s1602 + $0x2d1] sm:$0xff]
        %v1756 = vld [vmem:[%s1602 + $0x2d9] sm:$0xff]
        %v1757 = vld [vmem:[%s1602 + $0x2e9] sm:$0xff]
        %v1758 = vld [vmem:[%s1602 + $0x2f1] sm:$0xff]
        %v1759 = vld [vmem:[%s1602 + $0x301] sm:$0xff]
        %v1760 = vld [vmem:[%s1602 + $0x309] sm:$0xff]
        %v1761 = vld [vmem:[%s1602 + $0x319] sm:$0xff]
        %v1762 = vld [vmem:[%s1602 + $0x321] sm:$0xff]
        %v1763 = vpack.c.bf16 %v1700, %v1699
        %v1764 = vpack.c.bf16 %v1702, %v1701
        %v1765 = vpack.c.bf16 %v1704, %v1703
        %v1766 = vpack.c.bf16 %v1706, %v1705
        %v1767 = vpack.c.bf16 %v1708, %v1707
        %v1768 = vpack.c.bf16 %v1710, %v1709
        %v1769 = vpack.c.bf16 %v1712, %v1711
        %v1770 = vpack.c.bf16 %v1714, %v1713
        %v1771 = vpack.c.bf16 %v1716, %v1715
        %v1772 = vpack.c.bf16 %v1718, %v1717
        %v1773 = vpack.c.bf16 %v1720, %v1719
        %v1774 = vpack.c.bf16 %v1722, %v1721
        %v1775 = vpack.c.bf16 %v1724, %v1723
        %v1776 = vpack.c.bf16 %v1726, %v1725
        %v1777 = vpack.c.bf16 %v1728, %v1727
        %v1778 = vpack.c.bf16 %v1730, %v1729
        %v1779 = vpack.c.bf16 %v1732, %v1731
        %v1780 = vpack.c.bf16 %v1734, %v1733
        %v1781 = vpack.c.bf16 %v1736, %v1735
        %v1782 = vpack.c.bf16 %v1738, %v1737
        %v1783 = vpack.c.bf16 %v1740, %v1739
        %v1784 = vpack.c.bf16 %v1742, %v1741
        %v1785 = vpack.c.bf16 %v1744, %v1743
        %v1786 = vpack.c.bf16 %v1746, %v1745
        %v1787 = vpack.c.bf16 %v1748, %v1747
        %v1788 = vpack.c.bf16 %v1750, %v1749
        %v1789 = vpack.c.bf16 %v1752, %v1751
        %v1790 = vpack.c.bf16 %v1754, %v1753
        %v1791 = vpack.c.bf16 %v1756, %v1755
        %v1792 = vpack.c.bf16 %v1758, %v1757
        %v1793 = vpack.c.bf16 %v1760, %v1759
        %v1794 = vpack.c.bf16 %v1762, %v1761
        %v1795 = vld [vmem:[%s1602 + $0x2] sm:$0xff]
        %v1796 = vld [vmem:[%s1602 + $0xa] sm:$0xff]
        %v1797 = vld [vmem:[%s1602 + $0x1a] sm:$0xff]
        %v1798 = vld [vmem:[%s1602 + $0x22] sm:$0xff]
        %v1799 = vld [vmem:[%s1602 + $0x32] sm:$0xff]
        %v1800 = vld [vmem:[%s1602 + $0x3a] sm:$0xff]
        %v1801 = vld [vmem:[%s1602 + $0x4a] sm:$0xff]
        %v1802 = vld [vmem:[%s1602 + $0x52] sm:$0xff]
        %v1803 = vld [vmem:[%s1602 + $0x62] sm:$0xff]
        %v1804 = vld [vmem:[%s1602 + $0x6a] sm:$0xff]
        %v1805 = vld [vmem:[%s1602 + $0x7a] sm:$0xff]
        %v1806 = vld [vmem:[%s1602 + $0x82] sm:$0xff]
        %v1807 = vld [vmem:[%s1602 + $0x92] sm:$0xff]
        %v1808 = vld [vmem:[%s1602 + $0x9a] sm:$0xff]
        %v1809 = vld [vmem:[%s1602 + $0xaa] sm:$0xff]
        %v1810 = vld [vmem:[%s1602 + $0xb2] sm:$0xff]
        %v1811 = vld [vmem:[%s1602 + $0xc2] sm:$0xff]
        %v1812 = vld [vmem:[%s1602 + $0xca] sm:$0xff]
        %v1813 = vld [vmem:[%s1602 + $0xda] sm:$0xff]
        %v1814 = vld [vmem:[%s1602 + $0xe2] sm:$0xff]
        %v1815 = vld [vmem:[%s1602 + $0xf2] sm:$0xff]
        %v1816 = vld [vmem:[%s1602 + $0xfa] sm:$0xff]
        %v1817 = vld [vmem:[%s1602 + $0x10a] sm:$0xff]
        %v1818 = vld [vmem:[%s1602 + $0x112] sm:$0xff]
        %v1819 = vld [vmem:[%s1602 + $0x122] sm:$0xff]
        %v1820 = vld [vmem:[%s1602 + $0x12a] sm:$0xff]
        %v1821 = vld [vmem:[%s1602 + $0x13a] sm:$0xff]
        %v1822 = vld [vmem:[%s1602 + $0x142] sm:$0xff]
        %v1823 = vld [vmem:[%s1602 + $0x152] sm:$0xff]
        %v1824 = vld [vmem:[%s1602 + $0x15a] sm:$0xff]
        %v1825 = vld [vmem:[%s1602 + $0x16a] sm:$0xff]
        %v1826 = vld [vmem:[%s1602 + $0x172] sm:$0xff]
        %v1827 = vld [vmem:[%s1602 + $0x1b2] sm:$0xff]
        %v1828 = vld [vmem:[%s1602 + $0x1ba] sm:$0xff]
        %v1829 = vld [vmem:[%s1602 + $0x1ca] sm:$0xff]
        %v1830 = vld [vmem:[%s1602 + $0x1d2] sm:$0xff]
        %v1831 = vld [vmem:[%s1602 + $0x1e2] sm:$0xff]
        %v1832 = vld [vmem:[%s1602 + $0x1ea] sm:$0xff]
        %v1833 = vld [vmem:[%s1602 + $0x1fa] sm:$0xff]
        %v1834 = vld [vmem:[%s1602 + $0x202] sm:$0xff]
        %v1835 = vld [vmem:[%s1602 + $0x212] sm:$0xff]
        %v1836 = vld [vmem:[%s1602 + $0x21a] sm:$0xff]
        %v1837 = vld [vmem:[%s1602 + $0x22a] sm:$0xff]
        %v1838 = vld [vmem:[%s1602 + $0x232] sm:$0xff]
        %v1839 = vld [vmem:[%s1602 + $0x242] sm:$0xff]
        %v1840 = vld [vmem:[%s1602 + $0x24a] sm:$0xff]
        %v1841 = vld [vmem:[%s1602 + $0x25a] sm:$0xff]
        %v1842 = vld [vmem:[%s1602 + $0x262] sm:$0xff]
        %v1843 = vld [vmem:[%s1602 + $0x272] sm:$0xff]
        %v1844 = vld [vmem:[%s1602 + $0x27a] sm:$0xff]
        %v1845 = vld [vmem:[%s1602 + $0x28a] sm:$0xff]
        %v1846 = vld [vmem:[%s1602 + $0x292] sm:$0xff]
        %v1847 = vld [vmem:[%s1602 + $0x2a2] sm:$0xff]
        %v1848 = vld [vmem:[%s1602 + $0x2aa] sm:$0xff]
        %v1849 = vld [vmem:[%s1602 + $0x2ba] sm:$0xff]
        %v1850 = vld [vmem:[%s1602 + $0x2c2] sm:$0xff]
        %v1851 = vld [vmem:[%s1602 + $0x2d2] sm:$0xff]
        %v1852 = vld [vmem:[%s1602 + $0x2da] sm:$0xff]
        %v1853 = vld [vmem:[%s1602 + $0x2ea] sm:$0xff]
        %v1854 = vld [vmem:[%s1602 + $0x2f2] sm:$0xff]
        %v1855 = vld [vmem:[%s1602 + $0x302] sm:$0xff]
        %v1856 = vld [vmem:[%s1602 + $0x30a] sm:$0xff]
        %v1857 = vld [vmem:[%s1602 + $0x31a] sm:$0xff]
        %v1858 = vld [vmem:[%s1602 + $0x322] sm:$0xff]
        %v1859 = vpack.c.bf16 %v1796, %v1795
        %v1860 = vpack.c.bf16 %v1798, %v1797
        %v1861 = vpack.c.bf16 %v1800, %v1799
        %v1862 = vpack.c.bf16 %v1802, %v1801
        %v1863 = vpack.c.bf16 %v1804, %v1803
        %v1864 = vpack.c.bf16 %v1806, %v1805
        %v1865 = vpack.c.bf16 %v1808, %v1807
        %v1866 = vpack.c.bf16 %v1810, %v1809
        %v1867 = vpack.c.bf16 %v1812, %v1811
        %v1868 = vpack.c.bf16 %v1814, %v1813
        %v1869 = vpack.c.bf16 %v1816, %v1815
        %v1870 = vpack.c.bf16 %v1818, %v1817
        %v1871 = vpack.c.bf16 %v1820, %v1819
        %v1872 = vpack.c.bf16 %v1822, %v1821
        %v1873 = vpack.c.bf16 %v1824, %v1823
        %v1874 = vpack.c.bf16 %v1826, %v1825
        %v1875 = vpack.c.bf16 %v1828, %v1827
        %v1876 = vpack.c.bf16 %v1830, %v1829
        %v1877 = vpack.c.bf16 %v1832, %v1831
        %v1878 = vpack.c.bf16 %v1834, %v1833
        %v1879 = vpack.c.bf16 %v1836, %v1835
        %v1880 = vpack.c.bf16 %v1838, %v1837
        %v1881 = vpack.c.bf16 %v1840, %v1839
        %v1882 = vpack.c.bf16 %v1842, %v1841
        %v1883 = vpack.c.bf16 %v1844, %v1843
        %v1884 = vpack.c.bf16 %v1846, %v1845
        %v1885 = vpack.c.bf16 %v1848, %v1847
        %v1886 = vpack.c.bf16 %v1850, %v1849
        %v1887 = vpack.c.bf16 %v1852, %v1851
        %v1888 = vpack.c.bf16 %v1854, %v1853
        %v1889 = vpack.c.bf16 %v1856, %v1855
        %v1890 = vpack.c.bf16 %v1858, %v1857
        %1923 = vrot.lane.b32.xlu0 %v1186, 36
        %v1924 = vpop.permute.xlu0 %1923
        %1925 = vrot.lane.b32.xlu0 %v1187, 36
        %v1926 = vpop.permute.xlu0 %1925
        %1927 = vrot.lane.b32.xlu0 %v1188, 36
        %v1928 = vpop.permute.xlu0 %1927
        %1929 = vrot.lane.b32.xlu0 %v1189, 36
        %v1930 = vpop.permute.xlu0 %1929
        %1931 = vrot.lane.b32.xlu0 %v1190, 36
        %v1932 = vpop.permute.xlu0 %1931
        %1933 = vrot.lane.b32.xlu0 %v1191, 36
        %v1934 = vpop.permute.xlu0 %1933
        %1935 = vrot.lane.b32.xlu0 %v1192, 36
        %v1936 = vpop.permute.xlu0 %1935
        %1937 = vrot.lane.b32.xlu0 %v1193, 36
        %v1938 = vpop.permute.xlu0 %1937
        %1939 = vrot.lane.b32.xlu0 %v1194, 36
        %v1940 = vpop.permute.xlu0 %1939
        %1941 = vrot.lane.b32.xlu0 %v1195, 36
        %v1942 = vpop.permute.xlu0 %1941
        %1943 = vrot.lane.b32.xlu0 %v1196, 36
        %v1944 = vpop.permute.xlu0 %1943
        %1945 = vrot.lane.b32.xlu0 %v1197, 36
        %v1946 = vpop.permute.xlu0 %1945
        %1947 = vrot.lane.b32.xlu0 %v1198, 36
        %v1948 = vpop.permute.xlu0 %1947
        %1949 = vrot.lane.b32.xlu0 %v1199, 36
        %v1950 = vpop.permute.xlu0 %1949
        %1951 = vrot.lane.b32.xlu0 %v1200, 36
        %v1952 = vpop.permute.xlu0 %1951
        %1953 = vrot.lane.b32.xlu0 %v1201, 36
        %v1954 = vpop.permute.xlu0 %1953
        %1955 = vrot.lane.b32.xlu0 %v1202, 36
        %v1956 = vpop.permute.xlu0 %1955
        %1957 = vrot.lane.b32.xlu0 %v1203, 36
        %v1958 = vpop.permute.xlu0 %1957
        %1959 = vrot.lane.b32.xlu0 %v1204, 36
        %v1960 = vpop.permute.xlu0 %1959
        %1961 = vrot.lane.b32.xlu0 %v1205, 36
        %v1962 = vpop.permute.xlu0 %1961
        %1963 = vrot.lane.b32.xlu0 %v1206, 36
        %v1964 = vpop.permute.xlu0 %1963
        %1965 = vrot.lane.b32.xlu0 %v1207, 36
        %v1966 = vpop.permute.xlu0 %1965
        %1967 = vrot.lane.b32.xlu0 %v1208, 36
        %v1968 = vpop.permute.xlu0 %1967
        %1969 = vrot.lane.b32.xlu0 %v1209, 36
        %v1970 = vpop.permute.xlu0 %1969
        %1971 = vrot.lane.b32.xlu0 %v1210, 36
        %v1972 = vpop.permute.xlu0 %1971
        %1973 = vrot.lane.b32.xlu0 %v1211, 36
        %v1974 = vpop.permute.xlu0 %1973
        %1975 = vrot.lane.b32.xlu0 %v1212, 36
        %v1976 = vpop.permute.xlu0 %1975
        %1977 = vrot.lane.b32.xlu0 %v1213, 36
        %v1978 = vpop.permute.xlu0 %1977
        %1979 = vrot.lane.b32.xlu0 %v1214, 36
        %v1980 = vpop.permute.xlu0 %1979
        %1981 = vrot.lane.b32.xlu0 %v1215, 36
        %v1982 = vpop.permute.xlu0 %1981
        %1983 = vrot.lane.b32.xlu0 %v1216, 36
        %v1984 = vpop.permute.xlu0 %1983
        %1985 = vrot.lane.b32.xlu0 %v1217, 36
        %v1986 = vpop.permute.xlu0 %1985
        %2019 = vrot.lane.b32.xlu0 %v1282, 72
        %v2020 = vpop.permute.xlu0 %2019
        %2021 = vrot.lane.b32.xlu0 %v1283, 72
        %v2022 = vpop.permute.xlu0 %2021
        %2023 = vrot.lane.b32.xlu0 %v1284, 72
        %v2024 = vpop.permute.xlu0 %2023
        %2025 = vrot.lane.b32.xlu0 %v1285, 72
        %v2026 = vpop.permute.xlu0 %2025
        %2027 = vrot.lane.b32.xlu0 %v1286, 72
        %v2028 = vpop.permute.xlu0 %2027
        %2029 = vrot.lane.b32.xlu0 %v1287, 72
        %v2030 = vpop.permute.xlu0 %2029
        %2031 = vrot.lane.b32.xlu0 %v1288, 72
        %v2032 = vpop.permute.xlu0 %2031
        %2033 = vrot.lane.b32.xlu0 %v1289, 72
        %v2034 = vpop.permute.xlu0 %2033
        %2035 = vrot.lane.b32.xlu0 %v1290, 72
        %v2036 = vpop.permute.xlu0 %2035
        %2037 = vrot.lane.b32.xlu0 %v1291, 72
        %v2038 = vpop.permute.xlu0 %2037
        %2039 = vrot.lane.b32.xlu0 %v1292, 72
        %v2040 = vpop.permute.xlu0 %2039
        %2041 = vrot.lane.b32.xlu0 %v1293, 72
        %v2042 = vpop.permute.xlu0 %2041
        %2043 = vrot.lane.b32.xlu0 %v1294, 72
        %v2044 = vpop.permute.xlu0 %2043
        %2045 = vrot.lane.b32.xlu0 %v1295, 72
        %v2046 = vpop.permute.xlu0 %2045
        %2047 = vrot.lane.b32.xlu0 %v1296, 72
        %v2048 = vpop.permute.xlu0 %2047
        %2049 = vrot.lane.b32.xlu0 %v1297, 72
        %v2050 = vpop.permute.xlu0 %2049
        %2051 = vrot.lane.b32.xlu0 %v1298, 72
        %v2052 = vpop.permute.xlu0 %2051
        %2053 = vrot.lane.b32.xlu0 %v1299, 72
        %v2054 = vpop.permute.xlu0 %2053
        %2055 = vrot.lane.b32.xlu0 %v1300, 72
        %v2056 = vpop.permute.xlu0 %2055
        %2057 = vrot.lane.b32.xlu0 %v1301, 72
        %v2058 = vpop.permute.xlu0 %2057
        %2059 = vrot.lane.b32.xlu0 %v1302, 72
        %v2060 = vpop.permute.xlu0 %2059
        %2061 = vrot.lane.b32.xlu0 %v1303, 72
        %v2062 = vpop.permute.xlu0 %2061
        %2063 = vrot.lane.b32.xlu0 %v1304, 72
        %v2064 = vpop.permute.xlu0 %2063
        %2065 = vrot.lane.b32.xlu0 %v1305, 72
        %v2066 = vpop.permute.xlu0 %2065
        %2067 = vrot.lane.b32.xlu0 %v1306, 72
        %v2068 = vpop.permute.xlu0 %2067
        %2069 = vrot.lane.b32.xlu0 %v1307, 72
        %v2070 = vpop.permute.xlu0 %2069
        %2071 = vrot.lane.b32.xlu0 %v1308, 72
        %v2072 = vpop.permute.xlu0 %2071
        %2073 = vrot.lane.b32.xlu0 %v1309, 72
        %v2074 = vpop.permute.xlu0 %2073
        %2075 = vrot.lane.b32.xlu0 %v1310, 72
        %v2076 = vpop.permute.xlu0 %2075
        %2077 = vrot.lane.b32.xlu0 %v1311, 72
        %v2078 = vpop.permute.xlu0 %2077
        %2079 = vrot.lane.b32.xlu0 %v1312, 72
        %v2080 = vpop.permute.xlu0 %2079
        %2081 = vrot.lane.b32.xlu0 %v1313, 72
        %v2082 = vpop.permute.xlu0 %2081
        %2115 = vrot.lane.b32.xlu0 %v1378, 108
        %v2116 = vpop.permute.xlu0 %2115
        %2117 = vrot.lane.b32.xlu0 %v1379, 108
        %v2118 = vpop.permute.xlu0 %2117
        %2119 = vrot.lane.b32.xlu0 %v1380, 108
        %v2120 = vpop.permute.xlu0 %2119
        %2121 = vrot.lane.b32.xlu0 %v1381, 108
        %v2122 = vpop.permute.xlu0 %2121
        %2123 = vrot.lane.b32.xlu0 %v1382, 108
        %v2124 = vpop.permute.xlu0 %2123
        %2125 = vrot.lane.b32.xlu0 %v1383, 108
        %v2126 = vpop.permute.xlu0 %2125
        %2127 = vrot.lane.b32.xlu0 %v1384, 108
        %v2128 = vpop.permute.xlu0 %2127
        %2129 = vrot.lane.b32.xlu0 %v1385, 108
        %v2130 = vpop.permute.xlu0 %2129
        %2131 = vrot.lane.b32.xlu0 %v1386, 108
        %v2132 = vpop.permute.xlu0 %2131
        %2133 = vrot.lane.b32.xlu0 %v1387, 108
        %v2134 = vpop.permute.xlu0 %2133
        %2135 = vrot.lane.b32.xlu0 %v1388, 108
        %v2136 = vpop.permute.xlu0 %2135
        %2137 = vrot.lane.b32.xlu0 %v1389, 108
        %v2138 = vpop.permute.xlu0 %2137
        %2139 = vrot.lane.b32.xlu0 %v1390, 108
        %v2140 = vpop.permute.xlu0 %2139
        %2141 = vrot.lane.b32.xlu0 %v1391, 108
        %v2142 = vpop.permute.xlu0 %2141
        %2143 = vrot.lane.b32.xlu0 %v1392, 108
        %v2144 = vpop.permute.xlu0 %2143
        %2145 = vrot.lane.b32.xlu0 %v1393, 108
        %v2146 = vpop.permute.xlu0 %2145
        %2147 = vrot.lane.b32.xlu0 %v1394, 108
        %v2148 = vpop.permute.xlu0 %2147
        %2149 = vrot.lane.b32.xlu0 %v1395, 108
        %v2150 = vpop.permute.xlu0 %2149
        %2151 = vrot.lane.b32.xlu0 %v1396, 108
        %v2152 = vpop.permute.xlu0 %2151
        %2153 = vrot.lane.b32.xlu0 %v1397, 108
        %v2154 = vpop.permute.xlu0 %2153
        %2155 = vrot.lane.b32.xlu0 %v1398, 108
        %v2156 = vpop.permute.xlu0 %2155
        %2157 = vrot.lane.b32.xlu0 %v1399, 108
        %v2158 = vpop.permute.xlu0 %2157
        %2159 = vrot.lane.b32.xlu0 %v1400, 108
        %v2160 = vpop.permute.xlu0 %2159
        %2161 = vrot.lane.b32.xlu0 %v1401, 108
        %v2162 = vpop.permute.xlu0 %2161
        %2163 = vrot.lane.b32.xlu0 %v1402, 108
        %v2164 = vpop.permute.xlu0 %2163
        %2165 = vrot.lane.b32.xlu0 %v1403, 108
        %v2166 = vpop.permute.xlu0 %2165
        %2167 = vrot.lane.b32.xlu0 %v1404, 108
        %v2168 = vpop.permute.xlu0 %2167
        %2169 = vrot.lane.b32.xlu0 %v1405, 108
        %v2170 = vpop.permute.xlu0 %2169
        %2171 = vrot.lane.b32.xlu0 %v1406, 108
        %v2172 = vpop.permute.xlu0 %2171
        %2173 = vrot.lane.b32.xlu0 %v1407, 108
        %v2174 = vpop.permute.xlu0 %2173
        %2175 = vrot.lane.b32.xlu0 %v1408, 108
        %v2176 = vpop.permute.xlu0 %2175
        %2177 = vrot.lane.b32.xlu0 %v1409, 108
        %v2178 = vpop.permute.xlu0 %2177
        %2211 = vrot.lane.b32.xlu0 %v1474, 16
        %v2212 = vpop.permute.xlu0 %2211
        %2213 = vrot.lane.b32.xlu0 %v1475, 16
        %v2214 = vpop.permute.xlu0 %2213
        %2215 = vrot.lane.b32.xlu0 %v1476, 16
        %v2216 = vpop.permute.xlu0 %2215
        %2217 = vrot.lane.b32.xlu0 %v1477, 16
        %v2218 = vpop.permute.xlu0 %2217
        %2219 = vrot.lane.b32.xlu0 %v1478, 16
        %v2220 = vpop.permute.xlu0 %2219
        %2221 = vrot.lane.b32.xlu0 %v1479, 16
        %v2222 = vpop.permute.xlu0 %2221
        %2223 = vrot.lane.b32.xlu0 %v1480, 16
        %v2224 = vpop.permute.xlu0 %2223
        %2225 = vrot.lane.b32.xlu0 %v1481, 16
        %v2226 = vpop.permute.xlu0 %2225
        %2227 = vrot.lane.b32.xlu0 %v1482, 16
        %v2228 = vpop.permute.xlu0 %2227
        %2229 = vrot.lane.b32.xlu0 %v1483, 16
        %v2230 = vpop.permute.xlu0 %2229
        %2231 = vrot.lane.b32.xlu0 %v1484, 16
        %v2232 = vpop.permute.xlu0 %2231
        %2233 = vrot.lane.b32.xlu0 %v1485, 16
        %v2234 = vpop.permute.xlu0 %2233
        %2235 = vrot.lane.b32.xlu0 %v1486, 16
        %v2236 = vpop.permute.xlu0 %2235
        %2237 = vrot.lane.b32.xlu0 %v1487, 16
        %v2238 = vpop.permute.xlu0 %2237
        %2239 = vrot.lane.b32.xlu0 %v1488, 16
        %v2240 = vpop.permute.xlu0 %2239
        %2241 = vrot.lane.b32.xlu0 %v1489, 16
        %v2242 = vpop.permute.xlu0 %2241
        %2243 = vrot.lane.b32.xlu0 %v1490, 16
        %v2244 = vpop.permute.xlu0 %2243
        %2245 = vrot.lane.b32.xlu0 %v1491, 16
        %v2246 = vpop.permute.xlu0 %2245
        %2247 = vrot.lane.b32.xlu0 %v1492, 16
        %v2248 = vpop.permute.xlu0 %2247
        %2249 = vrot.lane.b32.xlu0 %v1493, 16
        %v2250 = vpop.permute.xlu0 %2249
        %2251 = vrot.lane.b32.xlu0 %v1494, 16
        %v2252 = vpop.permute.xlu0 %2251
        %2253 = vrot.lane.b32.xlu0 %v1495, 16
        %v2254 = vpop.permute.xlu0 %2253
        %2255 = vrot.lane.b32.xlu0 %v1496, 16
        %v2256 = vpop.permute.xlu0 %2255
        %2257 = vrot.lane.b32.xlu0 %v1497, 16
        %v2258 = vpop.permute.xlu0 %2257
        %2259 = vrot.lane.b32.xlu0 %v1498, 16
        %v2260 = vpop.permute.xlu0 %2259
        %2261 = vrot.lane.b32.xlu0 %v1499, 16
        %v2262 = vpop.permute.xlu0 %2261
        %2263 = vrot.lane.b32.xlu0 %v1500, 16
        %v2264 = vpop.permute.xlu0 %2263
        %2265 = vrot.lane.b32.xlu0 %v1501, 16
        %v2266 = vpop.permute.xlu0 %2265
        %2267 = vrot.lane.b32.xlu0 %v1502, 16
        %v2268 = vpop.permute.xlu0 %2267
        %2269 = vrot.lane.b32.xlu0 %v1503, 16
        %v2270 = vpop.permute.xlu0 %2269
        %2271 = vrot.lane.b32.xlu0 %v1504, 16
        %v2272 = vpop.permute.xlu0 %2271
        %2273 = vrot.lane.b32.xlu0 %v1505, 16
        %v2274 = vpop.permute.xlu0 %2273
        %2307 = vrot.lane.b32.xlu0 %v1570, 52
        %v2308 = vpop.permute.xlu0 %2307
        %2309 = vrot.lane.b32.xlu0 %v1571, 52
        %v2310 = vpop.permute.xlu0 %2309
        %2311 = vrot.lane.b32.xlu0 %v1572, 52
        %v2312 = vpop.permute.xlu0 %2311
        %2313 = vrot.lane.b32.xlu0 %v1573, 52
        %v2314 = vpop.permute.xlu0 %2313
        %2315 = vrot.lane.b32.xlu0 %v1574, 52
        %v2316 = vpop.permute.xlu0 %2315
        %2317 = vrot.lane.b32.xlu0 %v1575, 52
        %v2318 = vpop.permute.xlu0 %2317
        %2319 = vrot.lane.b32.xlu0 %v1576, 52
        %v2320 = vpop.permute.xlu0 %2319
        %2321 = vrot.lane.b32.xlu0 %v1577, 52
        %v2322 = vpop.permute.xlu0 %2321
        %2323 = vrot.lane.b32.xlu0 %v1578, 52
        %v2324 = vpop.permute.xlu0 %2323
        %2325 = vrot.lane.b32.xlu0 %v1579, 52
        %v2326 = vpop.permute.xlu0 %2325
        %2327 = vrot.lane.b32.xlu0 %v1580, 52
        %v2328 = vpop.permute.xlu0 %2327
        %2329 = vrot.lane.b32.xlu0 %v1581, 52
        %v2330 = vpop.permute.xlu0 %2329
        %2331 = vrot.lane.b32.xlu0 %v1582, 52
        %v2332 = vpop.permute.xlu0 %2331
        %2333 = vrot.lane.b32.xlu0 %v1583, 52
        %v2334 = vpop.permute.xlu0 %2333
        %2335 = vrot.lane.b32.xlu0 %v1584, 52
        %v2336 = vpop.permute.xlu0 %2335
        %2337 = vrot.lane.b32.xlu0 %v1585, 52
        %v2338 = vpop.permute.xlu0 %2337
        %2339 = vrot.lane.b32.xlu0 %v1586, 52
        %v2340 = vpop.permute.xlu0 %2339
        %2341 = vrot.lane.b32.xlu0 %v1587, 52
        %v2342 = vpop.permute.xlu0 %2341
        %2343 = vrot.lane.b32.xlu0 %v1588, 52
        %v2344 = vpop.permute.xlu0 %2343
        %2345 = vrot.lane.b32.xlu0 %v1589, 52
        %v2346 = vpop.permute.xlu0 %2345
        %2347 = vrot.lane.b32.xlu0 %v1590, 52
        %v2348 = vpop.permute.xlu0 %2347
        %2349 = vrot.lane.b32.xlu0 %v1591, 52
        %v2350 = vpop.permute.xlu0 %2349
        %2351 = vrot.lane.b32.xlu0 %v1592, 52
        %v2352 = vpop.permute.xlu0 %2351
        %2353 = vrot.lane.b32.xlu0 %v1593, 52
        %v2354 = vpop.permute.xlu0 %2353
        %2355 = vrot.lane.b32.xlu0 %v1594, 52
        %v2356 = vpop.permute.xlu0 %2355
        %2357 = vrot.lane.b32.xlu0 %v1595, 52
        %v2358 = vpop.permute.xlu0 %2357
        %2359 = vrot.lane.b32.xlu0 %v1596, 52
        %v2360 = vpop.permute.xlu0 %2359
        %2361 = vrot.lane.b32.xlu0 %v1597, 52
        %v2362 = vpop.permute.xlu0 %2361
        %2363 = vrot.lane.b32.xlu0 %v1598, 52
        %v2364 = vpop.permute.xlu0 %2363
        %2365 = vrot.lane.b32.xlu0 %v1599, 52
        %v2366 = vpop.permute.xlu0 %2365
        %2367 = vrot.lane.b32.xlu0 %v1600, 52
        %v2368 = vpop.permute.xlu0 %2367
        %2369 = vrot.lane.b32.xlu0 %v1601, 52
        %v2370 = vpop.permute.xlu0 %2369
        %2403 = vrot.lane.b32.xlu0 %v1667, 88
        %v2404 = vpop.permute.xlu0 %2403
        %2405 = vrot.lane.b32.xlu0 %v1668, 88
        %v2406 = vpop.permute.xlu0 %2405
        %2407 = vrot.lane.b32.xlu0 %v1669, 88
        %v2408 = vpop.permute.xlu0 %2407
        %2409 = vrot.lane.b32.xlu0 %v1670, 88
        %v2410 = vpop.permute.xlu0 %2409
        %2411 = vrot.lane.b32.xlu0 %v1671, 88
        %v2412 = vpop.permute.xlu0 %2411
        %2413 = vrot.lane.b32.xlu0 %v1672, 88
        %v2414 = vpop.permute.xlu0 %2413
        %2415 = vrot.lane.b32.xlu0 %v1673, 88
        %v2416 = vpop.permute.xlu0 %2415
        %2417 = vrot.lane.b32.xlu0 %v1674, 88
        %v2418 = vpop.permute.xlu0 %2417
        %2419 = vrot.lane.b32.xlu0 %v1675, 88
        %v2420 = vpop.permute.xlu0 %2419
        %2421 = vrot.lane.b32.xlu0 %v1676, 88
        %v2422 = vpop.permute.xlu0 %2421
        %2423 = vrot.lane.b32.xlu0 %v1677, 88
        %v2424 = vpop.permute.xlu0 %2423
        %2425 = vrot.lane.b32.xlu0 %v1678, 88
        %v2426 = vpop.permute.xlu0 %2425
        %2427 = vrot.lane.b32.xlu0 %v1679, 88
        %v2428 = vpop.permute.xlu0 %2427
        %2429 = vrot.lane.b32.xlu0 %v1680, 88
        %v2430 = vpop.permute.xlu0 %2429
        %2431 = vrot.lane.b32.xlu0 %v1681, 88
        %v2432 = vpop.permute.xlu0 %2431
        %2433 = vrot.lane.b32.xlu0 %v1682, 88
        %v2434 = vpop.permute.xlu0 %2433
        %2435 = vrot.lane.b32.xlu0 %v1683, 88
        %v2436 = vpop.permute.xlu0 %2435
        %2437 = vrot.lane.b32.xlu0 %v1684, 88
        %v2438 = vpop.permute.xlu0 %2437
        %2439 = vrot.lane.b32.xlu0 %v1685, 88
        %v2440 = vpop.permute.xlu0 %2439
        %2441 = vrot.lane.b32.xlu0 %v1686, 88
        %v2442 = vpop.permute.xlu0 %2441
        %2443 = vrot.lane.b32.xlu0 %v1687, 88
        %v2444 = vpop.permute.xlu0 %2443
        %2445 = vrot.lane.b32.xlu0 %v1688, 88
        %v2446 = vpop.permute.xlu0 %2445
        %2447 = vrot.lane.b32.xlu0 %v1689, 88
        %v2448 = vpop.permute.xlu0 %2447
        %2449 = vrot.lane.b32.xlu0 %v1690, 88
        %v2450 = vpop.permute.xlu0 %2449
        %2451 = vrot.lane.b32.xlu0 %v1691, 88
        %v2452 = vpop.permute.xlu0 %2451
        %2453 = vrot.lane.b32.xlu0 %v1692, 88
        %v2454 = vpop.permute.xlu0 %2453
        %2455 = vrot.lane.b32.xlu0 %v1693, 88
        %v2456 = vpop.permute.xlu0 %2455
        %2457 = vrot.lane.b32.xlu0 %v1694, 88
        %v2458 = vpop.permute.xlu0 %2457
        %2459 = vrot.lane.b32.xlu0 %v1695, 88
        %v2460 = vpop.permute.xlu0 %2459
        %2461 = vrot.lane.b32.xlu0 %v1696, 88
        %v2462 = vpop.permute.xlu0 %2461
        %2463 = vrot.lane.b32.xlu0 %v1697, 88
        %v2464 = vpop.permute.xlu0 %2463
        %2465 = vrot.lane.b32.xlu0 %v1698, 88
        %v2466 = vpop.permute.xlu0 %2465
        %2499 = vrot.lane.b32.xlu0 %v1763, 124
        %v2500 = vpop.permute.xlu0 %2499
        %2501 = vrot.lane.b32.xlu0 %v1764, 124
        %v2502 = vpop.permute.xlu0 %2501
        %2503 = vrot.lane.b32.xlu0 %v1765, 124
        %v2504 = vpop.permute.xlu0 %2503
        %2505 = vrot.lane.b32.xlu0 %v1766, 124
        %v2506 = vpop.permute.xlu0 %2505
        %2507 = vrot.lane.b32.xlu0 %v1767, 124
        %v2508 = vpop.permute.xlu0 %2507
        %2509 = vrot.lane.b32.xlu0 %v1768, 124
        %v2510 = vpop.permute.xlu0 %2509
        %2511 = vrot.lane.b32.xlu0 %v1769, 124
        %v2512 = vpop.permute.xlu0 %2511
        %2513 = vrot.lane.b32.xlu0 %v1770, 124
        %v2514 = vpop.permute.xlu0 %2513
        %2515 = vrot.lane.b32.xlu0 %v1771, 124
        %v2516 = vpop.permute.xlu0 %2515
        %2517 = vrot.lane.b32.xlu0 %v1772, 124
        %v2518 = vpop.permute.xlu0 %2517
        %2519 = vrot.lane.b32.xlu0 %v1773, 124
        %v2520 = vpop.permute.xlu0 %2519
        %2521 = vrot.lane.b32.xlu0 %v1774, 124
        %v2522 = vpop.permute.xlu0 %2521
        %2523 = vrot.lane.b32.xlu0 %v1775, 124
        %v2524 = vpop.permute.xlu0 %2523
        %2525 = vrot.lane.b32.xlu0 %v1776, 124
        %v2526 = vpop.permute.xlu0 %2525
        %2527 = vrot.lane.b32.xlu0 %v1777, 124
        %v2528 = vpop.permute.xlu0 %2527
        %2529 = vrot.lane.b32.xlu0 %v1778, 124
        %v2530 = vpop.permute.xlu0 %2529
        %2531 = vrot.lane.b32.xlu0 %v1779, 124
        %v2532 = vpop.permute.xlu0 %2531
        %2533 = vrot.lane.b32.xlu0 %v1780, 124
        %v2534 = vpop.permute.xlu0 %2533
        %2535 = vrot.lane.b32.xlu0 %v1781, 124
        %v2536 = vpop.permute.xlu0 %2535
        %2537 = vrot.lane.b32.xlu0 %v1782, 124
        %v2538 = vpop.permute.xlu0 %2537
        %2539 = vrot.lane.b32.xlu0 %v1783, 124
        %v2540 = vpop.permute.xlu0 %2539
        %2541 = vrot.lane.b32.xlu0 %v1784, 124
        %v2542 = vpop.permute.xlu0 %2541
        %2543 = vrot.lane.b32.xlu0 %v1785, 124
        %v2544 = vpop.permute.xlu0 %2543
        %2545 = vrot.lane.b32.xlu0 %v1786, 124
        %v2546 = vpop.permute.xlu0 %2545
        %2547 = vrot.lane.b32.xlu0 %v1787, 124
        %v2548 = vpop.permute.xlu0 %2547
        %2549 = vrot.lane.b32.xlu0 %v1788, 124
        %v2550 = vpop.permute.xlu0 %2549
        %2551 = vrot.lane.b32.xlu0 %v1789, 124
        %v2552 = vpop.permute.xlu0 %2551
        %2553 = vrot.lane.b32.xlu0 %v1790, 124
        %v2554 = vpop.permute.xlu0 %2553
        %2555 = vrot.lane.b32.xlu0 %v1791, 124
        %v2556 = vpop.permute.xlu0 %2555
        %2557 = vrot.lane.b32.xlu0 %v1792, 124
        %v2558 = vpop.permute.xlu0 %2557
        %2559 = vrot.lane.b32.xlu0 %v1793, 124
        %v2560 = vpop.permute.xlu0 %2559
        %2561 = vrot.lane.b32.xlu0 %v1794, 124
        %v2562 = vpop.permute.xlu0 %2561
        %2595 = vrot.lane.b32.xlu0 %v1859, 32
        %v2596 = vpop.permute.xlu0 %2595
        %2597 = vrot.lane.b32.xlu0 %v1860, 32
        %v2598 = vpop.permute.xlu0 %2597
        %2599 = vrot.lane.b32.xlu0 %v1861, 32
        %v2600 = vpop.permute.xlu0 %2599
        %2601 = vrot.lane.b32.xlu0 %v1862, 32
        %v2602 = vpop.permute.xlu0 %2601
        %2603 = vrot.lane.b32.xlu0 %v1863, 32
        %v2604 = vpop.permute.xlu0 %2603
        %2605 = vrot.lane.b32.xlu0 %v1864, 32
        %v2606 = vpop.permute.xlu0 %2605
        %2607 = vrot.lane.b32.xlu0 %v1865, 32
        %v2608 = vpop.permute.xlu0 %2607
        %2609 = vrot.lane.b32.xlu0 %v1866, 32
        %v2610 = vpop.permute.xlu0 %2609
        %2611 = vrot.lane.b32.xlu0 %v1867, 32
        %v2612 = vpop.permute.xlu0 %2611
        %2613 = vrot.lane.b32.xlu0 %v1868, 32
        %v2614 = vpop.permute.xlu0 %2613
        %2615 = vrot.lane.b32.xlu0 %v1869, 32
        %v2616 = vpop.permute.xlu0 %2615
        %2617 = vrot.lane.b32.xlu0 %v1870, 32
        %v2618 = vpop.permute.xlu0 %2617
        %2619 = vrot.lane.b32.xlu0 %v1871, 32
        %v2620 = vpop.permute.xlu0 %2619
        %2621 = vrot.lane.b32.xlu0 %v1872, 32
        %v2622 = vpop.permute.xlu0 %2621
        %2623 = vrot.lane.b32.xlu0 %v1873, 32
        %v2624 = vpop.permute.xlu0 %2623
        %2625 = vrot.lane.b32.xlu0 %v1874, 32
        %v2626 = vpop.permute.xlu0 %2625
        %2627 = vrot.lane.b32.xlu0 %v1875, 32
        %v2628 = vpop.permute.xlu0 %2627
        %2629 = vrot.lane.b32.xlu0 %v1876, 32
        %v2630 = vpop.permute.xlu0 %2629
        %2631 = vrot.lane.b32.xlu0 %v1877, 32
        %v2632 = vpop.permute.xlu0 %2631
        %2633 = vrot.lane.b32.xlu0 %v1878, 32
        %v2634 = vpop.permute.xlu0 %2633
        %2635 = vrot.lane.b32.xlu0 %v1879, 32
        %v2636 = vpop.permute.xlu0 %2635
        %2637 = vrot.lane.b32.xlu0 %v1880, 32
        %v2638 = vpop.permute.xlu0 %2637
        %2639 = vrot.lane.b32.xlu0 %v1881, 32
        %v2640 = vpop.permute.xlu0 %2639
        %2641 = vrot.lane.b32.xlu0 %v1882, 32
        %v2642 = vpop.permute.xlu0 %2641
        %2643 = vrot.lane.b32.xlu0 %v1883, 32
        %v2644 = vpop.permute.xlu0 %2643
        %2645 = vrot.lane.b32.xlu0 %v1884, 32
        %v2646 = vpop.permute.xlu0 %2645
        %2647 = vrot.lane.b32.xlu0 %v1885, 32
        %v2648 = vpop.permute.xlu0 %2647
        %2649 = vrot.lane.b32.xlu0 %v1886, 32
        %v2650 = vpop.permute.xlu0 %2649
        %2651 = vrot.lane.b32.xlu0 %v1887, 32
        %v2652 = vpop.permute.xlu0 %2651
        %2653 = vrot.lane.b32.xlu0 %v1888, 32
        %v2654 = vpop.permute.xlu0 %2653
        %2655 = vrot.lane.b32.xlu0 %v1889, 32
        %v2656 = vpop.permute.xlu0 %2655
        %2657 = vrot.lane.b32.xlu0 %v1890, 32
        %v2658 = vpop.permute.xlu0 %2657
        %vm2659 = vcmask 293888
        %v2662 = vsel %vm2659, %v1090, %v1924
        %v2665 = vsel %vm2659, %v1091, %v1926
        %v2668 = vsel %vm2659, %v1092, %v1928
        %v2671 = vsel %vm2659, %v1093, %v1930
        %v2674 = vsel %vm2659, %v1094, %v1932
        %v2677 = vsel %vm2659, %v1095, %v1934
        %v2680 = vsel %vm2659, %v1096, %v1936
        %v2683 = vsel %vm2659, %v1097, %v1938
        %v2686 = vsel %vm2659, %v1098, %v1940
        %v2689 = vsel %vm2659, %v1099, %v1942
        %v2692 = vsel %vm2659, %v1100, %v1944
        %v2695 = vsel %vm2659, %v1101, %v1946
        %v2698 = vsel %vm2659, %v1102, %v1948
        %v2701 = vsel %vm2659, %v1103, %v1950
        %v2704 = vsel %vm2659, %v1104, %v1952
        %v2707 = vsel %vm2659, %v1105, %v1954
        %v2710 = vsel %vm2659, %v1106, %v1956
        %v2713 = vsel %vm2659, %v1107, %v1958
        %v2716 = vsel %vm2659, %v1108, %v1960
        %v2719 = vsel %vm2659, %v1109, %v1962
        %v2722 = vsel %vm2659, %v1110, %v1964
        %v2725 = vsel %vm2659, %v1111, %v1966
        %v2728 = vsel %vm2659, %v1112, %v1968
        %v2731 = vsel %vm2659, %v1113, %v1970
        %v2734 = vsel %vm2659, %v1114, %v1972
        %v2737 = vsel %vm2659, %v1115, %v1974
        %v2740 = vsel %vm2659, %v1116, %v1976
        %v2743 = vsel %vm2659, %v1117, %v1978
        %v2746 = vsel %vm2659, %v1118, %v1980
        %v2749 = vsel %vm2659, %v1119, %v1982
        %v2752 = vsel %vm2659, %v1120, %v1984
        %v2755 = vsel %vm2659, %v1121, %v1986
        %vm2756 = vcmask 588800
        %v2758 = vsel %vm2756, %v2662, %v2020
        %v2760 = vsel %vm2756, %v2665, %v2022
        %v2762 = vsel %vm2756, %v2668, %v2024
        %v2764 = vsel %vm2756, %v2671, %v2026
        %v2766 = vsel %vm2756, %v2674, %v2028
        %v2768 = vsel %vm2756, %v2677, %v2030
        %v2770 = vsel %vm2756, %v2680, %v2032
        %v2772 = vsel %vm2756, %v2683, %v2034
        %v2774 = vsel %vm2756, %v2686, %v2036
        %v2776 = vsel %vm2756, %v2689, %v2038
        %v2778 = vsel %vm2756, %v2692, %v2040
        %v2780 = vsel %vm2756, %v2695, %v2042
        %v2782 = vsel %vm2756, %v2698, %v2044
        %v2784 = vsel %vm2756, %v2701, %v2046
        %v2786 = vsel %vm2756, %v2704, %v2048
        %v2788 = vsel %vm2756, %v2707, %v2050
        %v2790 = vsel %vm2756, %v2710, %v2052
        %v2792 = vsel %vm2756, %v2713, %v2054
        %v2794 = vsel %vm2756, %v2716, %v2056
        %v2796 = vsel %vm2756, %v2719, %v2058
        %v2798 = vsel %vm2756, %v2722, %v2060
        %v2800 = vsel %vm2756, %v2725, %v2062
        %v2802 = vsel %vm2756, %v2728, %v2064
        %v2804 = vsel %vm2756, %v2731, %v2066
        %v2806 = vsel %vm2756, %v2734, %v2068
        %v2808 = vsel %vm2756, %v2737, %v2070
        %v2810 = vsel %vm2756, %v2740, %v2072
        %v2812 = vsel %vm2756, %v2743, %v2074
        %v2814 = vsel %vm2756, %v2746, %v2076
        %v2816 = vsel %vm2756, %v2749, %v2078
        %v2818 = vsel %vm2756, %v2752, %v2080
        %v2820 = vsel %vm2756, %v2755, %v2082
        %vm2821 = vcmask 883712
        %v2823 = vsel %vm2821, %v2758, %v2116
        %v2826 = vsel %vm2821, %v2760, %v2118
        %v2829 = vsel %vm2821, %v2762, %v2120
        %v2832 = vsel %vm2821, %v2764, %v2122
        %v2835 = vsel %vm2821, %v2766, %v2124
        %v2838 = vsel %vm2821, %v2768, %v2126
        %v2841 = vsel %vm2821, %v2770, %v2128
        %v2844 = vsel %vm2821, %v2772, %v2130
        %v2847 = vsel %vm2821, %v2774, %v2132
        %v2850 = vsel %vm2821, %v2776, %v2134
        %v2853 = vsel %vm2821, %v2778, %v2136
        %v2856 = vsel %vm2821, %v2780, %v2138
        %v2859 = vsel %vm2821, %v2782, %v2140
        %v2862 = vsel %vm2821, %v2784, %v2142
        %v2865 = vsel %vm2821, %v2786, %v2144
        %v2868 = vsel %vm2821, %v2788, %v2146
        %v2871 = vsel %vm2821, %v2790, %v2148
        %v2874 = vsel %vm2821, %v2792, %v2150
        %v2877 = vsel %vm2821, %v2794, %v2152
        %v2880 = vsel %vm2821, %v2796, %v2154
        %v2883 = vsel %vm2821, %v2798, %v2156
        %v2886 = vsel %vm2821, %v2800, %v2158
        %v2889 = vsel %vm2821, %v2802, %v2160
        %v2892 = vsel %vm2821, %v2804, %v2162
        %v2895 = vsel %vm2821, %v2806, %v2164
        %v2898 = vsel %vm2821, %v2808, %v2166
        %v2901 = vsel %vm2821, %v2810, %v2168
        %v2904 = vsel %vm2821, %v2812, %v2170
        %v2907 = vsel %vm2821, %v2814, %v2172
        %v2910 = vsel %vm2821, %v2816, %v2174
        %v2913 = vsel %vm2821, %v2818, %v2176
        %v2916 = vsel %vm2821, %v2820, %v2178
        %vm2918 = vcmask 130048
        %v2920 = vsel %vm2918, %v2116, %v2212
        %v2922 = vsel %vm2918, %v2118, %v2214
        %v2924 = vsel %vm2918, %v2120, %v2216
        %v2926 = vsel %vm2918, %v2122, %v2218
        %v2928 = vsel %vm2918, %v2124, %v2220
        %v2930 = vsel %vm2918, %v2126, %v2222
        %v2932 = vsel %vm2918, %v2128, %v2224
        %v2934 = vsel %vm2918, %v2130, %v2226
        %v2936 = vsel %vm2918, %v2132, %v2228
        %v2938 = vsel %vm2918, %v2134, %v2230
        %v2940 = vsel %vm2918, %v2136, %v2232
        %v2942 = vsel %vm2918, %v2138, %v2234
        %v2944 = vsel %vm2918, %v2140, %v2236
        %v2946 = vsel %vm2918, %v2142, %v2238
        %v2948 = vsel %vm2918, %v2144, %v2240
        %v2950 = vsel %vm2918, %v2146, %v2242
        %v2952 = vsel %vm2918, %v2148, %v2244
        %v2954 = vsel %vm2918, %v2150, %v2246
        %v2956 = vsel %vm2918, %v2152, %v2248
        %v2958 = vsel %vm2918, %v2154, %v2250
        %v2960 = vsel %vm2918, %v2156, %v2252
        %v2962 = vsel %vm2918, %v2158, %v2254
        %v2964 = vsel %vm2918, %v2160, %v2256
        %v2966 = vsel %vm2918, %v2162, %v2258
        %v2968 = vsel %vm2918, %v2164, %v2260
        %v2970 = vsel %vm2918, %v2166, %v2262
        %v2972 = vsel %vm2918, %v2168, %v2264
        %v2974 = vsel %vm2918, %v2170, %v2266
        %v2976 = vsel %vm2918, %v2172, %v2268
        %v2978 = vsel %vm2918, %v2174, %v2270
        %v2980 = vsel %vm2918, %v2176, %v2272
        %v2982 = vsel %vm2918, %v2178, %v2274
        %vm2983 = vcmask 424960
        %v2985 = vsel %vm2983, %v2920, %v2308
        %v2987 = vsel %vm2983, %v2922, %v2310
        %v2989 = vsel %vm2983, %v2924, %v2312
        %v2991 = vsel %vm2983, %v2926, %v2314
        %v2993 = vsel %vm2983, %v2928, %v2316
        %v2995 = vsel %vm2983, %v2930, %v2318
        %v2997 = vsel %vm2983, %v2932, %v2320
        %v2999 = vsel %vm2983, %v2934, %v2322
        %v3001 = vsel %vm2983, %v2936, %v2324
        %v3003 = vsel %vm2983, %v2938, %v2326
        %v3005 = vsel %vm2983, %v2940, %v2328
        %v3007 = vsel %vm2983, %v2942, %v2330
        %v3009 = vsel %vm2983, %v2944, %v2332
        %v3011 = vsel %vm2983, %v2946, %v2334
        %v3013 = vsel %vm2983, %v2948, %v2336
        %v3015 = vsel %vm2983, %v2950, %v2338
        %v3017 = vsel %vm2983, %v2952, %v2340
        %v3019 = vsel %vm2983, %v2954, %v2342
        %v3021 = vsel %vm2983, %v2956, %v2344
        %v3023 = vsel %vm2983, %v2958, %v2346
        %v3025 = vsel %vm2983, %v2960, %v2348
        %v3027 = vsel %vm2983, %v2962, %v2350
        %v3029 = vsel %vm2983, %v2964, %v2352
        %v3031 = vsel %vm2983, %v2966, %v2354
        %v3033 = vsel %vm2983, %v2968, %v2356
        %v3035 = vsel %vm2983, %v2970, %v2358
        %v3037 = vsel %vm2983, %v2972, %v2360
        %v3039 = vsel %vm2983, %v2974, %v2362
        %v3041 = vsel %vm2983, %v2976, %v2364
        %v3043 = vsel %vm2983, %v2978, %v2366
        %v3045 = vsel %vm2983, %v2980, %v2368
        %v3047 = vsel %vm2983, %v2982, %v2370
        %vm3048 = vcmask 719872
        %v3050 = vsel %vm3048, %v2985, %v2404
        %v3052 = vsel %vm3048, %v2987, %v2406
        %v3054 = vsel %vm3048, %v2989, %v2408
        %v3056 = vsel %vm3048, %v2991, %v2410
        %v3058 = vsel %vm3048, %v2993, %v2412
        %v3060 = vsel %vm3048, %v2995, %v2414
        %v3062 = vsel %vm3048, %v2997, %v2416
        %v3064 = vsel %vm3048, %v2999, %v2418
        %v3066 = vsel %vm3048, %v3001, %v2420
        %v3068 = vsel %vm3048, %v3003, %v2422
        %v3070 = vsel %vm3048, %v3005, %v2424
        %v3072 = vsel %vm3048, %v3007, %v2426
        %v3074 = vsel %vm3048, %v3009, %v2428
        %v3076 = vsel %vm3048, %v3011, %v2430
        %v3078 = vsel %vm3048, %v3013, %v2432
        %v3080 = vsel %vm3048, %v3015, %v2434
        %v3082 = vsel %vm3048, %v3017, %v2436
        %v3084 = vsel %vm3048, %v3019, %v2438
        %v3086 = vsel %vm3048, %v3021, %v2440
        %v3088 = vsel %vm3048, %v3023, %v2442
        %v3090 = vsel %vm3048, %v3025, %v2444
        %v3092 = vsel %vm3048, %v3027, %v2446
        %v3094 = vsel %vm3048, %v3029, %v2448
        %v3096 = vsel %vm3048, %v3031, %v2450
        %v3098 = vsel %vm3048, %v3033, %v2452
        %v3100 = vsel %vm3048, %v3035, %v2454
        %v3102 = vsel %vm3048, %v3037, %v2456
        %v3104 = vsel %vm3048, %v3039, %v2458
        %v3106 = vsel %vm3048, %v3041, %v2460
        %v3108 = vsel %vm3048, %v3043, %v2462
        %v3110 = vsel %vm3048, %v3045, %v2464
        %v3112 = vsel %vm3048, %v3047, %v2466
        %vm3113 = vcmask 1014784
        %v3115 = vsel %vm3113, %v3050, %v2500
        %v3118 = vsel %vm3113, %v3052, %v2502
        %v3121 = vsel %vm3113, %v3054, %v2504
        %v3124 = vsel %vm3113, %v3056, %v2506
        %v3127 = vsel %vm3113, %v3058, %v2508
        %v3130 = vsel %vm3113, %v3060, %v2510
        %v3133 = vsel %vm3113, %v3062, %v2512
        %v3136 = vsel %vm3113, %v3064, %v2514
        %v3139 = vsel %vm3113, %v3066, %v2516
        %v3142 = vsel %vm3113, %v3068, %v2518
        %v3145 = vsel %vm3113, %v3070, %v2520
        %v3148 = vsel %vm3113, %v3072, %v2522
        %v3151 = vsel %vm3113, %v3074, %v2524
        %v3154 = vsel %vm3113, %v3076, %v2526
        %v3157 = vsel %vm3113, %v3078, %v2528
        %v3160 = vsel %vm3113, %v3080, %v2530
        %v3163 = vsel %vm3113, %v3082, %v2532
        %v3166 = vsel %vm3113, %v3084, %v2534
        %v3169 = vsel %vm3113, %v3086, %v2536
        %v3172 = vsel %vm3113, %v3088, %v2538
        %v3175 = vsel %vm3113, %v3090, %v2540
        %v3178 = vsel %vm3113, %v3092, %v2542
        %v3181 = vsel %vm3113, %v3094, %v2544
        %v3184 = vsel %vm3113, %v3096, %v2546
        %v3187 = vsel %vm3113, %v3098, %v2548
        %v3190 = vsel %vm3113, %v3100, %v2550
        %v3193 = vsel %vm3113, %v3102, %v2552
        %v3196 = vsel %vm3113, %v3104, %v2554
        %v3199 = vsel %vm3113, %v3106, %v2556
        %v3202 = vsel %vm3113, %v3108, %v2558
        %v3205 = vsel %vm3113, %v3110, %v2560
        %v3208 = vsel %vm3113, %v3112, %v2562
        %vm3210 = vcmask 261120
        %v3212 = vsel %vm3210, %v2500, %v2596
        %v3214 = vsel %vm3210, %v2502, %v2598
        %v3216 = vsel %vm3210, %v2504, %v2600
        %v3218 = vsel %vm3210, %v2506, %v2602
        %v3220 = vsel %vm3210, %v2508, %v2604
        %v3222 = vsel %vm3210, %v2510, %v2606
        %v3224 = vsel %vm3210, %v2512, %v2608
        %v3226 = vsel %vm3210, %v2514, %v2610
        %v3228 = vsel %vm3210, %v2516, %v2612
        %v3230 = vsel %vm3210, %v2518, %v2614
        %v3232 = vsel %vm3210, %v2520, %v2616
        %v3234 = vsel %vm3210, %v2522, %v2618
        %v3236 = vsel %vm3210, %v2524, %v2620
        %v3238 = vsel %vm3210, %v2526, %v2622
        %v3240 = vsel %vm3210, %v2528, %v2624
        %v3242 = vsel %vm3210, %v2530, %v2626
        %v3244 = vsel %vm3210, %v2532, %v2628
        %v3246 = vsel %vm3210, %v2534, %v2630
        %v3248 = vsel %vm3210, %v2536, %v2632
        %v3250 = vsel %vm3210, %v2538, %v2634
        %v3252 = vsel %vm3210, %v2540, %v2636
        %v3254 = vsel %vm3210, %v2542, %v2638
        %v3256 = vsel %vm3210, %v2544, %v2640
        %v3258 = vsel %vm3210, %v2546, %v2642
        %v3260 = vsel %vm3210, %v2548, %v2644
        %v3262 = vsel %vm3210, %v2550, %v2646
        %v3264 = vsel %vm3210, %v2552, %v2648
        %v3266 = vsel %vm3210, %v2554, %v2650
        %v3268 = vsel %vm3210, %v2556, %v2652
        %v3270 = vsel %vm3210, %v2558, %v2654
        %v3272 = vsel %vm3210, %v2560, %v2656
        %v3274 = vsel %vm3210, %v2562, %v2658
        %v3275 = vld [vmem:[%s1] sm:$0xf]
        %v3276 = vld [vmem:[%s1 + $0x4] sm:$0xf]
        %v3277 = vld [vmem:[%s1 + $0x8] sm:$0xf]
        %v3278 = vld [vmem:[%s1 + $0xc] sm:$0xf]
        %v3279 = vld [vmem:[%s1 + $0x10] sm:$0xf]
        %v3280 = vld [vmem:[%s1 + $0x14] sm:$0xf]
        %v3281 = vld [vmem:[%s1 + $0x18] sm:$0xf]
        %v3282 = vld [vmem:[%s1 + $0x1c] sm:$0xf]
        %v3283 = vld [vmem:[%s1 + $0x20] sm:$0xf]
        %v3284 = vld [vmem:[%s1 + $0x24] sm:$0xf]
        %v3285 = vld [vmem:[%s1 + $0x28] sm:$0xf]
        %v3286 = vld [vmem:[%s1 + $0x2c] sm:$0xf]
        %v3287 = vld [vmem:[%s1 + $0x30] sm:$0xf]
        %v3288 = vld [vmem:[%s1 + $0x34] sm:$0xf]
        %v3289 = vld [vmem:[%s1 + $0x38] sm:$0xf]
        %v3290 = vld [vmem:[%s1 + $0x3c] sm:$0xf]
        %v3291 = vld [vmem:[%s1 + $0x40] sm:$0xf]
        %v3292 = vld [vmem:[%s1 + $0x44] sm:$0xf]
        %v3293 = vld [vmem:[%s1 + $0x48] sm:$0xf]
        %v3294 = vld [vmem:[%s1 + $0x4c] sm:$0xf]
        %v3295 = vld [vmem:[%s1 + $0x50] sm:$0xf]
        %v3296 = vld [vmem:[%s1 + $0x54] sm:$0xf]
        %v3297 = vld [vmem:[%s1 + $0x58] sm:$0xf]
        %v3298 = vld [vmem:[%s1 + $0x5c] sm:$0xf]
        %v3299 = vld [vmem:[%s1 + $0x60] sm:$0xf]
        %v3300 = vld [vmem:[%s1 + $0x64] sm:$0xf]
        %v3301 = vld [vmem:[%s1 + $0x68] sm:$0xf]
        %v3302 = vld [vmem:[%s1 + $0x6c] sm:$0xf]
        %v3303 = vld [vmem:[%s1 + $0x70] sm:$0xf]
        %v3304 = vld [vmem:[%s1 + $0x74] sm:$0xf]
        %v3305 = vld [vmem:[%s1 + $0x78] sm:$0xf]
        %v3306 = vld [vmem:[%s1 + $0x7c] sm:$0xf]
        %v3307 = vld [vmem:[%s1 + $0x80] sm:$0xf]
        %v3308 = vld [vmem:[%s1 + $0x84] sm:$0xf]
        %v3309 = vld [vmem:[%s1 + $0x88] sm:$0xf]
        %v3310 = vld [vmem:[%s1 + $0x8c] sm:$0xf]
        %v3311 = vld [vmem:[%s1 + $0x90] sm:$0xf]
        %v3312 = vld [vmem:[%s1 + $0x94] sm:$0xf]
        %v3313 = vld [vmem:[%s1 + $0x98] sm:$0xf]
        %v3314 = vld [vmem:[%s1 + $0x9c] sm:$0xf]
        %v3315 = vld [vmem:[%s1 + $0xa0] sm:$0x3]
        %v3357 = vunpack.c.l.b16 %v3275
        %v3358 = vunpack.c.l.b16 %v3276
        %v3359 = vunpack.c.l.b16 %v3277
        %v3360 = vunpack.c.l.b16 %v3278
        %v3361 = vunpack.c.l.b16 %v3279
        %v3362 = vunpack.c.l.b16 %v3280
        %v3363 = vunpack.c.l.b16 %v3281
        %v3364 = vunpack.c.l.b16 %v3282
        %v3365 = vunpack.c.l.b16 %v3283
        %v3366 = vunpack.c.l.b16 %v3284
        %v3367 = vunpack.c.l.b16 %v3285
        %v3368 = vunpack.c.l.b16 %v3286
        %v3369 = vunpack.c.l.b16 %v3287
        %v3370 = vunpack.c.l.b16 %v3288
        %v3371 = vunpack.c.l.b16 %v3289
        %v3372 = vunpack.c.l.b16 %v3290
        %v3373 = vunpack.c.l.b16 %v3291
        %v3374 = vunpack.c.l.b16 %v3292
        %v3375 = vunpack.c.l.b16 %v3293
        %v3376 = vunpack.c.l.b16 %v3294
        %v3377 = vunpack.c.l.b16 %v3295
        %v3378 = vunpack.c.l.b16 %v3296
        %v3379 = vunpack.c.l.b16 %v3297
        %v3380 = vunpack.c.l.b16 %v3298
        %v3381 = vunpack.c.l.b16 %v3299
        %v3382 = vunpack.c.l.b16 %v3300
        %v3383 = vunpack.c.l.b16 %v3301
        %v3384 = vunpack.c.l.b16 %v3302
        %v3385 = vunpack.c.l.b16 %v3303
        %v3386 = vunpack.c.l.b16 %v3304
        %v3387 = vunpack.c.l.b16 %v3305
        %v3388 = vunpack.c.l.b16 %v3306
        %v3389 = vunpack.c.l.b16 %v3307
        %v3390 = vunpack.c.l.b16 %v3308
        %v3391 = vunpack.c.l.b16 %v3309
        %v3392 = vunpack.c.l.b16 %v3310
        %v3393 = vunpack.c.l.b16 %v3311
        %v3394 = vunpack.c.l.b16 %v3312
        %v3395 = vunpack.c.l.b16 %v3313
        %v3396 = vunpack.c.l.b16 %v3314
        %v3397 = vunpack.c.l.b16 %v3315
        %v3398 = vpack.c.b16 %v3358, %v3357
        %v3399 = vpack.c.b16 %v3360, %v3359
        %v3400 = vpack.c.b16 %v3362, %v3361
        %v3401 = vpack.c.b16 %v3364, %v3363
        %v3402 = vpack.c.b16 %v3366, %v3365
        %v3403 = vpack.c.b16 %v3368, %v3367
        %v3404 = vpack.c.b16 %v3370, %v3369
        %v3405 = vpack.c.b16 %v3372, %v3371
        %v3406 = vpack.c.b16 %v3374, %v3373
        %v3407 = vpack.c.b16 %v3376, %v3375
        %v3408 = vpack.c.b16 %v3378, %v3377
        %v3409 = vpack.c.b16 %v3380, %v3379
        %v3410 = vpack.c.b16 %v3382, %v3381
        %v3411 = vpack.c.b16 %v3384, %v3383
        %v3412 = vpack.c.b16 %v3386, %v3385
        %v3413 = vpack.c.b16 %v3388, %v3387
        %v3414 = vpack.c.b16 %v3390, %v3389
        %v3415 = vpack.c.b16 %v3392, %v3391
        %v3416 = vpack.c.b16 %v3394, %v3393
        %v3417 = vpack.c.b16 %v3396, %v3395
        %v3418 = vpack.c.b16 %v3397, %v3397
        %vm3439 = vcmask 556032
        %v3440 = vsel %vm3439, %v3212, 0
        %v3442 = vsel %vm3439, %v3214, 0
        %v3444 = vsel %vm3439, %v3216, 0
        %v3446 = vsel %vm3439, %v3218, 0
        %v3448 = vsel %vm3439, %v3220, 0
        %v3450 = vsel %vm3439, %v3222, 0
        %v3452 = vsel %vm3439, %v3224, 0
        %v3454 = vsel %vm3439, %v3226, 0
        %v3456 = vsel %vm3439, %v3228, 0
        %v3458 = vsel %vm3439, %v3230, 0
        %v3460 = vsel %vm3439, %v3232, 0
        %v3462 = vsel %vm3439, %v3234, 0
        %v3464 = vsel %vm3439, %v3236, 0
        %v3466 = vsel %vm3439, %v3238, 0
        %v3468 = vsel %vm3439, %v3240, 0
        %v3470 = vsel %vm3439, %v3242, 0
        %v3472 = vsel %vm3439, %v3244, 0
        %v3474 = vsel %vm3439, %v3246, 0
        %v3476 = vsel %vm3439, %v3248, 0
        %v3478 = vsel %vm3439, %v3250, 0
        %v3480 = vsel %vm3439, %v3252, 0
        %v3482 = vsel %vm3439, %v3254, 0
        %v3484 = vsel %vm3439, %v3256, 0
        %v3486 = vsel %vm3439, %v3258, 0
        %v3488 = vsel %vm3439, %v3260, 0
        %v3490 = vsel %vm3439, %v3262, 0
        %v3492 = vsel %vm3439, %v3264, 0
        %v3494 = vsel %vm3439, %v3266, 0
        %v3496 = vsel %vm3439, %v3268, 0
        %v3498 = vsel %vm3439, %v3270, 0
        %v3500 = vsel %vm3439, %v3272, 0
        %v3502 = vsel %vm3439, %v3274, 0
        %vm3504 = vcmask 1041408
        %v3506 = vsel %vm3504, %v3418, 0
        %3508 = vmatprep.subr.bf16.mxu0 0
        %3509 = vmatpush1.bf16.msra.mxu0 %v3398
        %3510 = vmatprep.subr.bf16.mxu0 0
        %3511 = vmatpush1.bf16.msra.mxu0 %v3399
        %3512 = vmatprep.subr.bf16.mxu0 0
        %3513 = vmatpush1.bf16.msra.mxu0 %v3400
        %3514 = vmatprep.subr.bf16.mxu0 0
        %3515 = vmatpush1.bf16.msra.mxu0 %v3401
        %3516 = vmatprep.subr.bf16.mxu0 0
        %3517 = vmatpush1.bf16.msra.mxu0 %v3402
        %3518 = vmatprep.subr.bf16.mxu0 0
        %3519 = vmatpush1.bf16.msra.mxu0 %v3403
        %3520 = vmatprep.subr.bf16.mxu0 0
        %3521 = vmatpush1.bf16.msra.mxu0 %v3404
        %3522 = vmatprep.subr.bf16.mxu0 0
        %3523 = vmatpush1.bf16.msra.mxu0 %v3405
        %3524 = vmatprep.subr.bf16.mxu0 0
        %3525 = vmatpush1.bf16.msra.mxu0 %v3406
        %3526 = vmatprep.subr.bf16.mxu0 0
        %3527 = vmatpush1.bf16.msra.mxu0 %v3407
        %3528 = vmatprep.subr.bf16.mxu0 0
        %3529 = vmatpush1.bf16.msra.mxu0 %v3408
        %3530 = vmatprep.subr.bf16.mxu0 0
        %3531 = vmatpush1.bf16.msra.mxu0 %v3409
        %3532 = vmatprep.subr.bf16.mxu0 0
        %3533 = vmatpush1.bf16.msra.mxu0 %v3410
        %3534 = vmatprep.subr.bf16.mxu0 0
        %3535 = vmatpush1.bf16.msra.mxu0 %v3411
        %3536 = vmatprep.subr.bf16.mxu0 0
        %3537 = vmatpush1.bf16.msra.mxu0 %v3412
        %3538 = vmatprep.subr.bf16.mxu0 0
        %3539 = vmatpush1.bf16.msra.mxu0 %v3413
        %3540 = vmatprep.mubr.bf16.mxu0 %v3115
        %3541 = vmatmul.mubr.bf16.gmra.mrb[0].mxu0 %v2823
        %v3542 = vpop.f32.mrb[0].mxu0
        %v3543 = vadd.f32 0.0, %v3542
        %v3544 = vpop.f32.mrb[0].mxu0
        %v3545 = vpop.f32.mrb[0].mxu0
        %v3546 = vadd.f32 0.0, %v3545
        %v3547 = vpop.f32.mrb[0].mxu0
        %3548 = vmatprep.mubr.bf16.mxu0 %v3118
        %3549 = vmatmul.mubr.bf16.gmra.mrb[0].mxu0 %v2826
        %v3550 = vpop.f32.mrb[0].mxu0
        %v3551 = vadd.f32 0.0, %v3550
        %v3552 = vpop.f32.mrb[0].mxu0
        %v3553 = vpop.f32.mrb[0].mxu0
        %v3554 = vadd.f32 0.0, %v3553
        %v3555 = vpop.f32.mrb[0].mxu0
        %3556 = vmatprep.mubr.bf16.mxu0 %v3121
        %3557 = vmatmul.mubr.bf16.gmra.mrb[0].mxu0 %v2829
        %v3558 = vpop.f32.mrb[0].mxu0
        %v3559 = vadd.f32 0.0, %v3558
        %v3560 = vpop.f32.mrb[0].mxu0
        %v3561 = vpop.f32.mrb[0].mxu0
        %v3562 = vadd.f32 0.0, %v3561
        %v3563 = vpop.f32.mrb[0].mxu0
        %3564 = vmatprep.mubr.bf16.mxu0 %v3124
        %3565 = vmatmul.mubr.bf16.gmra.mrb[0].mxu0 %v2832
        %v3566 = vpop.f32.mrb[0].mxu0
        %v3567 = vadd.f32 0.0, %v3566
        %v3568 = vpop.f32.mrb[0].mxu0
        %v3569 = vpop.f32.mrb[0].mxu0
        %v3570 = vadd.f32 0.0, %v3569
        %v3571 = vpop.f32.mrb[0].mxu0
        %3572 = vmatprep.mubr.bf16.mxu0 %v3127
        %3573 = vmatmul.mubr.bf16.gmra.mrb[0].mxu0 %v2835
        %v3574 = vpop.f32.mrb[0].mxu0
        %v3575 = vadd.f32 0.0, %v3574
        %v3576 = vpop.f32.mrb[0].mxu0
        %v3577 = vpop.f32.mrb[0].mxu0
        %v3578 = vadd.f32 0.0, %v3577
        %v3579 = vpop.f32.mrb[0].mxu0
        %3580 = vmatprep.mubr.bf16.mxu0 %v3130
        %3581 = vmatmul.mubr.bf16.gmra.mrb[0].mxu0 %v2838
        %v3582 = vpop.f32.mrb[0].mxu0
        %v3583 = vadd.f32 0.0, %v3582
        %v3584 = vpop.f32.mrb[0].mxu0
        %v3585 = vpop.f32.mrb[0].mxu0
        %v3586 = vadd.f32 0.0, %v3585
        %v3587 = vpop.f32.mrb[0].mxu0
        %3588 = vmatprep.mubr.bf16.mxu0 %v3133
        %3589 = vmatmul.mubr.bf16.gmra.mrb[0].mxu0 %v2841
        %v3590 = vpop.f32.mrb[0].mxu0
        %v3591 = vadd.f32 0.0, %v3590
        %v3592 = vpop.f32.mrb[0].mxu0
        %v3593 = vpop.f32.mrb[0].mxu0
        %v3594 = vadd.f32 0.0, %v3593
        %v3595 = vpop.f32.mrb[0].mxu0
        %3596 = vmatprep.mubr.bf16.mxu0 %v3136
        %3597 = vmatmul.mubr.bf16.gmra.mrb[0].mxu0 %v2844
        %v3598 = vpop.f32.mrb[0].mxu0
        %v3599 = vadd.f32 0.0, %v3598
        %v3600 = vpop.f32.mrb[0].mxu0
        %v3601 = vpop.f32.mrb[0].mxu0
        %v3602 = vadd.f32 0.0, %v3601
        %v3603 = vpop.f32.mrb[0].mxu0
        %3604 = vmatprep.mubr.bf16.mxu0 %v3139
        %3605 = vmatmul.mubr.bf16.gmra.mrb[0].mxu0 %v2847
        %v3606 = vpop.f32.mrb[0].mxu0
        %v3607 = vadd.f32 0.0, %v3606
        %v3608 = vpop.f32.mrb[0].mxu0
        %v3609 = vpop.f32.mrb[0].mxu0
        %v3610 = vadd.f32 0.0, %v3609
        %v3611 = vpop.f32.mrb[0].mxu0
        %3612 = vmatprep.mubr.bf16.mxu0 %v3142
        %3613 = vmatmul.mubr.bf16.gmra.mrb[0].mxu0 %v2850
        %v3614 = vpop.f32.mrb[0].mxu0
        %v3615 = vadd.f32 0.0, %v3614
        %v3616 = vpop.f32.mrb[0].mxu0
        %v3617 = vpop.f32.mrb[0].mxu0
        %v3618 = vadd.f32 0.0, %v3617
        %v3619 = vpop.f32.mrb[0].mxu0
        %3620 = vmatprep.mubr.bf16.mxu0 %v3145
        %3621 = vmatmul.mubr.bf16.gmra.mrb[0].mxu0 %v2853
        %v3622 = vpop.f32.mrb[0].mxu0
        %v3623 = vadd.f32 0.0, %v3622
        %v3624 = vpop.f32.mrb[0].mxu0
        %v3625 = vpop.f32.mrb[0].mxu0
        %v3626 = vadd.f32 0.0, %v3625
        %v3627 = vpop.f32.mrb[0].mxu0
        %3628 = vmatprep.mubr.bf16.mxu0 %v3148
        %3629 = vmatmul.mubr.bf16.gmra.mrb[0].mxu0 %v2856
        %v3630 = vpop.f32.mrb[0].mxu0
        %v3631 = vadd.f32 0.0, %v3630
        %v3632 = vpop.f32.mrb[0].mxu0
        %v3633 = vpop.f32.mrb[0].mxu0
        %v3634 = vadd.f32 0.0, %v3633
        %v3635 = vpop.f32.mrb[0].mxu0
        %3636 = vmatprep.mubr.bf16.mxu0 %v3151
        %3637 = vmatmul.mubr.bf16.gmra.mrb[0].mxu0 %v2859
        %v3638 = vpop.f32.mrb[0].mxu0
        %v3639 = vadd.f32 0.0, %v3638
        %v3640 = vpop.f32.mrb[0].mxu0
        %v3641 = vpop.f32.mrb[0].mxu0
        %v3642 = vadd.f32 0.0, %v3641
        %v3643 = vpop.f32.mrb[0].mxu0
        %3644 = vmatprep.mubr.bf16.mxu0 %v3154
        %3645 = vmatmul.mubr.bf16.gmra.mrb[0].mxu0 %v2862
        %v3646 = vpop.f32.mrb[0].mxu0
        %v3647 = vadd.f32 0.0, %v3646
        %v3648 = vpop.f32.mrb[0].mxu0
        %v3649 = vpop.f32.mrb[0].mxu0
        %v3650 = vadd.f32 0.0, %v3649
        %v3651 = vpop.f32.mrb[0].mxu0
        %3652 = vmatprep.mubr.bf16.mxu0 %v3157
        %3653 = vmatmul.mubr.bf16.gmra.mrb[0].mxu0 %v2865
        %v3654 = vpop.f32.mrb[0].mxu0
        %v3655 = vadd.f32 0.0, %v3654
        %v3656 = vpop.f32.mrb[0].mxu0
        %v3657 = vpop.f32.mrb[0].mxu0
        %v3658 = vadd.f32 0.0, %v3657
        %v3659 = vpop.f32.mrb[0].mxu0
        %3660 = vmatprep.mubr.bf16.mxu0 %v3160
        %3661 = vmatmul.mubr.bf16.gmra.mrb[0].mxu0 %v2868
        %v3662 = vpop.f32.mrb[0].mxu0
        %v3663 = vadd.f32 0.0, %v3662
        %v3664 = vpop.f32.mrb[0].mxu0
        %v3665 = vpop.f32.mrb[0].mxu0
        %v3666 = vadd.f32 0.0, %v3665
        %v3667 = vpop.f32.mrb[0].mxu0
        %3668 = vmatprep.mubr.bf16.mxu0 %v3163
        %3669 = vmatmul.mubr.bf16.gmra.mrb[0].mxu0 %v2871
        %v3670 = vpop.f32.mrb[0].mxu0
        %v3671 = vadd.f32 0.0, %v3670
        %v3672 = vpop.f32.mrb[0].mxu0
        %v3673 = vpop.f32.mrb[0].mxu0
        %v3674 = vadd.f32 0.0, %v3673
        %v3675 = vpop.f32.mrb[0].mxu0
        %3676 = vmatprep.mubr.bf16.mxu0 %v3166
        %3677 = vmatmul.mubr.bf16.gmra.mrb[0].mxu0 %v2874
        %v3678 = vpop.f32.mrb[0].mxu0
        %v3679 = vadd.f32 0.0, %v3678
        %v3680 = vpop.f32.mrb[0].mxu0
        %v3681 = vpop.f32.mrb[0].mxu0
        %v3682 = vadd.f32 0.0, %v3681
        %v3683 = vpop.f32.mrb[0].mxu0
        %3684 = vmatprep.mubr.bf16.mxu0 %v3169
        %3685 = vmatmul.mubr.bf16.gmra.mrb[0].mxu0 %v2877
        %v3686 = vpop.f32.mrb[0].mxu0
        %v3687 = vadd.f32 0.0, %v3686
        %v3688 = vpop.f32.mrb[0].mxu0
        %v3689 = vpop.f32.mrb[0].mxu0
        %v3690 = vadd.f32 0.0, %v3689
        %v3691 = vpop.f32.mrb[0].mxu0
        %3692 = vmatprep.mubr.bf16.mxu0 %v3172
        %3693 = vmatmul.mubr.bf16.gmra.mrb[0].mxu0 %v2880
        %v3694 = vpop.f32.mrb[0].mxu0
        %v3695 = vadd.f32 0.0, %v3694
        %v3696 = vpop.f32.mrb[0].mxu0
        %v3697 = vpop.f32.mrb[0].mxu0
        %v3698 = vadd.f32 0.0, %v3697
        %v3699 = vpop.f32.mrb[0].mxu0
        %3700 = vmatprep.mubr.bf16.mxu0 %v3175
        %3701 = vmatmul.mubr.bf16.gmra.mrb[0].mxu0 %v2883
        %v3702 = vpop.f32.mrb[0].mxu0
        %v3703 = vadd.f32 0.0, %v3702
        %v3704 = vpop.f32.mrb[0].mxu0
        %v3705 = vpop.f32.mrb[0].mxu0
        %v3706 = vadd.f32 0.0, %v3705
        %v3707 = vpop.f32.mrb[0].mxu0
        %3708 = vmatprep.mubr.bf16.mxu0 %v3178
        %3709 = vmatmul.mubr.bf16.gmra.mrb[0].mxu0 %v2886
        %v3710 = vpop.f32.mrb[0].mxu0
        %v3711 = vadd.f32 0.0, %v3710
        %v3712 = vpop.f32.mrb[0].mxu0
        %v3713 = vpop.f32.mrb[0].mxu0
        %v3714 = vadd.f32 0.0, %v3713
        %v3715 = vpop.f32.mrb[0].mxu0
        %3716 = vmatprep.mubr.bf16.mxu0 %v3181
        %3717 = vmatmul.mubr.bf16.gmra.mrb[0].mxu0 %v2889
        %v3718 = vpop.f32.mrb[0].mxu0
        %v3719 = vadd.f32 0.0, %v3718
        %v3720 = vpop.f32.mrb[0].mxu0
        %v3721 = vpop.f32.mrb[0].mxu0
        %v3722 = vadd.f32 0.0, %v3721
        %v3723 = vpop.f32.mrb[0].mxu0
        %3724 = vmatprep.mubr.bf16.mxu0 %v3184
        %3725 = vmatmul.mubr.bf16.gmra.mrb[0].mxu0 %v2892
        %v3726 = vpop.f32.mrb[0].mxu0
        %v3727 = vadd.f32 0.0, %v3726
        %v3728 = vpop.f32.mrb[0].mxu0
        %v3729 = vpop.f32.mrb[0].mxu0
        %v3730 = vadd.f32 0.0, %v3729
        %v3731 = vpop.f32.mrb[0].mxu0
        %3732 = vmatprep.mubr.bf16.mxu0 %v3187
        %3733 = vmatmul.mubr.bf16.gmra.mrb[0].mxu0 %v2895
        %v3734 = vpop.f32.mrb[0].mxu0
        %v3735 = vadd.f32 0.0, %v3734
        %v3736 = vpop.f32.mrb[0].mxu0
        %v3737 = vpop.f32.mrb[0].mxu0
        %v3738 = vadd.f32 0.0, %v3737
        %v3739 = vpop.f32.mrb[0].mxu0
        %3740 = vmatprep.mubr.bf16.mxu0 %v3190
        %3741 = vmatmul.mubr.bf16.gmra.mrb[0].mxu0 %v2898
        %v3742 = vpop.f32.mrb[0].mxu0
        %v3743 = vadd.f32 0.0, %v3742
        %v3744 = vpop.f32.mrb[0].mxu0
        %v3745 = vpop.f32.mrb[0].mxu0
        %v3746 = vadd.f32 0.0, %v3745
        %v3747 = vpop.f32.mrb[0].mxu0
        %3748 = vmatprep.mubr.bf16.mxu0 %v3193
        %3749 = vmatmul.mubr.bf16.gmra.mrb[0].mxu0 %v2901
        %v3750 = vpop.f32.mrb[0].mxu0
        %v3751 = vadd.f32 0.0, %v3750
        %v3752 = vpop.f32.mrb[0].mxu0
        %v3753 = vpop.f32.mrb[0].mxu0
        %v3754 = vadd.f32 0.0, %v3753
        %v3755 = vpop.f32.mrb[0].mxu0
        %3756 = vmatprep.mubr.bf16.mxu0 %v3196
        %3757 = vmatmul.mubr.bf16.gmra.mrb[0].mxu0 %v2904
        %v3758 = vpop.f32.mrb[0].mxu0
        %v3759 = vadd.f32 0.0, %v3758
        %v3760 = vpop.f32.mrb[0].mxu0
        %v3761 = vpop.f32.mrb[0].mxu0
        %v3762 = vadd.f32 0.0, %v3761
        %v3763 = vpop.f32.mrb[0].mxu0
        %3764 = vmatprep.mubr.bf16.mxu0 %v3199
        %3765 = vmatmul.mubr.bf16.gmra.mrb[0].mxu0 %v2907
        %v3766 = vpop.f32.mrb[0].mxu0
        %v3767 = vadd.f32 0.0, %v3766
        %v3768 = vpop.f32.mrb[0].mxu0
        %v3769 = vpop.f32.mrb[0].mxu0
        %v3770 = vadd.f32 0.0, %v3769
        %v3771 = vpop.f32.mrb[0].mxu0
        %3772 = vmatprep.mubr.bf16.mxu0 %v3202
        %3773 = vmatmul.mubr.bf16.gmra.mrb[0].mxu0 %v2910
        %v3774 = vpop.f32.mrb[0].mxu0
        %v3775 = vadd.f32 0.0, %v3774
        %v3776 = vpop.f32.mrb[0].mxu0
        %v3777 = vpop.f32.mrb[0].mxu0
        %v3778 = vadd.f32 0.0, %v3777
        %v3779 = vpop.f32.mrb[0].mxu0
        %3780 = vmatprep.mubr.bf16.mxu0 %v3205
        %3781 = vmatmul.mubr.bf16.gmra.mrb[0].mxu0 %v2913
        %v3782 = vpop.f32.mrb[0].mxu0
        %v3783 = vadd.f32 0.0, %v3782
        %v3784 = vpop.f32.mrb[0].mxu0
        %v3785 = vpop.f32.mrb[0].mxu0
        %v3786 = vadd.f32 0.0, %v3785
        %v3787 = vpop.f32.mrb[0].mxu0
        %3788 = vmatprep.mubr.bf16.mxu0 %v3208
        %3789 = vmatmul.mubr.bf16.gmra.mrb[0].mxu0 %v2916
        %v3790 = vpop.f32.mrb[0].mxu0
        %v3791 = vadd.f32 0.0, %v3790
        %v3792 = vpop.f32.mrb[0].mxu0
        %v3793 = vpop.f32.mrb[0].mxu0
        %v3794 = vadd.f32 0.0, %v3793
        %v3795 = vpop.f32.mrb[0].mxu0
        %3796 = vdwg.mxu0
        %3797 = vmatprep.subr.bf16.mxu0 0
        %3798 = vmatpush1.bf16.msra.mxu0 %v3414
        %3799 = vmatprep.subr.bf16.mxu0 0
        %3800 = vmatpush1.bf16.msra.mxu0 %v3415
        %3801 = vmatprep.subr.bf16.mxu0 0
        %3802 = vmatpush1.bf16.msra.mxu0 %v3416
        %3803 = vmatprep.subr.bf16.mxu0 0
        %3804 = vmatpush1.bf16.msra.mxu0 %v3417
        %3805 = vmatprep.subr.bf16.mxu0 0
        %3806 = vmatpush1.bf16.msra.mxu0 %v3506
        %3807 = vmatprep.subr.bf16.mxu0 0
        %3808 = vmatpush1.bf16.msra.mxu0 0
        %3809 = vmatprep.subr.bf16.mxu0 0
        %3810 = vmatpush1.bf16.msra.mxu0 0
        %3811 = vmatprep.subr.bf16.mxu0 0
        %3812 = vmatpush1.bf16.msra.mxu0 0
        %3813 = vmatprep.subr.bf16.mxu0 0
        %3814 = vmatpush1.bf16.msra.mxu0 0
        %3815 = vmatprep.subr.bf16.mxu0 0
        %3816 = vmatpush1.bf16.msra.mxu0 0
        %3817 = vmatprep.subr.bf16.mxu0 0
        %3818 = vmatpush1.bf16.msra.mxu0 0
        %3819 = vmatprep.subr.bf16.mxu0 0
        %3820 = vmatpush1.bf16.msra.mxu0 0
        %3821 = vmatprep.subr.bf16.mxu0 0
        %3822 = vmatpush1.bf16.msra.mxu0 0
        %3823 = vmatprep.subr.bf16.mxu0 0
        %3824 = vmatpush1.bf16.msra.mxu0 0
        %3825 = vmatprep.subr.bf16.mxu0 0
        %3826 = vmatpush1.bf16.msra.mxu0 0
        %3827 = vmatprep.subr.bf16.mxu0 0
        %3828 = vmatpush1.bf16.msra.mxu0 0
        %3829 = vmatprep.mubr.bf16.mxu0 0
        %3830 = vmatmul.mubr.bf16.gmra.mrb[0].mxu0 %v3440
        %v3831 = vpop.f32.mrb[0].mxu0
        %v3832 = vadd.f32 %v3543, %v3831
        %v3833 = vpop.f32.mrb[0].mxu0
        %v3834 = vpop.f32.mrb[0].mxu0
        %v3835 = vadd.f32 %v3546, %v3834
        %v3836 = vpop.f32.mrb[0].mxu0
        %3837 = vmatprep.mubr.bf16.mxu0 0
        %3838 = vmatmul.mubr.bf16.gmra.mrb[0].mxu0 %v3442
        %v3839 = vpop.f32.mrb[0].mxu0
        %v3840 = vadd.f32 %v3551, %v3839
        %v3841 = vpop.f32.mrb[0].mxu0
        %v3842 = vpop.f32.mrb[0].mxu0
        %v3843 = vadd.f32 %v3554, %v3842
        %v3844 = vpop.f32.mrb[0].mxu0
        %3845 = vmatprep.mubr.bf16.mxu0 0
        %3846 = vmatmul.mubr.bf16.gmra.mrb[0].mxu0 %v3444
        %v3847 = vpop.f32.mrb[0].mxu0
        %v3848 = vadd.f32 %v3559, %v3847
        %v3849 = vpop.f32.mrb[0].mxu0
        %v3850 = vpop.f32.mrb[0].mxu0
        %v3851 = vadd.f32 %v3562, %v3850
        %v3852 = vpop.f32.mrb[0].mxu0
        %3853 = vmatprep.mubr.bf16.mxu0 0
        %3854 = vmatmul.mubr.bf16.gmra.mrb[0].mxu0 %v3446
        %v3855 = vpop.f32.mrb[0].mxu0
        %v3856 = vadd.f32 %v3567, %v3855
        %v3857 = vpop.f32.mrb[0].mxu0
        %v3858 = vpop.f32.mrb[0].mxu0
        %v3859 = vadd.f32 %v3570, %v3858
        %v3860 = vpop.f32.mrb[0].mxu0
        %3861 = vmatprep.mubr.bf16.mxu0 0
        %3862 = vmatmul.mubr.bf16.gmra.mrb[0].mxu0 %v3448
        %v3863 = vpop.f32.mrb[0].mxu0
        %v3864 = vadd.f32 %v3575, %v3863
        %v3865 = vpop.f32.mrb[0].mxu0
        %v3866 = vpop.f32.mrb[0].mxu0
        %v3867 = vadd.f32 %v3578, %v3866
        %v3868 = vpop.f32.mrb[0].mxu0
        %3869 = vmatprep.mubr.bf16.mxu0 0
        %3870 = vmatmul.mubr.bf16.gmra.mrb[0].mxu0 %v3450
        %v3871 = vpop.f32.mrb[0].mxu0
        %v3872 = vadd.f32 %v3583, %v3871
        %v3873 = vpop.f32.mrb[0].mxu0
        %v3874 = vpop.f32.mrb[0].mxu0
        %v3875 = vadd.f32 %v3586, %v3874
        %v3876 = vpop.f32.mrb[0].mxu0
        %3877 = vmatprep.mubr.bf16.mxu0 0
        %3878 = vmatmul.mubr.bf16.gmra.mrb[0].mxu0 %v3452
        %v3879 = vpop.f32.mrb[0].mxu0
        %v3880 = vadd.f32 %v3591, %v3879
        %v3881 = vpop.f32.mrb[0].mxu0
        %v3882 = vpop.f32.mrb[0].mxu0
        %v3883 = vadd.f32 %v3594, %v3882
        %v3884 = vpop.f32.mrb[0].mxu0
        %3885 = vmatprep.mubr.bf16.mxu0 0
        %3886 = vmatmul.mubr.bf16.gmra.mrb[0].mxu0 %v3454
        %v3887 = vpop.f32.mrb[0].mxu0
        %v3888 = vadd.f32 %v3599, %v3887
        %v3889 = vpop.f32.mrb[0].mxu0
        %v3890 = vpop.f32.mrb[0].mxu0
        %v3891 = vadd.f32 %v3602, %v3890
        %v3892 = vpop.f32.mrb[0].mxu0
        %3893 = vmatprep.mubr.bf16.mxu0 0
        %3894 = vmatmul.mubr.bf16.gmra.mrb[0].mxu0 %v3456
        %v3895 = vpop.f32.mrb[0].mxu0
        %v3896 = vadd.f32 %v3607, %v3895
        %v3897 = vpop.f32.mrb[0].mxu0
        %v3898 = vpop.f32.mrb[0].mxu0
        %v3899 = vadd.f32 %v3610, %v3898
        %v3900 = vpop.f32.mrb[0].mxu0
        %3901 = vmatprep.mubr.bf16.mxu0 0
        %3902 = vmatmul.mubr.bf16.gmra.mrb[0].mxu0 %v3458
        %v3903 = vpop.f32.mrb[0].mxu0
        %v3904 = vadd.f32 %v3615, %v3903
        %v3905 = vpop.f32.mrb[0].mxu0
        %v3906 = vpop.f32.mrb[0].mxu0
        %v3907 = vadd.f32 %v3618, %v3906
        %v3908 = vpop.f32.mrb[0].mxu0
        %3909 = vmatprep.mubr.bf16.mxu0 0
        %3910 = vmatmul.mubr.bf16.gmra.mrb[0].mxu0 %v3460
        %v3911 = vpop.f32.mrb[0].mxu0
        %v3912 = vadd.f32 %v3623, %v3911
        %v3913 = vpop.f32.mrb[0].mxu0
        %v3914 = vpop.f32.mrb[0].mxu0
        %v3915 = vadd.f32 %v3626, %v3914
        %v3916 = vpop.f32.mrb[0].mxu0
        %3917 = vmatprep.mubr.bf16.mxu0 0
        %3918 = vmatmul.mubr.bf16.gmra.mrb[0].mxu0 %v3462
        %v3919 = vpop.f32.mrb[0].mxu0
        %v3920 = vadd.f32 %v3631, %v3919
        %v3921 = vpop.f32.mrb[0].mxu0
        %v3922 = vpop.f32.mrb[0].mxu0
        %v3923 = vadd.f32 %v3634, %v3922
        %v3924 = vpop.f32.mrb[0].mxu0
        %3925 = vmatprep.mubr.bf16.mxu0 0
        %3926 = vmatmul.mubr.bf16.gmra.mrb[0].mxu0 %v3464
        %v3927 = vpop.f32.mrb[0].mxu0
        %v3928 = vadd.f32 %v3639, %v3927
        %v3929 = vpop.f32.mrb[0].mxu0
        %v3930 = vpop.f32.mrb[0].mxu0
        %v3931 = vadd.f32 %v3642, %v3930
        %v3932 = vpop.f32.mrb[0].mxu0
        %3933 = vmatprep.mubr.bf16.mxu0 0
        %3934 = vmatmul.mubr.bf16.gmra.mrb[0].mxu0 %v3466
        %v3935 = vpop.f32.mrb[0].mxu0
        %v3936 = vadd.f32 %v3647, %v3935
        %v3937 = vpop.f32.mrb[0].mxu0
        %v3938 = vpop.f32.mrb[0].mxu0
        %v3939 = vadd.f32 %v3650, %v3938
        %v3940 = vpop.f32.mrb[0].mxu0
        %3941 = vmatprep.mubr.bf16.mxu0 0
        %3942 = vmatmul.mubr.bf16.gmra.mrb[0].mxu0 %v3468
        %v3943 = vpop.f32.mrb[0].mxu0
        %v3944 = vadd.f32 %v3655, %v3943
        %v3945 = vpop.f32.mrb[0].mxu0
        %v3946 = vpop.f32.mrb[0].mxu0
        %v3947 = vadd.f32 %v3658, %v3946
        %v3948 = vpop.f32.mrb[0].mxu0
        %3949 = vmatprep.mubr.bf16.mxu0 0
        %3950 = vmatmul.mubr.bf16.gmra.mrb[0].mxu0 %v3470
        %v3951 = vpop.f32.mrb[0].mxu0
        %v3952 = vadd.f32 %v3663, %v3951
        %v3953 = vpop.f32.mrb[0].mxu0
        %v3954 = vpop.f32.mrb[0].mxu0
        %v3955 = vadd.f32 %v3666, %v3954
        %v3956 = vpop.f32.mrb[0].mxu0
        %3957 = vmatprep.mubr.bf16.mxu0 0
        %3958 = vmatmul.mubr.bf16.gmra.mrb[0].mxu0 %v3472
        %v3959 = vpop.f32.mrb[0].mxu0
        %v3960 = vadd.f32 %v3671, %v3959
        %v3961 = vpop.f32.mrb[0].mxu0
        %v3962 = vpop.f32.mrb[0].mxu0
        %v3963 = vadd.f32 %v3674, %v3962
        %v3964 = vpop.f32.mrb[0].mxu0
        %3965 = vmatprep.mubr.bf16.mxu0 0
        %3966 = vmatmul.mubr.bf16.gmra.mrb[0].mxu0 %v3474
        %v3967 = vpop.f32.mrb[0].mxu0
        %v3968 = vadd.f32 %v3679, %v3967
        %v3969 = vpop.f32.mrb[0].mxu0
        %v3970 = vpop.f32.mrb[0].mxu0
        %v3971 = vadd.f32 %v3682, %v3970
        %v3972 = vpop.f32.mrb[0].mxu0
        %3973 = vmatprep.mubr.bf16.mxu0 0
        %3974 = vmatmul.mubr.bf16.gmra.mrb[0].mxu0 %v3476
        %v3975 = vpop.f32.mrb[0].mxu0
        %v3976 = vadd.f32 %v3687, %v3975
        %v3977 = vpop.f32.mrb[0].mxu0
        %v3978 = vpop.f32.mrb[0].mxu0
        %v3979 = vadd.f32 %v3690, %v3978
        %v3980 = vpop.f32.mrb[0].mxu0
        %3981 = vmatprep.mubr.bf16.mxu0 0
        %3982 = vmatmul.mubr.bf16.gmra.mrb[0].mxu0 %v3478
        %v3983 = vpop.f32.mrb[0].mxu0
        %v3984 = vadd.f32 %v3695, %v3983
        %v3985 = vpop.f32.mrb[0].mxu0
        %v3986 = vpop.f32.mrb[0].mxu0
        %v3987 = vadd.f32 %v3698, %v3986
        %v3988 = vpop.f32.mrb[0].mxu0
        %3989 = vmatprep.mubr.bf16.mxu0 0
        %3990 = vmatmul.mubr.bf16.gmra.mrb[0].mxu0 %v3480
        %v3991 = vpop.f32.mrb[0].mxu0
        %v3992 = vadd.f32 %v3703, %v3991
        %v3993 = vpop.f32.mrb[0].mxu0
        %v3994 = vpop.f32.mrb[0].mxu0
        %v3995 = vadd.f32 %v3706, %v3994
        %v3996 = vpop.f32.mrb[0].mxu0
        %3997 = vmatprep.mubr.bf16.mxu0 0
        %3998 = vmatmul.mubr.bf16.gmra.mrb[0].mxu0 %v3482
        %v3999 = vpop.f32.mrb[0].mxu0
        %v4000 = vadd.f32 %v3711, %v3999
        %v4001 = vpop.f32.mrb[0].mxu0
        %v4002 = vpop.f32.mrb[0].mxu0
        %v4003 = vadd.f32 %v3714, %v4002
        %v4004 = vpop.f32.mrb[0].mxu0
        %4005 = vmatprep.mubr.bf16.mxu0 0
        %4006 = vmatmul.mubr.bf16.gmra.mrb[0].mxu0 %v3484
        %v4007 = vpop.f32.mrb[0].mxu0
        %v4008 = vadd.f32 %v3719, %v4007
        %v4009 = vpop.f32.mrb[0].mxu0
        %v4010 = vpop.f32.mrb[0].mxu0
        %v4011 = vadd.f32 %v3722, %v4010
        %v4012 = vpop.f32.mrb[0].mxu0
        %4013 = vmatprep.mubr.bf16.mxu0 0
        %4014 = vmatmul.mubr.bf16.gmra.mrb[0].mxu0 %v3486
        %v4015 = vpop.f32.mrb[0].mxu0
        %v4016 = vadd.f32 %v3727, %v4015
        %v4017 = vpop.f32.mrb[0].mxu0
        %v4018 = vpop.f32.mrb[0].mxu0
        %v4019 = vadd.f32 %v3730, %v4018
        %v4020 = vpop.f32.mrb[0].mxu0
        %4021 = vmatprep.mubr.bf16.mxu0 0
        %4022 = vmatmul.mubr.bf16.gmra.mrb[0].mxu0 %v3488
        %v4023 = vpop.f32.mrb[0].mxu0
        %v4024 = vadd.f32 %v3735, %v4023
        %v4025 = vpop.f32.mrb[0].mxu0
        %v4026 = vpop.f32.mrb[0].mxu0
        %v4027 = vadd.f32 %v3738, %v4026
        %v4028 = vpop.f32.mrb[0].mxu0
        %4029 = vmatprep.mubr.bf16.mxu0 0
        %4030 = vmatmul.mubr.bf16.gmra.mrb[0].mxu0 %v3490
        %v4031 = vpop.f32.mrb[0].mxu0
        %v4032 = vadd.f32 %v3743, %v4031
        %v4033 = vpop.f32.mrb[0].mxu0
        %v4034 = vpop.f32.mrb[0].mxu0
        %v4035 = vadd.f32 %v3746, %v4034
        %v4036 = vpop.f32.mrb[0].mxu0
        %4037 = vmatprep.mubr.bf16.mxu0 0
        %4038 = vmatmul.mubr.bf16.gmra.mrb[0].mxu0 %v3492
        %v4039 = vpop.f32.mrb[0].mxu0
        %v4040 = vadd.f32 %v3751, %v4039
        %v4041 = vpop.f32.mrb[0].mxu0
        %v4042 = vpop.f32.mrb[0].mxu0
        %v4043 = vadd.f32 %v3754, %v4042
        %v4044 = vpop.f32.mrb[0].mxu0
        %4045 = vmatprep.mubr.bf16.mxu0 0
        %4046 = vmatmul.mubr.bf16.gmra.mrb[0].mxu0 %v3494
        %v4047 = vpop.f32.mrb[0].mxu0
        %v4048 = vadd.f32 %v3759, %v4047
        %v4049 = vpop.f32.mrb[0].mxu0
        %v4050 = vpop.f32.mrb[0].mxu0
        %v4051 = vadd.f32 %v3762, %v4050
        %v4052 = vpop.f32.mrb[0].mxu0
        %4053 = vmatprep.mubr.bf16.mxu0 0
        %4054 = vmatmul.mubr.bf16.gmra.mrb[0].mxu0 %v3496
        %v4055 = vpop.f32.mrb[0].mxu0
        %v4056 = vadd.f32 %v3767, %v4055
        %v4057 = vpop.f32.mrb[0].mxu0
        %v4058 = vpop.f32.mrb[0].mxu0
        %v4059 = vadd.f32 %v3770, %v4058
        %v4060 = vpop.f32.mrb[0].mxu0
        %4061 = vmatprep.mubr.bf16.mxu0 0
        %4062 = vmatmul.mubr.bf16.gmra.mrb[0].mxu0 %v3498
        %v4063 = vpop.f32.mrb[0].mxu0
        %v4064 = vadd.f32 %v3775, %v4063
        %v4065 = vpop.f32.mrb[0].mxu0
        %v4066 = vpop.f32.mrb[0].mxu0
        %v4067 = vadd.f32 %v3778, %v4066
        %v4068 = vpop.f32.mrb[0].mxu0
        %4069 = vmatprep.mubr.bf16.mxu0 0
        %4070 = vmatmul.mubr.bf16.gmra.mrb[0].mxu0 %v3500
        %v4071 = vpop.f32.mrb[0].mxu0
        %v4072 = vadd.f32 %v3783, %v4071
        %v4073 = vpop.f32.mrb[0].mxu0
        %v4074 = vpop.f32.mrb[0].mxu0
        %v4075 = vadd.f32 %v3786, %v4074
        %v4076 = vpop.f32.mrb[0].mxu0
        %4077 = vmatprep.mubr.bf16.mxu0 0
        %4078 = vmatmul.mubr.bf16.gmra.mrb[0].mxu0 %v3502
        %v4079 = vpop.f32.mrb[0].mxu0
        %v4080 = vadd.f32 %v3791, %v4079
        %v4081 = vpop.f32.mrb[0].mxu0
        %v4082 = vpop.f32.mrb[0].mxu0
        %v4083 = vadd.f32 %v3794, %v4082
        %v4084 = vpop.f32.mrb[0].mxu0
        %4085 = vdwg.mxu0
        %v4086 = vld [vmem:[%s2] sm:$0x1]
        %v4087 = vld [vmem:[%s3] sm:$0x1]
        %v4088 = vld [vmem:[%s4] sm:$0x1]
        %vm4089 = vcmask 523264
        %v4090 = vsel %vm4089, %v3832, 0.0
        %v4091 = vsel %vm4089, %v3835, 0.0
        %v4092 = vadd.f32 %v4090, %v4091
        %v4093 = vsel %vm4089, %v3840, 0.0
        %v4094 = vadd.f32 %v4092, %v4093
        %v4095 = vsel %vm4089, %v3843, 0.0
        %v4096 = vadd.f32 %v4094, %v4095
        %v4097 = vsel %vm4089, %v3848, 0.0
        %v4098 = vadd.f32 %v4096, %v4097
        %v4099 = vsel %vm4089, %v3851, 0.0
        %v4100 = vadd.f32 %v4098, %v4099
        %v4101 = vsel %vm4089, %v3856, 0.0
        %v4102 = vadd.f32 %v4100, %v4101
        %v4103 = vsel %vm4089, %v3859, 0.0
        %v4104 = vadd.f32 %v4102, %v4103
        %v4105 = vsel %vm4089, %v3864, 0.0
        %v4106 = vadd.f32 %v4104, %v4105
        %v4107 = vsel %vm4089, %v3867, 0.0
        %v4108 = vadd.f32 %v4106, %v4107
        %v4109 = vsel %vm4089, %v3872, 0.0
        %v4110 = vadd.f32 %v4108, %v4109
        %v4111 = vsel %vm4089, %v3875, 0.0
        %v4112 = vadd.f32 %v4110, %v4111
        %v4113 = vsel %vm4089, %v3880, 0.0
        %v4114 = vadd.f32 %v4112, %v4113
        %v4115 = vsel %vm4089, %v3883, 0.0
        %v4116 = vadd.f32 %v4114, %v4115
        %v4117 = vsel %vm4089, %v3888, 0.0
        %v4118 = vadd.f32 %v4116, %v4117
        %v4119 = vsel %vm4089, %v3891, 0.0
        %v4120 = vadd.f32 %v4118, %v4119
        %v4121 = vsel %vm4089, %v3896, 0.0
        %v4122 = vadd.f32 %v4120, %v4121
        %v4123 = vsel %vm4089, %v3899, 0.0
        %v4124 = vadd.f32 %v4122, %v4123
        %v4125 = vsel %vm4089, %v3904, 0.0
        %v4126 = vadd.f32 %v4124, %v4125
        %v4127 = vsel %vm4089, %v3907, 0.0
        %v4128 = vadd.f32 %v4126, %v4127
        %v4129 = vsel %vm4089, %v3912, 0.0
        %v4130 = vadd.f32 %v4128, %v4129
        %v4131 = vsel %vm4089, %v3915, 0.0
        %v4132 = vadd.f32 %v4130, %v4131
        %v4133 = vsel %vm4089, %v3920, 0.0
        %v4134 = vadd.f32 %v4132, %v4133
        %v4135 = vsel %vm4089, %v3923, 0.0
        %v4136 = vadd.f32 %v4134, %v4135
        %v4137 = vsel %vm4089, %v3928, 0.0
        %v4138 = vadd.f32 %v4136, %v4137
        %v4139 = vsel %vm4089, %v3931, 0.0
        %v4140 = vadd.f32 %v4138, %v4139
        %v4141 = vsel %vm4089, %v3936, 0.0
        %v4142 = vadd.f32 %v4140, %v4141
        %v4143 = vsel %vm4089, %v3939, 0.0
        %v4144 = vadd.f32 %v4142, %v4143
        %v4145 = vsel %vm4089, %v3944, 0.0
        %v4146 = vadd.f32 %v4144, %v4145
        %v4147 = vsel %vm4089, %v3947, 0.0
        %v4148 = vadd.f32 %v4146, %v4147
        %v4149 = vsel %vm4089, %v3952, 0.0
        %v4150 = vadd.f32 %v4148, %v4149
        %v4151 = vsel %vm4089, %v3955, 0.0
        %v4152 = vadd.f32 %v4150, %v4151
        %v4153 = vrot.slane %v4152, 4
        %v4154 = vadd.f32 %v4152, %v4153
        %v4155 = vrot.slane %v4154, 2
        %v4156 = vadd.f32 %v4154, %v4155
        %v4157 = vrot.slane %v4156, 1
        %v4158 = vadd.f32 %v4156, %v4157
        %v4159 = vsel %vm4089, %v3960, 0.0
        %v4160 = vsel %vm4089, %v3963, 0.0
        %v4161 = vadd.f32 %v4159, %v4160
        %v4162 = vsel %vm4089, %v3968, 0.0
        %v4163 = vadd.f32 %v4161, %v4162
        %v4164 = vsel %vm4089, %v3971, 0.0
        %v4165 = vadd.f32 %v4163, %v4164
        %v4166 = vsel %vm4089, %v3976, 0.0
        %v4167 = vadd.f32 %v4165, %v4166
        %v4168 = vsel %vm4089, %v3979, 0.0
        %v4169 = vadd.f32 %v4167, %v4168
        %v4170 = vsel %vm4089, %v3984, 0.0
        %v4171 = vadd.f32 %v4169, %v4170
        %v4172 = vsel %vm4089, %v3987, 0.0
        %v4173 = vadd.f32 %v4171, %v4172
        %v4174 = vsel %vm4089, %v3992, 0.0
        %v4175 = vadd.f32 %v4173, %v4174
        %v4176 = vsel %vm4089, %v3995, 0.0
        %v4177 = vadd.f32 %v4175, %v4176
        %v4178 = vsel %vm4089, %v4000, 0.0
        %v4179 = vadd.f32 %v4177, %v4178
        %v4180 = vsel %vm4089, %v4003, 0.0
        %v4181 = vadd.f32 %v4179, %v4180
        %v4182 = vsel %vm4089, %v4008, 0.0
        %v4183 = vadd.f32 %v4181, %v4182
        %v4184 = vsel %vm4089, %v4011, 0.0
        %v4185 = vadd.f32 %v4183, %v4184
        %v4186 = vsel %vm4089, %v4016, 0.0
        %v4187 = vadd.f32 %v4185, %v4186
        %v4188 = vsel %vm4089, %v4019, 0.0
        %v4189 = vadd.f32 %v4187, %v4188
        %v4190 = vsel %vm4089, %v4024, 0.0
        %v4191 = vadd.f32 %v4189, %v4190
        %v4192 = vsel %vm4089, %v4027, 0.0
        %v4193 = vadd.f32 %v4191, %v4192
        %v4194 = vsel %vm4089, %v4032, 0.0
        %v4195 = vadd.f32 %v4193, %v4194
        %v4196 = vsel %vm4089, %v4035, 0.0
        %v4197 = vadd.f32 %v4195, %v4196
        %v4198 = vsel %vm4089, %v4040, 0.0
        %v4199 = vadd.f32 %v4197, %v4198
        %v4200 = vsel %vm4089, %v4043, 0.0
        %v4201 = vadd.f32 %v4199, %v4200
        %v4202 = vsel %vm4089, %v4048, 0.0
        %v4203 = vadd.f32 %v4201, %v4202
        %v4204 = vsel %vm4089, %v4051, 0.0
        %v4205 = vadd.f32 %v4203, %v4204
        %v4206 = vsel %vm4089, %v4056, 0.0
        %v4207 = vadd.f32 %v4205, %v4206
        %v4208 = vsel %vm4089, %v4059, 0.0
        %v4209 = vadd.f32 %v4207, %v4208
        %v4210 = vsel %vm4089, %v4064, 0.0
        %v4211 = vadd.f32 %v4209, %v4210
        %v4212 = vsel %vm4089, %v4067, 0.0
        %v4213 = vadd.f32 %v4211, %v4212
        %v4214 = vsel %vm4089, %v4072, 0.0
        %v4215 = vadd.f32 %v4213, %v4214
        %v4216 = vsel %vm4089, %v4075, 0.0
        %v4217 = vadd.f32 %v4215, %v4216
        %v4218 = vsel %vm4089, %v4080, 0.0
        %v4219 = vadd.f32 %v4217, %v4218
        %v4220 = vsel %vm4089, %v4083, 0.0
        %v4221 = vadd.f32 %v4219, %v4220
        %v4222 = vrot.slane %v4221, 4
        %v4223 = vadd.f32 %v4221, %v4222
        %v4224 = vrot.slane %v4223, 2
        %v4225 = vadd.f32 %v4223, %v4224
        %v4226 = vrot.slane %v4225, 1
        %v4227 = vadd.f32 %v4225, %v4226
        %v4228 = vmul.f32 %v3832, %v3832
        %v4229 = vmul.f32 %v3835, %v3835
        %v4230 = vmul.f32 %v3840, %v3840
        %v4231 = vmul.f32 %v3843, %v3843
        %v4232 = vmul.f32 %v3848, %v3848
        %v4233 = vmul.f32 %v3851, %v3851
        %v4234 = vmul.f32 %v3856, %v3856
        %v4235 = vmul.f32 %v3859, %v3859
        %v4236 = vmul.f32 %v3864, %v3864
        %v4237 = vmul.f32 %v3867, %v3867
        %v4238 = vmul.f32 %v3872, %v3872
        %v4239 = vmul.f32 %v3875, %v3875
        %v4240 = vmul.f32 %v3880, %v3880
        %v4241 = vmul.f32 %v3883, %v3883
        %v4242 = vmul.f32 %v3888, %v3888
        %v4243 = vmul.f32 %v3891, %v3891
        %v4244 = vmul.f32 %v3896, %v3896
        %v4245 = vmul.f32 %v3899, %v3899
        %v4246 = vmul.f32 %v3904, %v3904
        %v4247 = vmul.f32 %v3907, %v3907
        %v4248 = vmul.f32 %v3912, %v3912
        %v4249 = vmul.f32 %v3915, %v3915
        %v4250 = vmul.f32 %v3920, %v3920
        %v4251 = vmul.f32 %v3923, %v3923
        %v4252 = vmul.f32 %v3928, %v3928
        %v4253 = vmul.f32 %v3931, %v3931
        %v4254 = vmul.f32 %v3936, %v3936
        %v4255 = vmul.f32 %v3939, %v3939
        %v4256 = vmul.f32 %v3944, %v3944
        %v4257 = vmul.f32 %v3947, %v3947
        %v4258 = vmul.f32 %v3952, %v3952
        %v4259 = vmul.f32 %v3955, %v3955
        %v4260 = vmul.f32 %v3960, %v3960
        %v4261 = vmul.f32 %v3963, %v3963
        %v4262 = vmul.f32 %v3968, %v3968
        %v4263 = vmul.f32 %v3971, %v3971
        %v4264 = vmul.f32 %v3976, %v3976
        %v4265 = vmul.f32 %v3979, %v3979
        %v4266 = vmul.f32 %v3984, %v3984
        %v4267 = vmul.f32 %v3987, %v3987
        %v4268 = vmul.f32 %v3992, %v3992
        %v4269 = vmul.f32 %v3995, %v3995
        %v4270 = vmul.f32 %v4000, %v4000
        %v4271 = vmul.f32 %v4003, %v4003
        %v4272 = vmul.f32 %v4008, %v4008
        %v4273 = vmul.f32 %v4011, %v4011
        %v4274 = vmul.f32 %v4016, %v4016
        %v4275 = vmul.f32 %v4019, %v4019
        %v4276 = vmul.f32 %v4024, %v4024
        %v4277 = vmul.f32 %v4027, %v4027
        %v4278 = vmul.f32 %v4032, %v4032
        %v4279 = vmul.f32 %v4035, %v4035
        %v4280 = vmul.f32 %v4040, %v4040
        %v4281 = vmul.f32 %v4043, %v4043
        %v4282 = vmul.f32 %v4048, %v4048
        %v4283 = vmul.f32 %v4051, %v4051
        %v4284 = vmul.f32 %v4056, %v4056
        %v4285 = vmul.f32 %v4059, %v4059
        %v4286 = vmul.f32 %v4064, %v4064
        %v4287 = vmul.f32 %v4067, %v4067
        %v4288 = vmul.f32 %v4072, %v4072
        %v4289 = vmul.f32 %v4075, %v4075
        %v4290 = vmul.f32 %v4080, %v4080
        %v4291 = vmul.f32 %v4083, %v4083
        %v4292 = vsel %vm4089, %v4228, 0.0
        %v4293 = vsel %vm4089, %v4229, 0.0
        %v4294 = vadd.f32 %v4292, %v4293
        %v4295 = vsel %vm4089, %v4230, 0.0
        %v4296 = vadd.f32 %v4294, %v4295
        %v4297 = vsel %vm4089, %v4231, 0.0
        %v4298 = vadd.f32 %v4296, %v4297
        %v4299 = vsel %vm4089, %v4232, 0.0
        %v4300 = vadd.f32 %v4298, %v4299
        %v4301 = vsel %vm4089, %v4233, 0.0
        %v4302 = vadd.f32 %v4300, %v4301
        %v4303 = vsel %vm4089, %v4234, 0.0
        %v4304 = vadd.f32 %v4302, %v4303
        %v4305 = vsel %vm4089, %v4235, 0.0
        %v4306 = vadd.f32 %v4304, %v4305
        %v4307 = vsel %vm4089, %v4236, 0.0
        %v4308 = vadd.f32 %v4306, %v4307
        %v4309 = vsel %vm4089, %v4237, 0.0
        %v4310 = vadd.f32 %v4308, %v4309
        %v4311 = vsel %vm4089, %v4238, 0.0
        %v4312 = vadd.f32 %v4310, %v4311
        %v4313 = vsel %vm4089, %v4239, 0.0
        %v4314 = vadd.f32 %v4312, %v4313
        %v4315 = vsel %vm4089, %v4240, 0.0
        %v4316 = vadd.f32 %v4314, %v4315
        %v4317 = vsel %vm4089, %v4241, 0.0
        %v4318 = vadd.f32 %v4316, %v4317
        %v4319 = vsel %vm4089, %v4242, 0.0
        %v4320 = vadd.f32 %v4318, %v4319
        %v4321 = vsel %vm4089, %v4243, 0.0
        %v4322 = vadd.f32 %v4320, %v4321
        %v4323 = vsel %vm4089, %v4244, 0.0
        %v4324 = vadd.f32 %v4322, %v4323
        %v4325 = vsel %vm4089, %v4245, 0.0
        %v4326 = vadd.f32 %v4324, %v4325
        %v4327 = vsel %vm4089, %v4246, 0.0
        %v4328 = vadd.f32 %v4326, %v4327
        %v4329 = vsel %vm4089, %v4247, 0.0
        %v4330 = vadd.f32 %v4328, %v4329
        %v4331 = vsel %vm4089, %v4248, 0.0
        %v4332 = vadd.f32 %v4330, %v4331
        %v4333 = vsel %vm4089, %v4249, 0.0
        %v4334 = vadd.f32 %v4332, %v4333
        %v4335 = vsel %vm4089, %v4250, 0.0
        %v4336 = vadd.f32 %v4334, %v4335
        %v4337 = vsel %vm4089, %v4251, 0.0
        %v4338 = vadd.f32 %v4336, %v4337
        %v4339 = vsel %vm4089, %v4252, 0.0
        %v4340 = vadd.f32 %v4338, %v4339
        %v4341 = vsel %vm4089, %v4253, 0.0
        %v4342 = vadd.f32 %v4340, %v4341
        %v4343 = vsel %vm4089, %v4254, 0.0
        %v4344 = vadd.f32 %v4342, %v4343
        %v4345 = vsel %vm4089, %v4255, 0.0
        %v4346 = vadd.f32 %v4344, %v4345
        %v4347 = vsel %vm4089, %v4256, 0.0
        %v4348 = vadd.f32 %v4346, %v4347
        %v4349 = vsel %vm4089, %v4257, 0.0
        %v4350 = vadd.f32 %v4348, %v4349
        %v4351 = vsel %vm4089, %v4258, 0.0
        %v4352 = vadd.f32 %v4350, %v4351
        %v4353 = vsel %vm4089, %v4259, 0.0
        %v4354 = vadd.f32 %v4352, %v4353
        %v4355 = vrot.slane %v4354, 4
        %v4356 = vadd.f32 %v4354, %v4355
        %v4357 = vrot.slane %v4356, 2
        %v4358 = vadd.f32 %v4356, %v4357
        %v4359 = vrot.slane %v4358, 1
        %v4360 = vadd.f32 %v4358, %v4359
        %v4361 = vsel %vm4089, %v4260, 0.0
        %v4362 = vsel %vm4089, %v4261, 0.0
        %v4363 = vadd.f32 %v4361, %v4362
        %v4364 = vsel %vm4089, %v4262, 0.0
        %v4365 = vadd.f32 %v4363, %v4364
        %v4366 = vsel %vm4089, %v4263, 0.0
        %v4367 = vadd.f32 %v4365, %v4366
        %v4368 = vsel %vm4089, %v4264, 0.0
        %v4369 = vadd.f32 %v4367, %v4368
        %v4370 = vsel %vm4089, %v4265, 0.0
        %v4371 = vadd.f32 %v4369, %v4370
        %v4372 = vsel %vm4089, %v4266, 0.0
        %v4373 = vadd.f32 %v4371, %v4372
        %v4374 = vsel %vm4089, %v4267, 0.0
        %v4375 = vadd.f32 %v4373, %v4374
        %v4376 = vsel %vm4089, %v4268, 0.0
        %v4377 = vadd.f32 %v4375, %v4376
        %v4378 = vsel %vm4089, %v4269, 0.0
        %v4379 = vadd.f32 %v4377, %v4378
        %v4380 = vsel %vm4089, %v4270, 0.0
        %v4381 = vadd.f32 %v4379, %v4380
        %v4382 = vsel %vm4089, %v4271, 0.0
        %v4383 = vadd.f32 %v4381, %v4382
        %v4384 = vsel %vm4089, %v4272, 0.0
        %v4385 = vadd.f32 %v4383, %v4384
        %v4386 = vsel %vm4089, %v4273, 0.0
        %v4387 = vadd.f32 %v4385, %v4386
        %v4388 = vsel %vm4089, %v4274, 0.0
        %v4389 = vadd.f32 %v4387, %v4388
        %v4390 = vsel %vm4089, %v4275, 0.0
        %v4391 = vadd.f32 %v4389, %v4390
        %v4392 = vsel %vm4089, %v4276, 0.0
        %v4393 = vadd.f32 %v4391, %v4392
        %v4394 = vsel %vm4089, %v4277, 0.0
        %v4395 = vadd.f32 %v4393, %v4394
        %v4396 = vsel %vm4089, %v4278, 0.0
        %v4397 = vadd.f32 %v4395, %v4396
        %v4398 = vsel %vm4089, %v4279, 0.0
        %v4399 = vadd.f32 %v4397, %v4398
        %v4400 = vsel %vm4089, %v4280, 0.0
        %v4401 = vadd.f32 %v4399, %v4400
        %v4402 = vsel %vm4089, %v4281, 0.0
        %v4403 = vadd.f32 %v4401, %v4402
        %v4404 = vsel %vm4089, %v4282, 0.0
        %v4405 = vadd.f32 %v4403, %v4404
        %v4406 = vsel %vm4089, %v4283, 0.0
        %v4407 = vadd.f32 %v4405, %v4406
        %v4408 = vsel %vm4089, %v4284, 0.0
        %v4409 = vadd.f32 %v4407, %v4408
        %v4410 = vsel %vm4089, %v4285, 0.0
        %v4411 = vadd.f32 %v4409, %v4410
        %v4412 = vsel %vm4089, %v4286, 0.0
        %v4413 = vadd.f32 %v4411, %v4412
        %v4414 = vsel %vm4089, %v4287, 0.0
        %v4415 = vadd.f32 %v4413, %v4414
        %v4416 = vsel %vm4089, %v4288, 0.0
        %v4417 = vadd.f32 %v4415, %v4416
        %v4418 = vsel %vm4089, %v4289, 0.0
        %v4419 = vadd.f32 %v4417, %v4418
        %v4420 = vsel %vm4089, %v4290, 0.0
        %v4421 = vadd.f32 %v4419, %v4420
        %v4422 = vsel %vm4089, %v4291, 0.0
        %v4423 = vadd.f32 %v4421, %v4422
        %v4424 = vrot.slane %v4423, 4
        %v4425 = vadd.f32 %v4423, %v4424
        %v4426 = vrot.slane %v4425, 2
        %v4427 = vadd.f32 %v4425, %v4426
        %v4428 = vrot.slane %v4427, 1
        %v4429 = vadd.f32 %v4427, %v4428
        %v4430 = vmul.f32 %v4086, 256.0
        %v4432 = vlaneseq
        %v4433 = vshrl.u32 %v4432, 7
        %v4434 = vsub.s32 0, %v4433
        %v4435 = vrot.slane %v4430, %v4434
        %v4437 = vadd.f32 %v4158, %v4435
        %v4438 = vadd.f32 %v4227, %v4435
        %v4439 = vmul.f32 %v4086, 2.0
        %v4441 = vlaneseq
        %v4442 = vshrl.u32 %v4441, 7
        %v4443 = vsub.s32 0, %v4442
        %v4444 = vrot.slane %v4439, %v4443
        %vm4448 = vcmask 1041409
        %v4449 = vsel %vm4448, %v4227, %v4158
        %v4451 = vmul.f32 %v4444, %v4449
        %v4453 = vrot.slane %v4451, 1
        %v4456 = vadd.f32 %v4360, %v4451
        %v4457 = vadd.f32 %v4429, %v4453
        %v4458 = vmul.f32 %v4086, %v4086
        %v4459 = vmul.f32 %v4458, 256.0
        %v4461 = vlaneseq
        %v4462 = vshrl.u32 %v4461, 7
        %v4463 = vsub.s32 0, %v4462
        %v4464 = vrot.slane %v4459, %v4463
        %v4466 = vadd.f32 %v4456, %v4464
        %v4467 = vadd.f32 %v4457, %v4464
        %v4470 = vrot.slane %v4438, 7
        %v4471 = vsel %vm4448, %v4470, %v4437
        %vm4473 = vcmask 123904
        %v4474 = vsel %vm4473, %v4471, 0.0
        %4475 = vadd.xlane.f32.xlu0 %v4474
        %v4476 = vpop.xlane.xlu0 %4475
        %v4479 = vrot.slane %v4467, 7
        %v4480 = vsel %vm4448, %v4479, %v4466
        %v4482 = vsel %vm4473, %v4480, 0.0
        %4483 = vadd.xlane.f32.xlu0 %v4482
        %v4484 = vpop.xlane.xlu0 %4483
        %v4485 = vrcp.pop 4096.0
        %v4486 = vmul.f32 %v4476, %v4485
        %v4487 = vmul.f32 %v4484, %v4485
        %v4488 = vmul.f32 %v4486, %v4486
        %v4489 = vsub.f32 %v4487, %v4488
        %v4490 = vadd.f32 %v4489, 1e-05
        %v4491 = vrsqrt.pop %v4490
        %v4493 = vlaneseq
        %v4494 = vshrl.u32 %v4493, 7
        %v4495 = vsub.s32 0, %v4494
        %v4496 = vrot.slane %v4087, %v4495
        %v4498 = vmul.f32 %v4491, %v4496
        %v4500 = vlaneseq
        %v4501 = vshrl.u32 %v4500, 7
        %v4502 = vsub.s32 0, %v4501
        %v4503 = vrot.slane %v4086, %v4502
        %v4505 = vsub.f32 %v4503, %v4486
        %v4506 = vmul.f32 %v4505, %v4498
        %v4508 = vlaneseq
        %v4509 = vshrl.u32 %v4508, 7
        %v4510 = vsub.s32 0, %v4509
        %v4511 = vrot.slane %v4088, %v4510
        %v4513 = vadd.f32 %v4506, %v4511
        %4514 = vrot.lane.b32.xlu0 %v4471, 112
        %v4515 = vpop.permute.xlu0 %4514
        %v4517 = vsel %vm4473, %v4515, 0.0
        %4518 = vadd.xlane.f32.xlu0 %v4517
        %v4519 = vpop.xlane.xlu0 %4518
        %4520 = vrot.lane.b32.xlu0 %v4480, 112
        %v4521 = vpop.permute.xlu0 %4520
        %v4523 = vsel %vm4473, %v4521, 0.0
        %4524 = vadd.xlane.f32.xlu0 %v4523
        %v4525 = vpop.xlane.xlu0 %4524
        %v4526 = vmul.f32 %v4519, %v4485
        %v4527 = vmul.f32 %v4525, %v4485
        %v4528 = vmul.f32 %v4526, %v4526
        %v4529 = vsub.f32 %v4527, %v4528
        %v4530 = vadd.f32 %v4529, 1e-05
        %v4531 = vrsqrt.pop %v4530
        %v4532 = vmul.f32 %v4531, %v4496
        %v4533 = vsub.f32 %v4503, %v4526
        %v4534 = vmul.f32 %v4533, %v4532
        %v4535 = vadd.f32 %v4534, %v4511
        %4536 = vrot.lane.b32.xlu0 %v4471, 96
        %v4537 = vpop.permute.xlu0 %4536
        %v4539 = vsel %vm4473, %v4537, 0.0
        %4540 = vadd.xlane.f32.xlu0 %v4539
        %v4541 = vpop.xlane.xlu0 %4540
        %4542 = vrot.lane.b32.xlu0 %v4480, 96
        %v4543 = vpop.permute.xlu0 %4542
        %v4545 = vsel %vm4473, %v4543, 0.0
        %4546 = vadd.xlane.f32.xlu0 %v4545
        %v4547 = vpop.xlane.xlu0 %4546
        %v4548 = vmul.f32 %v4541, %v4485
        %v4549 = vmul.f32 %v4547, %v4485
        %v4550 = vmul.f32 %v4548, %v4548
        %v4551 = vsub.f32 %v4549, %v4550
        %v4552 = vadd.f32 %v4551, 1e-05
        %v4553 = vrsqrt.pop %v4552
        %v4554 = vmul.f32 %v4553, %v4496
        %v4555 = vsub.f32 %v4503, %v4548
        %v4556 = vmul.f32 %v4555, %v4554
        %v4557 = vadd.f32 %v4556, %v4511
        %4558 = vrot.lane.b32.xlu0 %v4471, 80
        %v4559 = vpop.permute.xlu0 %4558
        %v4561 = vsel %vm4473, %v4559, 0.0
        %4562 = vadd.xlane.f32.xlu0 %v4561
        %v4563 = vpop.xlane.xlu0 %4562
        %4564 = vrot.lane.b32.xlu0 %v4480, 80
        %v4565 = vpop.permute.xlu0 %4564
        %v4567 = vsel %vm4473, %v4565, 0.0
        %4568 = vadd.xlane.f32.xlu0 %v4567
        %v4569 = vpop.xlane.xlu0 %4568
        %v4570 = vmul.f32 %v4563, %v4485
        %v4571 = vmul.f32 %v4569, %v4485
        %v4572 = vmul.f32 %v4570, %v4570
        %v4573 = vsub.f32 %v4571, %v4572
        %v4574 = vadd.f32 %v4573, 1e-05
        %v4575 = vrsqrt.pop %v4574
        %v4576 = vmul.f32 %v4575, %v4496
        %v4577 = vsub.f32 %v4503, %v4570
        %v4578 = vmul.f32 %v4577, %v4576
        %v4579 = vadd.f32 %v4578, %v4511
        %v4580 = vsel %vm2918, %v4498, %v4532
        %v4581 = vsel %vm3210, %v4580, %v4554
        %vm4582 = vcmask 392192
        %v4583 = vsel %vm4582, %v4581, %v4576
        %v4584 = vsel %vm2918, %v4513, %v4535
        %v4585 = vsel %vm3210, %v4584, %v4557
        %v4586 = vsel %vm4582, %v4585, %v4579
        %v4589 = vunpack.c.l.s4 1966171168
        %v4590 = vunpack.c.0.s8 %v4589
        %v4591 = vlaneseq
        %v4592 = vshrl.u32 %v4591, 7
        %v4593 = vsub.s32 %v4590, %v4592
        %v4594 = vrot.slane %v4583, %v4593
        %v4595 = vcombine.high %v4594, %v4594
        %v4597 = vunpack.c.l.s4 1966171168
        %v4598 = vunpack.c.0.s8 %v4597
        %v4599 = vlaneseq
        %v4600 = vshrl.u32 %v4599, 7
        %v4601 = vsub.s32 %v4598, %v4600
        %v4602 = vrot.slane %v4594, %v4601
        %v4604 = vunpack.c.l.s4 1966171168
        %v4605 = vunpack.c.0.s8 %v4604
        %v4606 = vlaneseq
        %v4607 = vshrl.u32 %v4606, 7
        %v4608 = vsub.s32 %v4605, %v4607
        %v4609 = vrot.slane %v4595, %v4608
        %v4610 = vlaneseq
        %v4611 = vshrl.u32 %v4610, 7
        %v4612 = vsub.s32 0, %v4611
        %v4613 = vrot.slane %v4602, %v4612
        %v4614 = vlaneseq
        %v4615 = vshrl.u32 %v4614, 7
        %v4616 = vsub.s32 0, %v4615
        %v4617 = vrot.slane %v4609, %v4616
        %v4620 = vmul.f32 %v3832, %v4613
        %v4621 = vmul.f32 %v3835, %v4613
        %v4622 = vmul.f32 %v3840, %v4613
        %v4623 = vmul.f32 %v3843, %v4613
        %v4624 = vmul.f32 %v3848, %v4613
        %v4625 = vmul.f32 %v3851, %v4613
        %v4626 = vmul.f32 %v3856, %v4613
        %v4627 = vmul.f32 %v3859, %v4613
        %v4628 = vmul.f32 %v3864, %v4613
        %v4629 = vmul.f32 %v3867, %v4613
        %v4630 = vmul.f32 %v3872, %v4613
        %v4631 = vmul.f32 %v3875, %v4613
        %v4632 = vmul.f32 %v3880, %v4613
        %v4633 = vmul.f32 %v3883, %v4613
        %v4634 = vmul.f32 %v3888, %v4613
        %v4635 = vmul.f32 %v3891, %v4613
        %v4636 = vmul.f32 %v3896, %v4613
        %v4637 = vmul.f32 %v3899, %v4613
        %v4638 = vmul.f32 %v3904, %v4613
        %v4639 = vmul.f32 %v3907, %v4613
        %v4640 = vmul.f32 %v3912, %v4613
        %v4641 = vmul.f32 %v3915, %v4613
        %v4642 = vmul.f32 %v3920, %v4613
        %v4643 = vmul.f32 %v3923, %v4613
        %v4644 = vmul.f32 %v3928, %v4613
        %v4645 = vmul.f32 %v3931, %v4613
        %v4646 = vmul.f32 %v3936, %v4613
        %v4647 = vmul.f32 %v3939, %v4613
        %v4648 = vmul.f32 %v3944, %v4613
        %v4649 = vmul.f32 %v3947, %v4613
        %v4650 = vmul.f32 %v3952, %v4613
        %v4651 = vmul.f32 %v3955, %v4613
        %v4652 = vmul.f32 %v3960, %v4617
        %v4653 = vmul.f32 %v3963, %v4617
        %v4654 = vmul.f32 %v3968, %v4617
        %v4655 = vmul.f32 %v3971, %v4617
        %v4656 = vmul.f32 %v3976, %v4617
        %v4657 = vmul.f32 %v3979, %v4617
        %v4658 = vmul.f32 %v3984, %v4617
        %v4659 = vmul.f32 %v3987, %v4617
        %v4660 = vmul.f32 %v3992, %v4617
        %v4661 = vmul.f32 %v3995, %v4617
        %v4662 = vmul.f32 %v4000, %v4617
        %v4663 = vmul.f32 %v4003, %v4617
        %v4664 = vmul.f32 %v4008, %v4617
        %v4665 = vmul.f32 %v4011, %v4617
        %v4666 = vmul.f32 %v4016, %v4617
        %v4667 = vmul.f32 %v4019, %v4617
        %v4668 = vmul.f32 %v4024, %v4617
        %v4669 = vmul.f32 %v4027, %v4617
        %v4670 = vmul.f32 %v4032, %v4617
        %v4671 = vmul.f32 %v4035, %v4617
        %v4672 = vmul.f32 %v4040, %v4617
        %v4673 = vmul.f32 %v4043, %v4617
        %v4674 = vmul.f32 %v4048, %v4617
        %v4675 = vmul.f32 %v4051, %v4617
        %v4676 = vmul.f32 %v4056, %v4617
        %v4677 = vmul.f32 %v4059, %v4617
        %v4678 = vmul.f32 %v4064, %v4617
        %v4679 = vmul.f32 %v4067, %v4617
        %v4680 = vmul.f32 %v4072, %v4617
        %v4681 = vmul.f32 %v4075, %v4617
        %v4682 = vmul.f32 %v4080, %v4617
        %v4683 = vmul.f32 %v4083, %v4617
        %v4686 = vunpack.c.l.s4 1966171168
        %v4687 = vunpack.c.0.s8 %v4686
        %v4688 = vlaneseq
        %v4689 = vshrl.u32 %v4688, 7
        %v4690 = vsub.s32 %v4687, %v4689
        %v4691 = vrot.slane %v4586, %v4690
        %v4692 = vcombine.high %v4691, %v4691
        %v4694 = vunpack.c.l.s4 1966171168
        %v4695 = vunpack.c.0.s8 %v4694
        %v4696 = vlaneseq
        %v4697 = vshrl.u32 %v4696, 7
        %v4698 = vsub.s32 %v4695, %v4697
        %v4699 = vrot.slane %v4691, %v4698
        %v4701 = vunpack.c.l.s4 1966171168
        %v4702 = vunpack.c.0.s8 %v4701
        %v4703 = vlaneseq
        %v4704 = vshrl.u32 %v4703, 7
        %v4705 = vsub.s32 %v4702, %v4704
        %v4706 = vrot.slane %v4692, %v4705
        %v4707 = vlaneseq
        %v4708 = vshrl.u32 %v4707, 7
        %v4709 = vsub.s32 0, %v4708
        %v4710 = vrot.slane %v4699, %v4709
        %v4711 = vlaneseq
        %v4712 = vshrl.u32 %v4711, 7
        %v4713 = vsub.s32 0, %v4712
        %v4714 = vrot.slane %v4706, %v4713
        %v4717 = vadd.f32 %v4620, %v4710
        %v4718 = vadd.f32 %v4621, %v4710
        %v4719 = vadd.f32 %v4622, %v4710
        %v4720 = vadd.f32 %v4623, %v4710
        %v4721 = vadd.f32 %v4624, %v4710
        %v4722 = vadd.f32 %v4625, %v4710
        %v4723 = vadd.f32 %v4626, %v4710
        %v4724 = vadd.f32 %v4627, %v4710
        %v4725 = vadd.f32 %v4628, %v4710
        %v4726 = vadd.f32 %v4629, %v4710
        %v4727 = vadd.f32 %v4630, %v4710
        %v4728 = vadd.f32 %v4631, %v4710
        %v4729 = vadd.f32 %v4632, %v4710
        %v4730 = vadd.f32 %v4633, %v4710
        %v4731 = vadd.f32 %v4634, %v4710
        %v4732 = vadd.f32 %v4635, %v4710
        %v4733 = vadd.f32 %v4636, %v4710
        %v4734 = vadd.f32 %v4637, %v4710
        %v4735 = vadd.f32 %v4638, %v4710
        %v4736 = vadd.f32 %v4639, %v4710
        %v4737 = vadd.f32 %v4640, %v4710
        %v4738 = vadd.f32 %v4641, %v4710
        %v4739 = vadd.f32 %v4642, %v4710
        %v4740 = vadd.f32 %v4643, %v4710
        %v4741 = vadd.f32 %v4644, %v4710
        %v4742 = vadd.f32 %v4645, %v4710
        %v4743 = vadd.f32 %v4646, %v4710
        %v4744 = vadd.f32 %v4647, %v4710
        %v4745 = vadd.f32 %v4648, %v4710
        %v4746 = vadd.f32 %v4649, %v4710
        %v4747 = vadd.f32 %v4650, %v4710
        %v4748 = vadd.f32 %v4651, %v4710
        %v4749 = vadd.f32 %v4652, %v4714
        %v4750 = vadd.f32 %v4653, %v4714
        %v4751 = vadd.f32 %v4654, %v4714
        %v4752 = vadd.f32 %v4655, %v4714
        %v4753 = vadd.f32 %v4656, %v4714
        %v4754 = vadd.f32 %v4657, %v4714
        %v4755 = vadd.f32 %v4658, %v4714
        %v4756 = vadd.f32 %v4659, %v4714
        %v4757 = vadd.f32 %v4660, %v4714
        %v4758 = vadd.f32 %v4661, %v4714
        %v4759 = vadd.f32 %v4662, %v4714
        %v4760 = vadd.f32 %v4663, %v4714
        %v4761 = vadd.f32 %v4664, %v4714
        %v4762 = vadd.f32 %v4665, %v4714
        %v4763 = vadd.f32 %v4666, %v4714
        %v4764 = vadd.f32 %v4667, %v4714
        %v4765 = vadd.f32 %v4668, %v4714
        %v4766 = vadd.f32 %v4669, %v4714
        %v4767 = vadd.f32 %v4670, %v4714
        %v4768 = vadd.f32 %v4671, %v4714
        %v4769 = vadd.f32 %v4672, %v4714
        %v4770 = vadd.f32 %v4673, %v4714
        %v4771 = vadd.f32 %v4674, %v4714
        %v4772 = vadd.f32 %v4675, %v4714
        %v4773 = vadd.f32 %v4676, %v4714
        %v4774 = vadd.f32 %v4677, %v4714
        %v4775 = vadd.f32 %v4678, %v4714
        %v4776 = vadd.f32 %v4679, %v4714
        %v4777 = vadd.f32 %v4680, %v4714
        %v4778 = vadd.f32 %v4681, %v4714
        %v4779 = vadd.f32 %v4682, %v4714
        %v4780 = vadd.f32 %v4683, %v4714
        %v4781 = vmul.f32 %v4717, 0.5
        %v4782 = vmul.f32 %v4718, 0.5
        %v4783 = vmul.f32 %v4719, 0.5
        %v4784 = vmul.f32 %v4720, 0.5
        %v4785 = vmul.f32 %v4721, 0.5
        %v4786 = vmul.f32 %v4722, 0.5
        %v4787 = vmul.f32 %v4723, 0.5
        %v4788 = vmul.f32 %v4724, 0.5
        %v4789 = vmul.f32 %v4725, 0.5
        %v4790 = vmul.f32 %v4726, 0.5
        %v4791 = vmul.f32 %v4727, 0.5
        %v4792 = vmul.f32 %v4728, 0.5
        %v4793 = vmul.f32 %v4729, 0.5
        %v4794 = vmul.f32 %v4730, 0.5
        %v4795 = vmul.f32 %v4731, 0.5
        %v4796 = vmul.f32 %v4732, 0.5
        %v4797 = vmul.f32 %v4733, 0.5
        %v4798 = vmul.f32 %v4734, 0.5
        %v4799 = vmul.f32 %v4735, 0.5
        %v4800 = vmul.f32 %v4736, 0.5
        %v4801 = vmul.f32 %v4737, 0.5
        %v4802 = vmul.f32 %v4738, 0.5
        %v4803 = vmul.f32 %v4739, 0.5
        %v4804 = vmul.f32 %v4740, 0.5
        %v4805 = vmul.f32 %v4741, 0.5
        %v4806 = vmul.f32 %v4742, 0.5
        %v4807 = vmul.f32 %v4743, 0.5
        %v4808 = vmul.f32 %v4744, 0.5
        %v4809 = vmul.f32 %v4745, 0.5
        %v4810 = vmul.f32 %v4746, 0.5
        %v4811 = vmul.f32 %v4747, 0.5
        %v4812 = vmul.f32 %v4748, 0.5
        %v4813 = vmul.f32 %v4749, 0.5
        %v4814 = vmul.f32 %v4750, 0.5
        %v4815 = vmul.f32 %v4751, 0.5
        %v4816 = vmul.f32 %v4752, 0.5
        %v4817 = vmul.f32 %v4753, 0.5
        %v4818 = vmul.f32 %v4754, 0.5
        %v4819 = vmul.f32 %v4755, 0.5
        %v4820 = vmul.f32 %v4756, 0.5
        %v4821 = vmul.f32 %v4757, 0.5
        %v4822 = vmul.f32 %v4758, 0.5
        %v4823 = vmul.f32 %v4759, 0.5
        %v4824 = vmul.f32 %v4760, 0.5
        %v4825 = vmul.f32 %v4761, 0.5
        %v4826 = vmul.f32 %v4762, 0.5
        %v4827 = vmul.f32 %v4763, 0.5
        %v4828 = vmul.f32 %v4764, 0.5
        %v4829 = vmul.f32 %v4765, 0.5
        %v4830 = vmul.f32 %v4766, 0.5
        %v4831 = vmul.f32 %v4767, 0.5
        %v4832 = vmul.f32 %v4768, 0.5
        %v4833 = vmul.f32 %v4769, 0.5
        %v4834 = vmul.f32 %v4770, 0.5
        %v4835 = vmul.f32 %v4771, 0.5
        %v4836 = vmul.f32 %v4772, 0.5
        %v4837 = vmul.f32 %v4773, 0.5
        %v4838 = vmul.f32 %v4774, 0.5
        %v4839 = vmul.f32 %v4775, 0.5
        %v4840 = vmul.f32 %v4776, 0.5
        %v4841 = vmul.f32 %v4777, 0.5
        %v4842 = vmul.f32 %v4778, 0.5
        %v4843 = vmul.f32 %v4779, 0.5
        %v4844 = vmul.f32 %v4780, 0.5
        %v4845 = vtanh.pop %v4781
        %v4846 = vtanh.pop %v4782
        %v4847 = vtanh.pop %v4783
        %v4848 = vtanh.pop %v4784
        %v4849 = vtanh.pop %v4785
        %v4850 = vtanh.pop %v4786
        %v4851 = vtanh.pop %v4787
        %v4852 = vtanh.pop %v4788
        %v4853 = vtanh.pop %v4789
        %v4854 = vtanh.pop %v4790
        %v4855 = vtanh.pop %v4791
        %v4856 = vtanh.pop %v4792
        %v4857 = vtanh.pop %v4793
        %v4858 = vtanh.pop %v4794
        %v4859 = vtanh.pop %v4795
        %v4860 = vtanh.pop %v4796
        %v4861 = vtanh.pop %v4797
        %v4862 = vtanh.pop %v4798
        %v4863 = vtanh.pop %v4799
        %v4864 = vtanh.pop %v4800
        %v4865 = vtanh.pop %v4801
        %v4866 = vtanh.pop %v4802
        %v4867 = vtanh.pop %v4803
        %v4868 = vtanh.pop %v4804
        %v4869 = vtanh.pop %v4805
        %v4870 = vtanh.pop %v4806
        %v4871 = vtanh.pop %v4807
        %v4872 = vtanh.pop %v4808
        %v4873 = vtanh.pop %v4809
        %v4874 = vtanh.pop %v4810
        %v4875 = vtanh.pop %v4811
        %v4876 = vtanh.pop %v4812
        %v4877 = vtanh.pop %v4813
        %v4878 = vtanh.pop %v4814
        %v4879 = vtanh.pop %v4815
        %v4880 = vtanh.pop %v4816
        %v4881 = vtanh.pop %v4817
        %v4882 = vtanh.pop %v4818
        %v4883 = vtanh.pop %v4819
        %v4884 = vtanh.pop %v4820
        %v4885 = vtanh.pop %v4821
        %v4886 = vtanh.pop %v4822
        %v4887 = vtanh.pop %v4823
        %v4888 = vtanh.pop %v4824
        %v4889 = vtanh.pop %v4825
        %v4890 = vtanh.pop %v4826
        %v4891 = vtanh.pop %v4827
        %v4892 = vtanh.pop %v4828
        %v4893 = vtanh.pop %v4829
        %v4894 = vtanh.pop %v4830
        %v4895 = vtanh.pop %v4831
        %v4896 = vtanh.pop %v4832
        %v4897 = vtanh.pop %v4833
        %v4898 = vtanh.pop %v4834
        %v4899 = vtanh.pop %v4835
        %v4900 = vtanh.pop %v4836
        %v4901 = vtanh.pop %v4837
        %v4902 = vtanh.pop %v4838
        %v4903 = vtanh.pop %v4839
        %v4904 = vtanh.pop %v4840
        %v4905 = vtanh.pop %v4841
        %v4906 = vtanh.pop %v4842
        %v4907 = vtanh.pop %v4843
        %v4908 = vtanh.pop %v4844
        %v4909 = vmul.f32 %v4845, 0.5
        %v4910 = vmul.f32 %v4846, 0.5
        %v4911 = vmul.f32 %v4847, 0.5
        %v4912 = vmul.f32 %v4848, 0.5
        %v4913 = vmul.f32 %v4849, 0.5
        %v4914 = vmul.f32 %v4850, 0.5
        %v4915 = vmul.f32 %v4851, 0.5
        %v4916 = vmul.f32 %v4852, 0.5
        %v4917 = vmul.f32 %v4853, 0.5
        %v4918 = vmul.f32 %v4854, 0.5
        %v4919 = vmul.f32 %v4855, 0.5
        %v4920 = vmul.f32 %v4856, 0.5
        %v4921 = vmul.f32 %v4857, 0.5
        %v4922 = vmul.f32 %v4858, 0.5
        %v4923 = vmul.f32 %v4859, 0.5
        %v4924 = vmul.f32 %v4860, 0.5
        %v4925 = vmul.f32 %v4861, 0.5
        %v4926 = vmul.f32 %v4862, 0.5
        %v4927 = vmul.f32 %v4863, 0.5
        %v4928 = vmul.f32 %v4864, 0.5
        %v4929 = vmul.f32 %v4865, 0.5
        %v4930 = vmul.f32 %v4866, 0.5
        %v4931 = vmul.f32 %v4867, 0.5
        %v4932 = vmul.f32 %v4868, 0.5
        %v4933 = vmul.f32 %v4869, 0.5
        %v4934 = vmul.f32 %v4870, 0.5
        %v4935 = vmul.f32 %v4871, 0.5
        %v4936 = vmul.f32 %v4872, 0.5
        %v4937 = vmul.f32 %v4873, 0.5
        %v4938 = vmul.f32 %v4874, 0.5
        %v4939 = vmul.f32 %v4875, 0.5
        %v4940 = vmul.f32 %v4876, 0.5
        %v4941 = vmul.f32 %v4877, 0.5
        %v4942 = vmul.f32 %v4878, 0.5
        %v4943 = vmul.f32 %v4879, 0.5
        %v4944 = vmul.f32 %v4880, 0.5
        %v4945 = vmul.f32 %v4881, 0.5
        %v4946 = vmul.f32 %v4882, 0.5
        %v4947 = vmul.f32 %v4883, 0.5
        %v4948 = vmul.f32 %v4884, 0.5
        %v4949 = vmul.f32 %v4885, 0.5
        %v4950 = vmul.f32 %v4886, 0.5
        %v4951 = vmul.f32 %v4887, 0.5
        %v4952 = vmul.f32 %v4888, 0.5
        %v4953 = vmul.f32 %v4889, 0.5
        %v4954 = vmul.f32 %v4890, 0.5
        %v4955 = vmul.f32 %v4891, 0.5
        %v4956 = vmul.f32 %v4892, 0.5
        %v4957 = vmul.f32 %v4893, 0.5
        %v4958 = vmul.f32 %v4894, 0.5
        %v4959 = vmul.f32 %v4895, 0.5
        %v4960 = vmul.f32 %v4896, 0.5
        %v4961 = vmul.f32 %v4897, 0.5
        %v4962 = vmul.f32 %v4898, 0.5
        %v4963 = vmul.f32 %v4899, 0.5
        %v4964 = vmul.f32 %v4900, 0.5
        %v4965 = vmul.f32 %v4901, 0.5
        %v4966 = vmul.f32 %v4902, 0.5
        %v4967 = vmul.f32 %v4903, 0.5
        %v4968 = vmul.f32 %v4904, 0.5
        %v4969 = vmul.f32 %v4905, 0.5
        %v4970 = vmul.f32 %v4906, 0.5
        %v4971 = vmul.f32 %v4907, 0.5
        %v4972 = vmul.f32 %v4908, 0.5
        %v4973 = vadd.f32 %v4909, 0.5
        %v4974 = vadd.f32 %v4910, 0.5
        %v4975 = vadd.f32 %v4911, 0.5
        %v4976 = vadd.f32 %v4912, 0.5
        %v4977 = vadd.f32 %v4913, 0.5
        %v4978 = vadd.f32 %v4914, 0.5
        %v4979 = vadd.f32 %v4915, 0.5
        %v4980 = vadd.f32 %v4916, 0.5
        %v4981 = vadd.f32 %v4917, 0.5
        %v4982 = vadd.f32 %v4918, 0.5
        %v4983 = vadd.f32 %v4919, 0.5
        %v4984 = vadd.f32 %v4920, 0.5
        %v4985 = vadd.f32 %v4921, 0.5
        %v4986 = vadd.f32 %v4922, 0.5
        %v4987 = vadd.f32 %v4923, 0.5
        %v4988 = vadd.f32 %v4924, 0.5
        %v4989 = vadd.f32 %v4925, 0.5
        %v4990 = vadd.f32 %v4926, 0.5
        %v4991 = vadd.f32 %v4927, 0.5
        %v4992 = vadd.f32 %v4928, 0.5
        %v4993 = vadd.f32 %v4929, 0.5
        %v4994 = vadd.f32 %v4930, 0.5
        %v4995 = vadd.f32 %v4931, 0.5
        %v4996 = vadd.f32 %v4932, 0.5
        %v4997 = vadd.f32 %v4933, 0.5
        %v4998 = vadd.f32 %v4934, 0.5
        %v4999 = vadd.f32 %v4935, 0.5
        %v5000 = vadd.f32 %v4936, 0.5
        %v5001 = vadd.f32 %v4937, 0.5
        %v5002 = vadd.f32 %v4938, 0.5
        %v5003 = vadd.f32 %v4939, 0.5
        %v5004 = vadd.f32 %v4940, 0.5
        %v5005 = vadd.f32 %v4941, 0.5
        %v5006 = vadd.f32 %v4942, 0.5
        %v5007 = vadd.f32 %v4943, 0.5
        %v5008 = vadd.f32 %v4944, 0.5
        %v5009 = vadd.f32 %v4945, 0.5
        %v5010 = vadd.f32 %v4946, 0.5
        %v5011 = vadd.f32 %v4947, 0.5
        %v5012 = vadd.f32 %v4948, 0.5
        %v5013 = vadd.f32 %v4949, 0.5
        %v5014 = vadd.f32 %v4950, 0.5
        %v5015 = vadd.f32 %v4951, 0.5
        %v5016 = vadd.f32 %v4952, 0.5
        %v5017 = vadd.f32 %v4953, 0.5
        %v5018 = vadd.f32 %v4954, 0.5
        %v5019 = vadd.f32 %v4955, 0.5
        %v5020 = vadd.f32 %v4956, 0.5
        %v5021 = vadd.f32 %v4957, 0.5
        %v5022 = vadd.f32 %v4958, 0.5
        %v5023 = vadd.f32 %v4959, 0.5
        %v5024 = vadd.f32 %v4960, 0.5
        %v5025 = vadd.f32 %v4961, 0.5
        %v5026 = vadd.f32 %v4962, 0.5
        %v5027 = vadd.f32 %v4963, 0.5
        %v5028 = vadd.f32 %v4964, 0.5
        %v5029 = vadd.f32 %v4965, 0.5
        %v5030 = vadd.f32 %v4966, 0.5
        %v5031 = vadd.f32 %v4967, 0.5
        %v5032 = vadd.f32 %v4968, 0.5
        %v5033 = vadd.f32 %v4969, 0.5
        %v5034 = vadd.f32 %v4970, 0.5
        %v5035 = vadd.f32 %v4971, 0.5
        %v5036 = vadd.f32 %v4972, 0.5
        %5037 = vrot.lane.b32.xlu0 %v641, 32
        %v5038 = vpop.permute.xlu0 %5037
        %5039 = vrot.lane.b32.xlu0 %v642, 32
        %v5040 = vpop.permute.xlu0 %5039
        %5041 = vrot.lane.b32.xlu0 %v643, 32
        %v5042 = vpop.permute.xlu0 %5041
        %5043 = vrot.lane.b32.xlu0 %v644, 32
        %v5044 = vpop.permute.xlu0 %5043
        %5045 = vrot.lane.b32.xlu0 %v645, 32
        %v5046 = vpop.permute.xlu0 %5045
        %5047 = vrot.lane.b32.xlu0 %v646, 32
        %v5048 = vpop.permute.xlu0 %5047
        %5049 = vrot.lane.b32.xlu0 %v647, 32
        %v5050 = vpop.permute.xlu0 %5049
        %5051 = vrot.lane.b32.xlu0 %v648, 32
        %v5052 = vpop.permute.xlu0 %5051
        %5053 = vrot.lane.b32.xlu0 %v649, 32
        %v5054 = vpop.permute.xlu0 %5053
        %5055 = vrot.lane.b32.xlu0 %v650, 32
        %v5056 = vpop.permute.xlu0 %5055
        %5057 = vrot.lane.b32.xlu0 %v651, 32
        %v5058 = vpop.permute.xlu0 %5057
        %5059 = vrot.lane.b32.xlu0 %v652, 32
        %v5060 = vpop.permute.xlu0 %5059
        %5061 = vrot.lane.b32.xlu0 %v653, 32
        %v5062 = vpop.permute.xlu0 %5061
        %5063 = vrot.lane.b32.xlu0 %v654, 32
        %v5064 = vpop.permute.xlu0 %5063
        %5065 = vrot.lane.b32.xlu0 %v655, 32
        %v5066 = vpop.permute.xlu0 %5065
        %5067 = vrot.lane.b32.xlu0 %v656, 32
        %v5068 = vpop.permute.xlu0 %5067
        %5069 = vrot.lane.b32.xlu0 %v657, 32
        %v5070 = vpop.permute.xlu0 %5069
        %5071 = vrot.lane.b32.xlu0 %v658, 32
        %v5072 = vpop.permute.xlu0 %5071
        %5073 = vrot.lane.b32.xlu0 %v659, 32
        %v5074 = vpop.permute.xlu0 %5073
        %5075 = vrot.lane.b32.xlu0 %v660, 32
        %v5076 = vpop.permute.xlu0 %5075
        %5077 = vrot.lane.b32.xlu0 %v661, 32
        %v5078 = vpop.permute.xlu0 %5077
        %5079 = vrot.lane.b32.xlu0 %v662, 32
        %v5080 = vpop.permute.xlu0 %5079
        %5081 = vrot.lane.b32.xlu0 %v663, 32
        %v5082 = vpop.permute.xlu0 %5081
        %5083 = vrot.lane.b32.xlu0 %v664, 32
        %v5084 = vpop.permute.xlu0 %5083
        %5085 = vrot.lane.b32.xlu0 %v665, 32
        %v5086 = vpop.permute.xlu0 %5085
        %5087 = vrot.lane.b32.xlu0 %v666, 32
        %v5088 = vpop.permute.xlu0 %5087
        %5089 = vrot.lane.b32.xlu0 %v667, 32
        %v5090 = vpop.permute.xlu0 %5089
        %5091 = vrot.lane.b32.xlu0 %v668, 32
        %v5092 = vpop.permute.xlu0 %5091
        %5093 = vrot.lane.b32.xlu0 %v669, 32
        %v5094 = vpop.permute.xlu0 %5093
        %5095 = vrot.lane.b32.xlu0 %v670, 32
        %v5096 = vpop.permute.xlu0 %5095
        %5097 = vrot.lane.b32.xlu0 %v671, 32
        %v5098 = vpop.permute.xlu0 %5097
        %5099 = vrot.lane.b32.xlu0 %v672, 32
        %v5100 = vpop.permute.xlu0 %5099
        %5101 = vrot.lane.b32.xlu0 %v673, 32
        %v5102 = vpop.permute.xlu0 %5101
        %5103 = vrot.lane.b32.xlu0 %v674, 32
        %v5104 = vpop.permute.xlu0 %5103
        %5105 = vrot.lane.b32.xlu0 %v675, 32
        %v5106 = vpop.permute.xlu0 %5105
        %5107 = vrot.lane.b32.xlu0 %v676, 32
        %v5108 = vpop.permute.xlu0 %5107
        %5109 = vrot.lane.b32.xlu0 %v677, 32
        %v5110 = vpop.permute.xlu0 %5109
        %5111 = vrot.lane.b32.xlu0 %v678, 32
        %v5112 = vpop.permute.xlu0 %5111
        %5113 = vrot.lane.b32.xlu0 %v679, 32
        %v5114 = vpop.permute.xlu0 %5113
        %5115 = vrot.lane.b32.xlu0 %v680, 32
        %v5116 = vpop.permute.xlu0 %5115
        %5117 = vrot.lane.b32.xlu0 %v681, 32
        %v5118 = vpop.permute.xlu0 %5117
        %5119 = vrot.lane.b32.xlu0 %v682, 32
        %v5120 = vpop.permute.xlu0 %5119
        %5121 = vrot.lane.b32.xlu0 %v683, 32
        %v5122 = vpop.permute.xlu0 %5121
        %5123 = vrot.lane.b32.xlu0 %v684, 32
        %v5124 = vpop.permute.xlu0 %5123
        %5125 = vrot.lane.b32.xlu0 %v685, 32
        %v5126 = vpop.permute.xlu0 %5125
        %5127 = vrot.lane.b32.xlu0 %v686, 32
        %v5128 = vpop.permute.xlu0 %5127
        %5129 = vrot.lane.b32.xlu0 %v687, 32
        %v5130 = vpop.permute.xlu0 %5129
        %5131 = vrot.lane.b32.xlu0 %v688, 32
        %v5132 = vpop.permute.xlu0 %5131
        %5133 = vrot.lane.b32.xlu0 %v689, 32
        %v5134 = vpop.permute.xlu0 %5133
        %5135 = vrot.lane.b32.xlu0 %v690, 32
        %v5136 = vpop.permute.xlu0 %5135
        %5137 = vrot.lane.b32.xlu0 %v691, 32
        %v5138 = vpop.permute.xlu0 %5137
        %5139 = vrot.lane.b32.xlu0 %v692, 32
        %v5140 = vpop.permute.xlu0 %5139
        %5141 = vrot.lane.b32.xlu0 %v693, 32
        %v5142 = vpop.permute.xlu0 %5141
        %5143 = vrot.lane.b32.xlu0 %v694, 32
        %v5144 = vpop.permute.xlu0 %5143
        %5145 = vrot.lane.b32.xlu0 %v695, 32
        %v5146 = vpop.permute.xlu0 %5145
        %5147 = vrot.lane.b32.xlu0 %v696, 32
        %v5148 = vpop.permute.xlu0 %5147
        %5149 = vrot.lane.b32.xlu0 %v697, 32
        %v5150 = vpop.permute.xlu0 %5149
        %5151 = vrot.lane.b32.xlu0 %v698, 32
        %v5152 = vpop.permute.xlu0 %5151
        %5153 = vrot.lane.b32.xlu0 %v699, 32
        %v5154 = vpop.permute.xlu0 %5153
        %5155 = vrot.lane.b32.xlu0 %v700, 32
        %v5156 = vpop.permute.xlu0 %5155
        %5157 = vrot.lane.b32.xlu0 %v701, 32
        %v5158 = vpop.permute.xlu0 %5157
        %5159 = vrot.lane.b32.xlu0 %v702, 32
        %v5160 = vpop.permute.xlu0 %5159
        %5161 = vrot.lane.b32.xlu0 %v703, 32
        %v5162 = vpop.permute.xlu0 %5161
        %5163 = vrot.lane.b32.xlu0 %v704, 32
        %v5164 = vpop.permute.xlu0 %5163
        %v5229 = vmul.f32 %v4973, %v5038
        %v5230 = vmul.f32 %v4974, %v5040
        %v5231 = vmul.f32 %v4975, %v5042
        %v5232 = vmul.f32 %v4976, %v5044
        %v5233 = vmul.f32 %v4977, %v5046
        %v5234 = vmul.f32 %v4978, %v5048
        %v5235 = vmul.f32 %v4979, %v5050
        %v5236 = vmul.f32 %v4980, %v5052
        %v5237 = vmul.f32 %v4981, %v5054
        %v5238 = vmul.f32 %v4982, %v5056
        %v5239 = vmul.f32 %v4983, %v5058
        %v5240 = vmul.f32 %v4984, %v5060
        %v5241 = vmul.f32 %v4985, %v5062
        %v5242 = vmul.f32 %v4986, %v5064
        %v5243 = vmul.f32 %v4987, %v5066
        %v5244 = vmul.f32 %v4988, %v5068
        %v5245 = vmul.f32 %v4989, %v5070
        %v5246 = vmul.f32 %v4990, %v5072
        %v5247 = vmul.f32 %v4991, %v5074
        %v5248 = vmul.f32 %v4992, %v5076
        %v5249 = vmul.f32 %v4993, %v5078
        %v5250 = vmul.f32 %v4994, %v5080
        %v5251 = vmul.f32 %v4995, %v5082
        %v5252 = vmul.f32 %v4996, %v5084
        %v5253 = vmul.f32 %v4997, %v5086
        %v5254 = vmul.f32 %v4998, %v5088
        %v5255 = vmul.f32 %v4999, %v5090
        %v5256 = vmul.f32 %v5000, %v5092
        %v5257 = vmul.f32 %v5001, %v5094
        %v5258 = vmul.f32 %v5002, %v5096
        %v5259 = vmul.f32 %v5003, %v5098
        %v5260 = vmul.f32 %v5004, %v5100
        %v5261 = vmul.f32 %v5005, %v5102
        %v5262 = vmul.f32 %v5006, %v5104
        %v5263 = vmul.f32 %v5007, %v5106
        %v5264 = vmul.f32 %v5008, %v5108
        %v5265 = vmul.f32 %v5009, %v5110
        %v5266 = vmul.f32 %v5010, %v5112
        %v5267 = vmul.f32 %v5011, %v5114
        %v5268 = vmul.f32 %v5012, %v5116
        %v5269 = vmul.f32 %v5013, %v5118
        %v5270 = vmul.f32 %v5014, %v5120
        %v5271 = vmul.f32 %v5015, %v5122
        %v5272 = vmul.f32 %v5016, %v5124
        %v5273 = vmul.f32 %v5017, %v5126
        %v5274 = vmul.f32 %v5018, %v5128
        %v5275 = vmul.f32 %v5019, %v5130
        %v5276 = vmul.f32 %v5020, %v5132
        %v5277 = vmul.f32 %v5021, %v5134
        %v5278 = vmul.f32 %v5022, %v5136
        %v5279 = vmul.f32 %v5023, %v5138
        %v5280 = vmul.f32 %v5024, %v5140
        %v5281 = vmul.f32 %v5025, %v5142
        %v5282 = vmul.f32 %v5026, %v5144
        %v5283 = vmul.f32 %v5027, %v5146
        %v5284 = vmul.f32 %v5028, %v5148
        %v5285 = vmul.f32 %v5029, %v5150
        %v5286 = vmul.f32 %v5030, %v5152
        %v5287 = vmul.f32 %v5031, %v5154
        %v5288 = vmul.f32 %v5032, %v5156
        %v5289 = vmul.f32 %v5033, %v5158
        %v5290 = vmul.f32 %v5034, %v5160
        %v5291 = vmul.f32 %v5035, %v5162
        %v5292 = vmul.f32 %v5036, %v5164
        %5357 = vrot.lane.b32.xlu0 %v5229, 100
        %v5358 = vpop.permute.xlu0 %5357
        %5359 = vrot.lane.b32.xlu0 %v5230, 100
        %v5360 = vpop.permute.xlu0 %5359
        %5361 = vrot.lane.b32.xlu0 %v5231, 100
        %v5362 = vpop.permute.xlu0 %5361
        %5363 = vrot.lane.b32.xlu0 %v5232, 100
        %v5364 = vpop.permute.xlu0 %5363
        %5365 = vrot.lane.b32.xlu0 %v5233, 100
        %v5366 = vpop.permute.xlu0 %5365
        %5367 = vrot.lane.b32.xlu0 %v5234, 100
        %v5368 = vpop.permute.xlu0 %5367
        %5369 = vrot.lane.b32.xlu0 %v5235, 100
        %v5370 = vpop.permute.xlu0 %5369
        %5371 = vrot.lane.b32.xlu0 %v5236, 100
        %v5372 = vpop.permute.xlu0 %5371
        %5373 = vrot.lane.b32.xlu0 %v5237, 100
        %v5374 = vpop.permute.xlu0 %5373
        %5375 = vrot.lane.b32.xlu0 %v5238, 100
        %v5376 = vpop.permute.xlu0 %5375
        %5377 = vrot.lane.b32.xlu0 %v5239, 100
        %v5378 = vpop.permute.xlu0 %5377
        %5379 = vrot.lane.b32.xlu0 %v5240, 100
        %v5380 = vpop.permute.xlu0 %5379
        %5381 = vrot.lane.b32.xlu0 %v5241, 100
        %v5382 = vpop.permute.xlu0 %5381
        %5383 = vrot.lane.b32.xlu0 %v5242, 100
        %v5384 = vpop.permute.xlu0 %5383
        %5385 = vrot.lane.b32.xlu0 %v5243, 100
        %v5386 = vpop.permute.xlu0 %5385
        %5387 = vrot.lane.b32.xlu0 %v5244, 100
        %v5388 = vpop.permute.xlu0 %5387
        %5389 = vrot.lane.b32.xlu0 %v5245, 100
        %v5390 = vpop.permute.xlu0 %5389
        %5391 = vrot.lane.b32.xlu0 %v5246, 100
        %v5392 = vpop.permute.xlu0 %5391
        %5393 = vrot.lane.b32.xlu0 %v5247, 100
        %v5394 = vpop.permute.xlu0 %5393
        %5395 = vrot.lane.b32.xlu0 %v5248, 100
        %v5396 = vpop.permute.xlu0 %5395
        %5397 = vrot.lane.b32.xlu0 %v5249, 100
        %v5398 = vpop.permute.xlu0 %5397
        %5399 = vrot.lane.b32.xlu0 %v5250, 100
        %v5400 = vpop.permute.xlu0 %5399
        %5401 = vrot.lane.b32.xlu0 %v5251, 100
        %v5402 = vpop.permute.xlu0 %5401
        %5403 = vrot.lane.b32.xlu0 %v5252, 100
        %v5404 = vpop.permute.xlu0 %5403
        %5405 = vrot.lane.b32.xlu0 %v5253, 100
        %v5406 = vpop.permute.xlu0 %5405
        %5407 = vrot.lane.b32.xlu0 %v5254, 100
        %v5408 = vpop.permute.xlu0 %5407
        %5409 = vrot.lane.b32.xlu0 %v5255, 100
        %v5410 = vpop.permute.xlu0 %5409
        %5411 = vrot.lane.b32.xlu0 %v5256, 100
        %v5412 = vpop.permute.xlu0 %5411
        %5413 = vrot.lane.b32.xlu0 %v5257, 100
        %v5414 = vpop.permute.xlu0 %5413
        %5415 = vrot.lane.b32.xlu0 %v5258, 100
        %v5416 = vpop.permute.xlu0 %5415
        %5417 = vrot.lane.b32.xlu0 %v5259, 100
        %v5418 = vpop.permute.xlu0 %5417
        %5419 = vrot.lane.b32.xlu0 %v5260, 100
        %v5420 = vpop.permute.xlu0 %5419
        %5421 = vrot.lane.b32.xlu0 %v5261, 100
        %v5422 = vpop.permute.xlu0 %5421
        %5423 = vrot.lane.b32.xlu0 %v5262, 100
        %v5424 = vpop.permute.xlu0 %5423
        %5425 = vrot.lane.b32.xlu0 %v5263, 100
        %v5426 = vpop.permute.xlu0 %5425
        %5427 = vrot.lane.b32.xlu0 %v5264, 100
        %v5428 = vpop.permute.xlu0 %5427
        %5429 = vrot.lane.b32.xlu0 %v5265, 100
        %v5430 = vpop.permute.xlu0 %5429
        %5431 = vrot.lane.b32.xlu0 %v5266, 100
        %v5432 = vpop.permute.xlu0 %5431
        %5433 = vrot.lane.b32.xlu0 %v5267, 100
        %v5434 = vpop.permute.xlu0 %5433
        %5435 = vrot.lane.b32.xlu0 %v5268, 100
        %v5436 = vpop.permute.xlu0 %5435
        %5437 = vrot.lane.b32.xlu0 %v5269, 100
        %v5438 = vpop.permute.xlu0 %5437
        %5439 = vrot.lane.b32.xlu0 %v5270, 100
        %v5440 = vpop.permute.xlu0 %5439
        %5441 = vrot.lane.b32.xlu0 %v5271, 100
        %v5442 = vpop.permute.xlu0 %5441
        %5443 = vrot.lane.b32.xlu0 %v5272, 100
        %v5444 = vpop.permute.xlu0 %5443
        %5445 = vrot.lane.b32.xlu0 %v5273, 100
        %v5446 = vpop.permute.xlu0 %5445
        %5447 = vrot.lane.b32.xlu0 %v5274, 100
        %v5448 = vpop.permute.xlu0 %5447
        %5449 = vrot.lane.b32.xlu0 %v5275, 100
        %v5450 = vpop.permute.xlu0 %5449
        %5451 = vrot.lane.b32.xlu0 %v5276, 100
        %v5452 = vpop.permute.xlu0 %5451
        %5453 = vrot.lane.b32.xlu0 %v5277, 100
        %v5454 = vpop.permute.xlu0 %5453
        %5455 = vrot.lane.b32.xlu0 %v5278, 100
        %v5456 = vpop.permute.xlu0 %5455
        %5457 = vrot.lane.b32.xlu0 %v5279, 100
        %v5458 = vpop.permute.xlu0 %5457
        %5459 = vrot.lane.b32.xlu0 %v5280, 100
        %v5460 = vpop.permute.xlu0 %5459
        %5461 = vrot.lane.b32.xlu0 %v5281, 100
        %v5462 = vpop.permute.xlu0 %5461
        %5463 = vrot.lane.b32.xlu0 %v5282, 100
        %v5464 = vpop.permute.xlu0 %5463
        %5465 = vrot.lane.b32.xlu0 %v5283, 100
        %v5466 = vpop.permute.xlu0 %5465
        %5467 = vrot.lane.b32.xlu0 %v5284, 100
        %v5468 = vpop.permute.xlu0 %5467
        %5469 = vrot.lane.b32.xlu0 %v5285, 100
        %v5470 = vpop.permute.xlu0 %5469
        %5471 = vrot.lane.b32.xlu0 %v5286, 100
        %v5472 = vpop.permute.xlu0 %5471
        %5473 = vrot.lane.b32.xlu0 %v5287, 100
        %v5474 = vpop.permute.xlu0 %5473
        %5475 = vrot.lane.b32.xlu0 %v5288, 100
        %v5476 = vpop.permute.xlu0 %5475
        %5477 = vrot.lane.b32.xlu0 %v5289, 100
        %v5478 = vpop.permute.xlu0 %5477
        %5479 = vrot.lane.b32.xlu0 %v5290, 100
        %v5480 = vpop.permute.xlu0 %5479
        %5481 = vrot.lane.b32.xlu0 %v5291, 100
        %v5482 = vpop.permute.xlu0 %5481
        %5483 = vrot.lane.b32.xlu0 %v5292, 100
        %v5484 = vpop.permute.xlu0 %5483
        %5549 = vst.msk [vmem:[%s575 + $0x1] sm:$0xff] %vm961, %v5358
        %5550 = vst.msk [vmem:[%s575 + $0x9] sm:$0xff] %vm961, %v5360
        %5551 = vst.msk [vmem:[%s575 + $0x19] sm:$0xff] %vm961, %v5362
        %5552 = vst.msk [vmem:[%s575 + $0x21] sm:$0xff] %vm961, %v5364
        %5553 = vst.msk [vmem:[%s575 + $0x31] sm:$0xff] %vm961, %v5366
        %5554 = vst.msk [vmem:[%s575 + $0x39] sm:$0xff] %vm961, %v5368
        %5555 = vst.msk [vmem:[%s575 + $0x49] sm:$0xff] %vm961, %v5370
        %5556 = vst.msk [vmem:[%s575 + $0x51] sm:$0xff] %vm961, %v5372
        %5557 = vst.msk [vmem:[%s575 + $0x61] sm:$0xff] %vm961, %v5374
        %5558 = vst.msk [vmem:[%s575 + $0x69] sm:$0xff] %vm961, %v5376
        %5559 = vst.msk [vmem:[%s575 + $0x79] sm:$0xff] %vm961, %v5378
        %5560 = vst.msk [vmem:[%s575 + $0x81] sm:$0xff] %vm961, %v5380
        %5561 = vst.msk [vmem:[%s575 + $0x91] sm:$0xff] %vm961, %v5382
        %5562 = vst.msk [vmem:[%s575 + $0x99] sm:$0xff] %vm961, %v5384
        %5563 = vst.msk [vmem:[%s575 + $0xa9] sm:$0xff] %vm961, %v5386
        %5564 = vst.msk [vmem:[%s575 + $0xb1] sm:$0xff] %vm961, %v5388
        %5565 = vst.msk [vmem:[%s575 + $0xc1] sm:$0xff] %vm961, %v5390
        %5566 = vst.msk [vmem:[%s575 + $0xc9] sm:$0xff] %vm961, %v5392
        %5567 = vst.msk [vmem:[%s575 + $0xd9] sm:$0xff] %vm961, %v5394
        %5568 = vst.msk [vmem:[%s575 + $0xe1] sm:$0xff] %vm961, %v5396
        %5569 = vst.msk [vmem:[%s575 + $0xf1] sm:$0xff] %vm961, %v5398
        %5570 = vst.msk [vmem:[%s575 + $0xf9] sm:$0xff] %vm961, %v5400
        %5571 = vst.msk [vmem:[%s575 + $0x109] sm:$0xff] %vm961, %v5402
        %5572 = vst.msk [vmem:[%s575 + $0x111] sm:$0xff] %vm961, %v5404
        %5573 = vst.msk [vmem:[%s575 + $0x121] sm:$0xff] %vm961, %v5406
        %5574 = vst.msk [vmem:[%s575 + $0x129] sm:$0xff] %vm961, %v5408
        %5575 = vst.msk [vmem:[%s575 + $0x139] sm:$0xff] %vm961, %v5410
        %5576 = vst.msk [vmem:[%s575 + $0x141] sm:$0xff] %vm961, %v5412
        %5577 = vst.msk [vmem:[%s575 + $0x151] sm:$0xff] %vm961, %v5414
        %5578 = vst.msk [vmem:[%s575 + $0x159] sm:$0xff] %vm961, %v5416
        %5579 = vst.msk [vmem:[%s575 + $0x169] sm:$0xff] %vm961, %v5418
        %5580 = vst.msk [vmem:[%s575 + $0x171] sm:$0xff] %vm961, %v5420
        %5581 = vst.msk [vmem:[%s575 + $0x1b1] sm:$0xff] %vm961, %v5422
        %5582 = vst.msk [vmem:[%s575 + $0x1b9] sm:$0xff] %vm961, %v5424
        %5583 = vst.msk [vmem:[%s575 + $0x1c9] sm:$0xff] %vm961, %v5426
        %5584 = vst.msk [vmem:[%s575 + $0x1d1] sm:$0xff] %vm961, %v5428
        %5585 = vst.msk [vmem:[%s575 + $0x1e1] sm:$0xff] %vm961, %v5430
        %5586 = vst.msk [vmem:[%s575 + $0x1e9] sm:$0xff] %vm961, %v5432
        %5587 = vst.msk [vmem:[%s575 + $0x1f9] sm:$0xff] %vm961, %v5434
        %5588 = vst.msk [vmem:[%s575 + $0x201] sm:$0xff] %vm961, %v5436
        %5589 = vst.msk [vmem:[%s575 + $0x211] sm:$0xff] %vm961, %v5438
        %5590 = vst.msk [vmem:[%s575 + $0x219] sm:$0xff] %vm961, %v5440
        %5591 = vst.msk [vmem:[%s575 + $0x229] sm:$0xff] %vm961, %v5442
        %5592 = vst.msk [vmem:[%s575 + $0x231] sm:$0xff] %vm961, %v5444
        %5593 = vst.msk [vmem:[%s575 + $0x241] sm:$0xff] %vm961, %v5446
        %5594 = vst.msk [vmem:[%s575 + $0x249] sm:$0xff] %vm961, %v5448
        %5595 = vst.msk [vmem:[%s575 + $0x259] sm:$0xff] %vm961, %v5450
        %5596 = vst.msk [vmem:[%s575 + $0x261] sm:$0xff] %vm961, %v5452
        %5597 = vst.msk [vmem:[%s575 + $0x271] sm:$0xff] %vm961, %v5454
        %5598 = vst.msk [vmem:[%s575 + $0x279] sm:$0xff] %vm961, %v5456
        %5599 = vst.msk [vmem:[%s575 + $0x289] sm:$0xff] %vm961, %v5458
        %5600 = vst.msk [vmem:[%s575 + $0x291] sm:$0xff] %vm961, %v5460
        %5601 = vst.msk [vmem:[%s575 + $0x2a1] sm:$0xff] %vm961, %v5462
        %5602 = vst.msk [vmem:[%s575 + $0x2a9] sm:$0xff] %vm961, %v5464
        %5603 = vst.msk [vmem:[%s575 + $0x2b9] sm:$0xff] %vm961, %v5466
        %5604 = vst.msk [vmem:[%s575 + $0x2c1] sm:$0xff] %vm961, %v5468
        %5605 = vst.msk [vmem:[%s575 + $0x2d1] sm:$0xff] %vm961, %v5470
        %5606 = vst.msk [vmem:[%s575 + $0x2d9] sm:$0xff] %vm961, %v5472
        %5607 = vst.msk [vmem:[%s575 + $0x2e9] sm:$0xff] %vm961, %v5474
        %5608 = vst.msk [vmem:[%s575 + $0x2f1] sm:$0xff] %vm961, %v5476
        %5609 = vst.msk [vmem:[%s575 + $0x301] sm:$0xff] %vm961, %v5478
        %5610 = vst.msk [vmem:[%s575 + $0x309] sm:$0xff] %vm961, %v5480
        %5611 = vst.msk [vmem:[%s575 + $0x319] sm:$0xff] %vm961, %v5482
        %5612 = vst.msk [vmem:[%s575 + $0x321] sm:$0xff] %vm961, %v5484
        %v5613 = vld [vmem:[#allocation3] sm:$0xff]
        %v5614 = vld [vmem:[#allocation3 + $0x8] sm:$0xff]
        %v5615 = vld [vmem:[#allocation3 + $0x18] sm:$0xff]
        %v5616 = vld [vmem:[#allocation3 + $0x20] sm:$0xff]
        %v5617 = vld [vmem:[#allocation3 + $0x30] sm:$0xff]
        %v5618 = vld [vmem:[#allocation3 + $0x38] sm:$0xff]
        %v5619 = vld [vmem:[#allocation3 + $0x48] sm:$0xff]
        %v5620 = vld [vmem:[#allocation3 + $0x50] sm:$0xff]
        %v5621 = vld [vmem:[#allocation3 + $0x60] sm:$0xff]
        %v5622 = vld [vmem:[#allocation3 + $0x68] sm:$0xff]
        %v5623 = vld [vmem:[#allocation3 + $0x78] sm:$0xff]
        %v5624 = vld [vmem:[#allocation3 + $0x80] sm:$0xff]
        %v5625 = vld [vmem:[#allocation3 + $0x90] sm:$0xff]
        %v5626 = vld [vmem:[#allocation3 + $0x98] sm:$0xff]
        %v5627 = vld [vmem:[#allocation3 + $0xa8] sm:$0xff]
        %v5628 = vld [vmem:[#allocation3 + $0xb0] sm:$0xff]
        %v5629 = vld [vmem:[#allocation3 + $0xc0] sm:$0xff]
        %v5630 = vld [vmem:[#allocation3 + $0xc8] sm:$0xff]
        %v5631 = vld [vmem:[#allocation3 + $0xd8] sm:$0xff]
        %v5632 = vld [vmem:[#allocation3 + $0xe0] sm:$0xff]
        %v5633 = vld [vmem:[#allocation3 + $0xf0] sm:$0xff]
        %v5634 = vld [vmem:[#allocation3 + $0xf8] sm:$0xff]
        %v5635 = vld [vmem:[#allocation3 + $0x108] sm:$0xff]
        %v5636 = vld [vmem:[#allocation3 + $0x110] sm:$0xff]
        %v5637 = vld [vmem:[#allocation3 + $0x120] sm:$0xff]
        %v5638 = vld [vmem:[#allocation3 + $0x128] sm:$0xff]
        %v5639 = vld [vmem:[#allocation3 + $0x138] sm:$0xff]
        %v5640 = vld [vmem:[#allocation3 + $0x140] sm:$0xff]
        %v5641 = vld [vmem:[#allocation3 + $0x150] sm:$0xff]
        %v5642 = vld [vmem:[#allocation3 + $0x158] sm:$0xff]
        %v5643 = vld [vmem:[#allocation3 + $0x168] sm:$0xff]
        %v5644 = vld [vmem:[#allocation3 + $0x170] sm:$0xff]
        %v5645 = vld [vmem:[#allocation3 + $0x1b0] sm:$0xff]
        %v5646 = vld [vmem:[#allocation3 + $0x1b8] sm:$0xff]
        %v5647 = vld [vmem:[#allocation3 + $0x1c8] sm:$0xff]
        %v5648 = vld [vmem:[#allocation3 + $0x1d0] sm:$0xff]
        %v5649 = vld [vmem:[#allocation3 + $0x1e0] sm:$0xff]
        %v5650 = vld [vmem:[#allocation3 + $0x1e8] sm:$0xff]
        %v5651 = vld [vmem:[#allocation3 + $0x1f8] sm:$0xff]
        %v5652 = vld [vmem:[#allocation3 + $0x200] sm:$0xff]
        %v5653 = vld [vmem:[#allocation3 + $0x210] sm:$0xff]
        %v5654 = vld [vmem:[#allocation3 + $0x218] sm:$0xff]
        %v5655 = vld [vmem:[#allocation3 + $0x228] sm:$0xff]
        %v5656 = vld [vmem:[#allocation3 + $0x230] sm:$0xff]
        %v5657 = vld [vmem:[#allocation3 + $0x240] sm:$0xff]
        %v5658 = vld [vmem:[#allocation3 + $0x248] sm:$0xff]
        %v5659 = vld [vmem:[#allocation3 + $0x258] sm:$0xff]
        %v5660 = vld [vmem:[#allocation3 + $0x260] sm:$0xff]
        %v5661 = vld [vmem:[#allocation3 + $0x270] sm:$0xff]
        %v5662 = vld [vmem:[#allocation3 + $0x278] sm:$0xff]
        %v5663 = vld [vmem:[#allocation3 + $0x288] sm:$0xff]
        %v5664 = vld [vmem:[#allocation3 + $0x290] sm:$0xff]
        %v5665 = vld [vmem:[#allocation3 + $0x2a0] sm:$0xff]
        %v5666 = vld [vmem:[#allocation3 + $0x2a8] sm:$0xff]
        %v5667 = vld [vmem:[#allocation3 + $0x2b8] sm:$0xff]
        %v5668 = vld [vmem:[#allocation3 + $0x2c0] sm:$0xff]
        %v5669 = vld [vmem:[#allocation3 + $0x2d0] sm:$0xff]
        %v5670 = vld [vmem:[#allocation3 + $0x2d8] sm:$0xff]
        %v5671 = vld [vmem:[#allocation3 + $0x2e8] sm:$0xff]
        %v5672 = vld [vmem:[#allocation3 + $0x2f0] sm:$0xff]
        %v5673 = vld [vmem:[#allocation3 + $0x300] sm:$0xff]
        %v5674 = vld [vmem:[#allocation3 + $0x308] sm:$0xff]
        %v5675 = vld [vmem:[#allocation3 + $0x318] sm:$0xff]
        %v5676 = vld [vmem:[#allocation3 + $0x320] sm:$0xff]
        %v5677 = vpack.c.bf16 %v5614, %v5613
        %v5678 = vpack.c.bf16 %v5616, %v5615
        %v5679 = vpack.c.bf16 %v5618, %v5617
        %v5680 = vpack.c.bf16 %v5620, %v5619
        %v5681 = vpack.c.bf16 %v5622, %v5621
        %v5682 = vpack.c.bf16 %v5624, %v5623
        %v5683 = vpack.c.bf16 %v5626, %v5625
        %v5684 = vpack.c.bf16 %v5628, %v5627
        %v5685 = vpack.c.bf16 %v5630, %v5629
        %v5686 = vpack.c.bf16 %v5632, %v5631
        %v5687 = vpack.c.bf16 %v5634, %v5633
        %v5688 = vpack.c.bf16 %v5636, %v5635
        %v5689 = vpack.c.bf16 %v5638, %v5637
        %v5690 = vpack.c.bf16 %v5640, %v5639
        %v5691 = vpack.c.bf16 %v5642, %v5641
        %v5692 = vpack.c.bf16 %v5644, %v5643
        %v5693 = vpack.c.bf16 %v5646, %v5645
        %v5694 = vpack.c.bf16 %v5648, %v5647
        %v5695 = vpack.c.bf16 %v5650, %v5649
        %v5696 = vpack.c.bf16 %v5652, %v5651
        %v5697 = vpack.c.bf16 %v5654, %v5653
        %v5698 = vpack.c.bf16 %v5656, %v5655
        %v5699 = vpack.c.bf16 %v5658, %v5657
        %v5700 = vpack.c.bf16 %v5660, %v5659
        %v5701 = vpack.c.bf16 %v5662, %v5661
        %v5702 = vpack.c.bf16 %v5664, %v5663
        %v5703 = vpack.c.bf16 %v5666, %v5665
        %v5704 = vpack.c.bf16 %v5668, %v5667
        %v5705 = vpack.c.bf16 %v5670, %v5669
        %v5706 = vpack.c.bf16 %v5672, %v5671
        %v5707 = vpack.c.bf16 %v5674, %v5673
        %v5708 = vpack.c.bf16 %v5676, %v5675
        %v5709 = vld [vmem:[#allocation3 + $0x1] sm:$0xff]
        %v5710 = vld [vmem:[#allocation3 + $0x9] sm:$0xff]
        %v5711 = vld [vmem:[#allocation3 + $0x19] sm:$0xff]
        %v5712 = vld [vmem:[#allocation3 + $0x21] sm:$0xff]
        %v5713 = vld [vmem:[#allocation3 + $0x31] sm:$0xff]
        %v5714 = vld [vmem:[#allocation3 + $0x39] sm:$0xff]
        %v5715 = vld [vmem:[#allocation3 + $0x49] sm:$0xff]
        %v5716 = vld [vmem:[#allocation3 + $0x51] sm:$0xff]
        %v5717 = vld [vmem:[#allocation3 + $0x61] sm:$0xff]
        %v5718 = vld [vmem:[#allocation3 + $0x69] sm:$0xff]
        %v5719 = vld [vmem:[#allocation3 + $0x79] sm:$0xff]
        %v5720 = vld [vmem:[#allocation3 + $0x81] sm:$0xff]
        %v5721 = vld [vmem:[#allocation3 + $0x91] sm:$0xff]
        %v5722 = vld [vmem:[#allocation3 + $0x99] sm:$0xff]
        %v5723 = vld [vmem:[#allocation3 + $0xa9] sm:$0xff]
        %v5724 = vld [vmem:[#allocation3 + $0xb1] sm:$0xff]
        %v5725 = vld [vmem:[#allocation3 + $0xc1] sm:$0xff]
        %v5726 = vld [vmem:[#allocation3 + $0xc9] sm:$0xff]
        %v5727 = vld [vmem:[#allocation3 + $0xd9] sm:$0xff]
        %v5728 = vld [vmem:[#allocation3 + $0xe1] sm:$0xff]
        %v5729 = vld [vmem:[#allocation3 + $0xf1] sm:$0xff]
        %v5730 = vld [vmem:[#allocation3 + $0xf9] sm:$0xff]
        %v5731 = vld [vmem:[#allocation3 + $0x109] sm:$0xff]
        %v5732 = vld [vmem:[#allocation3 + $0x111] sm:$0xff]
        %v5733 = vld [vmem:[#allocation3 + $0x121] sm:$0xff]
        %v5734 = vld [vmem:[#allocation3 + $0x129] sm:$0xff]
        %v5735 = vld [vmem:[#allocation3 + $0x139] sm:$0xff]
        %v5736 = vld [vmem:[#allocation3 + $0x141] sm:$0xff]
        %v5737 = vld [vmem:[#allocation3 + $0x151] sm:$0xff]
        %v5738 = vld [vmem:[#allocation3 + $0x159] sm:$0xff]
        %v5739 = vld [vmem:[#allocation3 + $0x169] sm:$0xff]
        %v5740 = vld [vmem:[#allocation3 + $0x171] sm:$0xff]
        %v5741 = vld [vmem:[#allocation3 + $0x1b1] sm:$0xff]
        %v5742 = vld [vmem:[#allocation3 + $0x1b9] sm:$0xff]
        %v5743 = vld [vmem:[#allocation3 + $0x1c9] sm:$0xff]
        %v5744 = vld [vmem:[#allocation3 + $0x1d1] sm:$0xff]
        %v5745 = vld [vmem:[#allocation3 + $0x1e1] sm:$0xff]
        %v5746 = vld [vmem:[#allocation3 + $0x1e9] sm:$0xff]
        %v5747 = vld [vmem:[#allocation3 + $0x1f9] sm:$0xff]
        %v5748 = vld [vmem:[#allocation3 + $0x201] sm:$0xff]
        %v5749 = vld [vmem:[#allocation3 + $0x211] sm:$0xff]
        %v5750 = vld [vmem:[#allocation3 + $0x219] sm:$0xff]
        %v5751 = vld [vmem:[#allocation3 + $0x229] sm:$0xff]
        %v5752 = vld [vmem:[#allocation3 + $0x231] sm:$0xff]
        %v5753 = vld [vmem:[#allocation3 + $0x241] sm:$0xff]
        %v5754 = vld [vmem:[#allocation3 + $0x249] sm:$0xff]
        %v5755 = vld [vmem:[#allocation3 + $0x259] sm:$0xff]
        %v5756 = vld [vmem:[#allocation3 + $0x261] sm:$0xff]
        %v5757 = vld [vmem:[#allocation3 + $0x271] sm:$0xff]
        %v5758 = vld [vmem:[#allocation3 + $0x279] sm:$0xff]
        %v5759 = vld [vmem:[#allocation3 + $0x289] sm:$0xff]
        %v5760 = vld [vmem:[#allocation3 + $0x291] sm:$0xff]
        %v5761 = vld [vmem:[#allocation3 + $0x2a1] sm:$0xff]
        %v5762 = vld [vmem:[#allocation3 + $0x2a9] sm:$0xff]
        %v5763 = vld [vmem:[#allocation3 + $0x2b9] sm:$0xff]
        %v5764 = vld [vmem:[#allocation3 + $0x2c1] sm:$0xff]
        %v5765 = vld [vmem:[#allocation3 + $0x2d1] sm:$0xff]
        %v5766 = vld [vmem:[#allocation3 + $0x2d9] sm:$0xff]
        %v5767 = vld [vmem:[#allocation3 + $0x2e9] sm:$0xff]
        %v5768 = vld [vmem:[#allocation3 + $0x2f1] sm:$0xff]
        %v5769 = vld [vmem:[#allocation3 + $0x301] sm:$0xff]
        %v5770 = vld [vmem:[#allocation3 + $0x309] sm:$0xff]
        %v5771 = vld [vmem:[#allocation3 + $0x319] sm:$0xff]
        %v5772 = vld [vmem:[#allocation3 + $0x321] sm:$0xff]
        %v5773 = vpack.c.bf16 %v5710, %v5709
        %v5774 = vpack.c.bf16 %v5712, %v5711
        %v5775 = vpack.c.bf16 %v5714, %v5713
        %v5776 = vpack.c.bf16 %v5716, %v5715
        %v5777 = vpack.c.bf16 %v5718, %v5717
        %v5778 = vpack.c.bf16 %v5720, %v5719
        %v5779 = vpack.c.bf16 %v5722, %v5721
        %v5780 = vpack.c.bf16 %v5724, %v5723
        %v5781 = vpack.c.bf16 %v5726, %v5725
        %v5782 = vpack.c.bf16 %v5728, %v5727
        %v5783 = vpack.c.bf16 %v5730, %v5729
        %v5784 = vpack.c.bf16 %v5732, %v5731
        %v5785 = vpack.c.bf16 %v5734, %v5733
        %v5786 = vpack.c.bf16 %v5736, %v5735
        %v5787 = vpack.c.bf16 %v5738, %v5737
        %v5788 = vpack.c.bf16 %v5740, %v5739
        %v5789 = vpack.c.bf16 %v5742, %v5741
        %v5790 = vpack.c.bf16 %v5744, %v5743
        %v5791 = vpack.c.bf16 %v5746, %v5745
        %v5792 = vpack.c.bf16 %v5748, %v5747
        %v5793 = vpack.c.bf16 %v5750, %v5749
        %v5794 = vpack.c.bf16 %v5752, %v5751
        %v5795 = vpack.c.bf16 %v5754, %v5753
        %v5796 = vpack.c.bf16 %v5756, %v5755
        %v5797 = vpack.c.bf16 %v5758, %v5757
        %v5798 = vpack.c.bf16 %v5760, %v5759
        %v5799 = vpack.c.bf16 %v5762, %v5761
        %v5800 = vpack.c.bf16 %v5764, %v5763
        %v5801 = vpack.c.bf16 %v5766, %v5765
        %v5802 = vpack.c.bf16 %v5768, %v5767
        %v5803 = vpack.c.bf16 %v5770, %v5769
        %v5804 = vpack.c.bf16 %v5772, %v5771
        %v5805 = vld [vmem:[#allocation3 + $0x2] sm:$0xff]
        %v5806 = vld [vmem:[#allocation3 + $0xa] sm:$0xff]
        %v5807 = vld [vmem:[#allocation3 + $0x1a] sm:$0xff]
        %v5808 = vld [vmem:[#allocation3 + $0x22] sm:$0xff]
        %v5809 = vld [vmem:[#allocation3 + $0x32] sm:$0xff]
        %v5810 = vld [vmem:[#allocation3 + $0x3a] sm:$0xff]
        %v5811 = vld [vmem:[#allocation3 + $0x4a] sm:$0xff]
        %v5812 = vld [vmem:[#allocation3 + $0x52] sm:$0xff]
        %v5813 = vld [vmem:[#allocation3 + $0x62] sm:$0xff]
        %v5814 = vld [vmem:[#allocation3 + $0x6a] sm:$0xff]
        %v5815 = vld [vmem:[#allocation3 + $0x7a] sm:$0xff]
        %v5816 = vld [vmem:[#allocation3 + $0x82] sm:$0xff]
        %v5817 = vld [vmem:[#allocation3 + $0x92] sm:$0xff]
        %v5818 = vld [vmem:[#allocation3 + $0x9a] sm:$0xff]
        %v5819 = vld [vmem:[#allocation3 + $0xaa] sm:$0xff]
        %v5820 = vld [vmem:[#allocation3 + $0xb2] sm:$0xff]
        %v5821 = vld [vmem:[#allocation3 + $0xc2] sm:$0xff]
        %v5822 = vld [vmem:[#allocation3 + $0xca] sm:$0xff]
        %v5823 = vld [vmem:[#allocation3 + $0xda] sm:$0xff]
        %v5824 = vld [vmem:[#allocation3 + $0xe2] sm:$0xff]
        %v5825 = vld [vmem:[#allocation3 + $0xf2] sm:$0xff]
        %v5826 = vld [vmem:[#allocation3 + $0xfa] sm:$0xff]
        %v5827 = vld [vmem:[#allocation3 + $0x10a] sm:$0xff]
        %v5828 = vld [vmem:[#allocation3 + $0x112] sm:$0xff]
        %v5829 = vld [vmem:[#allocation3 + $0x122] sm:$0xff]
        %v5830 = vld [vmem:[#allocation3 + $0x12a] sm:$0xff]
        %v5831 = vld [vmem:[#allocation3 + $0x13a] sm:$0xff]
        %v5832 = vld [vmem:[#allocation3 + $0x142] sm:$0xff]
        %v5833 = vld [vmem:[#allocation3 + $0x152] sm:$0xff]
        %v5834 = vld [vmem:[#allocation3 + $0x15a] sm:$0xff]
        %v5835 = vld [vmem:[#allocation3 + $0x16a] sm:$0xff]
        %v5836 = vld [vmem:[#allocation3 + $0x172] sm:$0xff]
        %v5837 = vld [vmem:[#allocation3 + $0x1b2] sm:$0xff]
        %v5838 = vld [vmem:[#allocation3 + $0x1ba] sm:$0xff]
        %v5839 = vld [vmem:[#allocation3 + $0x1ca] sm:$0xff]
        %v5840 = vld [vmem:[#allocation3 + $0x1d2] sm:$0xff]
        %v5841 = vld [vmem:[#allocation3 + $0x1e2] sm:$0xff]
        %v5842 = vld [vmem:[#allocation3 + $0x1ea] sm:$0xff]
        %v5843 = vld [vmem:[#allocation3 + $0x1fa] sm:$0xff]
        %v5844 = vld [vmem:[#allocation3 + $0x202] sm:$0xff]
        %v5845 = vld [vmem:[#allocation3 + $0x212] sm:$0xff]
        %v5846 = vld [vmem:[#allocation3 + $0x21a] sm:$0xff]
        %v5847 = vld [vmem:[#allocation3 + $0x22a] sm:$0xff]
        %v5848 = vld [vmem:[#allocation3 + $0x232] sm:$0xff]
        %v5849 = vld [vmem:[#allocation3 + $0x242] sm:$0xff]
        %v5850 = vld [vmem:[#allocation3 + $0x24a] sm:$0xff]
        %v5851 = vld [vmem:[#allocation3 + $0x25a] sm:$0xff]
        %v5852 = vld [vmem:[#allocation3 + $0x262] sm:$0xff]
        %v5853 = vld [vmem:[#allocation3 + $0x272] sm:$0xff]
        %v5854 = vld [vmem:[#allocation3 + $0x27a] sm:$0xff]
        %v5855 = vld [vmem:[#allocation3 + $0x28a] sm:$0xff]
        %v5856 = vld [vmem:[#allocation3 + $0x292] sm:$0xff]
        %v5857 = vld [vmem:[#allocation3 + $0x2a2] sm:$0xff]
        %v5858 = vld [vmem:[#allocation3 + $0x2aa] sm:$0xff]
        %v5859 = vld [vmem:[#allocation3 + $0x2ba] sm:$0xff]
        %v5860 = vld [vmem:[#allocation3 + $0x2c2] sm:$0xff]
        %v5861 = vld [vmem:[#allocation3 + $0x2d2] sm:$0xff]
        %v5862 = vld [vmem:[#allocation3 + $0x2da] sm:$0xff]
        %v5863 = vld [vmem:[#allocation3 + $0x2ea] sm:$0xff]
        %v5864 = vld [vmem:[#allocation3 + $0x2f2] sm:$0xff]
        %v5865 = vld [vmem:[#allocation3 + $0x302] sm:$0xff]
        %v5866 = vld [vmem:[#allocation3 + $0x30a] sm:$0xff]
        %v5867 = vld [vmem:[#allocation3 + $0x31a] sm:$0xff]
        %v5868 = vld [vmem:[#allocation3 + $0x322] sm:$0xff]
        %v5869 = vpack.c.bf16 %v5806, %v5805
        %v5870 = vpack.c.bf16 %v5808, %v5807
        %v5871 = vpack.c.bf16 %v5810, %v5809
        %v5872 = vpack.c.bf16 %v5812, %v5811
        %v5873 = vpack.c.bf16 %v5814, %v5813
        %v5874 = vpack.c.bf16 %v5816, %v5815
        %v5875 = vpack.c.bf16 %v5818, %v5817
        %v5876 = vpack.c.bf16 %v5820, %v5819
        %v5877 = vpack.c.bf16 %v5822, %v5821
        %v5878 = vpack.c.bf16 %v5824, %v5823
        %v5879 = vpack.c.bf16 %v5826, %v5825
        %v5880 = vpack.c.bf16 %v5828, %v5827
        %v5881 = vpack.c.bf16 %v5830, %v5829
        %v5882 = vpack.c.bf16 %v5832, %v5831
        %v5883 = vpack.c.bf16 %v5834, %v5833
        %v5884 = vpack.c.bf16 %v5836, %v5835
        %v5885 = vpack.c.bf16 %v5838, %v5837
        %v5886 = vpack.c.bf16 %v5840, %v5839
        %v5887 = vpack.c.bf16 %v5842, %v5841
        %v5888 = vpack.c.bf16 %v5844, %v5843
        %v5889 = vpack.c.bf16 %v5846, %v5845
        %v5890 = vpack.c.bf16 %v5848, %v5847
        %v5891 = vpack.c.bf16 %v5850, %v5849
        %v5892 = vpack.c.bf16 %v5852, %v5851
        %v5893 = vpack.c.bf16 %v5854, %v5853
        %v5894 = vpack.c.bf16 %v5856, %v5855
        %v5895 = vpack.c.bf16 %v5858, %v5857
        %v5896 = vpack.c.bf16 %v5860, %v5859
        %v5897 = vpack.c.bf16 %v5862, %v5861
        %v5898 = vpack.c.bf16 %v5864, %v5863
        %v5899 = vpack.c.bf16 %v5866, %v5865
        %v5900 = vpack.c.bf16 %v5868, %v5867
        %v5901 = vld [vmem:[%s575] sm:$0xff]
        %v5902 = vld [vmem:[%s575 + $0x8] sm:$0xff]
        %v5903 = vld [vmem:[%s575 + $0x18] sm:$0xff]
        %v5904 = vld [vmem:[%s575 + $0x20] sm:$0xff]
        %v5905 = vld [vmem:[%s575 + $0x30] sm:$0xff]
        %v5906 = vld [vmem:[%s575 + $0x38] sm:$0xff]
        %v5907 = vld [vmem:[%s575 + $0x48] sm:$0xff]
        %v5908 = vld [vmem:[%s575 + $0x50] sm:$0xff]
        %v5909 = vld [vmem:[%s575 + $0x60] sm:$0xff]
        %v5910 = vld [vmem:[%s575 + $0x68] sm:$0xff]
        %v5911 = vld [vmem:[%s575 + $0x78] sm:$0xff]
        %v5912 = vld [vmem:[%s575 + $0x80] sm:$0xff]
        %v5913 = vld [vmem:[%s575 + $0x90] sm:$0xff]
        %v5914 = vld [vmem:[%s575 + $0x98] sm:$0xff]
        %v5915 = vld [vmem:[%s575 + $0xa8] sm:$0xff]
        %v5916 = vld [vmem:[%s575 + $0xb0] sm:$0xff]
        %v5917 = vld [vmem:[%s575 + $0xc0] sm:$0xff]
        %v5918 = vld [vmem:[%s575 + $0xc8] sm:$0xff]
        %v5919 = vld [vmem:[%s575 + $0xd8] sm:$0xff]
        %v5920 = vld [vmem:[%s575 + $0xe0] sm:$0xff]
        %v5921 = vld [vmem:[%s575 + $0xf0] sm:$0xff]
        %v5922 = vld [vmem:[%s575 + $0xf8] sm:$0xff]
        %v5923 = vld [vmem:[%s575 + $0x108] sm:$0xff]
        %v5924 = vld [vmem:[%s575 + $0x110] sm:$0xff]
        %v5925 = vld [vmem:[%s575 + $0x120] sm:$0xff]
        %v5926 = vld [vmem:[%s575 + $0x128] sm:$0xff]
        %v5927 = vld [vmem:[%s575 + $0x138] sm:$0xff]
        %v5928 = vld [vmem:[%s575 + $0x140] sm:$0xff]
        %v5929 = vld [vmem:[%s575 + $0x150] sm:$0xff]
        %v5930 = vld [vmem:[%s575 + $0x158] sm:$0xff]
        %v5931 = vld [vmem:[%s575 + $0x168] sm:$0xff]
        %v5932 = vld [vmem:[%s575 + $0x170] sm:$0xff]
        %v5933 = vld [vmem:[%s575 + $0x1b0] sm:$0xff]
        %v5934 = vld [vmem:[%s575 + $0x1b8] sm:$0xff]
        %v5935 = vld [vmem:[%s575 + $0x1c8] sm:$0xff]
        %v5936 = vld [vmem:[%s575 + $0x1d0] sm:$0xff]
        %v5937 = vld [vmem:[%s575 + $0x1e0] sm:$0xff]
        %v5938 = vld [vmem:[%s575 + $0x1e8] sm:$0xff]
        %v5939 = vld [vmem:[%s575 + $0x1f8] sm:$0xff]
        %v5940 = vld [vmem:[%s575 + $0x200] sm:$0xff]
        %v5941 = vld [vmem:[%s575 + $0x210] sm:$0xff]
        %v5942 = vld [vmem:[%s575 + $0x218] sm:$0xff]
        %v5943 = vld [vmem:[%s575 + $0x228] sm:$0xff]
        %v5944 = vld [vmem:[%s575 + $0x230] sm:$0xff]
        %v5945 = vld [vmem:[%s575 + $0x240] sm:$0xff]
        %v5946 = vld [vmem:[%s575 + $0x248] sm:$0xff]
        %v5947 = vld [vmem:[%s575 + $0x258] sm:$0xff]
        %v5948 = vld [vmem:[%s575 + $0x260] sm:$0xff]
        %v5949 = vld [vmem:[%s575 + $0x270] sm:$0xff]
        %v5950 = vld [vmem:[%s575 + $0x278] sm:$0xff]
        %v5951 = vld [vmem:[%s575 + $0x288] sm:$0xff]
        %v5952 = vld [vmem:[%s575 + $0x290] sm:$0xff]
        %v5953 = vld [vmem:[%s575 + $0x2a0] sm:$0xff]
        %v5954 = vld [vmem:[%s575 + $0x2a8] sm:$0xff]
        %v5955 = vld [vmem:[%s575 + $0x2b8] sm:$0xff]
        %v5956 = vld [vmem:[%s575 + $0x2c0] sm:$0xff]
        %v5957 = vld [vmem:[%s575 + $0x2d0] sm:$0xff]
        %v5958 = vld [vmem:[%s575 + $0x2d8] sm:$0xff]
        %v5959 = vld [vmem:[%s575 + $0x2e8] sm:$0xff]
        %v5960 = vld [vmem:[%s575 + $0x2f0] sm:$0xff]
        %v5961 = vld [vmem:[%s575 + $0x300] sm:$0xff]
        %v5962 = vld [vmem:[%s575 + $0x308] sm:$0xff]
        %v5963 = vld [vmem:[%s575 + $0x318] sm:$0xff]
        %v5964 = vld [vmem:[%s575 + $0x320] sm:$0xff]
        %v5965 = vpack.c.bf16 %v5902, %v5901
        %v5966 = vpack.c.bf16 %v5904, %v5903
        %v5967 = vpack.c.bf16 %v5906, %v5905
        %v5968 = vpack.c.bf16 %v5908, %v5907
        %v5969 = vpack.c.bf16 %v5910, %v5909
        %v5970 = vpack.c.bf16 %v5912, %v5911
        %v5971 = vpack.c.bf16 %v5914, %v5913
        %v5972 = vpack.c.bf16 %v5916, %v5915
        %v5973 = vpack.c.bf16 %v5918, %v5917
        %v5974 = vpack.c.bf16 %v5920, %v5919
        %v5975 = vpack.c.bf16 %v5922, %v5921
        %v5976 = vpack.c.bf16 %v5924, %v5923
        %v5977 = vpack.c.bf16 %v5926, %v5925
        %v5978 = vpack.c.bf16 %v5928, %v5927
        %v5979 = vpack.c.bf16 %v5930, %v5929
        %v5980 = vpack.c.bf16 %v5932, %v5931
        %v5981 = vpack.c.bf16 %v5934, %v5933
        %v5982 = vpack.c.bf16 %v5936, %v5935
        %v5983 = vpack.c.bf16 %v5938, %v5937
        %v5984 = vpack.c.bf16 %v5940, %v5939
        %v5985 = vpack.c.bf16 %v5942, %v5941
        %v5986 = vpack.c.bf16 %v5944, %v5943
        %v5987 = vpack.c.bf16 %v5946, %v5945
        %v5988 = vpack.c.bf16 %v5948, %v5947
        %v5989 = vpack.c.bf16 %v5950, %v5949
        %v5990 = vpack.c.bf16 %v5952, %v5951
        %v5991 = vpack.c.bf16 %v5954, %v5953
        %v5992 = vpack.c.bf16 %v5956, %v5955
        %v5993 = vpack.c.bf16 %v5958, %v5957
        %v5994 = vpack.c.bf16 %v5960, %v5959
        %v5995 = vpack.c.bf16 %v5962, %v5961
        %v5996 = vpack.c.bf16 %v5964, %v5963
        %v5997 = vld [vmem:[%s575 + $0x1] sm:$0xff]
        %v5998 = vld [vmem:[%s575 + $0x9] sm:$0xff]
        %v5999 = vld [vmem:[%s575 + $0x19] sm:$0xff]
        %v6000 = vld [vmem:[%s575 + $0x21] sm:$0xff]
        %v6001 = vld [vmem:[%s575 + $0x31] sm:$0xff]
        %v6002 = vld [vmem:[%s575 + $0x39] sm:$0xff]
        %v6003 = vld [vmem:[%s575 + $0x49] sm:$0xff]
        %v6004 = vld [vmem:[%s575 + $0x51] sm:$0xff]
        %v6005 = vld [vmem:[%s575 + $0x61] sm:$0xff]
        %v6006 = vld [vmem:[%s575 + $0x69] sm:$0xff]
        %v6007 = vld [vmem:[%s575 + $0x79] sm:$0xff]
        %v6008 = vld [vmem:[%s575 + $0x81] sm:$0xff]
        %v6009 = vld [vmem:[%s575 + $0x91] sm:$0xff]
        %v6010 = vld [vmem:[%s575 + $0x99] sm:$0xff]
        %v6011 = vld [vmem:[%s575 + $0xa9] sm:$0xff]
        %v6012 = vld [vmem:[%s575 + $0xb1] sm:$0xff]
        %v6013 = vld [vmem:[%s575 + $0xc1] sm:$0xff]
        %v6014 = vld [vmem:[%s575 + $0xc9] sm:$0xff]
        %v6015 = vld [vmem:[%s575 + $0xd9] sm:$0xff]
        %v6016 = vld [vmem:[%s575 + $0xe1] sm:$0xff]
        %v6017 = vld [vmem:[%s575 + $0xf1] sm:$0xff]
        %v6018 = vld [vmem:[%s575 + $0xf9] sm:$0xff]
        %v6019 = vld [vmem:[%s575 + $0x109] sm:$0xff]
        %v6020 = vld [vmem:[%s575 + $0x111] sm:$0xff]
        %v6021 = vld [vmem:[%s575 + $0x121] sm:$0xff]
        %v6022 = vld [vmem:[%s575 + $0x129] sm:$0xff]
        %v6023 = vld [vmem:[%s575 + $0x139] sm:$0xff]
        %v6024 = vld [vmem:[%s575 + $0x141] sm:$0xff]
        %v6025 = vld [vmem:[%s575 + $0x151] sm:$0xff]
        %v6026 = vld [vmem:[%s575 + $0x159] sm:$0xff]
        %v6027 = vld [vmem:[%s575 + $0x169] sm:$0xff]
        %v6028 = vld [vmem:[%s575 + $0x171] sm:$0xff]
        %v6029 = vld [vmem:[%s575 + $0x1b1] sm:$0xff]
        %v6030 = vld [vmem:[%s575 + $0x1b9] sm:$0xff]
        %v6031 = vld [vmem:[%s575 + $0x1c9] sm:$0xff]
        %v6032 = vld [vmem:[%s575 + $0x1d1] sm:$0xff]
        %v6033 = vld [vmem:[%s575 + $0x1e1] sm:$0xff]
        %v6034 = vld [vmem:[%s575 + $0x1e9] sm:$0xff]
        %v6035 = vld [vmem:[%s575 + $0x1f9] sm:$0xff]
        %v6036 = vld [vmem:[%s575 + $0x201] sm:$0xff]
        %v6037 = vld [vmem:[%s575 + $0x211] sm:$0xff]
        %v6038 = vld [vmem:[%s575 + $0x219] sm:$0xff]
        %v6039 = vld [vmem:[%s575 + $0x229] sm:$0xff]
        %v6040 = vld [vmem:[%s575 + $0x231] sm:$0xff]
        %v6041 = vld [vmem:[%s575 + $0x241] sm:$0xff]
        %v6042 = vld [vmem:[%s575 + $0x249] sm:$0xff]
        %v6043 = vld [vmem:[%s575 + $0x259] sm:$0xff]
        %v6044 = vld [vmem:[%s575 + $0x261] sm:$0xff]
        %v6045 = vld [vmem:[%s575 + $0x271] sm:$0xff]
        %v6046 = vld [vmem:[%s575 + $0x279] sm:$0xff]
        %v6047 = vld [vmem:[%s575 + $0x289] sm:$0xff]
        %v6048 = vld [vmem:[%s575 + $0x291] sm:$0xff]
        %v6049 = vld [vmem:[%s575 + $0x2a1] sm:$0xff]
        %v6050 = vld [vmem:[%s575 + $0x2a9] sm:$0xff]
        %v6051 = vld [vmem:[%s575 + $0x2b9] sm:$0xff]
        %v6052 = vld [vmem:[%s575 + $0x2c1] sm:$0xff]
        %v6053 = vld [vmem:[%s575 + $0x2d1] sm:$0xff]
        %v6054 = vld [vmem:[%s575 + $0x2d9] sm:$0xff]
        %v6055 = vld [vmem:[%s575 + $0x2e9] sm:$0xff]
        %v6056 = vld [vmem:[%s575 + $0x2f1] sm:$0xff]
        %v6057 = vld [vmem:[%s575 + $0x301] sm:$0xff]
        %v6058 = vld [vmem:[%s575 + $0x309] sm:$0xff]
        %v6059 = vld [vmem:[%s575 + $0x319] sm:$0xff]
        %v6060 = vld [vmem:[%s575 + $0x321] sm:$0xff]
        %v6061 = vpack.c.bf16 %v5998, %v5997
        %v6062 = vpack.c.bf16 %v6000, %v5999
        %v6063 = vpack.c.bf16 %v6002, %v6001
        %v6064 = vpack.c.bf16 %v6004, %v6003
        %v6065 = vpack.c.bf16 %v6006, %v6005
        %v6066 = vpack.c.bf16 %v6008, %v6007
        %v6067 = vpack.c.bf16 %v6010, %v6009
        %v6068 = vpack.c.bf16 %v6012, %v6011
        %v6069 = vpack.c.bf16 %v6014, %v6013
        %v6070 = vpack.c.bf16 %v6016, %v6015
        %v6071 = vpack.c.bf16 %v6018, %v6017
        %v6072 = vpack.c.bf16 %v6020, %v6019
        %v6073 = vpack.c.bf16 %v6022, %v6021
        %v6074 = vpack.c.bf16 %v6024, %v6023
        %v6075 = vpack.c.bf16 %v6026, %v6025
        %v6076 = vpack.c.bf16 %v6028, %v6027
        %v6077 = vpack.c.bf16 %v6030, %v6029
        %v6078 = vpack.c.bf16 %v6032, %v6031
        %v6079 = vpack.c.bf16 %v6034, %v6033
        %v6080 = vpack.c.bf16 %v6036, %v6035
        %v6081 = vpack.c.bf16 %v6038, %v6037
        %v6082 = vpack.c.bf16 %v6040, %v6039
        %v6083 = vpack.c.bf16 %v6042, %v6041
        %v6084 = vpack.c.bf16 %v6044, %v6043
        %v6085 = vpack.c.bf16 %v6046, %v6045
        %v6086 = vpack.c.bf16 %v6048, %v6047
        %v6087 = vpack.c.bf16 %v6050, %v6049
        %v6088 = vpack.c.bf16 %v6052, %v6051
        %v6089 = vpack.c.bf16 %v6054, %v6053
        %v6090 = vpack.c.bf16 %v6056, %v6055
        %v6091 = vpack.c.bf16 %v6058, %v6057
        %v6092 = vpack.c.bf16 %v6060, %v6059
        %v6093 = vld [vmem:[%s575 + $0x2] sm:$0xff]
        %v6094 = vld [vmem:[%s575 + $0xa] sm:$0xff]
        %v6095 = vld [vmem:[%s575 + $0x1a] sm:$0xff]
        %v6096 = vld [vmem:[%s575 + $0x22] sm:$0xff]
        %v6097 = vld [vmem:[%s575 + $0x32] sm:$0xff]
        %v6098 = vld [vmem:[%s575 + $0x3a] sm:$0xff]
        %v6099 = vld [vmem:[%s575 + $0x4a] sm:$0xff]
        %v6100 = vld [vmem:[%s575 + $0x52] sm:$0xff]
        %v6101 = vld [vmem:[%s575 + $0x62] sm:$0xff]
        %v6102 = vld [vmem:[%s575 + $0x6a] sm:$0xff]
        %v6103 = vld [vmem:[%s575 + $0x7a] sm:$0xff]
        %v6104 = vld [vmem:[%s575 + $0x82] sm:$0xff]
        %v6105 = vld [vmem:[%s575 + $0x92] sm:$0xff]
        %v6106 = vld [vmem:[%s575 + $0x9a] sm:$0xff]
        %v6107 = vld [vmem:[%s575 + $0xaa] sm:$0xff]
        %v6108 = vld [vmem:[%s575 + $0xb2] sm:$0xff]
        %v6109 = vld [vmem:[%s575 + $0xc2] sm:$0xff]
        %v6110 = vld [vmem:[%s575 + $0xca] sm:$0xff]
        %v6111 = vld [vmem:[%s575 + $0xda] sm:$0xff]
        %v6112 = vld [vmem:[%s575 + $0xe2] sm:$0xff]
        %v6113 = vld [vmem:[%s575 + $0xf2] sm:$0xff]
        %v6114 = vld [vmem:[%s575 + $0xfa] sm:$0xff]
        %v6115 = vld [vmem:[%s575 + $0x10a] sm:$0xff]
        %v6116 = vld [vmem:[%s575 + $0x112] sm:$0xff]
        %v6117 = vld [vmem:[%s575 + $0x122] sm:$0xff]
        %v6118 = vld [vmem:[%s575 + $0x12a] sm:$0xff]
        %v6119 = vld [vmem:[%s575 + $0x13a] sm:$0xff]
        %v6120 = vld [vmem:[%s575 + $0x142] sm:$0xff]
        %v6121 = vld [vmem:[%s575 + $0x152] sm:$0xff]
        %v6122 = vld [vmem:[%s575 + $0x15a] sm:$0xff]
        %v6123 = vld [vmem:[%s575 + $0x16a] sm:$0xff]
        %v6124 = vld [vmem:[%s575 + $0x172] sm:$0xff]
        %v6125 = vld [vmem:[%s575 + $0x1b2] sm:$0xff]
        %v6126 = vld [vmem:[%s575 + $0x1ba] sm:$0xff]
        %v6127 = vld [vmem:[%s575 + $0x1ca] sm:$0xff]
        %v6128 = vld [vmem:[%s575 + $0x1d2] sm:$0xff]
        %v6129 = vld [vmem:[%s575 + $0x1e2] sm:$0xff]
        %v6130 = vld [vmem:[%s575 + $0x1ea] sm:$0xff]
        %v6131 = vld [vmem:[%s575 + $0x1fa] sm:$0xff]
        %v6132 = vld [vmem:[%s575 + $0x202] sm:$0xff]
        %v6133 = vld [vmem:[%s575 + $0x212] sm:$0xff]
        %v6134 = vld [vmem:[%s575 + $0x21a] sm:$0xff]
        %v6135 = vld [vmem:[%s575 + $0x22a] sm:$0xff]
        %v6136 = vld [vmem:[%s575 + $0x232] sm:$0xff]
        %v6137 = vld [vmem:[%s575 + $0x242] sm:$0xff]
        %v6138 = vld [vmem:[%s575 + $0x24a] sm:$0xff]
        %v6139 = vld [vmem:[%s575 + $0x25a] sm:$0xff]
        %v6140 = vld [vmem:[%s575 + $0x262] sm:$0xff]
        %v6141 = vld [vmem:[%s575 + $0x272] sm:$0xff]
        %v6142 = vld [vmem:[%s575 + $0x27a] sm:$0xff]
        %v6143 = vld [vmem:[%s575 + $0x28a] sm:$0xff]
        %v6144 = vld [vmem:[%s575 + $0x292] sm:$0xff]
        %v6145 = vld [vmem:[%s575 + $0x2a2] sm:$0xff]
        %v6146 = vld [vmem:[%s575 + $0x2aa] sm:$0xff]
        %v6147 = vld [vmem:[%s575 + $0x2ba] sm:$0xff]
        %v6148 = vld [vmem:[%s575 + $0x2c2] sm:$0xff]
        %v6149 = vld [vmem:[%s575 + $0x2d2] sm:$0xff]
        %v6150 = vld [vmem:[%s575 + $0x2da] sm:$0xff]
        %v6151 = vld [vmem:[%s575 + $0x2ea] sm:$0xff]
        %v6152 = vld [vmem:[%s575 + $0x2f2] sm:$0xff]
        %v6153 = vld [vmem:[%s575 + $0x302] sm:$0xff]
        %v6154 = vld [vmem:[%s575 + $0x30a] sm:$0xff]
        %v6155 = vld [vmem:[%s575 + $0x31a] sm:$0xff]
        %v6156 = vld [vmem:[%s575 + $0x322] sm:$0xff]
        %v6157 = vpack.c.bf16 %v6094, %v6093
        %v6158 = vpack.c.bf16 %v6096, %v6095
        %v6159 = vpack.c.bf16 %v6098, %v6097
        %v6160 = vpack.c.bf16 %v6100, %v6099
        %v6161 = vpack.c.bf16 %v6102, %v6101
        %v6162 = vpack.c.bf16 %v6104, %v6103
        %v6163 = vpack.c.bf16 %v6106, %v6105
        %v6164 = vpack.c.bf16 %v6108, %v6107
        %v6165 = vpack.c.bf16 %v6110, %v6109
        %v6166 = vpack.c.bf16 %v6112, %v6111
        %v6167 = vpack.c.bf16 %v6114, %v6113
        %v6168 = vpack.c.bf16 %v6116, %v6115
        %v6169 = vpack.c.bf16 %v6118, %v6117
        %v6170 = vpack.c.bf16 %v6120, %v6119
        %v6171 = vpack.c.bf16 %v6122, %v6121
        %v6172 = vpack.c.bf16 %v6124, %v6123
        %v6173 = vpack.c.bf16 %v6126, %v6125
        %v6174 = vpack.c.bf16 %v6128, %v6127
        %v6175 = vpack.c.bf16 %v6130, %v6129
        %v6176 = vpack.c.bf16 %v6132, %v6131
        %v6177 = vpack.c.bf16 %v6134, %v6133
        %v6178 = vpack.c.bf16 %v6136, %v6135
        %v6179 = vpack.c.bf16 %v6138, %v6137
        %v6180 = vpack.c.bf16 %v6140, %v6139
        %v6181 = vpack.c.bf16 %v6142, %v6141
        %v6182 = vpack.c.bf16 %v6144, %v6143
        %v6183 = vpack.c.bf16 %v6146, %v6145
        %v6184 = vpack.c.bf16 %v6148, %v6147
        %v6185 = vpack.c.bf16 %v6150, %v6149
        %v6186 = vpack.c.bf16 %v6152, %v6151
        %v6187 = vpack.c.bf16 %v6154, %v6153
        %v6188 = vpack.c.bf16 %v6156, %v6155
        %v6189 = vld [vmem:[%s1602] sm:$0xff]
        %v6190 = vld [vmem:[%s1602 + $0x8] sm:$0xff]
        %v6191 = vld [vmem:[%s1602 + $0x18] sm:$0xff]
        %v6192 = vld [vmem:[%s1602 + $0x20] sm:$0xff]
        %v6193 = vld [vmem:[%s1602 + $0x30] sm:$0xff]
        %v6194 = vld [vmem:[%s1602 + $0x38] sm:$0xff]
        %v6195 = vld [vmem:[%s1602 + $0x48] sm:$0xff]
        %v6196 = vld [vmem:[%s1602 + $0x50] sm:$0xff]
        %v6197 = vld [vmem:[%s1602 + $0x60] sm:$0xff]
        %v6198 = vld [vmem:[%s1602 + $0x68] sm:$0xff]
        %v6199 = vld [vmem:[%s1602 + $0x78] sm:$0xff]
        %v6200 = vld [vmem:[%s1602 + $0x80] sm:$0xff]
        %v6201 = vld [vmem:[%s1602 + $0x90] sm:$0xff]
        %v6202 = vld [vmem:[%s1602 + $0x98] sm:$0xff]
        %v6203 = vld [vmem:[%s1602 + $0xa8] sm:$0xff]
        %v6204 = vld [vmem:[%s1602 + $0xb0] sm:$0xff]
        %v6205 = vld [vmem:[%s1602 + $0xc0] sm:$0xff]
        %v6206 = vld [vmem:[%s1602 + $0xc8] sm:$0xff]
        %v6207 = vld [vmem:[%s1602 + $0xd8] sm:$0xff]
        %v6208 = vld [vmem:[%s1602 + $0xe0] sm:$0xff]
        %v6209 = vld [vmem:[%s1602 + $0xf0] sm:$0xff]
        %v6210 = vld [vmem:[%s1602 + $0xf8] sm:$0xff]
        %v6211 = vld [vmem:[%s1602 + $0x108] sm:$0xff]
        %v6212 = vld [vmem:[%s1602 + $0x110] sm:$0xff]
        %v6213 = vld [vmem:[%s1602 + $0x120] sm:$0xff]
        %v6214 = vld [vmem:[%s1602 + $0x128] sm:$0xff]
        %v6215 = vld [vmem:[%s1602 + $0x138] sm:$0xff]
        %v6216 = vld [vmem:[%s1602 + $0x140] sm:$0xff]
        %v6217 = vld [vmem:[%s1602 + $0x150] sm:$0xff]
        %v6218 = vld [vmem:[%s1602 + $0x158] sm:$0xff]
        %v6219 = vld [vmem:[%s1602 + $0x168] sm:$0xff]
        %v6220 = vld [vmem:[%s1602 + $0x170] sm:$0xff]
        %v6221 = vld [vmem:[%s1602 + $0x1b0] sm:$0xff]
        %v6222 = vld [vmem:[%s1602 + $0x1b8] sm:$0xff]
        %v6223 = vld [vmem:[%s1602 + $0x1c8] sm:$0xff]
        %v6224 = vld [vmem:[%s1602 + $0x1d0] sm:$0xff]
        %v6225 = vld [vmem:[%s1602 + $0x1e0] sm:$0xff]
        %v6226 = vld [vmem:[%s1602 + $0x1e8] sm:$0xff]
        %v6227 = vld [vmem:[%s1602 + $0x1f8] sm:$0xff]
        %v6228 = vld [vmem:[%s1602 + $0x200] sm:$0xff]
        %v6229 = vld [vmem:[%s1602 + $0x210] sm:$0xff]
        %v6230 = vld [vmem:[%s1602 + $0x218] sm:$0xff]
        %v6231 = vld [vmem:[%s1602 + $0x228] sm:$0xff]
        %v6232 = vld [vmem:[%s1602 + $0x230] sm:$0xff]
        %v6233 = vld [vmem:[%s1602 + $0x240] sm:$0xff]
        %v6234 = vld [vmem:[%s1602 + $0x248] sm:$0xff]
        %v6235 = vld [vmem:[%s1602 + $0x258] sm:$0xff]
        %v6236 = vld [vmem:[%s1602 + $0x260] sm:$0xff]
        %v6237 = vld [vmem:[%s1602 + $0x270] sm:$0xff]
        %v6238 = vld [vmem:[%s1602 + $0x278] sm:$0xff]
        %v6239 = vld [vmem:[%s1602 + $0x288] sm:$0xff]
        %v6240 = vld [vmem:[%s1602 + $0x290] sm:$0xff]
        %v6241 = vld [vmem:[%s1602 + $0x2a0] sm:$0xff]
        %v6242 = vld [vmem:[%s1602 + $0x2a8] sm:$0xff]
        %v6243 = vld [vmem:[%s1602 + $0x2b8] sm:$0xff]
        %v6244 = vld [vmem:[%s1602 + $0x2c0] sm:$0xff]
        %v6245 = vld [vmem:[%s1602 + $0x2d0] sm:$0xff]
        %v6246 = vld [vmem:[%s1602 + $0x2d8] sm:$0xff]
        %v6247 = vld [vmem:[%s1602 + $0x2e8] sm:$0xff]
        %v6248 = vld [vmem:[%s1602 + $0x2f0] sm:$0xff]
        %v6249 = vld [vmem:[%s1602 + $0x300] sm:$0xff]
        %v6250 = vld [vmem:[%s1602 + $0x308] sm:$0xff]
        %v6251 = vld [vmem:[%s1602 + $0x318] sm:$0xff]
        %v6252 = vld [vmem:[%s1602 + $0x320] sm:$0xff]
        %v6253 = vpack.c.bf16 %v6190, %v6189
        %v6254 = vpack.c.bf16 %v6192, %v6191
        %v6255 = vpack.c.bf16 %v6194, %v6193
        %v6256 = vpack.c.bf16 %v6196, %v6195
        %v6257 = vpack.c.bf16 %v6198, %v6197
        %v6258 = vpack.c.bf16 %v6200, %v6199
        %v6259 = vpack.c.bf16 %v6202, %v6201
        %v6260 = vpack.c.bf16 %v6204, %v6203
        %v6261 = vpack.c.bf16 %v6206, %v6205
        %v6262 = vpack.c.bf16 %v6208, %v6207
        %v6263 = vpack.c.bf16 %v6210, %v6209
        %v6264 = vpack.c.bf16 %v6212, %v6211
        %v6265 = vpack.c.bf16 %v6214, %v6213
        %v6266 = vpack.c.bf16 %v6216, %v6215
        %v6267 = vpack.c.bf16 %v6218, %v6217
        %v6268 = vpack.c.bf16 %v6220, %v6219
        %v6269 = vpack.c.bf16 %v6222, %v6221
        %v6270 = vpack.c.bf16 %v6224, %v6223
        %v6271 = vpack.c.bf16 %v6226, %v6225
        %v6272 = vpack.c.bf16 %v6228, %v6227
        %v6273 = vpack.c.bf16 %v6230, %v6229
        %v6274 = vpack.c.bf16 %v6232, %v6231
        %v6275 = vpack.c.bf16 %v6234, %v6233
        %v6276 = vpack.c.bf16 %v6236, %v6235
        %v6277 = vpack.c.bf16 %v6238, %v6237
        %v6278 = vpack.c.bf16 %v6240, %v6239
        %v6279 = vpack.c.bf16 %v6242, %v6241
        %v6280 = vpack.c.bf16 %v6244, %v6243
        %v6281 = vpack.c.bf16 %v6246, %v6245
        %v6282 = vpack.c.bf16 %v6248, %v6247
        %v6283 = vpack.c.bf16 %v6250, %v6249
        %v6284 = vpack.c.bf16 %v6252, %v6251
        %v6285 = vld [vmem:[%s1602 + $0x1] sm:$0xff]
        %v6286 = vld [vmem:[%s1602 + $0x9] sm:$0xff]
        %v6287 = vld [vmem:[%s1602 + $0x19] sm:$0xff]
        %v6288 = vld [vmem:[%s1602 + $0x21] sm:$0xff]
        %v6289 = vld [vmem:[%s1602 + $0x31] sm:$0xff]
        %v6290 = vld [vmem:[%s1602 + $0x39] sm:$0xff]
        %v6291 = vld [vmem:[%s1602 + $0x49] sm:$0xff]
        %v6292 = vld [vmem:[%s1602 + $0x51] sm:$0xff]
        %v6293 = vld [vmem:[%s1602 + $0x61] sm:$0xff]
        %v6294 = vld [vmem:[%s1602 + $0x69] sm:$0xff]
        %v6295 = vld [vmem:[%s1602 + $0x79] sm:$0xff]
        %v6296 = vld [vmem:[%s1602 + $0x81] sm:$0xff]
        %v6297 = vld [vmem:[%s1602 + $0x91] sm:$0xff]
        %v6298 = vld [vmem:[%s1602 + $0x99] sm:$0xff]
        %v6299 = vld [vmem:[%s1602 + $0xa9] sm:$0xff]
        %v6300 = vld [vmem:[%s1602 + $0xb1] sm:$0xff]
        %v6301 = vld [vmem:[%s1602 + $0xc1] sm:$0xff]
        %v6302 = vld [vmem:[%s1602 + $0xc9] sm:$0xff]
        %v6303 = vld [vmem:[%s1602 + $0xd9] sm:$0xff]
        %v6304 = vld [vmem:[%s1602 + $0xe1] sm:$0xff]
        %v6305 = vld [vmem:[%s1602 + $0xf1] sm:$0xff]
        %v6306 = vld [vmem:[%s1602 + $0xf9] sm:$0xff]
        %v6307 = vld [vmem:[%s1602 + $0x109] sm:$0xff]
        %v6308 = vld [vmem:[%s1602 + $0x111] sm:$0xff]
        %v6309 = vld [vmem:[%s1602 + $0x121] sm:$0xff]
        %v6310 = vld [vmem:[%s1602 + $0x129] sm:$0xff]
        %v6311 = vld [vmem:[%s1602 + $0x139] sm:$0xff]
        %v6312 = vld [vmem:[%s1602 + $0x141] sm:$0xff]
        %v6313 = vld [vmem:[%s1602 + $0x151] sm:$0xff]
        %v6314 = vld [vmem:[%s1602 + $0x159] sm:$0xff]
        %v6315 = vld [vmem:[%s1602 + $0x169] sm:$0xff]
        %v6316 = vld [vmem:[%s1602 + $0x171] sm:$0xff]
        %v6317 = vld [vmem:[%s1602 + $0x1b1] sm:$0xff]
        %v6318 = vld [vmem:[%s1602 + $0x1b9] sm:$0xff]
        %v6319 = vld [vmem:[%s1602 + $0x1c9] sm:$0xff]
        %v6320 = vld [vmem:[%s1602 + $0x1d1] sm:$0xff]
        %v6321 = vld [vmem:[%s1602 + $0x1e1] sm:$0xff]
        %v6322 = vld [vmem:[%s1602 + $0x1e9] sm:$0xff]
        %v6323 = vld [vmem:[%s1602 + $0x1f9] sm:$0xff]
        %v6324 = vld [vmem:[%s1602 + $0x201] sm:$0xff]
        %v6325 = vld [vmem:[%s1602 + $0x211] sm:$0xff]
        %v6326 = vld [vmem:[%s1602 + $0x219] sm:$0xff]
        %v6327 = vld [vmem:[%s1602 + $0x229] sm:$0xff]
        %v6328 = vld [vmem:[%s1602 + $0x231] sm:$0xff]
        %v6329 = vld [vmem:[%s1602 + $0x241] sm:$0xff]
        %v6330 = vld [vmem:[%s1602 + $0x249] sm:$0xff]
        %v6331 = vld [vmem:[%s1602 + $0x259] sm:$0xff]
        %v6332 = vld [vmem:[%s1602 + $0x261] sm:$0xff]
        %v6333 = vld [vmem:[%s1602 + $0x271] sm:$0xff]
        %v6334 = vld [vmem:[%s1602 + $0x279] sm:$0xff]
        %v6335 = vld [vmem:[%s1602 + $0x289] sm:$0xff]
        %v6336 = vld [vmem:[%s1602 + $0x291] sm:$0xff]
        %v6337 = vld [vmem:[%s1602 + $0x2a1] sm:$0xff]
        %v6338 = vld [vmem:[%s1602 + $0x2a9] sm:$0xff]
        %v6339 = vld [vmem:[%s1602 + $0x2b9] sm:$0xff]
        %v6340 = vld [vmem:[%s1602 + $0x2c1] sm:$0xff]
        %v6341 = vld [vmem:[%s1602 + $0x2d1] sm:$0xff]
        %v6342 = vld [vmem:[%s1602 + $0x2d9] sm:$0xff]
        %v6343 = vld [vmem:[%s1602 + $0x2e9] sm:$0xff]
        %v6344 = vld [vmem:[%s1602 + $0x2f1] sm:$0xff]
        %v6345 = vld [vmem:[%s1602 + $0x301] sm:$0xff]
        %v6346 = vld [vmem:[%s1602 + $0x309] sm:$0xff]
        %v6347 = vld [vmem:[%s1602 + $0x319] sm:$0xff]
        %v6348 = vld [vmem:[%s1602 + $0x321] sm:$0xff]
        %v6349 = vpack.c.bf16 %v6286, %v6285
        %v6350 = vpack.c.bf16 %v6288, %v6287
        %v6351 = vpack.c.bf16 %v6290, %v6289
        %v6352 = vpack.c.bf16 %v6292, %v6291
        %v6353 = vpack.c.bf16 %v6294, %v6293
        %v6354 = vpack.c.bf16 %v6296, %v6295
        %v6355 = vpack.c.bf16 %v6298, %v6297
        %v6356 = vpack.c.bf16 %v6300, %v6299
        %v6357 = vpack.c.bf16 %v6302, %v6301
        %v6358 = vpack.c.bf16 %v6304, %v6303
        %v6359 = vpack.c.bf16 %v6306, %v6305
        %v6360 = vpack.c.bf16 %v6308, %v6307
        %v6361 = vpack.c.bf16 %v6310, %v6309
        %v6362 = vpack.c.bf16 %v6312, %v6311
        %v6363 = vpack.c.bf16 %v6314, %v6313
        %v6364 = vpack.c.bf16 %v6316, %v6315
        %v6365 = vpack.c.bf16 %v6318, %v6317
        %v6366 = vpack.c.bf16 %v6320, %v6319
        %v6367 = vpack.c.bf16 %v6322, %v6321
        %v6368 = vpack.c.bf16 %v6324, %v6323
        %v6369 = vpack.c.bf16 %v6326, %v6325
        %v6370 = vpack.c.bf16 %v6328, %v6327
        %v6371 = vpack.c.bf16 %v6330, %v6329
        %v6372 = vpack.c.bf16 %v6332, %v6331
        %v6373 = vpack.c.bf16 %v6334, %v6333
        %v6374 = vpack.c.bf16 %v6336, %v6335
        %v6375 = vpack.c.bf16 %v6338, %v6337
        %v6376 = vpack.c.bf16 %v6340, %v6339
        %v6377 = vpack.c.bf16 %v6342, %v6341
        %v6378 = vpack.c.bf16 %v6344, %v6343
        %v6379 = vpack.c.bf16 %v6346, %v6345
        %v6380 = vpack.c.bf16 %v6348, %v6347
        %v6381 = vld [vmem:[%s1602 + $0x2] sm:$0xff]
        %v6382 = vld [vmem:[%s1602 + $0xa] sm:$0xff]
        %v6383 = vld [vmem:[%s1602 + $0x1a] sm:$0xff]
        %v6384 = vld [vmem:[%s1602 + $0x22] sm:$0xff]
        %v6385 = vld [vmem:[%s1602 + $0x32] sm:$0xff]
        %v6386 = vld [vmem:[%s1602 + $0x3a] sm:$0xff]
        %v6387 = vld [vmem:[%s1602 + $0x4a] sm:$0xff]
        %v6388 = vld [vmem:[%s1602 + $0x52] sm:$0xff]
        %v6389 = vld [vmem:[%s1602 + $0x62] sm:$0xff]
        %v6390 = vld [vmem:[%s1602 + $0x6a] sm:$0xff]
        %v6391 = vld [vmem:[%s1602 + $0x7a] sm:$0xff]
        %v6392 = vld [vmem:[%s1602 + $0x82] sm:$0xff]
        %v6393 = vld [vmem:[%s1602 + $0x92] sm:$0xff]
        %v6394 = vld [vmem:[%s1602 + $0x9a] sm:$0xff]
        %v6395 = vld [vmem:[%s1602 + $0xaa] sm:$0xff]
        %v6396 = vld [vmem:[%s1602 + $0xb2] sm:$0xff]
        %v6397 = vld [vmem:[%s1602 + $0xc2] sm:$0xff]
        %v6398 = vld [vmem:[%s1602 + $0xca] sm:$0xff]
        %v6399 = vld [vmem:[%s1602 + $0xda] sm:$0xff]
        %v6400 = vld [vmem:[%s1602 + $0xe2] sm:$0xff]
        %v6401 = vld [vmem:[%s1602 + $0xf2] sm:$0xff]
        %v6402 = vld [vmem:[%s1602 + $0xfa] sm:$0xff]
        %v6403 = vld [vmem:[%s1602 + $0x10a] sm:$0xff]
        %v6404 = vld [vmem:[%s1602 + $0x112] sm:$0xff]
        %v6405 = vld [vmem:[%s1602 + $0x122] sm:$0xff]
        %v6406 = vld [vmem:[%s1602 + $0x12a] sm:$0xff]
        %v6407 = vld [vmem:[%s1602 + $0x13a] sm:$0xff]
        %v6408 = vld [vmem:[%s1602 + $0x142] sm:$0xff]
        %v6409 = vld [vmem:[%s1602 + $0x152] sm:$0xff]
        %v6410 = vld [vmem:[%s1602 + $0x15a] sm:$0xff]
        %v6411 = vld [vmem:[%s1602 + $0x16a] sm:$0xff]
        %v6412 = vld [vmem:[%s1602 + $0x172] sm:$0xff]
        %v6413 = vld [vmem:[%s1602 + $0x1b2] sm:$0xff]
        %v6414 = vld [vmem:[%s1602 + $0x1ba] sm:$0xff]
        %v6415 = vld [vmem:[%s1602 + $0x1ca] sm:$0xff]
        %v6416 = vld [vmem:[%s1602 + $0x1d2] sm:$0xff]
        %v6417 = vld [vmem:[%s1602 + $0x1e2] sm:$0xff]
        %v6418 = vld [vmem:[%s1602 + $0x1ea] sm:$0xff]
        %v6419 = vld [vmem:[%s1602 + $0x1fa] sm:$0xff]
        %v6420 = vld [vmem:[%s1602 + $0x202] sm:$0xff]
        %v6421 = vld [vmem:[%s1602 + $0x212] sm:$0xff]
        %v6422 = vld [vmem:[%s1602 + $0x21a] sm:$0xff]
        %v6423 = vld [vmem:[%s1602 + $0x22a] sm:$0xff]
        %v6424 = vld [vmem:[%s1602 + $0x232] sm:$0xff]
        %v6425 = vld [vmem:[%s1602 + $0x242] sm:$0xff]
        %v6426 = vld [vmem:[%s1602 + $0x24a] sm:$0xff]
        %v6427 = vld [vmem:[%s1602 + $0x25a] sm:$0xff]
        %v6428 = vld [vmem:[%s1602 + $0x262] sm:$0xff]
        %v6429 = vld [vmem:[%s1602 + $0x272] sm:$0xff]
        %v6430 = vld [vmem:[%s1602 + $0x27a] sm:$0xff]
        %v6431 = vld [vmem:[%s1602 + $0x28a] sm:$0xff]
        %v6432 = vld [vmem:[%s1602 + $0x292] sm:$0xff]
        %v6433 = vld [vmem:[%s1602 + $0x2a2] sm:$0xff]
        %v6434 = vld [vmem:[%s1602 + $0x2aa] sm:$0xff]
        %v6435 = vld [vmem:[%s1602 + $0x2ba] sm:$0xff]
        %v6436 = vld [vmem:[%s1602 + $0x2c2] sm:$0xff]
        %v6437 = vld [vmem:[%s1602 + $0x2d2] sm:$0xff]
        %v6438 = vld [vmem:[%s1602 + $0x2da] sm:$0xff]
        %v6439 = vld [vmem:[%s1602 + $0x2ea] sm:$0xff]
        %v6440 = vld [vmem:[%s1602 + $0x2f2] sm:$0xff]
        %v6441 = vld [vmem:[%s1602 + $0x302] sm:$0xff]
        %v6442 = vld [vmem:[%s1602 + $0x30a] sm:$0xff]
        %v6443 = vld [vmem:[%s1602 + $0x31a] sm:$0xff]
        %v6444 = vld [vmem:[%s1602 + $0x322] sm:$0xff]
        %v6445 = vpack.c.bf16 %v6382, %v6381
        %v6446 = vpack.c.bf16 %v6384, %v6383
        %v6447 = vpack.c.bf16 %v6386, %v6385
        %v6448 = vpack.c.bf16 %v6388, %v6387
        %v6449 = vpack.c.bf16 %v6390, %v6389
        %v6450 = vpack.c.bf16 %v6392, %v6391
        %v6451 = vpack.c.bf16 %v6394, %v6393
        %v6452 = vpack.c.bf16 %v6396, %v6395
        %v6453 = vpack.c.bf16 %v6398, %v6397
        %v6454 = vpack.c.bf16 %v6400, %v6399
        %v6455 = vpack.c.bf16 %v6402, %v6401
        %v6456 = vpack.c.bf16 %v6404, %v6403
        %v6457 = vpack.c.bf16 %v6406, %v6405
        %v6458 = vpack.c.bf16 %v6408, %v6407
        %v6459 = vpack.c.bf16 %v6410, %v6409
        %v6460 = vpack.c.bf16 %v6412, %v6411
        %v6461 = vpack.c.bf16 %v6414, %v6413
        %v6462 = vpack.c.bf16 %v6416, %v6415
        %v6463 = vpack.c.bf16 %v6418, %v6417
        %v6464 = vpack.c.bf16 %v6420, %v6419
        %v6465 = vpack.c.bf16 %v6422, %v6421
        %v6466 = vpack.c.bf16 %v6424, %v6423
        %v6467 = vpack.c.bf16 %v6426, %v6425
        %v6468 = vpack.c.bf16 %v6428, %v6427
        %v6469 = vpack.c.bf16 %v6430, %v6429
        %v6470 = vpack.c.bf16 %v6432, %v6431
        %v6471 = vpack.c.bf16 %v6434, %v6433
        %v6472 = vpack.c.bf16 %v6436, %v6435
        %v6473 = vpack.c.bf16 %v6438, %v6437
        %v6474 = vpack.c.bf16 %v6440, %v6439
        %v6475 = vpack.c.bf16 %v6442, %v6441
        %v6476 = vpack.c.bf16 %v6444, %v6443
        %6509 = vrot.lane.b32.xlu0 %v5773, 36
        %v6510 = vpop.permute.xlu0 %6509
        %6511 = vrot.lane.b32.xlu0 %v5774, 36
        %v6512 = vpop.permute.xlu0 %6511
        %6513 = vrot.lane.b32.xlu0 %v5775, 36
        %v6514 = vpop.permute.xlu0 %6513
        %6515 = vrot.lane.b32.xlu0 %v5776, 36
        %v6516 = vpop.permute.xlu0 %6515
        %6517 = vrot.lane.b32.xlu0 %v5777, 36
        %v6518 = vpop.permute.xlu0 %6517
        %6519 = vrot.lane.b32.xlu0 %v5778, 36
        %v6520 = vpop.permute.xlu0 %6519
        %6521 = vrot.lane.b32.xlu0 %v5779, 36
        %v6522 = vpop.permute.xlu0 %6521
        %6523 = vrot.lane.b32.xlu0 %v5780, 36
        %v6524 = vpop.permute.xlu0 %6523
        %6525 = vrot.lane.b32.xlu0 %v5781, 36
        %v6526 = vpop.permute.xlu0 %6525
        %6527 = vrot.lane.b32.xlu0 %v5782, 36
        %v6528 = vpop.permute.xlu0 %6527
        %6529 = vrot.lane.b32.xlu0 %v5783, 36
        %v6530 = vpop.permute.xlu0 %6529
        %6531 = vrot.lane.b32.xlu0 %v5784, 36
        %v6532 = vpop.permute.xlu0 %6531
        %6533 = vrot.lane.b32.xlu0 %v5785, 36
        %v6534 = vpop.permute.xlu0 %6533
        %6535 = vrot.lane.b32.xlu0 %v5786, 36
        %v6536 = vpop.permute.xlu0 %6535
        %6537 = vrot.lane.b32.xlu0 %v5787, 36
        %v6538 = vpop.permute.xlu0 %6537
        %6539 = vrot.lane.b32.xlu0 %v5788, 36
        %v6540 = vpop.permute.xlu0 %6539
        %6541 = vrot.lane.b32.xlu0 %v5789, 36
        %v6542 = vpop.permute.xlu0 %6541
        %6543 = vrot.lane.b32.xlu0 %v5790, 36
        %v6544 = vpop.permute.xlu0 %6543
        %6545 = vrot.lane.b32.xlu0 %v5791, 36
        %v6546 = vpop.permute.xlu0 %6545
        %6547 = vrot.lane.b32.xlu0 %v5792, 36
        %v6548 = vpop.permute.xlu0 %6547
        %6549 = vrot.lane.b32.xlu0 %v5793, 36
        %v6550 = vpop.permute.xlu0 %6549
        %6551 = vrot.lane.b32.xlu0 %v5794, 36
        %v6552 = vpop.permute.xlu0 %6551
        %6553 = vrot.lane.b32.xlu0 %v5795, 36
        %v6554 = vpop.permute.xlu0 %6553
        %6555 = vrot.lane.b32.xlu0 %v5796, 36
        %v6556 = vpop.permute.xlu0 %6555
        %6557 = vrot.lane.b32.xlu0 %v5797, 36
        %v6558 = vpop.permute.xlu0 %6557
        %6559 = vrot.lane.b32.xlu0 %v5798, 36
        %v6560 = vpop.permute.xlu0 %6559
        %6561 = vrot.lane.b32.xlu0 %v5799, 36
        %v6562 = vpop.permute.xlu0 %6561
        %6563 = vrot.lane.b32.xlu0 %v5800, 36
        %v6564 = vpop.permute.xlu0 %6563
        %6565 = vrot.lane.b32.xlu0 %v5801, 36
        %v6566 = vpop.permute.xlu0 %6565
        %6567 = vrot.lane.b32.xlu0 %v5802, 36
        %v6568 = vpop.permute.xlu0 %6567
        %6569 = vrot.lane.b32.xlu0 %v5803, 36
        %v6570 = vpop.permute.xlu0 %6569
        %6571 = vrot.lane.b32.xlu0 %v5804, 36
        %v6572 = vpop.permute.xlu0 %6571
        %6605 = vrot.lane.b32.xlu0 %v5869, 72
        %v6606 = vpop.permute.xlu0 %6605
        %6607 = vrot.lane.b32.xlu0 %v5870, 72
        %v6608 = vpop.permute.xlu0 %6607
        %6609 = vrot.lane.b32.xlu0 %v5871, 72
        %v6610 = vpop.permute.xlu0 %6609
        %6611 = vrot.lane.b32.xlu0 %v5872, 72
        %v6612 = vpop.permute.xlu0 %6611
        %6613 = vrot.lane.b32.xlu0 %v5873, 72
        %v6614 = vpop.permute.xlu0 %6613
        %6615 = vrot.lane.b32.xlu0 %v5874, 72
        %v6616 = vpop.permute.xlu0 %6615
        %6617 = vrot.lane.b32.xlu0 %v5875, 72
        %v6618 = vpop.permute.xlu0 %6617
        %6619 = vrot.lane.b32.xlu0 %v5876, 72
        %v6620 = vpop.permute.xlu0 %6619
        %6621 = vrot.lane.b32.xlu0 %v5877, 72
        %v6622 = vpop.permute.xlu0 %6621
        %6623 = vrot.lane.b32.xlu0 %v5878, 72
        %v6624 = vpop.permute.xlu0 %6623
        %6625 = vrot.lane.b32.xlu0 %v5879, 72
        %v6626 = vpop.permute.xlu0 %6625
        %6627 = vrot.lane.b32.xlu0 %v5880, 72
        %v6628 = vpop.permute.xlu0 %6627
        %6629 = vrot.lane.b32.xlu0 %v5881, 72
        %v6630 = vpop.permute.xlu0 %6629
        %6631 = vrot.lane.b32.xlu0 %v5882, 72
        %v6632 = vpop.permute.xlu0 %6631
        %6633 = vrot.lane.b32.xlu0 %v5883, 72
        %v6634 = vpop.permute.xlu0 %6633
        %6635 = vrot.lane.b32.xlu0 %v5884, 72
        %v6636 = vpop.permute.xlu0 %6635
        %6637 = vrot.lane.b32.xlu0 %v5885, 72
        %v6638 = vpop.permute.xlu0 %6637
        %6639 = vrot.lane.b32.xlu0 %v5886, 72
        %v6640 = vpop.permute.xlu0 %6639
        %6641 = vrot.lane.b32.xlu0 %v5887, 72
        %v6642 = vpop.permute.xlu0 %6641
        %6643 = vrot.lane.b32.xlu0 %v5888, 72
        %v6644 = vpop.permute.xlu0 %6643
        %6645 = vrot.lane.b32.xlu0 %v5889, 72
        %v6646 = vpop.permute.xlu0 %6645
        %6647 = vrot.lane.b32.xlu0 %v5890, 72
        %v6648 = vpop.permute.xlu0 %6647
        %6649 = vrot.lane.b32.xlu0 %v5891, 72
        %v6650 = vpop.permute.xlu0 %6649
        %6651 = vrot.lane.b32.xlu0 %v5892, 72
        %v6652 = vpop.permute.xlu0 %6651
        %6653 = vrot.lane.b32.xlu0 %v5893, 72
        %v6654 = vpop.permute.xlu0 %6653
        %6655 = vrot.lane.b32.xlu0 %v5894, 72
        %v6656 = vpop.permute.xlu0 %6655
        %6657 = vrot.lane.b32.xlu0 %v5895, 72
        %v6658 = vpop.permute.xlu0 %6657
        %6659 = vrot.lane.b32.xlu0 %v5896, 72
        %v6660 = vpop.permute.xlu0 %6659
        %6661 = vrot.lane.b32.xlu0 %v5897, 72
        %v6662 = vpop.permute.xlu0 %6661
        %6663 = vrot.lane.b32.xlu0 %v5898, 72
        %v6664 = vpop.permute.xlu0 %6663
        %6665 = vrot.lane.b32.xlu0 %v5899, 72
        %v6666 = vpop.permute.xlu0 %6665
        %6667 = vrot.lane.b32.xlu0 %v5900, 72
        %v6668 = vpop.permute.xlu0 %6667
        %6701 = vrot.lane.b32.xlu0 %v5965, 108
        %v6702 = vpop.permute.xlu0 %6701
        %6703 = vrot.lane.b32.xlu0 %v5966, 108
        %v6704 = vpop.permute.xlu0 %6703
        %6705 = vrot.lane.b32.xlu0 %v5967, 108
        %v6706 = vpop.permute.xlu0 %6705
        %6707 = vrot.lane.b32.xlu0 %v5968, 108
        %v6708 = vpop.permute.xlu0 %6707
        %6709 = vrot.lane.b32.xlu0 %v5969, 108
        %v6710 = vpop.permute.xlu0 %6709
        %6711 = vrot.lane.b32.xlu0 %v5970, 108
        %v6712 = vpop.permute.xlu0 %6711
        %6713 = vrot.lane.b32.xlu0 %v5971, 108
        %v6714 = vpop.permute.xlu0 %6713
        %6715 = vrot.lane.b32.xlu0 %v5972, 108
        %v6716 = vpop.permute.xlu0 %6715
        %6717 = vrot.lane.b32.xlu0 %v5973, 108
        %v6718 = vpop.permute.xlu0 %6717
        %6719 = vrot.lane.b32.xlu0 %v5974, 108
        %v6720 = vpop.permute.xlu0 %6719
        %6721 = vrot.lane.b32.xlu0 %v5975, 108
        %v6722 = vpop.permute.xlu0 %6721
        %6723 = vrot.lane.b32.xlu0 %v5976, 108
        %v6724 = vpop.permute.xlu0 %6723
        %6725 = vrot.lane.b32.xlu0 %v5977, 108
        %v6726 = vpop.permute.xlu0 %6725
        %6727 = vrot.lane.b32.xlu0 %v5978, 108
        %v6728 = vpop.permute.xlu0 %6727
        %6729 = vrot.lane.b32.xlu0 %v5979, 108
        %v6730 = vpop.permute.xlu0 %6729
        %6731 = vrot.lane.b32.xlu0 %v5980, 108
        %v6732 = vpop.permute.xlu0 %6731
        %6733 = vrot.lane.b32.xlu0 %v5981, 108
        %v6734 = vpop.permute.xlu0 %6733
        %6735 = vrot.lane.b32.xlu0 %v5982, 108
        %v6736 = vpop.permute.xlu0 %6735
        %6737 = vrot.lane.b32.xlu0 %v5983, 108
        %v6738 = vpop.permute.xlu0 %6737
        %6739 = vrot.lane.b32.xlu0 %v5984, 108
        %v6740 = vpop.permute.xlu0 %6739
        %6741 = vrot.lane.b32.xlu0 %v5985, 108
        %v6742 = vpop.permute.xlu0 %6741
        %6743 = vrot.lane.b32.xlu0 %v5986, 108
        %v6744 = vpop.permute.xlu0 %6743
        %6745 = vrot.lane.b32.xlu0 %v5987, 108
        %v6746 = vpop.permute.xlu0 %6745
        %6747 = vrot.lane.b32.xlu0 %v5988, 108
        %v6748 = vpop.permute.xlu0 %6747
        %6749 = vrot.lane.b32.xlu0 %v5989, 108
        %v6750 = vpop.permute.xlu0 %6749
        %6751 = vrot.lane.b32.xlu0 %v5990, 108
        %v6752 = vpop.permute.xlu0 %6751
        %6753 = vrot.lane.b32.xlu0 %v5991, 108
        %v6754 = vpop.permute.xlu0 %6753
        %6755 = vrot.lane.b32.xlu0 %v5992, 108
        %v6756 = vpop.permute.xlu0 %6755
        %6757 = vrot.lane.b32.xlu0 %v5993, 108
        %v6758 = vpop.permute.xlu0 %6757
        %6759 = vrot.lane.b32.xlu0 %v5994, 108
        %v6760 = vpop.permute.xlu0 %6759
        %6761 = vrot.lane.b32.xlu0 %v5995, 108
        %v6762 = vpop.permute.xlu0 %6761
        %6763 = vrot.lane.b32.xlu0 %v5996, 108
        %v6764 = vpop.permute.xlu0 %6763
        %6797 = vrot.lane.b32.xlu0 %v6061, 16
        %v6798 = vpop.permute.xlu0 %6797
        %6799 = vrot.lane.b32.xlu0 %v6062, 16
        %v6800 = vpop.permute.xlu0 %6799
        %6801 = vrot.lane.b32.xlu0 %v6063, 16
        %v6802 = vpop.permute.xlu0 %6801
        %6803 = vrot.lane.b32.xlu0 %v6064, 16
        %v6804 = vpop.permute.xlu0 %6803
        %6805 = vrot.lane.b32.xlu0 %v6065, 16
        %v6806 = vpop.permute.xlu0 %6805
        %6807 = vrot.lane.b32.xlu0 %v6066, 16
        %v6808 = vpop.permute.xlu0 %6807
        %6809 = vrot.lane.b32.xlu0 %v6067, 16
        %v6810 = vpop.permute.xlu0 %6809
        %6811 = vrot.lane.b32.xlu0 %v6068, 16
        %v6812 = vpop.permute.xlu0 %6811
        %6813 = vrot.lane.b32.xlu0 %v6069, 16
        %v6814 = vpop.permute.xlu0 %6813
        %6815 = vrot.lane.b32.xlu0 %v6070, 16
        %v6816 = vpop.permute.xlu0 %6815
        %6817 = vrot.lane.b32.xlu0 %v6071, 16
        %v6818 = vpop.permute.xlu0 %6817
        %6819 = vrot.lane.b32.xlu0 %v6072, 16
        %v6820 = vpop.permute.xlu0 %6819
        %6821 = vrot.lane.b32.xlu0 %v6073, 16
        %v6822 = vpop.permute.xlu0 %6821
        %6823 = vrot.lane.b32.xlu0 %v6074, 16
        %v6824 = vpop.permute.xlu0 %6823
        %6825 = vrot.lane.b32.xlu0 %v6075, 16
        %v6826 = vpop.permute.xlu0 %6825
        %6827 = vrot.lane.b32.xlu0 %v6076, 16
        %v6828 = vpop.permute.xlu0 %6827
        %6829 = vrot.lane.b32.xlu0 %v6077, 16
        %v6830 = vpop.permute.xlu0 %6829
        %6831 = vrot.lane.b32.xlu0 %v6078, 16
        %v6832 = vpop.permute.xlu0 %6831
        %6833 = vrot.lane.b32.xlu0 %v6079, 16
        %v6834 = vpop.permute.xlu0 %6833
        %6835 = vrot.lane.b32.xlu0 %v6080, 16
        %v6836 = vpop.permute.xlu0 %6835
        %6837 = vrot.lane.b32.xlu0 %v6081, 16
        %v6838 = vpop.permute.xlu0 %6837
        %6839 = vrot.lane.b32.xlu0 %v6082, 16
        %v6840 = vpop.permute.xlu0 %6839
        %6841 = vrot.lane.b32.xlu0 %v6083, 16
        %v6842 = vpop.permute.xlu0 %6841
        %6843 = vrot.lane.b32.xlu0 %v6084, 16
        %v6844 = vpop.permute.xlu0 %6843
        %6845 = vrot.lane.b32.xlu0 %v6085, 16
        %v6846 = vpop.permute.xlu0 %6845
        %6847 = vrot.lane.b32.xlu0 %v6086, 16
        %v6848 = vpop.permute.xlu0 %6847
        %6849 = vrot.lane.b32.xlu0 %v6087, 16
        %v6850 = vpop.permute.xlu0 %6849
        %6851 = vrot.lane.b32.xlu0 %v6088, 16
        %v6852 = vpop.permute.xlu0 %6851
        %6853 = vrot.lane.b32.xlu0 %v6089, 16
        %v6854 = vpop.permute.xlu0 %6853
        %6855 = vrot.lane.b32.xlu0 %v6090, 16
        %v6856 = vpop.permute.xlu0 %6855
        %6857 = vrot.lane.b32.xlu0 %v6091, 16
        %v6858 = vpop.permute.xlu0 %6857
        %6859 = vrot.lane.b32.xlu0 %v6092, 16
        %v6860 = vpop.permute.xlu0 %6859
        %6893 = vrot.lane.b32.xlu0 %v6157, 52
        %v6894 = vpop.permute.xlu0 %6893
        %6895 = vrot.lane.b32.xlu0 %v6158, 52
        %v6896 = vpop.permute.xlu0 %6895
        %6897 = vrot.lane.b32.xlu0 %v6159, 52
        %v6898 = vpop.permute.xlu0 %6897
        %6899 = vrot.lane.b32.xlu0 %v6160, 52
        %v6900 = vpop.permute.xlu0 %6899
        %6901 = vrot.lane.b32.xlu0 %v6161, 52
        %v6902 = vpop.permute.xlu0 %6901
        %6903 = vrot.lane.b32.xlu0 %v6162, 52
        %v6904 = vpop.permute.xlu0 %6903
        %6905 = vrot.lane.b32.xlu0 %v6163, 52
        %v6906 = vpop.permute.xlu0 %6905
        %6907 = vrot.lane.b32.xlu0 %v6164, 52
        %v6908 = vpop.permute.xlu0 %6907
        %6909 = vrot.lane.b32.xlu0 %v6165, 52
        %v6910 = vpop.permute.xlu0 %6909
        %6911 = vrot.lane.b32.xlu0 %v6166, 52
        %v6912 = vpop.permute.xlu0 %6911
        %6913 = vrot.lane.b32.xlu0 %v6167, 52
        %v6914 = vpop.permute.xlu0 %6913
        %6915 = vrot.lane.b32.xlu0 %v6168, 52
        %v6916 = vpop.permute.xlu0 %6915
        %6917 = vrot.lane.b32.xlu0 %v6169, 52
        %v6918 = vpop.permute.xlu0 %6917
        %6919 = vrot.lane.b32.xlu0 %v6170, 52
        %v6920 = vpop.permute.xlu0 %6919
        %6921 = vrot.lane.b32.xlu0 %v6171, 52
        %v6922 = vpop.permute.xlu0 %6921
        %6923 = vrot.lane.b32.xlu0 %v6172, 52
        %v6924 = vpop.permute.xlu0 %6923
        %6925 = vrot.lane.b32.xlu0 %v6173, 52
        %v6926 = vpop.permute.xlu0 %6925
        %6927 = vrot.lane.b32.xlu0 %v6174, 52
        %v6928 = vpop.permute.xlu0 %6927
        %6929 = vrot.lane.b32.xlu0 %v6175, 52
        %v6930 = vpop.permute.xlu0 %6929
        %6931 = vrot.lane.b32.xlu0 %v6176, 52
        %v6932 = vpop.permute.xlu0 %6931
        %6933 = vrot.lane.b32.xlu0 %v6177, 52
        %v6934 = vpop.permute.xlu0 %6933
        %6935 = vrot.lane.b32.xlu0 %v6178, 52
        %v6936 = vpop.permute.xlu0 %6935
        %6937 = vrot.lane.b32.xlu0 %v6179, 52
        %v6938 = vpop.permute.xlu0 %6937
        %6939 = vrot.lane.b32.xlu0 %v6180, 52
        %v6940 = vpop.permute.xlu0 %6939
        %6941 = vrot.lane.b32.xlu0 %v6181, 52
        %v6942 = vpop.permute.xlu0 %6941
        %6943 = vrot.lane.b32.xlu0 %v6182, 52
        %v6944 = vpop.permute.xlu0 %6943
        %6945 = vrot.lane.b32.xlu0 %v6183, 52
        %v6946 = vpop.permute.xlu0 %6945
        %6947 = vrot.lane.b32.xlu0 %v6184, 52
        %v6948 = vpop.permute.xlu0 %6947
        %6949 = vrot.lane.b32.xlu0 %v6185, 52
        %v6950 = vpop.permute.xlu0 %6949
        %6951 = vrot.lane.b32.xlu0 %v6186, 52
        %v6952 = vpop.permute.xlu0 %6951
        %6953 = vrot.lane.b32.xlu0 %v6187, 52
        %v6954 = vpop.permute.xlu0 %6953
        %6955 = vrot.lane.b32.xlu0 %v6188, 52
        %v6956 = vpop.permute.xlu0 %6955
        %6989 = vrot.lane.b32.xlu0 %v6253, 88
        %v6990 = vpop.permute.xlu0 %6989
        %6991 = vrot.lane.b32.xlu0 %v6254, 88
        %v6992 = vpop.permute.xlu0 %6991
        %6993 = vrot.lane.b32.xlu0 %v6255, 88
        %v6994 = vpop.permute.xlu0 %6993
        %6995 = vrot.lane.b32.xlu0 %v6256, 88
        %v6996 = vpop.permute.xlu0 %6995
        %6997 = vrot.lane.b32.xlu0 %v6257, 88
        %v6998 = vpop.permute.xlu0 %6997
        %6999 = vrot.lane.b32.xlu0 %v6258, 88
        %v7000 = vpop.permute.xlu0 %6999
        %7001 = vrot.lane.b32.xlu0 %v6259, 88
        %v7002 = vpop.permute.xlu0 %7001
        %7003 = vrot.lane.b32.xlu0 %v6260, 88
        %v7004 = vpop.permute.xlu0 %7003
        %7005 = vrot.lane.b32.xlu0 %v6261, 88
        %v7006 = vpop.permute.xlu0 %7005
        %7007 = vrot.lane.b32.xlu0 %v6262, 88
        %v7008 = vpop.permute.xlu0 %7007
        %7009 = vrot.lane.b32.xlu0 %v6263, 88
        %v7010 = vpop.permute.xlu0 %7009
        %7011 = vrot.lane.b32.xlu0 %v6264, 88
        %v7012 = vpop.permute.xlu0 %7011
        %7013 = vrot.lane.b32.xlu0 %v6265, 88
        %v7014 = vpop.permute.xlu0 %7013
        %7015 = vrot.lane.b32.xlu0 %v6266, 88
        %v7016 = vpop.permute.xlu0 %7015
        %7017 = vrot.lane.b32.xlu0 %v6267, 88
        %v7018 = vpop.permute.xlu0 %7017
        %7019 = vrot.lane.b32.xlu0 %v6268, 88
        %v7020 = vpop.permute.xlu0 %7019
        %7021 = vrot.lane.b32.xlu0 %v6269, 88
        %v7022 = vpop.permute.xlu0 %7021
        %7023 = vrot.lane.b32.xlu0 %v6270, 88
        %v7024 = vpop.permute.xlu0 %7023
        %7025 = vrot.lane.b32.xlu0 %v6271, 88
        %v7026 = vpop.permute.xlu0 %7025
        %7027 = vrot.lane.b32.xlu0 %v6272, 88
        %v7028 = vpop.permute.xlu0 %7027
        %7029 = vrot.lane.b32.xlu0 %v6273, 88
        %v7030 = vpop.permute.xlu0 %7029
        %7031 = vrot.lane.b32.xlu0 %v6274, 88
        %v7032 = vpop.permute.xlu0 %7031
        %7033 = vrot.lane.b32.xlu0 %v6275, 88
        %v7034 = vpop.permute.xlu0 %7033
        %7035 = vrot.lane.b32.xlu0 %v6276, 88
        %v7036 = vpop.permute.xlu0 %7035
        %7037 = vrot.lane.b32.xlu0 %v6277, 88
        %v7038 = vpop.permute.xlu0 %7037
        %7039 = vrot.lane.b32.xlu0 %v6278, 88
        %v7040 = vpop.permute.xlu0 %7039
        %7041 = vrot.lane.b32.xlu0 %v6279, 88
        %v7042 = vpop.permute.xlu0 %7041
        %7043 = vrot.lane.b32.xlu0 %v6280, 88
        %v7044 = vpop.permute.xlu0 %7043
        %7045 = vrot.lane.b32.xlu0 %v6281, 88
        %v7046 = vpop.permute.xlu0 %7045
        %7047 = vrot.lane.b32.xlu0 %v6282, 88
        %v7048 = vpop.permute.xlu0 %7047
        %7049 = vrot.lane.b32.xlu0 %v6283, 88
        %v7050 = vpop.permute.xlu0 %7049
        %7051 = vrot.lane.b32.xlu0 %v6284, 88
        %v7052 = vpop.permute.xlu0 %7051
        %7085 = vrot.lane.b32.xlu0 %v6349, 124
        %v7086 = vpop.permute.xlu0 %7085
        %7087 = vrot.lane.b32.xlu0 %v6350, 124
        %v7088 = vpop.permute.xlu0 %7087
        %7089 = vrot.lane.b32.xlu0 %v6351, 124
        %v7090 = vpop.permute.xlu0 %7089
        %7091 = vrot.lane.b32.xlu0 %v6352, 124
        %v7092 = vpop.permute.xlu0 %7091
        %7093 = vrot.lane.b32.xlu0 %v6353, 124
        %v7094 = vpop.permute.xlu0 %7093
        %7095 = vrot.lane.b32.xlu0 %v6354, 124
        %v7096 = vpop.permute.xlu0 %7095
        %7097 = vrot.lane.b32.xlu0 %v6355, 124
        %v7098 = vpop.permute.xlu0 %7097
        %7099 = vrot.lane.b32.xlu0 %v6356, 124
        %v7100 = vpop.permute.xlu0 %7099
        %7101 = vrot.lane.b32.xlu0 %v6357, 124
        %v7102 = vpop.permute.xlu0 %7101
        %7103 = vrot.lane.b32.xlu0 %v6358, 124
        %v7104 = vpop.permute.xlu0 %7103
        %7105 = vrot.lane.b32.xlu0 %v6359, 124
        %v7106 = vpop.permute.xlu0 %7105
        %7107 = vrot.lane.b32.xlu0 %v6360, 124
        %v7108 = vpop.permute.xlu0 %7107
        %7109 = vrot.lane.b32.xlu0 %v6361, 124
        %v7110 = vpop.permute.xlu0 %7109
        %7111 = vrot.lane.b32.xlu0 %v6362, 124
        %v7112 = vpop.permute.xlu0 %7111
        %7113 = vrot.lane.b32.xlu0 %v6363, 124
        %v7114 = vpop.permute.xlu0 %7113
        %7115 = vrot.lane.b32.xlu0 %v6364, 124
        %v7116 = vpop.permute.xlu0 %7115
        %7117 = vrot.lane.b32.xlu0 %v6365, 124
        %v7118 = vpop.permute.xlu0 %7117
        %7119 = vrot.lane.b32.xlu0 %v6366, 124
        %v7120 = vpop.permute.xlu0 %7119
        %7121 = vrot.lane.b32.xlu0 %v6367, 124
        %v7122 = vpop.permute.xlu0 %7121
        %7123 = vrot.lane.b32.xlu0 %v6368, 124
        %v7124 = vpop.permute.xlu0 %7123
        %7125 = vrot.lane.b32.xlu0 %v6369, 124
        %v7126 = vpop.permute.xlu0 %7125
        %7127 = vrot.lane.b32.xlu0 %v6370, 124
        %v7128 = vpop.permute.xlu0 %7127
        %7129 = vrot.lane.b32.xlu0 %v6371, 124
        %v7130 = vpop.permute.xlu0 %7129
        %7131 = vrot.lane.b32.xlu0 %v6372, 124
        %v7132 = vpop.permute.xlu0 %7131
        %7133 = vrot.lane.b32.xlu0 %v6373, 124
        %v7134 = vpop.permute.xlu0 %7133
        %7135 = vrot.lane.b32.xlu0 %v6374, 124
        %v7136 = vpop.permute.xlu0 %7135
        %7137 = vrot.lane.b32.xlu0 %v6375, 124
        %v7138 = vpop.permute.xlu0 %7137
        %7139 = vrot.lane.b32.xlu0 %v6376, 124
        %v7140 = vpop.permute.xlu0 %7139
        %7141 = vrot.lane.b32.xlu0 %v6377, 124
        %v7142 = vpop.permute.xlu0 %7141
        %7143 = vrot.lane.b32.xlu0 %v6378, 124
        %v7144 = vpop.permute.xlu0 %7143
        %7145 = vrot.lane.b32.xlu0 %v6379, 124
        %v7146 = vpop.permute.xlu0 %7145
        %7147 = vrot.lane.b32.xlu0 %v6380, 124
        %v7148 = vpop.permute.xlu0 %7147
        %7181 = vrot.lane.b32.xlu0 %v6445, 32
        %v7182 = vpop.permute.xlu0 %7181
        %7183 = vrot.lane.b32.xlu0 %v6446, 32
        %v7184 = vpop.permute.xlu0 %7183
        %7185 = vrot.lane.b32.xlu0 %v6447, 32
        %v7186 = vpop.permute.xlu0 %7185
        %7187 = vrot.lane.b32.xlu0 %v6448, 32
        %v7188 = vpop.permute.xlu0 %7187
        %7189 = vrot.lane.b32.xlu0 %v6449, 32
        %v7190 = vpop.permute.xlu0 %7189
        %7191 = vrot.lane.b32.xlu0 %v6450, 32
        %v7192 = vpop.permute.xlu0 %7191
        %7193 = vrot.lane.b32.xlu0 %v6451, 32
        %v7194 = vpop.permute.xlu0 %7193
        %7195 = vrot.lane.b32.xlu0 %v6452, 32
        %v7196 = vpop.permute.xlu0 %7195
        %7197 = vrot.lane.b32.xlu0 %v6453, 32
        %v7198 = vpop.permute.xlu0 %7197
        %7199 = vrot.lane.b32.xlu0 %v6454, 32
        %v7200 = vpop.permute.xlu0 %7199
        %7201 = vrot.lane.b32.xlu0 %v6455, 32
        %v7202 = vpop.permute.xlu0 %7201
        %7203 = vrot.lane.b32.xlu0 %v6456, 32
        %v7204 = vpop.permute.xlu0 %7203
        %7205 = vrot.lane.b32.xlu0 %v6457, 32
        %v7206 = vpop.permute.xlu0 %7205
        %7207 = vrot.lane.b32.xlu0 %v6458, 32
        %v7208 = vpop.permute.xlu0 %7207
        %7209 = vrot.lane.b32.xlu0 %v6459, 32
        %v7210 = vpop.permute.xlu0 %7209
        %7211 = vrot.lane.b32.xlu0 %v6460, 32
        %v7212 = vpop.permute.xlu0 %7211
        %7213 = vrot.lane.b32.xlu0 %v6461, 32
        %v7214 = vpop.permute.xlu0 %7213
        %7215 = vrot.lane.b32.xlu0 %v6462, 32
        %v7216 = vpop.permute.xlu0 %7215
        %7217 = vrot.lane.b32.xlu0 %v6463, 32
        %v7218 = vpop.permute.xlu0 %7217
        %7219 = vrot.lane.b32.xlu0 %v6464, 32
        %v7220 = vpop.permute.xlu0 %7219
        %7221 = vrot.lane.b32.xlu0 %v6465, 32
        %v7222 = vpop.permute.xlu0 %7221
        %7223 = vrot.lane.b32.xlu0 %v6466, 32
        %v7224 = vpop.permute.xlu0 %7223
        %7225 = vrot.lane.b32.xlu0 %v6467, 32
        %v7226 = vpop.permute.xlu0 %7225
        %7227 = vrot.lane.b32.xlu0 %v6468, 32
        %v7228 = vpop.permute.xlu0 %7227
        %7229 = vrot.lane.b32.xlu0 %v6469, 32
        %v7230 = vpop.permute.xlu0 %7229
        %7231 = vrot.lane.b32.xlu0 %v6470, 32
        %v7232 = vpop.permute.xlu0 %7231
        %7233 = vrot.lane.b32.xlu0 %v6471, 32
        %v7234 = vpop.permute.xlu0 %7233
        %7235 = vrot.lane.b32.xlu0 %v6472, 32
        %v7236 = vpop.permute.xlu0 %7235
        %7237 = vrot.lane.b32.xlu0 %v6473, 32
        %v7238 = vpop.permute.xlu0 %7237
        %7239 = vrot.lane.b32.xlu0 %v6474, 32
        %v7240 = vpop.permute.xlu0 %7239
        %7241 = vrot.lane.b32.xlu0 %v6475, 32
        %v7242 = vpop.permute.xlu0 %7241
        %7243 = vrot.lane.b32.xlu0 %v6476, 32
        %v7244 = vpop.permute.xlu0 %7243
        %v7247 = vsel %vm2659, %v5677, %v6510
        %v7250 = vsel %vm2659, %v5678, %v6512
        %v7253 = vsel %vm2659, %v5679, %v6514
        %v7256 = vsel %vm2659, %v5680, %v6516
        %v7259 = vsel %vm2659, %v5681, %v6518
        %v7262 = vsel %vm2659, %v5682, %v6520
        %v7265 = vsel %vm2659, %v5683, %v6522
        %v7268 = vsel %vm2659, %v5684, %v6524
        %v7271 = vsel %vm2659, %v5685, %v6526
        %v7274 = vsel %vm2659, %v5686, %v6528
        %v7277 = vsel %vm2659, %v5687, %v6530
        %v7280 = vsel %vm2659, %v5688, %v6532
        %v7283 = vsel %vm2659, %v5689, %v6534
        %v7286 = vsel %vm2659, %v5690, %v6536
        %v7289 = vsel %vm2659, %v5691, %v6538
        %v7292 = vsel %vm2659, %v5692, %v6540
        %v7295 = vsel %vm2659, %v5693, %v6542
        %v7298 = vsel %vm2659, %v5694, %v6544
        %v7301 = vsel %vm2659, %v5695, %v6546
        %v7304 = vsel %vm2659, %v5696, %v6548
        %v7307 = vsel %vm2659, %v5697, %v6550
        %v7310 = vsel %vm2659, %v5698, %v6552
        %v7313 = vsel %vm2659, %v5699, %v6554
        %v7316 = vsel %vm2659, %v5700, %v6556
        %v7319 = vsel %vm2659, %v5701, %v6558
        %v7322 = vsel %vm2659, %v5702, %v6560
        %v7325 = vsel %vm2659, %v5703, %v6562
        %v7328 = vsel %vm2659, %v5704, %v6564
        %v7331 = vsel %vm2659, %v5705, %v6566
        %v7334 = vsel %vm2659, %v5706, %v6568
        %v7337 = vsel %vm2659, %v5707, %v6570
        %v7340 = vsel %vm2659, %v5708, %v6572
        %v7342 = vsel %vm2756, %v7247, %v6606
        %v7344 = vsel %vm2756, %v7250, %v6608
        %v7346 = vsel %vm2756, %v7253, %v6610
        %v7348 = vsel %vm2756, %v7256, %v6612
        %v7350 = vsel %vm2756, %v7259, %v6614
        %v7352 = vsel %vm2756, %v7262, %v6616
        %v7354 = vsel %vm2756, %v7265, %v6618
        %v7356 = vsel %vm2756, %v7268, %v6620
        %v7358 = vsel %vm2756, %v7271, %v6622
        %v7360 = vsel %vm2756, %v7274, %v6624
        %v7362 = vsel %vm2756, %v7277, %v6626
        %v7364 = vsel %vm2756, %v7280, %v6628
        %v7366 = vsel %vm2756, %v7283, %v6630
        %v7368 = vsel %vm2756, %v7286, %v6632
        %v7370 = vsel %vm2756, %v7289, %v6634
        %v7372 = vsel %vm2756, %v7292, %v6636
        %v7374 = vsel %vm2756, %v7295, %v6638
        %v7376 = vsel %vm2756, %v7298, %v6640
        %v7378 = vsel %vm2756, %v7301, %v6642
        %v7380 = vsel %vm2756, %v7304, %v6644
        %v7382 = vsel %vm2756, %v7307, %v6646
        %v7384 = vsel %vm2756, %v7310, %v6648
        %v7386 = vsel %vm2756, %v7313, %v6650
        %v7388 = vsel %vm2756, %v7316, %v6652
        %v7390 = vsel %vm2756, %v7319, %v6654
        %v7392 = vsel %vm2756, %v7322, %v6656
        %v7394 = vsel %vm2756, %v7325, %v6658
        %v7396 = vsel %vm2756, %v7328, %v6660
        %v7398 = vsel %vm2756, %v7331, %v6662
        %v7400 = vsel %vm2756, %v7334, %v6664
        %v7402 = vsel %vm2756, %v7337, %v6666
        %v7404 = vsel %vm2756, %v7340, %v6668
        %v7406 = vsel %vm2821, %v7342, %v6702
        %v7409 = vsel %vm2821, %v7344, %v6704
        %v7412 = vsel %vm2821, %v7346, %v6706
        %v7415 = vsel %vm2821, %v7348, %v6708
        %v7418 = vsel %vm2821, %v7350, %v6710
        %v7421 = vsel %vm2821, %v7352, %v6712
        %v7424 = vsel %vm2821, %v7354, %v6714
        %v7427 = vsel %vm2821, %v7356, %v6716
        %v7430 = vsel %vm2821, %v7358, %v6718
        %v7433 = vsel %vm2821, %v7360, %v6720
        %v7436 = vsel %vm2821, %v7362, %v6722
        %v7439 = vsel %vm2821, %v7364, %v6724
        %v7442 = vsel %vm2821, %v7366, %v6726
        %v7445 = vsel %vm2821, %v7368, %v6728
        %v7448 = vsel %vm2821, %v7370, %v6730
        %v7451 = vsel %vm2821, %v7372, %v6732
        %v7454 = vsel %vm2821, %v7374, %v6734
        %v7457 = vsel %vm2821, %v7376, %v6736
        %v7460 = vsel %vm2821, %v7378, %v6738
        %v7463 = vsel %vm2821, %v7380, %v6740
        %v7466 = vsel %vm2821, %v7382, %v6742
        %v7469 = vsel %vm2821, %v7384, %v6744
        %v7472 = vsel %vm2821, %v7386, %v6746
        %v7475 = vsel %vm2821, %v7388, %v6748
        %v7478 = vsel %vm2821, %v7390, %v6750
        %v7481 = vsel %vm2821, %v7392, %v6752
        %v7484 = vsel %vm2821, %v7394, %v6754
        %v7487 = vsel %vm2821, %v7396, %v6756
        %v7490 = vsel %vm2821, %v7398, %v6758
        %v7493 = vsel %vm2821, %v7400, %v6760
        %v7496 = vsel %vm2821, %v7402, %v6762
        %v7499 = vsel %vm2821, %v7404, %v6764
        %v7502 = vsel %vm2918, %v6702, %v6798
        %v7504 = vsel %vm2918, %v6704, %v6800
        %v7506 = vsel %vm2918, %v6706, %v6802
        %v7508 = vsel %vm2918, %v6708, %v6804
        %v7510 = vsel %vm2918, %v6710, %v6806
        %v7512 = vsel %vm2918, %v6712, %v6808
        %v7514 = vsel %vm2918, %v6714, %v6810
        %v7516 = vsel %vm2918, %v6716, %v6812
        %v7518 = vsel %vm2918, %v6718, %v6814
        %v7520 = vsel %vm2918, %v6720, %v6816
        %v7522 = vsel %vm2918, %v6722, %v6818
        %v7524 = vsel %vm2918, %v6724, %v6820
        %v7526 = vsel %vm2918, %v6726, %v6822
        %v7528 = vsel %vm2918, %v6728, %v6824
        %v7530 = vsel %vm2918, %v6730, %v6826
        %v7532 = vsel %vm2918, %v6732, %v6828
        %v7534 = vsel %vm2918, %v6734, %v6830
        %v7536 = vsel %vm2918, %v6736, %v6832
        %v7538 = vsel %vm2918, %v6738, %v6834
        %v7540 = vsel %vm2918, %v6740, %v6836
        %v7542 = vsel %vm2918, %v6742, %v6838
        %v7544 = vsel %vm2918, %v6744, %v6840
        %v7546 = vsel %vm2918, %v6746, %v6842
        %v7548 = vsel %vm2918, %v6748, %v6844
        %v7550 = vsel %vm2918, %v6750, %v6846
        %v7552 = vsel %vm2918, %v6752, %v6848
        %v7554 = vsel %vm2918, %v6754, %v6850
        %v7556 = vsel %vm2918, %v6756, %v6852
        %v7558 = vsel %vm2918, %v6758, %v6854
        %v7560 = vsel %vm2918, %v6760, %v6856
        %v7562 = vsel %vm2918, %v6762, %v6858
        %v7564 = vsel %vm2918, %v6764, %v6860
        %v7566 = vsel %vm2983, %v7502, %v6894
        %v7568 = vsel %vm2983, %v7504, %v6896
        %v7570 = vsel %vm2983, %v7506, %v6898
        %v7572 = vsel %vm2983, %v7508, %v6900
        %v7574 = vsel %vm2983, %v7510, %v6902
        %v7576 = vsel %vm2983, %v7512, %v6904
        %v7578 = vsel %vm2983, %v7514, %v6906
        %v7580 = vsel %vm2983, %v7516, %v6908
        %v7582 = vsel %vm2983, %v7518, %v6910
        %v7584 = vsel %vm2983, %v7520, %v6912
        %v7586 = vsel %vm2983, %v7522, %v6914
        %v7588 = vsel %vm2983, %v7524, %v6916
        %v7590 = vsel %vm2983, %v7526, %v6918
        %v7592 = vsel %vm2983, %v7528, %v6920
        %v7594 = vsel %vm2983, %v7530, %v6922
        %v7596 = vsel %vm2983, %v7532, %v6924
        %v7598 = vsel %vm2983, %v7534, %v6926
        %v7600 = vsel %vm2983, %v7536, %v6928
        %v7602 = vsel %vm2983, %v7538, %v6930
        %v7604 = vsel %vm2983, %v7540, %v6932
        %v7606 = vsel %vm2983, %v7542, %v6934
        %v7608 = vsel %vm2983, %v7544, %v6936
        %v7610 = vsel %vm2983, %v7546, %v6938
        %v7612 = vsel %vm2983, %v7548, %v6940
        %v7614 = vsel %vm2983, %v7550, %v6942
        %v7616 = vsel %vm2983, %v7552, %v6944
        %v7618 = vsel %vm2983, %v7554, %v6946
        %v7620 = vsel %vm2983, %v7556, %v6948
        %v7622 = vsel %vm2983, %v7558, %v6950
        %v7624 = vsel %vm2983, %v7560, %v6952
        %v7626 = vsel %vm2983, %v7562, %v6954
        %v7628 = vsel %vm2983, %v7564, %v6956
        %v7630 = vsel %vm3048, %v7566, %v6990
        %v7632 = vsel %vm3048, %v7568, %v6992
        %v7634 = vsel %vm3048, %v7570, %v6994
        %v7636 = vsel %vm3048, %v7572, %v6996
        %v7638 = vsel %vm3048, %v7574, %v6998
        %v7640 = vsel %vm3048, %v7576, %v7000
        %v7642 = vsel %vm3048, %v7578, %v7002
        %v7644 = vsel %vm3048, %v7580, %v7004
        %v7646 = vsel %vm3048, %v7582, %v7006
        %v7648 = vsel %vm3048, %v7584, %v7008
        %v7650 = vsel %vm3048, %v7586, %v7010
        %v7652 = vsel %vm3048, %v7588, %v7012
        %v7654 = vsel %vm3048, %v7590, %v7014
        %v7656 = vsel %vm3048, %v7592, %v7016
        %v7658 = vsel %vm3048, %v7594, %v7018
        %v7660 = vsel %vm3048, %v7596, %v7020
        %v7662 = vsel %vm3048, %v7598, %v7022
        %v7664 = vsel %vm3048, %v7600, %v7024
        %v7666 = vsel %vm3048, %v7602, %v7026
        %v7668 = vsel %vm3048, %v7604, %v7028
        %v7670 = vsel %vm3048, %v7606, %v7030
        %v7672 = vsel %vm3048, %v7608, %v7032
        %v7674 = vsel %vm3048, %v7610, %v7034
        %v7676 = vsel %vm3048, %v7612, %v7036
        %v7678 = vsel %vm3048, %v7614, %v7038
        %v7680 = vsel %vm3048, %v7616, %v7040
        %v7682 = vsel %vm3048, %v7618, %v7042
        %v7684 = vsel %vm3048, %v7620, %v7044
        %v7686 = vsel %vm3048, %v7622, %v7046
        %v7688 = vsel %vm3048, %v7624, %v7048
        %v7690 = vsel %vm3048, %v7626, %v7050
        %v7692 = vsel %vm3048, %v7628, %v7052
        %v7694 = vsel %vm3113, %v7630, %v7086
        %v7697 = vsel %vm3113, %v7632, %v7088
        %v7700 = vsel %vm3113, %v7634, %v7090
        %v7703 = vsel %vm3113, %v7636, %v7092
        %v7706 = vsel %vm3113, %v7638, %v7094
        %v7709 = vsel %vm3113, %v7640, %v7096
        %v7712 = vsel %vm3113, %v7642, %v7098
        %v7715 = vsel %vm3113, %v7644, %v7100
        %v7718 = vsel %vm3113, %v7646, %v7102
        %v7721 = vsel %vm3113, %v7648, %v7104
        %v7724 = vsel %vm3113, %v7650, %v7106
        %v7727 = vsel %vm3113, %v7652, %v7108
        %v7730 = vsel %vm3113, %v7654, %v7110
        %v7733 = vsel %vm3113, %v7656, %v7112
        %v7736 = vsel %vm3113, %v7658, %v7114
        %v7739 = vsel %vm3113, %v7660, %v7116
        %v7742 = vsel %vm3113, %v7662, %v7118
        %v7745 = vsel %vm3113, %v7664, %v7120
        %v7748 = vsel %vm3113, %v7666, %v7122
        %v7751 = vsel %vm3113, %v7668, %v7124
        %v7754 = vsel %vm3113, %v7670, %v7126
        %v7757 = vsel %vm3113, %v7672, %v7128
        %v7760 = vsel %vm3113, %v7674, %v7130
        %v7763 = vsel %vm3113, %v7676, %v7132
        %v7766 = vsel %vm3113, %v7678, %v7134
        %v7769 = vsel %vm3113, %v7680, %v7136
        %v7772 = vsel %vm3113, %v7682, %v7138
        %v7775 = vsel %vm3113, %v7684, %v7140
        %v7778 = vsel %vm3113, %v7686, %v7142
        %v7781 = vsel %vm3113, %v7688, %v7144
        %v7784 = vsel %vm3113, %v7690, %v7146
        %v7787 = vsel %vm3113, %v7692, %v7148
        %v7790 = vsel %vm3210, %v7086, %v7182
        %v7792 = vsel %vm3210, %v7088, %v7184
        %v7794 = vsel %vm3210, %v7090, %v7186
        %v7796 = vsel %vm3210, %v7092, %v7188
        %v7798 = vsel %vm3210, %v7094, %v7190
        %v7800 = vsel %vm3210, %v7096, %v7192
        %v7802 = vsel %vm3210, %v7098, %v7194
        %v7804 = vsel %vm3210, %v7100, %v7196
        %v7806 = vsel %vm3210, %v7102, %v7198
        %v7808 = vsel %vm3210, %v7104, %v7200
        %v7810 = vsel %vm3210, %v7106, %v7202
        %v7812 = vsel %vm3210, %v7108, %v7204
        %v7814 = vsel %vm3210, %v7110, %v7206
        %v7816 = vsel %vm3210, %v7112, %v7208
        %v7818 = vsel %vm3210, %v7114, %v7210
        %v7820 = vsel %vm3210, %v7116, %v7212
        %v7822 = vsel %vm3210, %v7118, %v7214
        %v7824 = vsel %vm3210, %v7120, %v7216
        %v7826 = vsel %vm3210, %v7122, %v7218
        %v7828 = vsel %vm3210, %v7124, %v7220
        %v7830 = vsel %vm3210, %v7126, %v7222
        %v7832 = vsel %vm3210, %v7128, %v7224
        %v7834 = vsel %vm3210, %v7130, %v7226
        %v7836 = vsel %vm3210, %v7132, %v7228
        %v7838 = vsel %vm3210, %v7134, %v7230
        %v7840 = vsel %vm3210, %v7136, %v7232
        %v7842 = vsel %vm3210, %v7138, %v7234
        %v7844 = vsel %vm3210, %v7140, %v7236
        %v7846 = vsel %vm3210, %v7142, %v7238
        %v7848 = vsel %vm3210, %v7144, %v7240
        %v7850 = vsel %vm3210, %v7146, %v7242
        %v7852 = vsel %vm3210, %v7148, %v7244
        %v7853 = vld [vmem:[%s5] sm:$0xf]
        %v7854 = vld [vmem:[%s5 + $0x4] sm:$0xf]
        %v7855 = vld [vmem:[%s5 + $0x8] sm:$0xf]
        %v7856 = vld [vmem:[%s5 + $0xc] sm:$0xf]
        %v7857 = vld [vmem:[%s5 + $0x10] sm:$0xf]
        %v7858 = vld [vmem:[%s5 + $0x14] sm:$0xf]
        %v7859 = vld [vmem:[%s5 + $0x18] sm:$0xf]
        %v7860 = vld [vmem:[%s5 + $0x1c] sm:$0xf]
        %v7861 = vld [vmem:[%s5 + $0x20] sm:$0xf]
        %v7862 = vld [vmem:[%s5 + $0x24] sm:$0xf]
        %v7863 = vld [vmem:[%s5 + $0x28] sm:$0xf]
        %v7864 = vld [vmem:[%s5 + $0x2c] sm:$0xf]
        %v7865 = vld [vmem:[%s5 + $0x30] sm:$0xf]
        %v7866 = vld [vmem:[%s5 + $0x34] sm:$0xf]
        %v7867 = vld [vmem:[%s5 + $0x38] sm:$0xf]
        %v7868 = vld [vmem:[%s5 + $0x3c] sm:$0xf]
        %v7869 = vld [vmem:[%s5 + $0x40] sm:$0xf]
        %v7870 = vld [vmem:[%s5 + $0x44] sm:$0xf]
        %v7871 = vld [vmem:[%s5 + $0x48] sm:$0xf]
        %v7872 = vld [vmem:[%s5 + $0x4c] sm:$0xf]
        %v7873 = vld [vmem:[%s5 + $0x50] sm:$0xf]
        %v7874 = vld [vmem:[%s5 + $0x54] sm:$0xf]
        %v7875 = vld [vmem:[%s5 + $0x58] sm:$0xf]
        %v7876 = vld [vmem:[%s5 + $0x5c] sm:$0xf]
        %v7877 = vld [vmem:[%s5 + $0x60] sm:$0xf]
        %v7878 = vld [vmem:[%s5 + $0x64] sm:$0xf]
        %v7879 = vld [vmem:[%s5 + $0x68] sm:$0xf]
        %v7880 = vld [vmem:[%s5 + $0x6c] sm:$0xf]
        %v7881 = vld [vmem:[%s5 + $0x70] sm:$0xf]
        %v7882 = vld [vmem:[%s5 + $0x74] sm:$0xf]
        %v7883 = vld [vmem:[%s5 + $0x78] sm:$0xf]
        %v7884 = vld [vmem:[%s5 + $0x7c] sm:$0xf]
        %v7885 = vld [vmem:[%s5 + $0x80] sm:$0xf]
        %v7886 = vld [vmem:[%s5 + $0x84] sm:$0xf]
        %v7887 = vld [vmem:[%s5 + $0x88] sm:$0xf]
        %v7888 = vld [vmem:[%s5 + $0x8c] sm:$0xf]
        %v7889 = vld [vmem:[%s5 + $0x90] sm:$0xf]
        %v7890 = vld [vmem:[%s5 + $0x94] sm:$0xf]
        %v7891 = vld [vmem:[%s5 + $0x98] sm:$0xf]
        %v7892 = vld [vmem:[%s5 + $0x9c] sm:$0xf]
        %v7893 = vld [vmem:[%s5 + $0xa0] sm:$0x3]
        %v7935 = vunpack.c.l.b16 %v7853
        %v7936 = vunpack.c.l.b16 %v7854
        %v7937 = vunpack.c.l.b16 %v7855
        %v7938 = vunpack.c.l.b16 %v7856
        %v7939 = vunpack.c.l.b16 %v7857
        %v7940 = vunpack.c.l.b16 %v7858
        %v7941 = vunpack.c.l.b16 %v7859
        %v7942 = vunpack.c.l.b16 %v7860
        %v7943 = vunpack.c.l.b16 %v7861
        %v7944 = vunpack.c.l.b16 %v7862
        %v7945 = vunpack.c.l.b16 %v7863
        %v7946 = vunpack.c.l.b16 %v7864
        %v7947 = vunpack.c.l.b16 %v7865
        %v7948 = vunpack.c.l.b16 %v7866
        %v7949 = vunpack.c.l.b16 %v7867
        %v7950 = vunpack.c.l.b16 %v7868
        %v7951 = vunpack.c.l.b16 %v7869
        %v7952 = vunpack.c.l.b16 %v7870
        %v7953 = vunpack.c.l.b16 %v7871
        %v7954 = vunpack.c.l.b16 %v7872
        %v7955 = vunpack.c.l.b16 %v7873
        %v7956 = vunpack.c.l.b16 %v7874
        %v7957 = vunpack.c.l.b16 %v7875
        %v7958 = vunpack.c.l.b16 %v7876
        %v7959 = vunpack.c.l.b16 %v7877
        %v7960 = vunpack.c.l.b16 %v7878
        %v7961 = vunpack.c.l.b16 %v7879
        %v7962 = vunpack.c.l.b16 %v7880
        %v7963 = vunpack.c.l.b16 %v7881
        %v7964 = vunpack.c.l.b16 %v7882
        %v7965 = vunpack.c.l.b16 %v7883
        %v7966 = vunpack.c.l.b16 %v7884
        %v7967 = vunpack.c.l.b16 %v7885
        %v7968 = vunpack.c.l.b16 %v7886
        %v7969 = vunpack.c.l.b16 %v7887
        %v7970 = vunpack.c.l.b16 %v7888
        %v7971 = vunpack.c.l.b16 %v7889
        %v7972 = vunpack.c.l.b16 %v7890
        %v7973 = vunpack.c.l.b16 %v7891
        %v7974 = vunpack.c.l.b16 %v7892
        %v7975 = vunpack.c.l.b16 %v7893
        %v7976 = vpack.c.b16 %v7936, %v7935
        %v7977 = vpack.c.b16 %v7938, %v7937
        %v7978 = vpack.c.b16 %v7940, %v7939
        %v7979 = vpack.c.b16 %v7942, %v7941
        %v7980 = vpack.c.b16 %v7944, %v7943
        %v7981 = vpack.c.b16 %v7946, %v7945
        %v7982 = vpack.c.b16 %v7948, %v7947
        %v7983 = vpack.c.b16 %v7950, %v7949
        %v7984 = vpack.c.b16 %v7952, %v7951
        %v7985 = vpack.c.b16 %v7954, %v7953
        %v7986 = vpack.c.b16 %v7956, %v7955
        %v7987 = vpack.c.b16 %v7958, %v7957
        %v7988 = vpack.c.b16 %v7960, %v7959
        %v7989 = vpack.c.b16 %v7962, %v7961
        %v7990 = vpack.c.b16 %v7964, %v7963
        %v7991 = vpack.c.b16 %v7966, %v7965
        %v7992 = vpack.c.b16 %v7968, %v7967
        %v7993 = vpack.c.b16 %v7970, %v7969
        %v7994 = vpack.c.b16 %v7972, %v7971
        %v7995 = vpack.c.b16 %v7974, %v7973
        %v7996 = vpack.c.b16 %v7975, %v7975
        %v8017 = vsel %vm3439, %v7790, 0
        %v8019 = vsel %vm3439, %v7792, 0
        %v8021 = vsel %vm3439, %v7794, 0
        %v8023 = vsel %vm3439, %v7796, 0
        %v8025 = vsel %vm3439, %v7798, 0
        %v8027 = vsel %vm3439, %v7800, 0
        %v8029 = vsel %vm3439, %v7802, 0
        %v8031 = vsel %vm3439, %v7804, 0
        %v8033 = vsel %vm3439, %v7806, 0
        %v8035 = vsel %vm3439, %v7808, 0
        %v8037 = vsel %vm3439, %v7810, 0
        %v8039 = vsel %vm3439, %v7812, 0
        %v8041 = vsel %vm3439, %v7814, 0
        %v8043 = vsel %vm3439, %v7816, 0
        %v8045 = vsel %vm3439, %v7818, 0
        %v8047 = vsel %vm3439, %v7820, 0
        %v8049 = vsel %vm3439, %v7822, 0
        %v8051 = vsel %vm3439, %v7824, 0
        %v8053 = vsel %vm3439, %v7826, 0
        %v8055 = vsel %vm3439, %v7828, 0
        %v8057 = vsel %vm3439, %v7830, 0
        %v8059 = vsel %vm3439, %v7832, 0
        %v8061 = vsel %vm3439, %v7834, 0
        %v8063 = vsel %vm3439, %v7836, 0
        %v8065 = vsel %vm3439, %v7838, 0
        %v8067 = vsel %vm3439, %v7840, 0
        %v8069 = vsel %vm3439, %v7842, 0
        %v8071 = vsel %vm3439, %v7844, 0
        %v8073 = vsel %vm3439, %v7846, 0
        %v8075 = vsel %vm3439, %v7848, 0
        %v8077 = vsel %vm3439, %v7850, 0
        %v8079 = vsel %vm3439, %v7852, 0
        %v8082 = vsel %vm3504, %v7996, 0
        %8084 = vmatprep.subr.bf16.mxu0 0
        %8085 = vmatpush1.bf16.msra.mxu0 %v7976
        %8086 = vmatprep.subr.bf16.mxu0 0
        %8087 = vmatpush1.bf16.msra.mxu0 %v7977
        %8088 = vmatprep.subr.bf16.mxu0 0
        %8089 = vmatpush1.bf16.msra.mxu0 %v7978
        %8090 = vmatprep.subr.bf16.mxu0 0
        %8091 = vmatpush1.bf16.msra.mxu0 %v7979
        %8092 = vmatprep.subr.bf16.mxu0 0
        %8093 = vmatpush1.bf16.msra.mxu0 %v7980
        %8094 = vmatprep.subr.bf16.mxu0 0
        %8095 = vmatpush1.bf16.msra.mxu0 %v7981
        %8096 = vmatprep.subr.bf16.mxu0 0
        %8097 = vmatpush1.bf16.msra.mxu0 %v7982
        %8098 = vmatprep.subr.bf16.mxu0 0
        %8099 = vmatpush1.bf16.msra.mxu0 %v7983
        %8100 = vmatprep.subr.bf16.mxu0 0
        %8101 = vmatpush1.bf16.msra.mxu0 %v7984
        %8102 = vmatprep.subr.bf16.mxu0 0
        %8103 = vmatpush1.bf16.msra.mxu0 %v7985
        %8104 = vmatprep.subr.bf16.mxu0 0
        %8105 = vmatpush1.bf16.msra.mxu0 %v7986
        %8106 = vmatprep.subr.bf16.mxu0 0
        %8107 = vmatpush1.bf16.msra.mxu0 %v7987
        %8108 = vmatprep.subr.bf16.mxu0 0
        %8109 = vmatpush1.bf16.msra.mxu0 %v7988
        %8110 = vmatprep.subr.bf16.mxu0 0
        %8111 = vmatpush1.bf16.msra.mxu0 %v7989
        %8112 = vmatprep.subr.bf16.mxu0 0
        %8113 = vmatpush1.bf16.msra.mxu0 %v7990
        %8114 = vmatprep.subr.bf16.mxu0 0
        %8115 = vmatpush1.bf16.msra.mxu0 %v7991
        %8116 = vmatprep.mubr.bf16.mxu0 %v7694
        %8117 = vmatmul.mubr.bf16.gmra.mrb[0].mxu0 %v7406
        %v8118 = vpop.f32.mrb[0].mxu0
        %v8119 = vadd.f32 0.0, %v8118
        %v8120 = vpop.f32.mrb[0].mxu0
        %v8121 = vpop.f32.mrb[0].mxu0
        %v8122 = vadd.f32 0.0, %v8121
        %v8123 = vpop.f32.mrb[0].mxu0
        %8124 = vmatprep.mubr.bf16.mxu0 %v7697
        %8125 = vmatmul.mubr.bf16.gmra.mrb[0].mxu0 %v7409
        %v8126 = vpop.f32.mrb[0].mxu0
        %v8127 = vadd.f32 0.0, %v8126
        %v8128 = vpop.f32.mrb[0].mxu0
        %v8129 = vpop.f32.mrb[0].mxu0
        %v8130 = vadd.f32 0.0, %v8129
        %v8131 = vpop.f32.mrb[0].mxu0
        %8132 = vmatprep.mubr.bf16.mxu0 %v7700
        %8133 = vmatmul.mubr.bf16.gmra.mrb[0].mxu0 %v7412
        %v8134 = vpop.f32.mrb[0].mxu0
        %v8135 = vadd.f32 0.0, %v8134
        %v8136 = vpop.f32.mrb[0].mxu0
        %v8137 = vpop.f32.mrb[0].mxu0
        %v8138 = vadd.f32 0.0, %v8137
        %v8139 = vpop.f32.mrb[0].mxu0
        %8140 = vmatprep.mubr.bf16.mxu0 %v7703
        %8141 = vmatmul.mubr.bf16.gmra.mrb[0].mxu0 %v7415
        %v8142 = vpop.f32.mrb[0].mxu0
        %v8143 = vadd.f32 0.0, %v8142
        %v8144 = vpop.f32.mrb[0].mxu0
        %v8145 = vpop.f32.mrb[0].mxu0
        %v8146 = vadd.f32 0.0, %v8145
        %v8147 = vpop.f32.mrb[0].mxu0
        %8148 = vmatprep.mubr.bf16.mxu0 %v7706
        %8149 = vmatmul.mubr.bf16.gmra.mrb[0].mxu0 %v7418
        %v8150 = vpop.f32.mrb[0].mxu0
        %v8151 = vadd.f32 0.0, %v8150
        %v8152 = vpop.f32.mrb[0].mxu0
        %v8153 = vpop.f32.mrb[0].mxu0
        %v8154 = vadd.f32 0.0, %v8153
        %v8155 = vpop.f32.mrb[0].mxu0
        %8156 = vmatprep.mubr.bf16.mxu0 %v7709
        %8157 = vmatmul.mubr.bf16.gmra.mrb[0].mxu0 %v7421
        %v8158 = vpop.f32.mrb[0].mxu0
        %v8159 = vadd.f32 0.0, %v8158
        %v8160 = vpop.f32.mrb[0].mxu0
        %v8161 = vpop.f32.mrb[0].mxu0
        %v8162 = vadd.f32 0.0, %v8161
        %v8163 = vpop.f32.mrb[0].mxu0
        %8164 = vmatprep.mubr.bf16.mxu0 %v7712
        %8165 = vmatmul.mubr.bf16.gmra.mrb[0].mxu0 %v7424
        %v8166 = vpop.f32.mrb[0].mxu0
        %v8167 = vadd.f32 0.0, %v8166
        %v8168 = vpop.f32.mrb[0].mxu0
        %v8169 = vpop.f32.mrb[0].mxu0
        %v8170 = vadd.f32 0.0, %v8169
        %v8171 = vpop.f32.mrb[0].mxu0
        %8172 = vmatprep.mubr.bf16.mxu0 %v7715
        %8173 = vmatmul.mubr.bf16.gmra.mrb[0].mxu0 %v7427
        %v8174 = vpop.f32.mrb[0].mxu0
        %v8175 = vadd.f32 0.0, %v8174
        %v8176 = vpop.f32.mrb[0].mxu0
        %v8177 = vpop.f32.mrb[0].mxu0
        %v8178 = vadd.f32 0.0, %v8177
        %v8179 = vpop.f32.mrb[0].mxu0
        %8180 = vmatprep.mubr.bf16.mxu0 %v7718
        %8181 = vmatmul.mubr.bf16.gmra.mrb[0].mxu0 %v7430
        %v8182 = vpop.f32.mrb[0].mxu0
        %v8183 = vadd.f32 0.0, %v8182
        %v8184 = vpop.f32.mrb[0].mxu0
        %v8185 = vpop.f32.mrb[0].mxu0
        %v8186 = vadd.f32 0.0, %v8185
        %v8187 = vpop.f32.mrb[0].mxu0
        %8188 = vmatprep.mubr.bf16.mxu0 %v7721
        %8189 = vmatmul.mubr.bf16.gmra.mrb[0].mxu0 %v7433
        %v8190 = vpop.f32.mrb[0].mxu0
        %v8191 = vadd.f32 0.0, %v8190
        %v8192 = vpop.f32.mrb[0].mxu0
        %v8193 = vpop.f32.mrb[0].mxu0
        %v8194 = vadd.f32 0.0, %v8193
        %v8195 = vpop.f32.mrb[0].mxu0
        %8196 = vmatprep.mubr.bf16.mxu0 %v7724
        %8197 = vmatmul.mubr.bf16.gmra.mrb[0].mxu0 %v7436
        %v8198 = vpop.f32.mrb[0].mxu0
        %v8199 = vadd.f32 0.0, %v8198
        %v8200 = vpop.f32.mrb[0].mxu0
        %v8201 = vpop.f32.mrb[0].mxu0
        %v8202 = vadd.f32 0.0, %v8201
        %v8203 = vpop.f32.mrb[0].mxu0
        %8204 = vmatprep.mubr.bf16.mxu0 %v7727
        %8205 = vmatmul.mubr.bf16.gmra.mrb[0].mxu0 %v7439
        %v8206 = vpop.f32.mrb[0].mxu0
        %v8207 = vadd.f32 0.0, %v8206
        %v8208 = vpop.f32.mrb[0].mxu0
        %v8209 = vpop.f32.mrb[0].mxu0
        %v8210 = vadd.f32 0.0, %v8209
        %v8211 = vpop.f32.mrb[0].mxu0
        %8212 = vmatprep.mubr.bf16.mxu0 %v7730
        %8213 = vmatmul.mubr.bf16.gmra.mrb[0].mxu0 %v7442
        %v8214 = vpop.f32.mrb[0].mxu0
        %v8215 = vadd.f32 0.0, %v8214
        %v8216 = vpop.f32.mrb[0].mxu0
        %v8217 = vpop.f32.mrb[0].mxu0
        %v8218 = vadd.f32 0.0, %v8217
        %v8219 = vpop.f32.mrb[0].mxu0
        %8220 = vmatprep.mubr.bf16.mxu0 %v7733
        %8221 = vmatmul.mubr.bf16.gmra.mrb[0].mxu0 %v7445
        %v8222 = vpop.f32.mrb[0].mxu0
        %v8223 = vadd.f32 0.0, %v8222
        %v8224 = vpop.f32.mrb[0].mxu0
        %v8225 = vpop.f32.mrb[0].mxu0
        %v8226 = vadd.f32 0.0, %v8225
        %v8227 = vpop.f32.mrb[0].mxu0
        %8228 = vmatprep.mubr.bf16.mxu0 %v7736
        %8229 = vmatmul.mubr.bf16.gmra.mrb[0].mxu0 %v7448
        %v8230 = vpop.f32.mrb[0].mxu0
        %v8231 = vadd.f32 0.0, %v8230
        %v8232 = vpop.f32.mrb[0].mxu0
        %v8233 = vpop.f32.mrb[0].mxu0
        %v8234 = vadd.f32 0.0, %v8233
        %v8235 = vpop.f32.mrb[0].mxu0
        %8236 = vmatprep.mubr.bf16.mxu0 %v7739
        %8237 = vmatmul.mubr.bf16.gmra.mrb[0].mxu0 %v7451
        %v8238 = vpop.f32.mrb[0].mxu0
        %v8239 = vadd.f32 0.0, %v8238
        %v8240 = vpop.f32.mrb[0].mxu0
        %v8241 = vpop.f32.mrb[0].mxu0
        %v8242 = vadd.f32 0.0, %v8241
        %v8243 = vpop.f32.mrb[0].mxu0
        %8244 = vmatprep.mubr.bf16.mxu0 %v7742
        %8245 = vmatmul.mubr.bf16.gmra.mrb[0].mxu0 %v7454
        %v8246 = vpop.f32.mrb[0].mxu0
        %v8247 = vadd.f32 0.0, %v8246
        %v8248 = vpop.f32.mrb[0].mxu0
        %v8249 = vpop.f32.mrb[0].mxu0
        %v8250 = vadd.f32 0.0, %v8249
        %v8251 = vpop.f32.mrb[0].mxu0
        %8252 = vmatprep.mubr.bf16.mxu0 %v7745
        %8253 = vmatmul.mubr.bf16.gmra.mrb[0].mxu0 %v7457
        %v8254 = vpop.f32.mrb[0].mxu0
        %v8255 = vadd.f32 0.0, %v8254
        %v8256 = vpop.f32.mrb[0].mxu0
        %v8257 = vpop.f32.mrb[0].mxu0
        %v8258 = vadd.f32 0.0, %v8257
        %v8259 = vpop.f32.mrb[0].mxu0
        %8260 = vmatprep.mubr.bf16.mxu0 %v7748
        %8261 = vmatmul.mubr.bf16.gmra.mrb[0].mxu0 %v7460
        %v8262 = vpop.f32.mrb[0].mxu0
        %v8263 = vadd.f32 0.0, %v8262
        %v8264 = vpop.f32.mrb[0].mxu0
        %v8265 = vpop.f32.mrb[0].mxu0
        %v8266 = vadd.f32 0.0, %v8265
        %v8267 = vpop.f32.mrb[0].mxu0
        %8268 = vmatprep.mubr.bf16.mxu0 %v7751
        %8269 = vmatmul.mubr.bf16.gmra.mrb[0].mxu0 %v7463
        %v8270 = vpop.f32.mrb[0].mxu0
        %v8271 = vadd.f32 0.0, %v8270
        %v8272 = vpop.f32.mrb[0].mxu0
        %v8273 = vpop.f32.mrb[0].mxu0
        %v8274 = vadd.f32 0.0, %v8273
        %v8275 = vpop.f32.mrb[0].mxu0
        %8276 = vmatprep.mubr.bf16.mxu0 %v7754
        %8277 = vmatmul.mubr.bf16.gmra.mrb[0].mxu0 %v7466
        %v8278 = vpop.f32.mrb[0].mxu0
        %v8279 = vadd.f32 0.0, %v8278
        %v8280 = vpop.f32.mrb[0].mxu0
        %v8281 = vpop.f32.mrb[0].mxu0
        %v8282 = vadd.f32 0.0, %v8281
        %v8283 = vpop.f32.mrb[0].mxu0
        %8284 = vmatprep.mubr.bf16.mxu0 %v7757
        %8285 = vmatmul.mubr.bf16.gmra.mrb[0].mxu0 %v7469
        %v8286 = vpop.f32.mrb[0].mxu0
        %v8287 = vadd.f32 0.0, %v8286
        %v8288 = vpop.f32.mrb[0].mxu0
        %v8289 = vpop.f32.mrb[0].mxu0
        %v8290 = vadd.f32 0.0, %v8289
        %v8291 = vpop.f32.mrb[0].mxu0
        %8292 = vmatprep.mubr.bf16.mxu0 %v7760
        %8293 = vmatmul.mubr.bf16.gmra.mrb[0].mxu0 %v7472
        %v8294 = vpop.f32.mrb[0].mxu0
        %v8295 = vadd.f32 0.0, %v8294
        %v8296 = vpop.f32.mrb[0].mxu0
        %v8297 = vpop.f32.mrb[0].mxu0
        %v8298 = vadd.f32 0.0, %v8297
        %v8299 = vpop.f32.mrb[0].mxu0
        %8300 = vmatprep.mubr.bf16.mxu0 %v7763
        %8301 = vmatmul.mubr.bf16.gmra.mrb[0].mxu0 %v7475
        %v8302 = vpop.f32.mrb[0].mxu0
        %v8303 = vadd.f32 0.0, %v8302
        %v8304 = vpop.f32.mrb[0].mxu0
        %v8305 = vpop.f32.mrb[0].mxu0
        %v8306 = vadd.f32 0.0, %v8305
        %v8307 = vpop.f32.mrb[0].mxu0
        %8308 = vmatprep.mubr.bf16.mxu0 %v7766
        %8309 = vmatmul.mubr.bf16.gmra.mrb[0].mxu0 %v7478
        %v8310 = vpop.f32.mrb[0].mxu0
        %v8311 = vadd.f32 0.0, %v8310
        %v8312 = vpop.f32.mrb[0].mxu0
        %v8313 = vpop.f32.mrb[0].mxu0
        %v8314 = vadd.f32 0.0, %v8313
        %v8315 = vpop.f32.mrb[0].mxu0
        %8316 = vmatprep.mubr.bf16.mxu0 %v7769
        %8317 = vmatmul.mubr.bf16.gmra.mrb[0].mxu0 %v7481
        %v8318 = vpop.f32.mrb[0].mxu0
        %v8319 = vadd.f32 0.0, %v8318
        %v8320 = vpop.f32.mrb[0].mxu0
        %v8321 = vpop.f32.mrb[0].mxu0
        %v8322 = vadd.f32 0.0, %v8321
        %v8323 = vpop.f32.mrb[0].mxu0
        %8324 = vmatprep.mubr.bf16.mxu0 %v7772
        %8325 = vmatmul.mubr.bf16.gmra.mrb[0].mxu0 %v7484
        %v8326 = vpop.f32.mrb[0].mxu0
        %v8327 = vadd.f32 0.0, %v8326
        %v8328 = vpop.f32.mrb[0].mxu0
        %v8329 = vpop.f32.mrb[0].mxu0
        %v8330 = vadd.f32 0.0, %v8329
        %v8331 = vpop.f32.mrb[0].mxu0
        %8332 = vmatprep.mubr.bf16.mxu0 %v7775
        %8333 = vmatmul.mubr.bf16.gmra.mrb[0].mxu0 %v7487
        %v8334 = vpop.f32.mrb[0].mxu0
        %v8335 = vadd.f32 0.0, %v8334
        %v8336 = vpop.f32.mrb[0].mxu0
        %v8337 = vpop.f32.mrb[0].mxu0
        %v8338 = vadd.f32 0.0, %v8337
        %v8339 = vpop.f32.mrb[0].mxu0
        %8340 = vmatprep.mubr.bf16.mxu0 %v7778
        %8341 = vmatmul.mubr.bf16.gmra.mrb[0].mxu0 %v7490
        %v8342 = vpop.f32.mrb[0].mxu0
        %v8343 = vadd.f32 0.0, %v8342
        %v8344 = vpop.f32.mrb[0].mxu0
        %v8345 = vpop.f32.mrb[0].mxu0
        %v8346 = vadd.f32 0.0, %v8345
        %v8347 = vpop.f32.mrb[0].mxu0
        %8348 = vmatprep.mubr.bf16.mxu0 %v7781
        %8349 = vmatmul.mubr.bf16.gmra.mrb[0].mxu0 %v7493
        %v8350 = vpop.f32.mrb[0].mxu0
        %v8351 = vadd.f32 0.0, %v8350
        %v8352 = vpop.f32.mrb[0].mxu0
        %v8353 = vpop.f32.mrb[0].mxu0
        %v8354 = vadd.f32 0.0, %v8353
        %v8355 = vpop.f32.mrb[0].mxu0
        %8356 = vmatprep.mubr.bf16.mxu0 %v7784
        %8357 = vmatmul.mubr.bf16.gmra.mrb[0].mxu0 %v7496
        %v8358 = vpop.f32.mrb[0].mxu0
        %v8359 = vadd.f32 0.0, %v8358
        %v8360 = vpop.f32.mrb[0].mxu0
        %v8361 = vpop.f32.mrb[0].mxu0
        %v8362 = vadd.f32 0.0, %v8361
        %v8363 = vpop.f32.mrb[0].mxu0
        %8364 = vmatprep.mubr.bf16.mxu0 %v7787
        %8365 = vmatmul.mubr.bf16.gmra.mrb[0].mxu0 %v7499
        %v8366 = vpop.f32.mrb[0].mxu0
        %v8367 = vadd.f32 0.0, %v8366
        %v8368 = vpop.f32.mrb[0].mxu0
        %v8369 = vpop.f32.mrb[0].mxu0
        %v8370 = vadd.f32 0.0, %v8369
        %v8371 = vpop.f32.mrb[0].mxu0
        %8372 = vdwg.mxu0
        %8373 = vmatprep.subr.bf16.mxu0 0
        %8374 = vmatpush1.bf16.msra.mxu0 %v7992
        %8375 = vmatprep.subr.bf16.mxu0 0
        %8376 = vmatpush1.bf16.msra.mxu0 %v7993
        %8377 = vmatprep.subr.bf16.mxu0 0
        %8378 = vmatpush1.bf16.msra.mxu0 %v7994
        %8379 = vmatprep.subr.bf16.mxu0 0
        %8380 = vmatpush1.bf16.msra.mxu0 %v7995
        %8381 = vmatprep.subr.bf16.mxu0 0
        %8382 = vmatpush1.bf16.msra.mxu0 %v8082
        %8383 = vmatprep.subr.bf16.mxu0 0
        %8384 = vmatpush1.bf16.msra.mxu0 0
        %8385 = vmatprep.subr.bf16.mxu0 0
        %8386 = vmatpush1.bf16.msra.mxu0 0
        %8387 = vmatprep.subr.bf16.mxu0 0
        %8388 = vmatpush1.bf16.msra.mxu0 0
        %8389 = vmatprep.subr.bf16.mxu0 0
        %8390 = vmatpush1.bf16.msra.mxu0 0
        %8391 = vmatprep.subr.bf16.mxu0 0
        %8392 = vmatpush1.bf16.msra.mxu0 0
        %8393 = vmatprep.subr.bf16.mxu0 0
        %8394 = vmatpush1.bf16.msra.mxu0 0
        %8395 = vmatprep.subr.bf16.mxu0 0
        %8396 = vmatpush1.bf16.msra.mxu0 0
        %8397 = vmatprep.subr.bf16.mxu0 0
        %8398 = vmatpush1.bf16.msra.mxu0 0
        %8399 = vmatprep.subr.bf16.mxu0 0
        %8400 = vmatpush1.bf16.msra.mxu0 0
        %8401 = vmatprep.subr.bf16.mxu0 0
        %8402 = vmatpush1.bf16.msra.mxu0 0
        %8403 = vmatprep.subr.bf16.mxu0 0
        %8404 = vmatpush1.bf16.msra.mxu0 0
        %8405 = vmatprep.mubr.bf16.mxu0 0
        %8406 = vmatmul.mubr.bf16.gmra.mrb[0].mxu0 %v8017
        %v8407 = vpop.f32.mrb[0].mxu0
        %v8408 = vadd.f32 %v8119, %v8407
        %v8409 = vpop.f32.mrb[0].mxu0
        %v8410 = vpop.f32.mrb[0].mxu0
        %v8411 = vadd.f32 %v8122, %v8410
        %v8412 = vpop.f32.mrb[0].mxu0
        %8413 = vmatprep.mubr.bf16.mxu0 0
        %8414 = vmatmul.mubr.bf16.gmra.mrb[0].mxu0 %v8019
        %v8415 = vpop.f32.mrb[0].mxu0
        %v8416 = vadd.f32 %v8127, %v8415
        %v8417 = vpop.f32.mrb[0].mxu0
        %v8418 = vpop.f32.mrb[0].mxu0
        %v8419 = vadd.f32 %v8130, %v8418
        %v8420 = vpop.f32.mrb[0].mxu0
        %8421 = vmatprep.mubr.bf16.mxu0 0
        %8422 = vmatmul.mubr.bf16.gmra.mrb[0].mxu0 %v8021
        %v8423 = vpop.f32.mrb[0].mxu0
        %v8424 = vadd.f32 %v8135, %v8423
        %v8425 = vpop.f32.mrb[0].mxu0
        %v8426 = vpop.f32.mrb[0].mxu0
        %v8427 = vadd.f32 %v8138, %v8426
        %v8428 = vpop.f32.mrb[0].mxu0
        %8429 = vmatprep.mubr.bf16.mxu0 0
        %8430 = vmatmul.mubr.bf16.gmra.mrb[0].mxu0 %v8023
        %v8431 = vpop.f32.mrb[0].mxu0
        %v8432 = vadd.f32 %v8143, %v8431
        %v8433 = vpop.f32.mrb[0].mxu0
        %v8434 = vpop.f32.mrb[0].mxu0
        %v8435 = vadd.f32 %v8146, %v8434
        %v8436 = vpop.f32.mrb[0].mxu0
        %8437 = vmatprep.mubr.bf16.mxu0 0
        %8438 = vmatmul.mubr.bf16.gmra.mrb[0].mxu0 %v8025
        %v8439 = vpop.f32.mrb[0].mxu0
        %v8440 = vadd.f32 %v8151, %v8439
        %v8441 = vpop.f32.mrb[0].mxu0
        %v8442 = vpop.f32.mrb[0].mxu0
        %v8443 = vadd.f32 %v8154, %v8442
        %v8444 = vpop.f32.mrb[0].mxu0
        %8445 = vmatprep.mubr.bf16.mxu0 0
        %8446 = vmatmul.mubr.bf16.gmra.mrb[0].mxu0 %v8027
        %v8447 = vpop.f32.mrb[0].mxu0
        %v8448 = vadd.f32 %v8159, %v8447
        %v8449 = vpop.f32.mrb[0].mxu0
        %v8450 = vpop.f32.mrb[0].mxu0
        %v8451 = vadd.f32 %v8162, %v8450
        %v8452 = vpop.f32.mrb[0].mxu0
        %8453 = vmatprep.mubr.bf16.mxu0 0
        %8454 = vmatmul.mubr.bf16.gmra.mrb[0].mxu0 %v8029
        %v8455 = vpop.f32.mrb[0].mxu0
        %v8456 = vadd.f32 %v8167, %v8455
        %v8457 = vpop.f32.mrb[0].mxu0
        %v8458 = vpop.f32.mrb[0].mxu0
        %v8459 = vadd.f32 %v8170, %v8458
        %v8460 = vpop.f32.mrb[0].mxu0
        %8461 = vmatprep.mubr.bf16.mxu0 0
        %8462 = vmatmul.mubr.bf16.gmra.mrb[0].mxu0 %v8031
        %v8463 = vpop.f32.mrb[0].mxu0
        %v8464 = vadd.f32 %v8175, %v8463
        %v8465 = vpop.f32.mrb[0].mxu0
        %v8466 = vpop.f32.mrb[0].mxu0
        %v8467 = vadd.f32 %v8178, %v8466
        %v8468 = vpop.f32.mrb[0].mxu0
        %8469 = vmatprep.mubr.bf16.mxu0 0
        %8470 = vmatmul.mubr.bf16.gmra.mrb[0].mxu0 %v8033
        %v8471 = vpop.f32.mrb[0].mxu0
        %v8472 = vadd.f32 %v8183, %v8471
        %v8473 = vpop.f32.mrb[0].mxu0
        %v8474 = vpop.f32.mrb[0].mxu0
        %v8475 = vadd.f32 %v8186, %v8474
        %v8476 = vpop.f32.mrb[0].mxu0
        %8477 = vmatprep.mubr.bf16.mxu0 0
        %8478 = vmatmul.mubr.bf16.gmra.mrb[0].mxu0 %v8035
        %v8479 = vpop.f32.mrb[0].mxu0
        %v8480 = vadd.f32 %v8191, %v8479
        %v8481 = vpop.f32.mrb[0].mxu0
        %v8482 = vpop.f32.mrb[0].mxu0
        %v8483 = vadd.f32 %v8194, %v8482
        %v8484 = vpop.f32.mrb[0].mxu0
        %8485 = vmatprep.mubr.bf16.mxu0 0
        %8486 = vmatmul.mubr.bf16.gmra.mrb[0].mxu0 %v8037
        %v8487 = vpop.f32.mrb[0].mxu0
        %v8488 = vadd.f32 %v8199, %v8487
        %v8489 = vpop.f32.mrb[0].mxu0
        %v8490 = vpop.f32.mrb[0].mxu0
        %v8491 = vadd.f32 %v8202, %v8490
        %v8492 = vpop.f32.mrb[0].mxu0
        %8493 = vmatprep.mubr.bf16.mxu0 0
        %8494 = vmatmul.mubr.bf16.gmra.mrb[0].mxu0 %v8039
        %v8495 = vpop.f32.mrb[0].mxu0
        %v8496 = vadd.f32 %v8207, %v8495
        %v8497 = vpop.f32.mrb[0].mxu0
        %v8498 = vpop.f32.mrb[0].mxu0
        %v8499 = vadd.f32 %v8210, %v8498
        %v8500 = vpop.f32.mrb[0].mxu0
        %8501 = vmatprep.mubr.bf16.mxu0 0
        %8502 = vmatmul.mubr.bf16.gmra.mrb[0].mxu0 %v8041
        %v8503 = vpop.f32.mrb[0].mxu0
        %v8504 = vadd.f32 %v8215, %v8503
        %v8505 = vpop.f32.mrb[0].mxu0
        %v8506 = vpop.f32.mrb[0].mxu0
        %v8507 = vadd.f32 %v8218, %v8506
        %v8508 = vpop.f32.mrb[0].mxu0
        %8509 = vmatprep.mubr.bf16.mxu0 0
        %8510 = vmatmul.mubr.bf16.gmra.mrb[0].mxu0 %v8043
        %v8511 = vpop.f32.mrb[0].mxu0
        %v8512 = vadd.f32 %v8223, %v8511
        %v8513 = vpop.f32.mrb[0].mxu0
        %v8514 = vpop.f32.mrb[0].mxu0
        %v8515 = vadd.f32 %v8226, %v8514
        %v8516 = vpop.f32.mrb[0].mxu0
        %8517 = vmatprep.mubr.bf16.mxu0 0
        %8518 = vmatmul.mubr.bf16.gmra.mrb[0].mxu0 %v8045
        %v8519 = vpop.f32.mrb[0].mxu0
        %v8520 = vadd.f32 %v8231, %v8519
        %v8521 = vpop.f32.mrb[0].mxu0
        %v8522 = vpop.f32.mrb[0].mxu0
        %v8523 = vadd.f32 %v8234, %v8522
        %v8524 = vpop.f32.mrb[0].mxu0
        %8525 = vmatprep.mubr.bf16.mxu0 0
        %8526 = vmatmul.mubr.bf16.gmra.mrb[0].mxu0 %v8047
        %v8527 = vpop.f32.mrb[0].mxu0
        %v8528 = vadd.f32 %v8239, %v8527
        %v8529 = vpop.f32.mrb[0].mxu0
        %v8530 = vpop.f32.mrb[0].mxu0
        %v8531 = vadd.f32 %v8242, %v8530
        %v8532 = vpop.f32.mrb[0].mxu0
        %8533 = vmatprep.mubr.bf16.mxu0 0
        %8534 = vmatmul.mubr.bf16.gmra.mrb[0].mxu0 %v8049
        %v8535 = vpop.f32.mrb[0].mxu0
        %v8536 = vadd.f32 %v8247, %v8535
        %v8537 = vpop.f32.mrb[0].mxu0
        %v8538 = vpop.f32.mrb[0].mxu0
        %v8539 = vadd.f32 %v8250, %v8538
        %v8540 = vpop.f32.mrb[0].mxu0
        %8541 = vmatprep.mubr.bf16.mxu0 0
        %8542 = vmatmul.mubr.bf16.gmra.mrb[0].mxu0 %v8051
        %v8543 = vpop.f32.mrb[0].mxu0
        %v8544 = vadd.f32 %v8255, %v8543
        %v8545 = vpop.f32.mrb[0].mxu0
        %v8546 = vpop.f32.mrb[0].mxu0
        %v8547 = vadd.f32 %v8258, %v8546
        %v8548 = vpop.f32.mrb[0].mxu0
        %8549 = vmatprep.mubr.bf16.mxu0 0
        %8550 = vmatmul.mubr.bf16.gmra.mrb[0].mxu0 %v8053
        %v8551 = vpop.f32.mrb[0].mxu0
        %v8552 = vadd.f32 %v8263, %v8551
        %v8553 = vpop.f32.mrb[0].mxu0
        %v8554 = vpop.f32.mrb[0].mxu0
        %v8555 = vadd.f32 %v8266, %v8554
        %v8556 = vpop.f32.mrb[0].mxu0
        %8557 = vmatprep.mubr.bf16.mxu0 0
        %8558 = vmatmul.mubr.bf16.gmra.mrb[0].mxu0 %v8055
        %v8559 = vpop.f32.mrb[0].mxu0
        %v8560 = vadd.f32 %v8271, %v8559
        %v8561 = vpop.f32.mrb[0].mxu0
        %v8562 = vpop.f32.mrb[0].mxu0
        %v8563 = vadd.f32 %v8274, %v8562
        %v8564 = vpop.f32.mrb[0].mxu0
        %8565 = vmatprep.mubr.bf16.mxu0 0
        %8566 = vmatmul.mubr.bf16.gmra.mrb[0].mxu0 %v8057
        %v8567 = vpop.f32.mrb[0].mxu0
        %v8568 = vadd.f32 %v8279, %v8567
        %v8569 = vpop.f32.mrb[0].mxu0
        %v8570 = vpop.f32.mrb[0].mxu0
        %v8571 = vadd.f32 %v8282, %v8570
        %v8572 = vpop.f32.mrb[0].mxu0
        %8573 = vmatprep.mubr.bf16.mxu0 0
        %8574 = vmatmul.mubr.bf16.gmra.mrb[0].mxu0 %v8059
        %v8575 = vpop.f32.mrb[0].mxu0
        %v8576 = vadd.f32 %v8287, %v8575
        %v8577 = vpop.f32.mrb[0].mxu0
        %v8578 = vpop.f32.mrb[0].mxu0
        %v8579 = vadd.f32 %v8290, %v8578
        %v8580 = vpop.f32.mrb[0].mxu0
        %8581 = vmatprep.mubr.bf16.mxu0 0
        %8582 = vmatmul.mubr.bf16.gmra.mrb[0].mxu0 %v8061
        %v8583 = vpop.f32.mrb[0].mxu0
        %v8584 = vadd.f32 %v8295, %v8583
        %v8585 = vpop.f32.mrb[0].mxu0
        %v8586 = vpop.f32.mrb[0].mxu0
        %v8587 = vadd.f32 %v8298, %v8586
        %v8588 = vpop.f32.mrb[0].mxu0
        %8589 = vmatprep.mubr.bf16.mxu0 0
        %8590 = vmatmul.mubr.bf16.gmra.mrb[0].mxu0 %v8063
        %v8591 = vpop.f32.mrb[0].mxu0
        %v8592 = vadd.f32 %v8303, %v8591
        %v8593 = vpop.f32.mrb[0].mxu0
        %v8594 = vpop.f32.mrb[0].mxu0
        %v8595 = vadd.f32 %v8306, %v8594
        %v8596 = vpop.f32.mrb[0].mxu0
        %8597 = vmatprep.mubr.bf16.mxu0 0
        %8598 = vmatmul.mubr.bf16.gmra.mrb[0].mxu0 %v8065
        %v8599 = vpop.f32.mrb[0].mxu0
        %v8600 = vadd.f32 %v8311, %v8599
        %v8601 = vpop.f32.mrb[0].mxu0
        %v8602 = vpop.f32.mrb[0].mxu0
        %v8603 = vadd.f32 %v8314, %v8602
        %v8604 = vpop.f32.mrb[0].mxu0
        %8605 = vmatprep.mubr.bf16.mxu0 0
        %8606 = vmatmul.mubr.bf16.gmra.mrb[0].mxu0 %v8067
        %v8607 = vpop.f32.mrb[0].mxu0
        %v8608 = vadd.f32 %v8319, %v8607
        %v8609 = vpop.f32.mrb[0].mxu0
        %v8610 = vpop.f32.mrb[0].mxu0
        %v8611 = vadd.f32 %v8322, %v8610
        %v8612 = vpop.f32.mrb[0].mxu0
        %8613 = vmatprep.mubr.bf16.mxu0 0
        %8614 = vmatmul.mubr.bf16.gmra.mrb[0].mxu0 %v8069
        %v8615 = vpop.f32.mrb[0].mxu0
        %v8616 = vadd.f32 %v8327, %v8615
        %v8617 = vpop.f32.mrb[0].mxu0
        %v8618 = vpop.f32.mrb[0].mxu0
        %v8619 = vadd.f32 %v8330, %v8618
        %v8620 = vpop.f32.mrb[0].mxu0
        %8621 = vmatprep.mubr.bf16.mxu0 0
        %8622 = vmatmul.mubr.bf16.gmra.mrb[0].mxu0 %v8071
        %v8623 = vpop.f32.mrb[0].mxu0
        %v8624 = vadd.f32 %v8335, %v8623
        %v8625 = vpop.f32.mrb[0].mxu0
        %v8626 = vpop.f32.mrb[0].mxu0
        %v8627 = vadd.f32 %v8338, %v8626
        %v8628 = vpop.f32.mrb[0].mxu0
        %8629 = vmatprep.mubr.bf16.mxu0 0
        %8630 = vmatmul.mubr.bf16.gmra.mrb[0].mxu0 %v8073
        %v8631 = vpop.f32.mrb[0].mxu0
        %v8632 = vadd.f32 %v8343, %v8631
        %v8633 = vpop.f32.mrb[0].mxu0
        %v8634 = vpop.f32.mrb[0].mxu0
        %v8635 = vadd.f32 %v8346, %v8634
        %v8636 = vpop.f32.mrb[0].mxu0
        %8637 = vmatprep.mubr.bf16.mxu0 0
        %8638 = vmatmul.mubr.bf16.gmra.mrb[0].mxu0 %v8075
        %v8639 = vpop.f32.mrb[0].mxu0
        %v8640 = vadd.f32 %v8351, %v8639
        %v8641 = vpop.f32.mrb[0].mxu0
        %v8642 = vpop.f32.mrb[0].mxu0
        %v8643 = vadd.f32 %v8354, %v8642
        %v8644 = vpop.f32.mrb[0].mxu0
        %8645 = vmatprep.mubr.bf16.mxu0 0
        %8646 = vmatmul.mubr.bf16.gmra.mrb[0].mxu0 %v8077
        %v8647 = vpop.f32.mrb[0].mxu0
        %v8648 = vadd.f32 %v8359, %v8647
        %v8649 = vpop.f32.mrb[0].mxu0
        %v8650 = vpop.f32.mrb[0].mxu0
        %v8651 = vadd.f32 %v8362, %v8650
        %v8652 = vpop.f32.mrb[0].mxu0
        %8653 = vmatprep.mubr.bf16.mxu0 0
        %8654 = vmatmul.mubr.bf16.gmra.mrb[0].mxu0 %v8079
        %v8655 = vpop.f32.mrb[0].mxu0
        %v8656 = vadd.f32 %v8367, %v8655
        %v8657 = vpop.f32.mrb[0].mxu0
        %v8658 = vpop.f32.mrb[0].mxu0
        %v8659 = vadd.f32 %v8370, %v8658
        %v8660 = vpop.f32.mrb[0].mxu0
        %8661 = vdwg.mxu0
        %v8662 = vld [vmem:[%s6] sm:$0x1]
        %v8663 = vld [vmem:[%s7] sm:$0x1]
        %v8664 = vld [vmem:[%s8] sm:$0x1]
        %v8665 = vsel %vm3210, %v8408, 0.0
        %v8666 = vsel %vm3210, %v8411, 0.0
        %v8667 = vadd.f32 %v8665, %v8666
        %v8668 = vsel %vm3210, %v8416, 0.0
        %v8669 = vadd.f32 %v8667, %v8668
        %v8670 = vsel %vm3210, %v8419, 0.0
        %v8671 = vadd.f32 %v8669, %v8670
        %v8672 = vsel %vm3210, %v8424, 0.0
        %v8673 = vadd.f32 %v8671, %v8672
        %v8674 = vsel %vm3210, %v8427, 0.0
        %v8675 = vadd.f32 %v8673, %v8674
        %v8676 = vsel %vm3210, %v8432, 0.0
        %v8677 = vadd.f32 %v8675, %v8676
        %v8678 = vsel %vm3210, %v8435, 0.0
        %v8679 = vadd.f32 %v8677, %v8678
        %v8680 = vsel %vm3210, %v8440, 0.0
        %v8681 = vadd.f32 %v8679, %v8680
        %v8682 = vsel %vm3210, %v8443, 0.0
        %v8683 = vadd.f32 %v8681, %v8682
        %v8684 = vsel %vm3210, %v8448, 0.0
        %v8685 = vadd.f32 %v8683, %v8684
        %v8686 = vsel %vm3210, %v8451, 0.0
        %v8687 = vadd.f32 %v8685, %v8686
        %v8688 = vsel %vm3210, %v8456, 0.0
        %v8689 = vadd.f32 %v8687, %v8688
        %v8690 = vsel %vm3210, %v8459, 0.0
        %v8691 = vadd.f32 %v8689, %v8690
        %v8692 = vsel %vm3210, %v8464, 0.0
        %v8693 = vadd.f32 %v8691, %v8692
        %v8694 = vsel %vm3210, %v8467, 0.0
        %v8695 = vadd.f32 %v8693, %v8694
        %v8696 = vsel %vm3210, %v8472, 0.0
        %v8697 = vadd.f32 %v8695, %v8696
        %v8698 = vsel %vm3210, %v8475, 0.0
        %v8699 = vadd.f32 %v8697, %v8698
        %v8700 = vsel %vm3210, %v8480, 0.0
        %v8701 = vadd.f32 %v8699, %v8700
        %v8702 = vsel %vm3210, %v8483, 0.0
        %v8703 = vadd.f32 %v8701, %v8702
        %v8704 = vsel %vm3210, %v8488, 0.0
        %v8705 = vadd.f32 %v8703, %v8704
        %v8706 = vsel %vm3210, %v8491, 0.0
        %v8707 = vadd.f32 %v8705, %v8706
        %v8708 = vsel %vm3210, %v8496, 0.0
        %v8709 = vadd.f32 %v8707, %v8708
        %v8710 = vsel %vm3210, %v8499, 0.0
        %v8711 = vadd.f32 %v8709, %v8710
        %v8712 = vsel %vm3210, %v8504, 0.0
        %v8713 = vadd.f32 %v8711, %v8712
        %v8714 = vsel %vm3210, %v8507, 0.0
        %v8715 = vadd.f32 %v8713, %v8714
        %v8716 = vsel %vm3210, %v8512, 0.0
        %v8717 = vadd.f32 %v8715, %v8716
        %v8718 = vsel %vm3210, %v8515, 0.0
        %v8719 = vadd.f32 %v8717, %v8718
        %v8720 = vsel %vm3210, %v8520, 0.0
        %v8721 = vadd.f32 %v8719, %v8720
        %v8722 = vsel %vm3210, %v8523, 0.0
        %v8723 = vadd.f32 %v8721, %v8722
        %v8724 = vsel %vm3210, %v8528, 0.0
        %v8725 = vadd.f32 %v8723, %v8724
        %v8726 = vsel %vm3210, %v8531, 0.0
        %v8727 = vadd.f32 %v8725, %v8726
        %v8728 = vrot.slane %v8727, 4
        %v8729 = vadd.f32 %v8727, %v8728
        %v8730 = vrot.slane %v8729, 2
        %v8731 = vadd.f32 %v8729, %v8730
        %v8732 = vrot.slane %v8731, 1
        %v8733 = vadd.f32 %v8731, %v8732
        %v8734 = vsel %vm3210, %v8536, 0.0
        %v8735 = vsel %vm3210, %v8539, 0.0
        %v8736 = vadd.f32 %v8734, %v8735
        %v8737 = vsel %vm3210, %v8544, 0.0
        %v8738 = vadd.f32 %v8736, %v8737
        %v8739 = vsel %vm3210, %v8547, 0.0
        %v8740 = vadd.f32 %v8738, %v8739
        %v8741 = vsel %vm3210, %v8552, 0.0
        %v8742 = vadd.f32 %v8740, %v8741
        %v8743 = vsel %vm3210, %v8555, 0.0
        %v8744 = vadd.f32 %v8742, %v8743
        %v8745 = vsel %vm3210, %v8560, 0.0
        %v8746 = vadd.f32 %v8744, %v8745
        %v8747 = vsel %vm3210, %v8563, 0.0
        %v8748 = vadd.f32 %v8746, %v8747
        %v8749 = vsel %vm3210, %v8568, 0.0
        %v8750 = vadd.f32 %v8748, %v8749
        %v8751 = vsel %vm3210, %v8571, 0.0
        %v8752 = vadd.f32 %v8750, %v8751
        %v8753 = vsel %vm3210, %v8576, 0.0
        %v8754 = vadd.f32 %v8752, %v8753
        %v8755 = vsel %vm3210, %v8579, 0.0
        %v8756 = vadd.f32 %v8754, %v8755
        %v8757 = vsel %vm3210, %v8584, 0.0
        %v8758 = vadd.f32 %v8756, %v8757
        %v8759 = vsel %vm3210, %v8587, 0.0
        %v8760 = vadd.f32 %v8758, %v8759
        %v8761 = vsel %vm3210, %v8592, 0.0
        %v8762 = vadd.f32 %v8760, %v8761
        %v8763 = vsel %vm3210, %v8595, 0.0
        %v8764 = vadd.f32 %v8762, %v8763
        %v8765 = vsel %vm3210, %v8600, 0.0
        %v8766 = vadd.f32 %v8764, %v8765
        %v8767 = vsel %vm3210, %v8603, 0.0
        %v8768 = vadd.f32 %v8766, %v8767
        %v8769 = vsel %vm3210, %v8608, 0.0
        %v8770 = vadd.f32 %v8768, %v8769
        %v8771 = vsel %vm3210, %v8611, 0.0
        %v8772 = vadd.f32 %v8770, %v8771
        %v8773 = vsel %vm3210, %v8616, 0.0
        %v8774 = vadd.f32 %v8772, %v8773
        %v8775 = vsel %vm3210, %v8619, 0.0
        %v8776 = vadd.f32 %v8774, %v8775
        %v8777 = vsel %vm3210, %v8624, 0.0
        %v8778 = vadd.f32 %v8776, %v8777
        %v8779 = vsel %vm3210, %v8627, 0.0
        %v8780 = vadd.f32 %v8778, %v8779
        %v8781 = vsel %vm3210, %v8632, 0.0
        %v8782 = vadd.f32 %v8780, %v8781
        %v8783 = vsel %vm3210, %v8635, 0.0
        %v8784 = vadd.f32 %v8782, %v8783
        %v8785 = vsel %vm3210, %v8640, 0.0
        %v8786 = vadd.f32 %v8784, %v8785
        %v8787 = vsel %vm3210, %v8643, 0.0
        %v8788 = vadd.f32 %v8786, %v8787
        %v8789 = vsel %vm3210, %v8648, 0.0
        %v8790 = vadd.f32 %v8788, %v8789
        %v8791 = vsel %vm3210, %v8651, 0.0
        %v8792 = vadd.f32 %v8790, %v8791
        %v8793 = vsel %vm3210, %v8656, 0.0
        %v8794 = vadd.f32 %v8792, %v8793
        %v8795 = vsel %vm3210, %v8659, 0.0
        %v8796 = vadd.f32 %v8794, %v8795
        %v8797 = vrot.slane %v8796, 4
        %v8798 = vadd.f32 %v8796, %v8797
        %v8799 = vrot.slane %v8798, 2
        %v8800 = vadd.f32 %v8798, %v8799
        %v8801 = vrot.slane %v8800, 1
        %v8802 = vadd.f32 %v8800, %v8801
        %v8803 = vmul.f32 %v8408, %v8408
        %v8804 = vmul.f32 %v8411, %v8411
        %v8805 = vmul.f32 %v8416, %v8416
        %v8806 = vmul.f32 %v8419, %v8419
        %v8807 = vmul.f32 %v8424, %v8424
        %v8808 = vmul.f32 %v8427, %v8427
        %v8809 = vmul.f32 %v8432, %v8432
        %v8810 = vmul.f32 %v8435, %v8435
        %v8811 = vmul.f32 %v8440, %v8440
        %v8812 = vmul.f32 %v8443, %v8443
        %v8813 = vmul.f32 %v8448, %v8448
        %v8814 = vmul.f32 %v8451, %v8451
        %v8815 = vmul.f32 %v8456, %v8456
        %v8816 = vmul.f32 %v8459, %v8459
        %v8817 = vmul.f32 %v8464, %v8464
        %v8818 = vmul.f32 %v8467, %v8467
        %v8819 = vmul.f32 %v8472, %v8472
        %v8820 = vmul.f32 %v8475, %v8475
        %v8821 = vmul.f32 %v8480, %v8480
        %v8822 = vmul.f32 %v8483, %v8483
        %v8823 = vmul.f32 %v8488, %v8488
        %v8824 = vmul.f32 %v8491, %v8491
        %v8825 = vmul.f32 %v8496, %v8496
        %v8826 = vmul.f32 %v8499, %v8499
        %v8827 = vmul.f32 %v8504, %v8504
        %v8828 = vmul.f32 %v8507, %v8507
        %v8829 = vmul.f32 %v8512, %v8512
        %v8830 = vmul.f32 %v8515, %v8515
        %v8831 = vmul.f32 %v8520, %v8520
        %v8832 = vmul.f32 %v8523, %v8523
        %v8833 = vmul.f32 %v8528, %v8528
        %v8834 = vmul.f32 %v8531, %v8531
        %v8835 = vmul.f32 %v8536, %v8536
        %v8836 = vmul.f32 %v8539, %v8539
        %v8837 = vmul.f32 %v8544, %v8544
        %v8838 = vmul.f32 %v8547, %v8547
        %v8839 = vmul.f32 %v8552, %v8552
        %v8840 = vmul.f32 %v8555, %v8555
        %v8841 = vmul.f32 %v8560, %v8560
        %v8842 = vmul.f32 %v8563, %v8563
        %v8843 = vmul.f32 %v8568, %v8568
        %v8844 = vmul.f32 %v8571, %v8571
        %v8845 = vmul.f32 %v8576, %v8576
        %v8846 = vmul.f32 %v8579, %v8579
        %v8847 = vmul.f32 %v8584, %v8584
        %v8848 = vmul.f32 %v8587, %v8587
        %v8849 = vmul.f32 %v8592, %v8592
        %v8850 = vmul.f32 %v8595, %v8595
        %v8851 = vmul.f32 %v8600, %v8600
        %v8852 = vmul.f32 %v8603, %v8603
        %v8853 = vmul.f32 %v8608, %v8608
        %v8854 = vmul.f32 %v8611, %v8611
        %v8855 = vmul.f32 %v8616, %v8616
        %v8856 = vmul.f32 %v8619, %v8619
        %v8857 = vmul.f32 %v8624, %v8624
        %v8858 = vmul.f32 %v8627, %v8627
        %v8859 = vmul.f32 %v8632, %v8632
        %v8860 = vmul.f32 %v8635, %v8635
        %v8861 = vmul.f32 %v8640, %v8640
        %v8862 = vmul.f32 %v8643, %v8643
        %v8863 = vmul.f32 %v8648, %v8648
        %v8864 = vmul.f32 %v8651, %v8651
        %v8865 = vmul.f32 %v8656, %v8656
        %v8866 = vmul.f32 %v8659, %v8659
        %v8867 = vsel %vm3210, %v8803, 0.0
        %v8868 = vsel %vm3210, %v8804, 0.0
        %v8869 = vadd.f32 %v8867, %v8868
        %v8870 = vsel %vm3210, %v8805, 0.0
        %v8871 = vadd.f32 %v8869, %v8870
        %v8872 = vsel %vm3210, %v8806, 0.0
        %v8873 = vadd.f32 %v8871, %v8872
        %v8874 = vsel %vm3210, %v8807, 0.0
        %v8875 = vadd.f32 %v8873, %v8874
        %v8876 = vsel %vm3210, %v8808, 0.0
        %v8877 = vadd.f32 %v8875, %v8876
        %v8878 = vsel %vm3210, %v8809, 0.0
        %v8879 = vadd.f32 %v8877, %v8878
        %v8880 = vsel %vm3210, %v8810, 0.0
        %v8881 = vadd.f32 %v8879, %v8880
        %v8882 = vsel %vm3210, %v8811, 0.0
        %v8883 = vadd.f32 %v8881, %v8882
        %v8884 = vsel %vm3210, %v8812, 0.0
        %v8885 = vadd.f32 %v8883, %v8884
        %v8886 = vsel %vm3210, %v8813, 0.0
        %v8887 = vadd.f32 %v8885, %v8886
        %v8888 = vsel %vm3210, %v8814, 0.0
        %v8889 = vadd.f32 %v8887, %v8888
        %v8890 = vsel %vm3210, %v8815, 0.0
        %v8891 = vadd.f32 %v8889, %v8890
        %v8892 = vsel %vm3210, %v8816, 0.0
        %v8893 = vadd.f32 %v8891, %v8892
        %v8894 = vsel %vm3210, %v8817, 0.0
        %v8895 = vadd.f32 %v8893, %v8894
        %v8896 = vsel %vm3210, %v8818, 0.0
        %v8897 = vadd.f32 %v8895, %v8896
        %v8898 = vsel %vm3210, %v8819, 0.0
        %v8899 = vadd.f32 %v8897, %v8898
        %v8900 = vsel %vm3210, %v8820, 0.0
        %v8901 = vadd.f32 %v8899, %v8900
        %v8902 = vsel %vm3210, %v8821, 0.0
        %v8903 = vadd.f32 %v8901, %v8902
        %v8904 = vsel %vm3210, %v8822, 0.0
        %v8905 = vadd.f32 %v8903, %v8904
        %v8906 = vsel %vm3210, %v8823, 0.0
        %v8907 = vadd.f32 %v8905, %v8906
        %v8908 = vsel %vm3210, %v8824, 0.0
        %v8909 = vadd.f32 %v8907, %v8908
        %v8910 = vsel %vm3210, %v8825, 0.0
        %v8911 = vadd.f32 %v8909, %v8910
        %v8912 = vsel %vm3210, %v8826, 0.0
        %v8913 = vadd.f32 %v8911, %v8912
        %v8914 = vsel %vm3210, %v8827, 0.0
        %v8915 = vadd.f32 %v8913, %v8914
        %v8916 = vsel %vm3210, %v8828, 0.0
        %v8917 = vadd.f32 %v8915, %v8916
        %v8918 = vsel %vm3210, %v8829, 0.0
        %v8919 = vadd.f32 %v8917, %v8918
        %v8920 = vsel %vm3210, %v8830, 0.0
        %v8921 = vadd.f32 %v8919, %v8920
        %v8922 = vsel %vm3210, %v8831, 0.0
        %v8923 = vadd.f32 %v8921, %v8922
        %v8924 = vsel %vm3210, %v8832, 0.0
        %v8925 = vadd.f32 %v8923, %v8924
        %v8926 = vsel %vm3210, %v8833, 0.0
        %v8927 = vadd.f32 %v8925, %v8926
        %v8928 = vsel %vm3210, %v8834, 0.0
        %v8929 = vadd.f32 %v8927, %v8928
        %v8930 = vrot.slane %v8929, 4
        %v8931 = vadd.f32 %v8929, %v8930
        %v8932 = vrot.slane %v8931, 2
        %v8933 = vadd.f32 %v8931, %v8932
        %v8934 = vrot.slane %v8933, 1
        %v8935 = vadd.f32 %v8933, %v8934
        %v8936 = vsel %vm3210, %v8835, 0.0
        %v8937 = vsel %vm3210, %v8836, 0.0
        %v8938 = vadd.f32 %v8936, %v8937
        %v8939 = vsel %vm3210, %v8837, 0.0
        %v8940 = vadd.f32 %v8938, %v8939
        %v8941 = vsel %vm3210, %v8838, 0.0
        %v8942 = vadd.f32 %v8940, %v8941
        %v8943 = vsel %vm3210, %v8839, 0.0
        %v8944 = vadd.f32 %v8942, %v8943
        %v8945 = vsel %vm3210, %v8840, 0.0
        %v8946 = vadd.f32 %v8944, %v8945
        %v8947 = vsel %vm3210, %v8841, 0.0
        %v8948 = vadd.f32 %v8946, %v8947
        %v8949 = vsel %vm3210, %v8842, 0.0
        %v8950 = vadd.f32 %v8948, %v8949
        %v8951 = vsel %vm3210, %v8843, 0.0
        %v8952 = vadd.f32 %v8950, %v8951
        %v8953 = vsel %vm3210, %v8844, 0.0
        %v8954 = vadd.f32 %v8952, %v8953
        %v8955 = vsel %vm3210, %v8845, 0.0
        %v8956 = vadd.f32 %v8954, %v8955
        %v8957 = vsel %vm3210, %v8846, 0.0
        %v8958 = vadd.f32 %v8956, %v8957
        %v8959 = vsel %vm3210, %v8847, 0.0
        %v8960 = vadd.f32 %v8958, %v8959
        %v8961 = vsel %vm3210, %v8848, 0.0
        %v8962 = vadd.f32 %v8960, %v8961
        %v8963 = vsel %vm3210, %v8849, 0.0
        %v8964 = vadd.f32 %v8962, %v8963
        %v8965 = vsel %vm3210, %v8850, 0.0
        %v8966 = vadd.f32 %v8964, %v8965
        %v8967 = vsel %vm3210, %v8851, 0.0
        %v8968 = vadd.f32 %v8966, %v8967
        %v8969 = vsel %vm3210, %v8852, 0.0
        %v8970 = vadd.f32 %v8968, %v8969
        %v8971 = vsel %vm3210, %v8853, 0.0
        %v8972 = vadd.f32 %v8970, %v8971
        %v8973 = vsel %vm3210, %v8854, 0.0
        %v8974 = vadd.f32 %v8972, %v8973
        %v8975 = vsel %vm3210, %v8855, 0.0
        %v8976 = vadd.f32 %v8974, %v8975
        %v8977 = vsel %vm3210, %v8856, 0.0
        %v8978 = vadd.f32 %v8976, %v8977
        %v8979 = vsel %vm3210, %v8857, 0.0
        %v8980 = vadd.f32 %v8978, %v8979
        %v8981 = vsel %vm3210, %v8858, 0.0
        %v8982 = vadd.f32 %v8980, %v8981
        %v8983 = vsel %vm3210, %v8859, 0.0
        %v8984 = vadd.f32 %v8982, %v8983
        %v8985 = vsel %vm3210, %v8860, 0.0
        %v8986 = vadd.f32 %v8984, %v8985
        %v8987 = vsel %vm3210, %v8861, 0.0
        %v8988 = vadd.f32 %v8986, %v8987
        %v8989 = vsel %vm3210, %v8862, 0.0
        %v8990 = vadd.f32 %v8988, %v8989
        %v8991 = vsel %vm3210, %v8863, 0.0
        %v8992 = vadd.f32 %v8990, %v8991
        %v8993 = vsel %vm3210, %v8864, 0.0
        %v8994 = vadd.f32 %v8992, %v8993
        %v8995 = vsel %vm3210, %v8865, 0.0
        %v8996 = vadd.f32 %v8994, %v8995
        %v8997 = vsel %vm3210, %v8866, 0.0
        %v8998 = vadd.f32 %v8996, %v8997
        %v8999 = vrot.slane %v8998, 4
        %v9000 = vadd.f32 %v8998, %v8999
        %v9001 = vrot.slane %v9000, 2
        %v9002 = vadd.f32 %v9000, %v9001
        %v9003 = vrot.slane %v9002, 1
        %v9004 = vadd.f32 %v9002, %v9003
        %v9005 = vmul.f32 %v8662, 256.0
        %v9007 = vlaneseq
        %v9008 = vshrl.u32 %v9007, 7
        %v9009 = vsub.s32 0, %v9008
        %v9010 = vrot.slane %v9005, %v9009
        %v9012 = vadd.f32 %v8733, %v9010
        %v9013 = vadd.f32 %v8802, %v9010
        %v9014 = vmul.f32 %v8662, 2.0
        %v9016 = vlaneseq
        %v9017 = vshrl.u32 %v9016, 7
        %v9018 = vsub.s32 0, %v9017
        %v9019 = vrot.slane %v9014, %v9018
        %v9023 = vsel %vm4448, %v8802, %v8733
        %v9025 = vmul.f32 %v9019, %v9023
        %v9027 = vrot.slane %v9025, 1
        %v9030 = vadd.f32 %v8935, %v9025
        %v9031 = vadd.f32 %v9004, %v9027
        %v9032 = vmul.f32 %v8662, %v8662
        %v9033 = vmul.f32 %v9032, 256.0
        %v9035 = vlaneseq
        %v9036 = vshrl.u32 %v9035, 7
        %v9037 = vsub.s32 0, %v9036
        %v9038 = vrot.slane %v9033, %v9037
        %v9040 = vadd.f32 %v9030, %v9038
        %v9041 = vadd.f32 %v9031, %v9038
        %v9044 = vrot.slane %v9013, 7
        %v9045 = vsel %vm4448, %v9044, %v9012
        %v9047 = vsel %vm4473, %v9045, 0.0
        %9048 = vadd.xlane.f32.xlu0 %v9047
        %v9049 = vpop.xlane.xlu0 %9048
        %v9052 = vrot.slane %v9041, 7
        %v9053 = vsel %vm4448, %v9052, %v9040
        %v9055 = vsel %vm4473, %v9053, 0.0
        %9056 = vadd.xlane.f32.xlu0 %v9055
        %v9057 = vpop.xlane.xlu0 %9056
        %v9058 = vmul.f32 %v9049, %v4485
        %v9059 = vmul.f32 %v9057, %v4485
        %v9060 = vmul.f32 %v9058, %v9058
        %v9061 = vsub.f32 %v9059, %v9060
        %v9062 = vadd.f32 %v9061, 1e-05
        %v9063 = vrsqrt.pop %v9062
        %v9065 = vlaneseq
        %v9066 = vshrl.u32 %v9065, 7
        %v9067 = vsub.s32 0, %v9066
        %v9068 = vrot.slane %v8663, %v9067
        %v9070 = vmul.f32 %v9063, %v9068
        %v9072 = vlaneseq
        %v9073 = vshrl.u32 %v9072, 7
        %v9074 = vsub.s32 0, %v9073
        %v9075 = vrot.slane %v8662, %v9074
        %v9077 = vsub.f32 %v9075, %v9058
        %v9078 = vmul.f32 %v9077, %v9070
        %v9080 = vlaneseq
        %v9081 = vshrl.u32 %v9080, 7
        %v9082 = vsub.s32 0, %v9081
        %v9083 = vrot.slane %v8664, %v9082
        %v9085 = vadd.f32 %v9078, %v9083
        %9086 = vrot.lane.b32.xlu0 %v9045, 112
        %v9087 = vpop.permute.xlu0 %9086
        %v9089 = vsel %vm4473, %v9087, 0.0
        %9090 = vadd.xlane.f32.xlu0 %v9089
        %v9091 = vpop.xlane.xlu0 %9090
        %9092 = vrot.lane.b32.xlu0 %v9053, 112
        %v9093 = vpop.permute.xlu0 %9092
        %v9095 = vsel %vm4473, %v9093, 0.0
        %9096 = vadd.xlane.f32.xlu0 %v9095
        %v9097 = vpop.xlane.xlu0 %9096
        %v9098 = vmul.f32 %v9091, %v4485
        %v9099 = vmul.f32 %v9097, %v4485
        %v9100 = vmul.f32 %v9098, %v9098
        %v9101 = vsub.f32 %v9099, %v9100
        %v9102 = vadd.f32 %v9101, 1e-05
        %v9103 = vrsqrt.pop %v9102
        %v9104 = vmul.f32 %v9103, %v9068
        %v9105 = vsub.f32 %v9075, %v9098
        %v9106 = vmul.f32 %v9105, %v9104
        %v9107 = vadd.f32 %v9106, %v9083
        %v9108 = vsel %vm2918, %v9070, %v9104
        %v9109 = vsel %vm2918, %v9085, %v9107
        %v9112 = vunpack.c.l.s4 1966171168
        %v9113 = vunpack.c.0.s8 %v9112
        %v9114 = vlaneseq
        %v9115 = vshrl.u32 %v9114, 7
        %v9116 = vsub.s32 %v9113, %v9115
        %v9117 = vrot.slane %v9108, %v9116
        %v9118 = vcombine.high %v9117, %v9117
        %v9120 = vunpack.c.l.s4 1966171168
        %v9121 = vunpack.c.0.s8 %v9120
        %v9122 = vlaneseq
        %v9123 = vshrl.u32 %v9122, 7
        %v9124 = vsub.s32 %v9121, %v9123
        %v9125 = vrot.slane %v9117, %v9124
        %v9127 = vunpack.c.l.s4 1966171168
        %v9128 = vunpack.c.0.s8 %v9127
        %v9129 = vlaneseq
        %v9130 = vshrl.u32 %v9129, 7
        %v9131 = vsub.s32 %v9128, %v9130
        %v9132 = vrot.slane %v9118, %v9131
        %v9133 = vlaneseq
        %v9134 = vshrl.u32 %v9133, 7
        %v9135 = vsub.s32 0, %v9134
        %v9136 = vrot.slane %v9125, %v9135
        %v9137 = vlaneseq
        %v9138 = vshrl.u32 %v9137, 7
        %v9139 = vsub.s32 0, %v9138
        %v9140 = vrot.slane %v9132, %v9139
        %v9143 = vmul.f32 %v8408, %v9136
        %v9144 = vmul.f32 %v8411, %v9136
        %v9145 = vmul.f32 %v8416, %v9136
        %v9146 = vmul.f32 %v8419, %v9136
        %v9147 = vmul.f32 %v8424, %v9136
        %v9148 = vmul.f32 %v8427, %v9136
        %v9149 = vmul.f32 %v8432, %v9136
        %v9150 = vmul.f32 %v8435, %v9136
        %v9151 = vmul.f32 %v8440, %v9136
        %v9152 = vmul.f32 %v8443, %v9136
        %v9153 = vmul.f32 %v8448, %v9136
        %v9154 = vmul.f32 %v8451, %v9136
        %v9155 = vmul.f32 %v8456, %v9136
        %v9156 = vmul.f32 %v8459, %v9136
        %v9157 = vmul.f32 %v8464, %v9136
        %v9158 = vmul.f32 %v8467, %v9136
        %v9159 = vmul.f32 %v8472, %v9136
        %v9160 = vmul.f32 %v8475, %v9136
        %v9161 = vmul.f32 %v8480, %v9136
        %v9162 = vmul.f32 %v8483, %v9136
        %v9163 = vmul.f32 %v8488, %v9136
        %v9164 = vmul.f32 %v8491, %v9136
        %v9165 = vmul.f32 %v8496, %v9136
        %v9166 = vmul.f32 %v8499, %v9136
        %v9167 = vmul.f32 %v8504, %v9136
        %v9168 = vmul.f32 %v8507, %v9136
        %v9169 = vmul.f32 %v8512, %v9136
        %v9170 = vmul.f32 %v8515, %v9136
        %v9171 = vmul.f32 %v8520, %v9136
        %v9172 = vmul.f32 %v8523, %v9136
        %v9173 = vmul.f32 %v8528, %v9136
        %v9174 = vmul.f32 %v8531, %v9136
        %v9175 = vmul.f32 %v8536, %v9140
        %v9176 = vmul.f32 %v8539, %v9140
        %v9177 = vmul.f32 %v8544, %v9140
        %v9178 = vmul.f32 %v8547, %v9140
        %v9179 = vmul.f32 %v8552, %v9140
        %v9180 = vmul.f32 %v8555, %v9140
        %v9181 = vmul.f32 %v8560, %v9140
        %v9182 = vmul.f32 %v8563, %v9140
        %v9183 = vmul.f32 %v8568, %v9140
        %v9184 = vmul.f32 %v8571, %v9140
        %v9185 = vmul.f32 %v8576, %v9140
        %v9186 = vmul.f32 %v8579, %v9140
        %v9187 = vmul.f32 %v8584, %v9140
        %v9188 = vmul.f32 %v8587, %v9140
        %v9189 = vmul.f32 %v8592, %v9140
        %v9190 = vmul.f32 %v8595, %v9140
        %v9191 = vmul.f32 %v8600, %v9140
        %v9192 = vmul.f32 %v8603, %v9140
        %v9193 = vmul.f32 %v8608, %v9140
        %v9194 = vmul.f32 %v8611, %v9140
        %v9195 = vmul.f32 %v8616, %v9140
        %v9196 = vmul.f32 %v8619, %v9140
        %v9197 = vmul.f32 %v8624, %v9140
        %v9198 = vmul.f32 %v8627, %v9140
        %v9199 = vmul.f32 %v8632, %v9140
        %v9200 = vmul.f32 %v8635, %v9140
        %v9201 = vmul.f32 %v8640, %v9140
        %v9202 = vmul.f32 %v8643, %v9140
        %v9203 = vmul.f32 %v8648, %v9140
        %v9204 = vmul.f32 %v8651, %v9140
        %v9205 = vmul.f32 %v8656, %v9140
        %v9206 = vmul.f32 %v8659, %v9140
        %v9209 = vunpack.c.l.s4 1966171168
        %v9210 = vunpack.c.0.s8 %v9209
        %v9211 = vlaneseq
        %v9212 = vshrl.u32 %v9211, 7
        %v9213 = vsub.s32 %v9210, %v9212
        %v9214 = vrot.slane %v9109, %v9213
        %v9215 = vcombine.high %v9214, %v9214
        %v9217 = vunpack.c.l.s4 1966171168
        %v9218 = vunpack.c.0.s8 %v9217
        %v9219 = vlaneseq
        %v9220 = vshrl.u32 %v9219, 7
        %v9221 = vsub.s32 %v9218, %v9220
        %v9222 = vrot.slane %v9214, %v9221
        %v9224 = vunpack.c.l.s4 1966171168
        %v9225 = vunpack.c.0.s8 %v9224
        %v9226 = vlaneseq
        %v9227 = vshrl.u32 %v9226, 7
        %v9228 = vsub.s32 %v9225, %v9227
        %v9229 = vrot.slane %v9215, %v9228
        %v9230 = vlaneseq
        %v9231 = vshrl.u32 %v9230, 7
        %v9232 = vsub.s32 0, %v9231
        %v9233 = vrot.slane %v9222, %v9232
        %v9234 = vlaneseq
        %v9235 = vshrl.u32 %v9234, 7
        %v9236 = vsub.s32 0, %v9235
        %v9237 = vrot.slane %v9229, %v9236
        %v9240 = vadd.f32 %v9143, %v9233
        %v9241 = vadd.f32 %v9144, %v9233
        %v9242 = vadd.f32 %v9145, %v9233
        %v9243 = vadd.f32 %v9146, %v9233
        %v9244 = vadd.f32 %v9147, %v9233
        %v9245 = vadd.f32 %v9148, %v9233
        %v9246 = vadd.f32 %v9149, %v9233
        %v9247 = vadd.f32 %v9150, %v9233
        %v9248 = vadd.f32 %v9151, %v9233
        %v9249 = vadd.f32 %v9152, %v9233
        %v9250 = vadd.f32 %v9153, %v9233
        %v9251 = vadd.f32 %v9154, %v9233
        %v9252 = vadd.f32 %v9155, %v9233
        %v9253 = vadd.f32 %v9156, %v9233
        %v9254 = vadd.f32 %v9157, %v9233
        %v9255 = vadd.f32 %v9158, %v9233
        %v9256 = vadd.f32 %v9159, %v9233
        %v9257 = vadd.f32 %v9160, %v9233
        %v9258 = vadd.f32 %v9161, %v9233
        %v9259 = vadd.f32 %v9162, %v9233
        %v9260 = vadd.f32 %v9163, %v9233
        %v9261 = vadd.f32 %v9164, %v9233
        %v9262 = vadd.f32 %v9165, %v9233
        %v9263 = vadd.f32 %v9166, %v9233
        %v9264 = vadd.f32 %v9167, %v9233
        %v9265 = vadd.f32 %v9168, %v9233
        %v9266 = vadd.f32 %v9169, %v9233
        %v9267 = vadd.f32 %v9170, %v9233
        %v9268 = vadd.f32 %v9171, %v9233
        %v9269 = vadd.f32 %v9172, %v9233
        %v9270 = vadd.f32 %v9173, %v9233
        %v9271 = vadd.f32 %v9174, %v9233
        %v9272 = vadd.f32 %v9175, %v9237
        %v9273 = vadd.f32 %v9176, %v9237
        %v9274 = vadd.f32 %v9177, %v9237
        %v9275 = vadd.f32 %v9178, %v9237
        %v9276 = vadd.f32 %v9179, %v9237
        %v9277 = vadd.f32 %v9180, %v9237
        %v9278 = vadd.f32 %v9181, %v9237
        %v9279 = vadd.f32 %v9182, %v9237
        %v9280 = vadd.f32 %v9183, %v9237
        %v9281 = vadd.f32 %v9184, %v9237
        %v9282 = vadd.f32 %v9185, %v9237
        %v9283 = vadd.f32 %v9186, %v9237
        %v9284 = vadd.f32 %v9187, %v9237
        %v9285 = vadd.f32 %v9188, %v9237
        %v9286 = vadd.f32 %v9189, %v9237
        %v9287 = vadd.f32 %v9190, %v9237
        %v9288 = vadd.f32 %v9191, %v9237
        %v9289 = vadd.f32 %v9192, %v9237
        %v9290 = vadd.f32 %v9193, %v9237
        %v9291 = vadd.f32 %v9194, %v9237
        %v9292 = vadd.f32 %v9195, %v9237
        %v9293 = vadd.f32 %v9196, %v9237
        %v9294 = vadd.f32 %v9197, %v9237
        %v9295 = vadd.f32 %v9198, %v9237
        %v9296 = vadd.f32 %v9199, %v9237
        %v9297 = vadd.f32 %v9200, %v9237
        %v9298 = vadd.f32 %v9201, %v9237
        %v9299 = vadd.f32 %v9202, %v9237
        %v9300 = vadd.f32 %v9203, %v9237
        %v9301 = vadd.f32 %v9204, %v9237
        %v9302 = vadd.f32 %v9205, %v9237
        %v9303 = vadd.f32 %v9206, %v9237
        %v9304 = vtanh.pop %v9240
        %v9305 = vtanh.pop %v9241
        %v9306 = vtanh.pop %v9242
        %v9307 = vtanh.pop %v9243
        %v9308 = vtanh.pop %v9244
        %v9309 = vtanh.pop %v9245
        %v9310 = vtanh.pop %v9246
        %v9311 = vtanh.pop %v9247
        %v9312 = vtanh.pop %v9248
        %v9313 = vtanh.pop %v9249
        %v9314 = vtanh.pop %v9250
        %v9315 = vtanh.pop %v9251
        %v9316 = vtanh.pop %v9252
        %v9317 = vtanh.pop %v9253
        %v9318 = vtanh.pop %v9254
        %v9319 = vtanh.pop %v9255
        %v9320 = vtanh.pop %v9256
        %v9321 = vtanh.pop %v9257
        %v9322 = vtanh.pop %v9258
        %v9323 = vtanh.pop %v9259
        %v9324 = vtanh.pop %v9260
        %v9325 = vtanh.pop %v9261
        %v9326 = vtanh.pop %v9262
        %v9327 = vtanh.pop %v9263
        %v9328 = vtanh.pop %v9264
        %v9329 = vtanh.pop %v9265
        %v9330 = vtanh.pop %v9266
        %v9331 = vtanh.pop %v9267
        %v9332 = vtanh.pop %v9268
        %v9333 = vtanh.pop %v9269
        %v9334 = vtanh.pop %v9270
        %v9335 = vtanh.pop %v9271
        %v9336 = vtanh.pop %v9272
        %v9337 = vtanh.pop %v9273
        %v9338 = vtanh.pop %v9274
        %v9339 = vtanh.pop %v9275
        %v9340 = vtanh.pop %v9276
        %v9341 = vtanh.pop %v9277
        %v9342 = vtanh.pop %v9278
        %v9343 = vtanh.pop %v9279
        %v9344 = vtanh.pop %v9280
        %v9345 = vtanh.pop %v9281
        %v9346 = vtanh.pop %v9282
        %v9347 = vtanh.pop %v9283
        %v9348 = vtanh.pop %v9284
        %v9349 = vtanh.pop %v9285
        %v9350 = vtanh.pop %v9286
        %v9351 = vtanh.pop %v9287
        %v9352 = vtanh.pop %v9288
        %v9353 = vtanh.pop %v9289
        %v9354 = vtanh.pop %v9290
        %v9355 = vtanh.pop %v9291
        %v9356 = vtanh.pop %v9292
        %v9357 = vtanh.pop %v9293
        %v9358 = vtanh.pop %v9294
        %v9359 = vtanh.pop %v9295
        %v9360 = vtanh.pop %v9296
        %v9361 = vtanh.pop %v9297
        %v9362 = vtanh.pop %v9298
        %v9363 = vtanh.pop %v9299
        %v9364 = vtanh.pop %v9300
        %v9365 = vtanh.pop %v9301
        %v9366 = vtanh.pop %v9302
        %v9367 = vtanh.pop %v9303
        %v9368 = vsub.f32 %v9304, %v641
        %v9369 = vsub.f32 %v9305, %v642
        %v9370 = vsub.f32 %v9306, %v643
        %v9371 = vsub.f32 %v9307, %v644
        %v9372 = vsub.f32 %v9308, %v645
        %v9373 = vsub.f32 %v9309, %v646
        %v9374 = vsub.f32 %v9310, %v647
        %v9375 = vsub.f32 %v9311, %v648
        %v9376 = vsub.f32 %v9312, %v649
        %v9377 = vsub.f32 %v9313, %v650
        %v9378 = vsub.f32 %v9314, %v651
        %v9379 = vsub.f32 %v9315, %v652
        %v9380 = vsub.f32 %v9316, %v653
        %v9381 = vsub.f32 %v9317, %v654
        %v9382 = vsub.f32 %v9318, %v655
        %v9383 = vsub.f32 %v9319, %v656
        %v9384 = vsub.f32 %v9320, %v657
        %v9385 = vsub.f32 %v9321, %v658
        %v9386 = vsub.f32 %v9322, %v659
        %v9387 = vsub.f32 %v9323, %v660
        %v9388 = vsub.f32 %v9324, %v661
        %v9389 = vsub.f32 %v9325, %v662
        %v9390 = vsub.f32 %v9326, %v663
        %v9391 = vsub.f32 %v9327, %v664
        %v9392 = vsub.f32 %v9328, %v665
        %v9393 = vsub.f32 %v9329, %v666
        %v9394 = vsub.f32 %v9330, %v667
        %v9395 = vsub.f32 %v9331, %v668
        %v9396 = vsub.f32 %v9332, %v669
        %v9397 = vsub.f32 %v9333, %v670
        %v9398 = vsub.f32 %v9334, %v671
        %v9399 = vsub.f32 %v9335, %v672
        %v9400 = vsub.f32 %v9336, %v673
        %v9401 = vsub.f32 %v9337, %v674
        %v9402 = vsub.f32 %v9338, %v675
        %v9403 = vsub.f32 %v9339, %v676
        %v9404 = vsub.f32 %v9340, %v677
        %v9405 = vsub.f32 %v9341, %v678
        %v9406 = vsub.f32 %v9342, %v679
        %v9407 = vsub.f32 %v9343, %v680
        %v9408 = vsub.f32 %v9344, %v681
        %v9409 = vsub.f32 %v9345, %v682
        %v9410 = vsub.f32 %v9346, %v683
        %v9411 = vsub.f32 %v9347, %v684
        %v9412 = vsub.f32 %v9348, %v685
        %v9413 = vsub.f32 %v9349, %v686
        %v9414 = vsub.f32 %v9350, %v687
        %v9415 = vsub.f32 %v9351, %v688
        %v9416 = vsub.f32 %v9352, %v689
        %v9417 = vsub.f32 %v9353, %v690
        %v9418 = vsub.f32 %v9354, %v691
        %v9419 = vsub.f32 %v9355, %v692
        %v9420 = vsub.f32 %v9356, %v693
        %v9421 = vsub.f32 %v9357, %v694
        %v9422 = vsub.f32 %v9358, %v695
        %v9423 = vsub.f32 %v9359, %v696
        %v9424 = vsub.f32 %v9360, %v697
        %v9425 = vsub.f32 %v9361, %v698
        %v9426 = vsub.f32 %v9362, %v699
        %v9427 = vsub.f32 %v9363, %v700
        %v9428 = vsub.f32 %v9364, %v701
        %v9429 = vsub.f32 %v9365, %v702
        %v9430 = vsub.f32 %v9366, %v703
        %v9431 = vsub.f32 %v9367, %v704
        %v9432 = vmul.f32 %v4973, %v9368
        %v9433 = vmul.f32 %v4974, %v9369
        %v9434 = vmul.f32 %v4975, %v9370
        %v9435 = vmul.f32 %v4976, %v9371
        %v9436 = vmul.f32 %v4977, %v9372
        %v9437 = vmul.f32 %v4978, %v9373
        %v9438 = vmul.f32 %v4979, %v9374
        %v9439 = vmul.f32 %v4980, %v9375
        %v9440 = vmul.f32 %v4981, %v9376
        %v9441 = vmul.f32 %v4982, %v9377
        %v9442 = vmul.f32 %v4983, %v9378
        %v9443 = vmul.f32 %v4984, %v9379
        %v9444 = vmul.f32 %v4985, %v9380
        %v9445 = vmul.f32 %v4986, %v9381
        %v9446 = vmul.f32 %v4987, %v9382
        %v9447 = vmul.f32 %v4988, %v9383
        %v9448 = vmul.f32 %v4989, %v9384
        %v9449 = vmul.f32 %v4990, %v9385
        %v9450 = vmul.f32 %v4991, %v9386
        %v9451 = vmul.f32 %v4992, %v9387
        %v9452 = vmul.f32 %v4993, %v9388
        %v9453 = vmul.f32 %v4994, %v9389
        %v9454 = vmul.f32 %v4995, %v9390
        %v9455 = vmul.f32 %v4996, %v9391
        %v9456 = vmul.f32 %v4997, %v9392
        %v9457 = vmul.f32 %v4998, %v9393
        %v9458 = vmul.f32 %v4999, %v9394
        %v9459 = vmul.f32 %v5000, %v9395
        %v9460 = vmul.f32 %v5001, %v9396
        %v9461 = vmul.f32 %v5002, %v9397
        %v9462 = vmul.f32 %v5003, %v9398
        %v9463 = vmul.f32 %v5004, %v9399
        %v9464 = vmul.f32 %v5005, %v9400
        %v9465 = vmul.f32 %v5006, %v9401
        %v9466 = vmul.f32 %v5007, %v9402
        %v9467 = vmul.f32 %v5008, %v9403
        %v9468 = vmul.f32 %v5009, %v9404
        %v9469 = vmul.f32 %v5010, %v9405
        %v9470 = vmul.f32 %v5011, %v9406
        %v9471 = vmul.f32 %v5012, %v9407
        %v9472 = vmul.f32 %v5013, %v9408
        %v9473 = vmul.f32 %v5014, %v9409
        %v9474 = vmul.f32 %v5015, %v9410
        %v9475 = vmul.f32 %v5016, %v9411
        %v9476 = vmul.f32 %v5017, %v9412
        %v9477 = vmul.f32 %v5018, %v9413
        %v9478 = vmul.f32 %v5019, %v9414
        %v9479 = vmul.f32 %v5020, %v9415
        %v9480 = vmul.f32 %v5021, %v9416
        %v9481 = vmul.f32 %v5022, %v9417
        %v9482 = vmul.f32 %v5023, %v9418
        %v9483 = vmul.f32 %v5024, %v9419
        %v9484 = vmul.f32 %v5025, %v9420
        %v9485 = vmul.f32 %v5026, %v9421
        %v9486 = vmul.f32 %v5027, %v9422
        %v9487 = vmul.f32 %v5028, %v9423
        %v9488 = vmul.f32 %v5029, %v9424
        %v9489 = vmul.f32 %v5030, %v9425
        %v9490 = vmul.f32 %v5031, %v9426
        %v9491 = vmul.f32 %v5032, %v9427
        %v9492 = vmul.f32 %v5033, %v9428
        %v9493 = vmul.f32 %v5034, %v9429
        %v9494 = vmul.f32 %v5035, %v9430
        %v9495 = vmul.f32 %v5036, %v9431
        %v9496 = vadd.f32 %v641, %v9432
        %v9497 = vadd.f32 %v642, %v9433
        %v9498 = vadd.f32 %v643, %v9434
        %v9499 = vadd.f32 %v644, %v9435
        %v9500 = vadd.f32 %v645, %v9436
        %v9501 = vadd.f32 %v646, %v9437
        %v9502 = vadd.f32 %v647, %v9438
        %v9503 = vadd.f32 %v648, %v9439
        %v9504 = vadd.f32 %v649, %v9440
        %v9505 = vadd.f32 %v650, %v9441
        %v9506 = vadd.f32 %v651, %v9442
        %v9507 = vadd.f32 %v652, %v9443
        %v9508 = vadd.f32 %v653, %v9444
        %v9509 = vadd.f32 %v654, %v9445
        %v9510 = vadd.f32 %v655, %v9446
        %v9511 = vadd.f32 %v656, %v9447
        %v9512 = vadd.f32 %v657, %v9448
        %v9513 = vadd.f32 %v658, %v9449
        %v9514 = vadd.f32 %v659, %v9450
        %v9515 = vadd.f32 %v660, %v9451
        %v9516 = vadd.f32 %v661, %v9452
        %v9517 = vadd.f32 %v662, %v9453
        %v9518 = vadd.f32 %v663, %v9454
        %v9519 = vadd.f32 %v664, %v9455
        %v9520 = vadd.f32 %v665, %v9456
        %v9521 = vadd.f32 %v666, %v9457
        %v9522 = vadd.f32 %v667, %v9458
        %v9523 = vadd.f32 %v668, %v9459
        %v9524 = vadd.f32 %v669, %v9460
        %v9525 = vadd.f32 %v670, %v9461
        %v9526 = vadd.f32 %v671, %v9462
        %v9527 = vadd.f32 %v672, %v9463
        %v9528 = vadd.f32 %v673, %v9464
        %v9529 = vadd.f32 %v674, %v9465
        %v9530 = vadd.f32 %v675, %v9466
        %v9531 = vadd.f32 %v676, %v9467
        %v9532 = vadd.f32 %v677, %v9468
        %v9533 = vadd.f32 %v678, %v9469
        %v9534 = vadd.f32 %v679, %v9470
        %v9535 = vadd.f32 %v680, %v9471
        %v9536 = vadd.f32 %v681, %v9472
        %v9537 = vadd.f32 %v682, %v9473
        %v9538 = vadd.f32 %v683, %v9474
        %v9539 = vadd.f32 %v684, %v9475
        %v9540 = vadd.f32 %v685, %v9476
        %v9541 = vadd.f32 %v686, %v9477
        %v9542 = vadd.f32 %v687, %v9478
        %v9543 = vadd.f32 %v688, %v9479
        %v9544 = vadd.f32 %v689, %v9480
        %v9545 = vadd.f32 %v690, %v9481
        %v9546 = vadd.f32 %v691, %v9482
        %v9547 = vadd.f32 %v692, %v9483
        %v9548 = vadd.f32 %v693, %v9484
        %v9549 = vadd.f32 %v694, %v9485
        %v9550 = vadd.f32 %v695, %v9486
        %v9551 = vadd.f32 %v696, %v9487
        %v9552 = vadd.f32 %v697, %v9488
        %v9553 = vadd.f32 %v698, %v9489
        %v9554 = vadd.f32 %v699, %v9490
        %v9555 = vadd.f32 %v700, %v9491
        %v9556 = vadd.f32 %v701, %v9492
        %v9557 = vadd.f32 %v702, %v9493
        %v9558 = vadd.f32 %v703, %v9494
        %v9559 = vadd.f32 %v704, %v9495
        %9560 = vst.msk [vmem:[#allocation2] sm:$0xff] %vm3210, %v9496
        %9561 = vst.msk [vmem:[#allocation2 + $0x8] sm:$0xff] %vm3210, %v9497
        %9562 = vst.msk [vmem:[#allocation2 + $0x10] sm:$0xff] %vm3210, %v9498
        %9563 = vst.msk [vmem:[#allocation2 + $0x18] sm:$0xff] %vm3210, %v9499
        %9564 = vst.msk [vmem:[#allocation2 + $0x20] sm:$0xff] %vm3210, %v9500
        %9565 = vst.msk [vmem:[#allocation2 + $0x28] sm:$0xff] %vm3210, %v9501
        %9566 = vst.msk [vmem:[#allocation2 + $0x30] sm:$0xff] %vm3210, %v9502
        %9567 = vst.msk [vmem:[#allocation2 + $0x38] sm:$0xff] %vm3210, %v9503
        %9568 = vst.msk [vmem:[#allocation2 + $0x40] sm:$0xff] %vm3210, %v9504
        %9569 = vst.msk [vmem:[#allocation2 + $0x48] sm:$0xff] %vm3210, %v9505
        %9570 = vst.msk [vmem:[#allocation2 + $0x50] sm:$0xff] %vm3210, %v9506
        %9571 = vst.msk [vmem:[#allocation2 + $0x58] sm:$0xff] %vm3210, %v9507
        %9572 = vst.msk [vmem:[#allocation2 + $0x60] sm:$0xff] %vm3210, %v9508
        %9573 = vst.msk [vmem:[#allocation2 + $0x68] sm:$0xff] %vm3210, %v9509
        %9574 = vst.msk [vmem:[#allocation2 + $0x70] sm:$0xff] %vm3210, %v9510
        %9575 = vst.msk [vmem:[#allocation2 + $0x78] sm:$0xff] %vm3210, %v9511
        %9576 = vst.msk [vmem:[#allocation2 + $0x80] sm:$0xff] %vm3210, %v9512
        %9577 = vst.msk [vmem:[#allocation2 + $0x88] sm:$0xff] %vm3210, %v9513
        %9578 = vst.msk [vmem:[#allocation2 + $0x90] sm:$0xff] %vm3210, %v9514
        %9579 = vst.msk [vmem:[#allocation2 + $0x98] sm:$0xff] %vm3210, %v9515
        %9580 = vst.msk [vmem:[#allocation2 + $0xa0] sm:$0xff] %vm3210, %v9516
        %9581 = vst.msk [vmem:[#allocation2 + $0xa8] sm:$0xff] %vm3210, %v9517
        %9582 = vst.msk [vmem:[#allocation2 + $0xb0] sm:$0xff] %vm3210, %v9518
        %9583 = vst.msk [vmem:[#allocation2 + $0xb8] sm:$0xff] %vm3210, %v9519
        %9584 = vst.msk [vmem:[#allocation2 + $0xc0] sm:$0xff] %vm3210, %v9520
        %9585 = vst.msk [vmem:[#allocation2 + $0xc8] sm:$0xff] %vm3210, %v9521
        %9586 = vst.msk [vmem:[#allocation2 + $0xd0] sm:$0xff] %vm3210, %v9522
        %9587 = vst.msk [vmem:[#allocation2 + $0xd8] sm:$0xff] %vm3210, %v9523
        %9588 = vst.msk [vmem:[#allocation2 + $0xe0] sm:$0xff] %vm3210, %v9524
        %9589 = vst.msk [vmem:[#allocation2 + $0xe8] sm:$0xff] %vm3210, %v9525
        %9590 = vst.msk [vmem:[#allocation2 + $0xf0] sm:$0xff] %vm3210, %v9526
        %9591 = vst.msk [vmem:[#allocation2 + $0xf8] sm:$0xff] %vm3210, %v9527
        %9592 = vst.msk [vmem:[#allocation2 + $0x100] sm:$0xff] %vm3210, %v9528
        %9593 = vst.msk [vmem:[#allocation2 + $0x108] sm:$0xff] %vm3210, %v9529
        %9594 = vst.msk [vmem:[#allocation2 + $0x110] sm:$0xff] %vm3210, %v9530
        %9595 = vst.msk [vmem:[#allocation2 + $0x118] sm:$0xff] %vm3210, %v9531
        %9596 = vst.msk [vmem:[#allocation2 + $0x120] sm:$0xff] %vm3210, %v9532
        %9597 = vst.msk [vmem:[#allocation2 + $0x128] sm:$0xff] %vm3210, %v9533
        %9598 = vst.msk [vmem:[#allocation2 + $0x130] sm:$0xff] %vm3210, %v9534
        %9599 = vst.msk [vmem:[#allocation2 + $0x138] sm:$0xff] %vm3210, %v9535
        %9600 = vst.msk [vmem:[#allocation2 + $0x140] sm:$0xff] %vm3210, %v9536
        %9601 = vst.msk [vmem:[#allocation2 + $0x148] sm:$0xff] %vm3210, %v9537
        %9602 = vst.msk [vmem:[#allocation2 + $0x150] sm:$0xff] %vm3210, %v9538
        %9603 = vst.msk [vmem:[#allocation2 + $0x158] sm:$0xff] %vm3210, %v9539
        %9604 = vst.msk [vmem:[#allocation2 + $0x160] sm:$0xff] %vm3210, %v9540
        %9605 = vst.msk [vmem:[#allocation2 + $0x168] sm:$0xff] %vm3210, %v9541
        %9606 = vst.msk [vmem:[#allocation2 + $0x170] sm:$0xff] %vm3210, %v9542
        %9607 = vst.msk [vmem:[#allocation2 + $0x178] sm:$0xff] %vm3210, %v9543
        %9608 = vst.msk [vmem:[#allocation2 + $0x180] sm:$0xff] %vm3210, %v9544
        %9609 = vst.msk [vmem:[#allocation2 + $0x188] sm:$0xff] %vm3210, %v9545
        %9610 = vst.msk [vmem:[#allocation2 + $0x190] sm:$0xff] %vm3210, %v9546
        %9611 = vst.msk [vmem:[#allocation2 + $0x198] sm:$0xff] %vm3210, %v9547
        %9612 = vst.msk [vmem:[#allocation2 + $0x1a0] sm:$0xff] %vm3210, %v9548
        %9613 = vst.msk [vmem:[#allocation2 + $0x1a8] sm:$0xff] %vm3210, %v9549
        %9614 = vst.msk [vmem:[#allocation2 + $0x1b0] sm:$0xff] %vm3210, %v9550
        %9615 = vst.msk [vmem:[#allocation2 + $0x1b8] sm:$0xff] %vm3210, %v9551
        %9616 = vst.msk [vmem:[#allocation2 + $0x1c0] sm:$0xff] %vm3210, %v9552
        %9617 = vst.msk [vmem:[#allocation2 + $0x1c8] sm:$0xff] %vm3210, %v9553
        %9618 = vst.msk [vmem:[#allocation2 + $0x1d0] sm:$0xff] %vm3210, %v9554
        %9619 = vst.msk [vmem:[#allocation2 + $0x1d8] sm:$0xff] %vm3210, %v9555
        %9620 = vst.msk [vmem:[#allocation2 + $0x1e0] sm:$0xff] %vm3210, %v9556
        %9621 = vst.msk [vmem:[#allocation2 + $0x1e8] sm:$0xff] %vm3210, %v9557
        %9622 = vst.msk [vmem:[#allocation2 + $0x1f0] sm:$0xff] %vm3210, %v9558
        %9623 = vst.msk [vmem:[#allocation2 + $0x1f8] sm:$0xff] %vm3210, %v9559
        %9624 = vst.msk [vmem:[%s325] sm:$0xff] %vm3210, %v9496
        %9625 = vst.msk [vmem:[%s325 + $0x8] sm:$0xff] %vm3210, %v9497
        %9626 = vst.msk [vmem:[%s325 + $0x10] sm:$0xff] %vm3210, %v9498
        %9627 = vst.msk [vmem:[%s325 + $0x18] sm:$0xff] %vm3210, %v9499
        %9628 = vst.msk [vmem:[%s325 + $0x20] sm:$0xff] %vm3210, %v9500
        %9629 = vst.msk [vmem:[%s325 + $0x28] sm:$0xff] %vm3210, %v9501
        %9630 = vst.msk [vmem:[%s325 + $0x30] sm:$0xff] %vm3210, %v9502
        %9631 = vst.msk [vmem:[%s325 + $0x38] sm:$0xff] %vm3210, %v9503
        %9632 = vst.msk [vmem:[%s325 + $0x40] sm:$0xff] %vm3210, %v9504
        %9633 = vst.msk [vmem:[%s325 + $0x48] sm:$0xff] %vm3210, %v9505
        %9634 = vst.msk [vmem:[%s325 + $0x50] sm:$0xff] %vm3210, %v9506
        %9635 = vst.msk [vmem:[%s325 + $0x58] sm:$0xff] %vm3210, %v9507
        %9636 = vst.msk [vmem:[%s325 + $0x60] sm:$0xff] %vm3210, %v9508
        %9637 = vst.msk [vmem:[%s325 + $0x68] sm:$0xff] %vm3210, %v9509
        %9638 = vst.msk [vmem:[%s325 + $0x70] sm:$0xff] %vm3210, %v9510
        %9639 = vst.msk [vmem:[%s325 + $0x78] sm:$0xff] %vm3210, %v9511
        %9640 = vst.msk [vmem:[%s325 + $0x80] sm:$0xff] %vm3210, %v9512
        %9641 = vst.msk [vmem:[%s325 + $0x88] sm:$0xff] %vm3210, %v9513
        %9642 = vst.msk [vmem:[%s325 + $0x90] sm:$0xff] %vm3210, %v9514
        %9643 = vst.msk [vmem:[%s325 + $0x98] sm:$0xff] %vm3210, %v9515
        %9644 = vst.msk [vmem:[%s325 + $0xa0] sm:$0xff] %vm3210, %v9516
        %9645 = vst.msk [vmem:[%s325 + $0xa8] sm:$0xff] %vm3210, %v9517
        %9646 = vst.msk [vmem:[%s325 + $0xb0] sm:$0xff] %vm3210, %v9518
        %9647 = vst.msk [vmem:[%s325 + $0xb8] sm:$0xff] %vm3210, %v9519
        %9648 = vst.msk [vmem:[%s325 + $0xc0] sm:$0xff] %vm3210, %v9520
        %9649 = vst.msk [vmem:[%s325 + $0xc8] sm:$0xff] %vm3210, %v9521
        %9650 = vst.msk [vmem:[%s325 + $0xd0] sm:$0xff] %vm3210, %v9522
        %9651 = vst.msk [vmem:[%s325 + $0xd8] sm:$0xff] %vm3210, %v9523
        %9652 = vst.msk [vmem:[%s325 + $0xe0] sm:$0xff] %vm3210, %v9524
        %9653 = vst.msk [vmem:[%s325 + $0xe8] sm:$0xff] %vm3210, %v9525
        %9654 = vst.msk [vmem:[%s325 + $0xf0] sm:$0xff] %vm3210, %v9526
        %9655 = vst.msk [vmem:[%s325 + $0xf8] sm:$0xff] %vm3210, %v9527
        %9656 = vst.msk [vmem:[%s325 + $0x100] sm:$0xff] %vm3210, %v9528
        %9657 = vst.msk [vmem:[%s325 + $0x108] sm:$0xff] %vm3210, %v9529
        %9658 = vst.msk [vmem:[%s325 + $0x110] sm:$0xff] %vm3210, %v9530
        %9659 = vst.msk [vmem:[%s325 + $0x118] sm:$0xff] %vm3210, %v9531
        %9660 = vst.msk [vmem:[%s325 + $0x120] sm:$0xff] %vm3210, %v9532
        %9661 = vst.msk [vmem:[%s325 + $0x128] sm:$0xff] %vm3210, %v9533
        %9662 = vst.msk [vmem:[%s325 + $0x130] sm:$0xff] %vm3210, %v9534
        %9663 = vst.msk [vmem:[%s325 + $0x138] sm:$0xff] %vm3210, %v9535
        %9664 = vst.msk [vmem:[%s325 + $0x140] sm:$0xff] %vm3210, %v9536
        %9665 = vst.msk [vmem:[%s325 + $0x148] sm:$0xff] %vm3210, %v9537
        %9666 = vst.msk [vmem:[%s325 + $0x150] sm:$0xff] %vm3210, %v9538
        %9667 = vst.msk [vmem:[%s325 + $0x158] sm:$0xff] %vm3210, %v9539
        %9668 = vst.msk [vmem:[%s325 + $0x160] sm:$0xff] %vm3210, %v9540
        %9669 = vst.msk [vmem:[%s325 + $0x168] sm:$0xff] %vm3210, %v9541
        %9670 = vst.msk [vmem:[%s325 + $0x170] sm:$0xff] %vm3210, %v9542
        %9671 = vst.msk [vmem:[%s325 + $0x178] sm:$0xff] %vm3210, %v9543
        %9672 = vst.msk [vmem:[%s325 + $0x180] sm:$0xff] %vm3210, %v9544
        %9673 = vst.msk [vmem:[%s325 + $0x188] sm:$0xff] %vm3210, %v9545
        %9674 = vst.msk [vmem:[%s325 + $0x190] sm:$0xff] %vm3210, %v9546
        %9675 = vst.msk [vmem:[%s325 + $0x198] sm:$0xff] %vm3210, %v9547
        %9676 = vst.msk [vmem:[%s325 + $0x1a0] sm:$0xff] %vm3210, %v9548
        %9677 = vst.msk [vmem:[%s325 + $0x1a8] sm:$0xff] %vm3210, %v9549
        %9678 = vst.msk [vmem:[%s325 + $0x1b0] sm:$0xff] %vm3210, %v9550
        %9679 = vst.msk [vmem:[%s325 + $0x1b8] sm:$0xff] %vm3210, %v9551
        %9680 = vst.msk [vmem:[%s325 + $0x1c0] sm:$0xff] %vm3210, %v9552
        %9681 = vst.msk [vmem:[%s325 + $0x1c8] sm:$0xff] %vm3210, %v9553
        %9682 = vst.msk [vmem:[%s325 + $0x1d0] sm:$0xff] %vm3210, %v9554
        %9683 = vst.msk [vmem:[%s325 + $0x1d8] sm:$0xff] %vm3210, %v9555
        %9684 = vst.msk [vmem:[%s325 + $0x1e0] sm:$0xff] %vm3210, %v9556
        %9685 = vst.msk [vmem:[%s325 + $0x1e8] sm:$0xff] %vm3210, %v9557
        %9686 = vst.msk [vmem:[%s325 + $0x1f0] sm:$0xff] %vm3210, %v9558
        %9687 = vst.msk [vmem:[%s325 + $0x1f8] sm:$0xff] %vm3210, %v9559
        %s9688 = sand.u32 %s225, 1
        %s9689 = scalar_lea.sflag [#allocation5], %s9688
        %s9690 = sand.u32 %s225, 1
        %s9691 = smul.addr %s9690, 512
        %s9692 = scalar_lea.vmem [#allocation4], %s9691
        // Predicated region
        $region61: #{tpu_custom_call.1} parent=55 // pred_check
          %p9693 = pneg %p235
        $region62: #{tpu_custom_call.1} parent=55 // pred_check_branch
          %9695 = sbr.rel (%p9693) target = $region64
        $region63: #{tpu_custom_call.1} parent=55 // pred_region
          %s9697 = ssub.s32 8192, 8192
          %9698 = vsyncadd %s9689, %s9697
          %s9699 = smul.addr %s23, 64
          %s9700 = smul.addr %s9699, 128
          %s9701 = scalar_lea.hbm %s9, %s9700
          %s9702 = sshll.u32 %s9692, 4
          %s9703 = int_to_ptr.vmem [resolvable:$true] %s9702
          %9708 = dma.vmem_to_hbm [thread:$0]  %s9703, 8192, %s9701, %s9689, 128, 128, 8
        $region64: #{tpu_custom_call.1} parent=55 // pred_fallthru
          _
      $region56: #{tpu_custom_call.1} parent=5 // pred_fallthru
        _
      %p9709 = scmp.le.s32.totalorder 2, %s18
      // Predicated region
      $region65: #{tpu_custom_call.1} parent=5 // pred_check
        %p9710 = pneg %p9709
      $region66: #{tpu_custom_call.1} parent=5 // pred_check_branch
        %9712 = sbr.rel (%p9710) target = $region68
      $region67: #{tpu_custom_call.1} parent=5 // pred_region
        %s9713 = ssub.s32 %s18, 2
        // Predicated region
        $region69: #{tpu_custom_call.1} parent=67 // pred_check
          %p9714 = pneg %p241
        $region70: #{tpu_custom_call.1} parent=67 // pred_check_branch
          %9716 = sbr.rel (%p9714) target = $region72
        $region71: #{tpu_custom_call.1} parent=67 // pred_region
          %s9717 = sand.u32 %s226, 1
          %s9718 = scalar_lea.sflag [#allocation5], %s9717
          %s9719 = sand.u32 %s226, 1
          %s9720 = smul.addr %s9719, 512
          %s9721 = scalar_lea.vmem [#allocation4], %s9720
          %9722 = dma.done %s9718, 8192
        $region72: #{tpu_custom_call.1} parent=67 // pred_fallthru
          _
      $region68: #{tpu_custom_call.1} parent=5 // pred_fallthru
        _
    $region6: #{tpu_custom_call.1} parent=1 // loop_footer
      %s22 = sadd.s32 1, %s18
    $region7: #{tpu_custom_call.1} parent=1 // loop_footer_branch
      %17 = sbr.rel target = $region3
    $region8: #{tpu_custom_call.1} parent=1 // loop_exit
      _
    %9723 = vsyncpa [#allocation5], 1
    %s9724 = scalar_lea.sflag [#allocation5], 1
    %9725 = vsyncpa %s9724, 1

</llo_original>
